<compile_context>
chip_gen: v7x
topology: tpu7x:2x2x1
jax: 0.10.0
libtpu: 0.0.40
codegen_flags: <defaults>
</compile_context>

<pallas_src>
import math
from functools import partial

import jax
import jax.numpy as jnp
from jax import lax
from jax.experimental import pallas as pl
from jax.experimental.pallas import tpu as pltpu


def _round_up(x, m):
    return ((x + m - 1) // m) * m


def _sigmoid(x):
    # One EUP op (tanh) instead of exp + divide; mathematically identical.
    return 0.5 * jnp.tanh(0.5 * x) + 0.5


def _compiler_params():
    # dim 0 (batch blocks) is parallel -> megacore sharding on 2-TC parts;
    # dim 1 (time chunks) carries state in scratch -> arbitrary.
    kwargs = dict(dimension_semantics=("parallel", "arbitrary"))
    try:
        cap = pltpu.get_tpu_info().vmem_capacity_bytes
        # ~100 MiB on v5e/v6e (128 MiB physical), ~56 MiB on v7x (64 MiB).
        kwargs["vmem_limit_bytes"] = int(min(100 * 1024 * 1024, (cap * 7) // 8))
    except Exception:
        pass  # fall back to the default scoped-VMEM limit
    return pltpu.CompilerParams(**kwargs)


# ----------------------------------------------------------------------------
# Pallas kernel: one subLSTM sub-layer, Tt timesteps per grid step.
# Grid = (batch_blocks, time_chunks); h/c state lives in VMEM scratch.
# ----------------------------------------------------------------------------
def _make_recurrent_kernel(t_real, t_chunk, needs_mask):
    bf16, f32 = jnp.bfloat16, jnp.float32

    def kernel(x_ref, wih_ref, whh_ref, bias_ref,
               hseq_ref, hlast_ref, clast_ref,
               gx_scr, h_scr, c_scr):
        t = pl.program_id(1)
        nt = pl.num_programs(1)
        Tt, Bb, Dp = x_ref.shape
        Hp = h_scr.shape[-1]

        @pl.when(t == 0)
        def _():
            h_scr[...] = jnp.zeros(h_scr.shape, f32)
            c_scr[...] = jnp.zeros(c_scr.shape, f32)

        # Fused input projection for the whole time chunk: one big MXU GEMM
        # (M = Tt*Bb) in bf16 with f32 accumulation, plus bias, into scratch.
        xb = x_ref[...].reshape(Tt * Bb, Dp)
        gx_scr[...] = jnp.dot(xb, wih_ref[...],
                              preferred_element_type=f32) + bias_ref[...]

        def run_chunk(masked):
            def step(s, carry):
                h, c = carry                                    # f32 (Bb, Hp)
                row = pl.multiple_of(s * Bb, Bb)
                gx = gx_scr[pl.ds(row, Bb), :]                  # (Bb, 4Hp) f32
                # Sequential part: h @ W_hh^T on the MXU (bf16 in, f32 acc).
                # TODO(synk): hold W_hh^T weight-stationary across the chunk
                # via pltpu.matmul_push_rhs / matmul_acc_lhs / matmul_pop.
                gates = _sigmoid(gx + jnp.dot(h.astype(bf16), whh_ref[...],
                                              preferred_element_type=f32))
                # Hp is a multiple of 128 -> gate slices are lane-aligned.
                i_g = gates[:, 0 * Hp:1 * Hp]
                f_g = gates[:, 1 * Hp:2 * Hp]
                z_g = gates[:, 2 * Hp:3 * Hp]
                o_g = gates[:, 3 * Hp:4 * Hp]
                c_new = f_g * c + z_g - i_g
                h_new = _sigmoid(c_new) - o_g
                if masked:                                      # last chunk only
                    valid = (t * t_chunk + s) < t_real
                    c_new = jnp.where(valid, c_new, c)
                    h_new = jnp.where(valid, h_new, h)
                hseq_ref[s] = h_new.astype(hseq_ref.dtype)      # lane-dense bf16
                return (h_new, c_new)

            h, c = lax.fori_loop(0, Tt, step, (h_scr[...], c_scr[...]),
                                 unroll=True)
            h_scr[...] = h
            c_scr[...] = c

        if needs_mask:
            # Keep the padded-time mask out of the steady-state chunks.
            @pl.when(t != nt - 1)
            def _():
                run_chunk(False)

            @pl.when(t == nt - 1)
            def _():
                run_chunk(True)
        else:
            run_chunk(False)

        @pl.when(t == nt - 1)
        def _():
            hlast_ref[...] = h_scr[...]
            clast_ref[...] = c_scr[...]

    return kernel


# ----------------------------------------------------------------------------
# One subLSTM sub-layer over the whole (time-major, batch-padded) sequence.
# ----------------------------------------------------------------------------
def sublstm_layer(x_tm, w_ih, w_hh, b_ih, b_hh, *, time_block=32):
    """x_tm: (T, Bp, Din) time-major, Bp a multiple of 16 (cast to bf16
    internally).  Weights use PyTorch conventions: w_ih (4H, Dw), w_hh (4H, H),
    biases (4H,), with Dw <= Din (extra input lanes multiply zero-padded rows
    of W_ih^T, so their contents never matter).
    Returns h_seq (T, Bp, Hp) bf16 (Hp = H rounded up to 128; padded lanes are
    exactly 0) and the final state (h_T, c_T), each (Bp, Hp) f32."""
    T, Bp, Din = x_tm.shape
    Dw = w_ih.shape[1]
    H = w_hh.shape[1]
    assert w_ih.shape[0] == 4 * H and Din >= Dw and Bp % 16 == 0

    f32, bf16 = jnp.float32, jnp.bfloat16
    Hp = max(_round_up(H, 128), 128)
    Dp = max(_round_up(Din, 128), 128)
    Tt = min(time_block, T)
    Tpad = _round_up(T, Tt)
    needs_mask = (Tpad != T)

    # --- gate-padded, pre-transposed weights (bf16, VMEM-resident) ---------
    # Zero padding keeps padded gate lanes at pre-activation 0 => padded h/c
    # lanes stay exactly 0; zero-padded W_ih^T rows make padded input lanes
    # contribute nothing regardless of their contents.
    wiht = jnp.transpose(w_ih).reshape(Dw, 4, H)
    wiht = jnp.pad(wiht, ((0, Dp - Dw), (0, 0), (0, Hp - H)))
    wiht = wiht.reshape(Dp, 4 * Hp).astype(bf16)

    whht = jnp.transpose(w_hh).reshape(H, 4, H)
    whht = jnp.pad(whht, ((0, Hp - H), (0, 0), (0, Hp - H)))
    whht = whht.reshape(Hp, 4 * Hp).astype(bf16)

    bias = (b_ih + b_hh).reshape(4, H)
    bias = jnp.pad(bias, ((0, 0), (0, Hp - H))).reshape(1, 4 * Hp).astype(f32)

    # --- input: bf16, lane-padded feature dim, time padded to the chunk ----
    x = x_tm.astype(bf16)
    if (Tpad != T) or (Dp != Din):
        x = jnp.pad(x, ((0, Tpad - T), (0, 0), (0, Dp - Din)))

    # Shard independent batch blocks across TensorCores (v7x megacore) only
    # when each half-batch still fills the MXU rows; otherwise one block.
    nb = 2 if (Bp >= 256 and Bp % 32 == 0) else 1
    Bb = Bp // nb
    nt = Tpad // Tt

    kernel = _make_recurrent_kernel(T, Tt, needs_mask)

    # TODO(synk): single-buffer the three constant-index resident inputs
    # (pipeline_mode=pl.Buffered(1)) to save VMEM at large H on v7x.
    h_seq, h_last, c_last = pl.pallas_call(
        kernel,
        out_shape=(jax.ShapeDtypeStruct((Tpad, Bp, Hp), bf16),
                   jax.ShapeDtypeStruct((Bp, Hp), f32),
                   jax.ShapeDtypeStruct((Bp, Hp), f32)),
        grid_spec=pltpu.PrefetchScalarGridSpec(
            num_scalar_prefetch=0,
            grid=(nb, nt),
            in_specs=[
                pl.BlockSpec((Tt, Bb, Dp), lambda b, t: (t, b, 0)),
                # Constant index maps -> weights/bias stay resident in VMEM.
                pl.BlockSpec((Dp, 4 * Hp), lambda b, t: (0, 0)),
                pl.BlockSpec((Hp, 4 * Hp), lambda b, t: (0, 0)),
                pl.BlockSpec((1, 4 * Hp), lambda b, t: (0, 0)),
            ],
            out_specs=(
                pl.BlockSpec((Tt, Bb, Hp), lambda b, t: (t, b, 0)),
                pl.BlockSpec((Bb, Hp), lambda b, t: (b, 0)),
                pl.BlockSpec((Bb, Hp), lambda b, t: (b, 0)),
            ),
            scratch_shapes=[pltpu.VMEM((Tt * Bb, 4 * Hp), f32),
                            pltpu.VMEM((Bb, Hp), f32),
                            pltpu.VMEM((Bb, Hp), f32)],
        ),
        compiler_params=_compiler_params(),
    )(x, wiht, whht, bias)

    if Tpad != T:
        h_seq = h_seq[:T]
    return h_seq, (h_last, c_last)


# ----------------------------------------------------------------------------
# SubLSTM module (num_layers=2 internal stacked sub-layers); stays time-major.
# ----------------------------------------------------------------------------
def sublstm_module(x_tm, layer_params):
    hidden = []
    h = x_tm
    for p in layer_params:
        h, (h_last, c_last) = sublstm_layer(
            h, p["w_ih"], p["w_hh"], p["b_ih"], p["b_hh"])
        hidden.append((h_last, c_last))
    return h, hidden


# ----------------------------------------------------------------------------
# RNNModel forward
# ----------------------------------------------------------------------------
def rnn_model_forward(params, tokens, nlayers):
    # TODO(synk): nn.Dropout / embedding dropout are stochastic at train time;
    # implemented here as identity (eval-mode forward).
    B, T = tokens.shape
    nhid = params["rnns"][-1][-1]["w_hh"].shape[1]
    Bp = max(_round_up(B, 16), 16)               # bf16 sublane-aligned batch

    emb = params["encoder"][tokens]              # (B, T, ninp) plain-JAX gather
    x_tm = jnp.transpose(emb, (1, 0, 2))         # time-major once
    if Bp != B:
        x_tm = jnp.pad(x_tm, ((0, 0), (0, Bp - B), (0, 0)))

    # Recurrent stack stays time-major / padded / bf16 between layers; the
    # batch-major unpadded f32 views below only exist because the forward
    # returns them (they are never fed back into the recurrence).
    h_tm = x_tm
    per_layer = []
    hidden = None
    for l in range(nlayers):
        h_tm, hidden = sublstm_module(h_tm, params["rnns"][l])
        per_layer.append(h_tm)

    raw_outputs, outputs = [], []
    for l, h in enumerate(per_layer):
        raw_bf = jnp.transpose(h[:, :B, :nhid], (1, 0, 2)).astype(jnp.float32)
        raw_outputs.append(raw_bf)
        if l != nlayers - 1:
            outputs.append(raw_bf)
    output = raw_outputs[-1]
    outputs.append(output)
    result = output.reshape(output.shape[0] * output.shape[1], output.shape[2])
    hidden = [(h[:B, :nhid], c[:B, :nhid]) for (h, c) in hidden]
    return result, hidden, raw_outputs, outputs


# ----------------------------------------------------------------------------
# Deterministic parameter init (shapes follow the PyTorch module __init__,
# tie_weights=False)
# ----------------------------------------------------------------------------
def init_params(key, ntoken, ninp, nhid, nlayers):
    key, k_enc = jax.random.split(key)
    params = {
        "encoder": jax.random.uniform(k_enc, (ntoken, ninp), jnp.float32,
                                      -0.1, 0.1),
        "rnns": [],
    }
    stdv = 1.0 / math.sqrt(nhid)
    for l in range(nlayers):
        in0 = ninp if l == 0 else nhid
        h = nhid
        layers = []
        for sub in range(2):                     # num_layers=2 inside SubLSTM
            d_in = in0 if sub == 0 else h
            key, k1, k2, k3, k4 = jax.random.split(key, 5)
            layers.append({
                "w_ih": jax.random.uniform(k1, (4 * h, d_in), jnp.float32, -stdv, stdv),
                "w_hh": jax.random.uniform(k2, (4 * h, h), jnp.float32, -stdv, stdv),
                "b_ih": jax.random.uniform(k3, (4 * h,), jnp.float32, -stdv, stdv),
                "b_hh": jax.random.uniform(k4, (4 * h,), jnp.float32, -stdv, stdv),
            })
        params["rnns"].append(layers)
    return params, key


# ----------------------------------------------------------------------------
# Pure-JAX reference (for correctness check)
# ----------------------------------------------------------------------------
def _sublstm_layer_ref(x_tm, w_ih, w_hh, b_ih, b_hh):
    T, B, _ = x_tm.shape
    H = w_hh.shape[1]

    def step(carry, x_t):
        h, c = carry
        gates = jax.nn.sigmoid(x_t @ w_ih.T + b_ih + h @ w_hh.T + b_hh)
        i, f, z, o = jnp.split(gates, 4, axis=-1)
        c = f * c + z - i
        h = jax.nn.sigmoid(c) - o
        return (h, c), h

    (h, c), hs = jax.lax.scan(
        step, (jnp.zeros((B, H), jnp.float32), jnp.zeros((B, H), jnp.float32)), x_tm)
    return hs, (h, c)


def _model_ref(params, tokens, nlayers):
    x = params["encoder"][tokens]
    for l in range(nlayers):
        h = jnp.transpose(x, (1, 0, 2))
        for p in params["rnns"][l]:
            h, _ = _sublstm_layer_ref(h, p["w_ih"], p["w_hh"], p["b_ih"], p["b_hh"])
        x = jnp.transpose(h, (1, 0, 2))
    return x.reshape(x.shape[0] * x.shape[1], x.shape[2])


if __name__ == "__main__":
    ntoken, ninp, nhid, nlayers = 50, 32, 32, 2
    B, T = 2, 8

    key = jax.random.PRNGKey(0)
    params, key = init_params(key, ntoken, ninp, nhid, nlayers)
    key, k_tok = jax.random.split(key)
    tokens = jax.random.randint(k_tok, (B, T), 0, ntoken, dtype=jnp.int32)

    fwd = jax.jit(partial(rnn_model_forward, nlayers=nlayers))
    result, hidden, raw_outputs, outputs = fwd(params, tokens)
    result = jax.block_until_ready(result)

    assert result.shape == (B * T, nhid), result.shape
    assert len(raw_outputs) == nlayers and len(outputs) == nlayers
    assert len(hidden) == 2 and hidden[0][0].shape == (B, nhid)

    ref = jax.block_until_ready(_model_ref(params, tokens, nlayers))
    assert jnp.allclose(result, ref, atol=2e-2, rtol=2e-2), \
        float(jnp.max(jnp.abs(result - ref)))

    print("KERNEL_OK")
</pallas_src>

<mosaic_0001>
module attributes {stable_mosaic.version = 11 : i64} {
  func.func @kernel(%arg0: i32, %arg1: i32, %arg2: memref<8x16x128xbf16, #tpu.memory_space<vmem>>, %arg3: memref<128x512xbf16, #tpu.memory_space<vmem>>, %arg4: memref<128x512xbf16, #tpu.memory_space<vmem>>, %arg5: memref<1x512xf32, #tpu.memory_space<vmem>>, %arg6: memref<8x16x128xbf16, #tpu.memory_space<vmem>>, %arg7: memref<16x128xf32, #tpu.memory_space<vmem>>, %arg8: memref<16x128xf32, #tpu.memory_space<vmem>>, %arg9: memref<128x512xf32, #tpu.memory_space<vmem>>, %arg10: memref<16x128xf32, #tpu.memory_space<vmem>>, %arg11: memref<16x128xf32, #tpu.memory_space<vmem>>) attributes {dimension_semantics = [#tpu.dimension_semantics<parallel>, #tpu.dimension_semantics<arbitrary>], iteration_bounds = array<i64: 1, 1>, scalar_prefetch = 0 : i64, scratch_operands = 3 : i64, tpu.core_type = #tpu.core_type<tc>, window_params = [{transform_indices = @transform_0, window_bounds = array<i64: 8, 16, 128>}, {pipeline_mode = #tpu.pipeline_mode<synchronous>, transform_indices = @transform_1, window_bounds = array<i64: 128, 512>}, {pipeline_mode = #tpu.pipeline_mode<synchronous>, transform_indices = @transform_2, window_bounds = array<i64: 128, 512>}, {pipeline_mode = #tpu.pipeline_mode<synchronous>, transform_indices = @transform_3, window_bounds = array<i64: 1, 512>}, {transform_indices = @transform_4, window_bounds = array<i64: 8, 16, 128>}, {transform_indices = @transform_5, window_bounds = array<i64: 16, 128>}, {transform_indices = @transform_6, window_bounds = array<i64: 16, 128>}]} {
    %c0_i32 = arith.constant 0 : i32
    %0 = arith.cmpi eq, %arg1, %c0_i32 : i32
    %1 = arith.extui %0 : i1 to i32
    %c0_i32_0 = arith.constant 0 : i32
    %2 = arith.cmpi ne, %1, %c0_i32_0 : i32
    scf.if %2 {
      %cst_123 = arith.constant 0.000000e+00 : f32
      %298 = vector.broadcast %cst_123 : f32 to vector<16x128xf32>
      %c0_124 = arith.constant 0 : index
      %c0_125 = arith.constant 0 : index
      %299 = vector.load %arg10[%c0_124, %c0_125] : memref<16x128xf32, #tpu.memory_space<vmem>>, vector<16x128xf32>
      tpu.vector_store %arg10[%c0_124, %c0_125], %298 {strides = array<i32>} : memref<16x128xf32, #tpu.memory_space<vmem>>, vector<16x128xf32>,
      %cst_126 = arith.constant 0.000000e+00 : f32
      %300 = vector.broadcast %cst_126 : f32 to vector<16x128xf32>
      %c0_127 = arith.constant 0 : index
      %c0_128 = arith.constant 0 : index
      %301 = vector.load %arg11[%c0_127, %c0_128] : memref<16x128xf32, #tpu.memory_space<vmem>>, vector<16x128xf32>
      tpu.vector_store %arg11[%c0_127, %c0_128], %300 {strides = array<i32>} : memref<16x128xf32, #tpu.memory_space<vmem>>, vector<16x128xf32>,
    } else {
    }
    %c0 = arith.constant 0 : index
    %c0_1 = arith.constant 0 : index
    %c0_2 = arith.constant 0 : index
    %3 = vector.load %arg2[%c0, %c0_1, %c0_2] : memref<8x16x128xbf16, #tpu.memory_space<vmem>>, vector<8x16x128xbf16>
    %4 = vector.shape_cast %3 : vector<8x16x128xbf16> to vector<128x128xbf16>
    %c0_3 = arith.constant 0 : index
    %c0_4 = arith.constant 0 : index
    %5 = vector.load %arg3[%c0_3, %c0_4] : memref<128x512xbf16, #tpu.memory_space<vmem>>, vector<128x512xbf16>
    %cst = arith.constant dense<0.000000e+00> : vector<128x512xf32>
    %6 = tpu.matmul %4, %5, %cst {dimension_numbers = #tpu.dot_dimension_numbers<[1], [0], [0], [1], [0, 0, 1, 1], [], []>} : vector<128x128xbf16>, vector<128x512xbf16>, vector<128x512xf32> -> vector<128x512xf32>
    %c0_5 = arith.constant 0 : index
    %c0_6 = arith.constant 0 : index
    %7 = vector.load %arg5[%c0_5, %c0_6] : memref<1x512xf32, #tpu.memory_space<vmem>>, vector<1x512xf32>
    %8 = vector.broadcast %7 : vector<1x512xf32> to vector<128x512xf32>
    %9 = arith.addf %6, %8 : vector<128x512xf32>
    %c0_7 = arith.constant 0 : index
    %c0_8 = arith.constant 0 : index
    %10 = vector.load %arg9[%c0_7, %c0_8] : memref<128x512xf32, #tpu.memory_space<vmem>>, vector<128x512xf32>
    tpu.vector_store %arg9[%c0_7, %c0_8], %9 {strides = array<i32>} : memref<128x512xf32, #tpu.memory_space<vmem>>, vector<128x512xf32>,
    %c0_9 = arith.constant 0 : index
    %c0_10 = arith.constant 0 : index
    %11 = vector.load %arg10[%c0_9, %c0_10] : memref<16x128xf32, #tpu.memory_space<vmem>>, vector<16x128xf32>
    %c0_11 = arith.constant 0 : index
    %c0_12 = arith.constant 0 : index
    %12 = vector.load %arg11[%c0_11, %c0_12] : memref<16x128xf32, #tpu.memory_space<vmem>>, vector<16x128xf32>
    %c0_i32_13 = arith.constant 0 : i32
    %c16_i32 = arith.constant 16 : i32
    %13 = arith.muli %c0_i32_13, %c16_i32 : i32
    %14 = tpu.assume_multiple %13, 16 : i32
    %15 = arith.index_cast %14 : i32 to index
    %c0_14 = arith.constant 0 : index
    %16 = vector.load %arg9[%15, %c0_14] : memref<128x512xf32, #tpu.memory_space<vmem>>, vector<16x512xf32>
    %17 = arith.truncf %11 : vector<16x128xf32> to vector<16x128xbf16>
    %c0_15 = arith.constant 0 : index
    %c0_16 = arith.constant 0 : index
    %18 = vector.load %arg4[%c0_15, %c0_16] : memref<128x512xbf16, #tpu.memory_space<vmem>>, vector<128x512xbf16>
    %cst_17 = arith.constant dense<0.000000e+00> : vector<16x512xf32>
    %19 = tpu.matmul %17, %18, %cst_17 {dimension_numbers = #tpu.dot_dimension_numbers<[1], [0], [0], [1], [0, 0, 1, 1], [], []>} : vector<16x128xbf16>, vector<128x512xbf16>, vector<16x512xf32> -> vector<16x512xf32>
    %20 = arith.addf %16, %19 : vector<16x512xf32>
    %cst_18 = arith.constant 5.000000e-01 : f32
    %21 = vector.broadcast %cst_18 : f32 to vector<16x512xf32>
    %22 = arith.mulf %21, %20 : vector<16x512xf32>
    %23 = math.tanh %22 : vector<16x512xf32>
    %cst_19 = arith.constant 5.000000e-01 : f32
    %24 = vector.broadcast %cst_19 : f32 to vector<16x512xf32>
    %25 = arith.mulf %24, %23 : vector<16x512xf32>
    %cst_20 = arith.constant 5.000000e-01 : f32
    %26 = vector.broadcast %cst_20 : f32 to vector<16x512xf32>
    %27 = arith.addf %25, %26 : vector<16x512xf32>
    %28 = vector.extract_strided_slice %27 {offsets = [0, 0], sizes = [16, 128], strides = [1, 1]} : vector<16x512xf32> to vector<16x128xf32>
    %29 = vector.extract_strided_slice %27 {offsets = [0, 128], sizes = [16, 128], strides = [1, 1]} : vector<16x512xf32> to vector<16x128xf32>
    %30 = vector.extract_strided_slice %27 {offsets = [0, 256], sizes = [16, 128], strides = [1, 1]} : vector<16x512xf32> to vector<16x128xf32>
    %31 = vector.extract_strided_slice %27 {offsets = [0, 384], sizes = [16, 128], strides = [1, 1]} : vector<16x512xf32> to vector<16x128xf32>
    %32 = arith.mulf %29, %12 : vector<16x128xf32>
    %33 = arith.addf %32, %30 : vector<16x128xf32>
    %34 = arith.subf %33, %28 : vector<16x128xf32>
    %cst_21 = arith.constant 5.000000e-01 : f32
    %35 = vector.broadcast %cst_21 : f32 to vector<16x128xf32>
    %36 = arith.mulf %35, %34 : vector<16x128xf32>
    %37 = math.tanh %36 : vector<16x128xf32>
    %cst_22 = arith.constant 5.000000e-01 : f32
    %38 = vector.broadcast %cst_22 : f32 to vector<16x128xf32>
    %39 = arith.mulf %38, %37 : vector<16x128xf32>
    %cst_23 = arith.constant 5.000000e-01 : f32
    %40 = vector.broadcast %cst_23 : f32 to vector<16x128xf32>
    %41 = arith.addf %39, %40 : vector<16x128xf32>
    %42 = arith.subf %41, %31 : vector<16x128xf32>
    %43 = arith.truncf %42 : vector<16x128xf32> to vector<16x128xbf16>
    %44 = arith.index_cast %c0_i32_13 : i32 to index
    %c0_24 = arith.constant 0 : index
    %c0_25 = arith.constant 0 : index
    %45 = vector.load %arg6[%44, %c0_24, %c0_25] : memref<8x16x128xbf16, #tpu.memory_space<vmem>>, vector<1x16x128xbf16>
    %46 = vector.shape_cast %45 : vector<1x16x128xbf16> to vector<16x128xbf16>
    %47 = vector.shape_cast %43 : vector<16x128xbf16> to vector<1x16x128xbf16>
    tpu.vector_store %arg6[%44, %c0_24, %c0_25], %47 {strides = array<i32>} : memref<8x16x128xbf16, #tpu.memory_space<vmem>>, vector<1x16x128xbf16>,
    %c1_i32 = arith.constant 1 : i32
    %c16_i32_26 = arith.constant 16 : i32
    %48 = arith.muli %c1_i32, %c16_i32_26 : i32
    %49 = tpu.assume_multiple %48, 16 : i32
    %50 = arith.index_cast %49 : i32 to index
    %c0_27 = arith.constant 0 : index
    %51 = vector.load %arg9[%50, %c0_27] : memref<128x512xf32, #tpu.memory_space<vmem>>, vector<16x512xf32>
    %52 = arith.truncf %42 : vector<16x128xf32> to vector<16x128xbf16>
    %c0_28 = arith.constant 0 : index
    %c0_29 = arith.constant 0 : index
    %53 = vector.load %arg4[%c0_28, %c0_29] : memref<128x512xbf16, #tpu.memory_space<vmem>>, vector<128x512xbf16>
    %cst_30 = arith.constant dense<0.000000e+00> : vector<16x512xf32>
    %54 = tpu.matmul %52, %53, %cst_30 {dimension_numbers = #tpu.dot_dimension_numbers<[1], [0], [0], [1], [0, 0, 1, 1], [], []>} : vector<16x128xbf16>, vector<128x512xbf16>, vector<16x512xf32> -> vector<16x512xf32>
    %55 = arith.addf %51, %54 : vector<16x512xf32>
    %cst_31 = arith.constant 5.000000e-01 : f32
    %56 = vector.broadcast %cst_31 : f32 to vector<16x512xf32>
    %57 = arith.mulf %56, %55 : vector<16x512xf32>
    %58 = math.tanh %57 : vector<16x512xf32>
    %cst_32 = arith.constant 5.000000e-01 : f32
    %59 = vector.broadcast %cst_32 : f32 to vector<16x512xf32>
    %60 = arith.mulf %59, %58 : vector<16x512xf32>
    %cst_33 = arith.constant 5.000000e-01 : f32
    %61 = vector.broadcast %cst_33 : f32 to vector<16x512xf32>
    %62 = arith.addf %60, %61 : vector<16x512xf32>
    %63 = vector.extract_strided_slice %62 {offsets = [0, 0], sizes = [16, 128], strides = [1, 1]} : vector<16x512xf32> to vector<16x128xf32>
    %64 = vector.extract_strided_slice %62 {offsets = [0, 128], sizes = [16, 128], strides = [1, 1]} : vector<16x512xf32> to vector<16x128xf32>
    %65 = vector.extract_strided_slice %62 {offsets = [0, 256], sizes = [16, 128], strides = [1, 1]} : vector<16x512xf32> to vector<16x128xf32>
    %66 = vector.extract_strided_slice %62 {offsets = [0, 384], sizes = [16, 128], strides = [1, 1]} : vector<16x512xf32> to vector<16x128xf32>
    %67 = arith.mulf %64, %34 : vector<16x128xf32>
    %68 = arith.addf %67, %65 : vector<16x128xf32>
    %69 = arith.subf %68, %63 : vector<16x128xf32>
    %cst_34 = arith.constant 5.000000e-01 : f32
    %70 = vector.broadcast %cst_34 : f32 to vector<16x128xf32>
    %71 = arith.mulf %70, %69 : vector<16x128xf32>
    %72 = math.tanh %71 : vector<16x128xf32>
    %cst_35 = arith.constant 5.000000e-01 : f32
    %73 = vector.broadcast %cst_35 : f32 to vector<16x128xf32>
    %74 = arith.mulf %73, %72 : vector<16x128xf32>
    %cst_36 = arith.constant 5.000000e-01 : f32
    %75 = vector.broadcast %cst_36 : f32 to vector<16x128xf32>
    %76 = arith.addf %74, %75 : vector<16x128xf32>
    %77 = arith.subf %76, %66 : vector<16x128xf32>
    %78 = arith.truncf %77 : vector<16x128xf32> to vector<16x128xbf16>
    %79 = arith.index_cast %c1_i32 : i32 to index
    %c0_37 = arith.constant 0 : index
    %c0_38 = arith.constant 0 : index
    %80 = vector.load %arg6[%79, %c0_37, %c0_38] : memref<8x16x128xbf16, #tpu.memory_space<vmem>>, vector<1x16x128xbf16>
    %81 = vector.shape_cast %80 : vector<1x16x128xbf16> to vector<16x128xbf16>
    %82 = vector.shape_cast %78 : vector<16x128xbf16> to vector<1x16x128xbf16>
    tpu.vector_store %arg6[%79, %c0_37, %c0_38], %82 {strides = array<i32>} : memref<8x16x128xbf16, #tpu.memory_space<vmem>>, vector<1x16x128xbf16>,
    %c2_i32 = arith.constant 2 : i32
    %c16_i32_39 = arith.constant 16 : i32
    %83 = arith.muli %c2_i32, %c16_i32_39 : i32
    %84 = tpu.assume_multiple %83, 16 : i32
    %85 = arith.index_cast %84 : i32 to index
    %c0_40 = arith.constant 0 : index
    %86 = vector.load %arg9[%85, %c0_40] : memref<128x512xf32, #tpu.memory_space<vmem>>, vector<16x512xf32>
    %87 = arith.truncf %77 : vector<16x128xf32> to vector<16x128xbf16>
    %c0_41 = arith.constant 0 : index
    %c0_42 = arith.constant 0 : index
    %88 = vector.load %arg4[%c0_41, %c0_42] : memref<128x512xbf16, #tpu.memory_space<vmem>>, vector<128x512xbf16>
    %cst_43 = arith.constant dense<0.000000e+00> : vector<16x512xf32>
    %89 = tpu.matmul %87, %88, %cst_43 {dimension_numbers = #tpu.dot_dimension_numbers<[1], [0], [0], [1], [0, 0, 1, 1], [], []>} : vector<16x128xbf16>, vector<128x512xbf16>, vector<16x512xf32> -> vector<16x512xf32>
    %90 = arith.addf %86, %89 : vector<16x512xf32>
    %cst_44 = arith.constant 5.000000e-01 : f32
    %91 = vector.broadcast %cst_44 : f32 to vector<16x512xf32>
    %92 = arith.mulf %91, %90 : vector<16x512xf32>
    %93 = math.tanh %92 : vector<16x512xf32>
    %cst_45 = arith.constant 5.000000e-01 : f32
    %94 = vector.broadcast %cst_45 : f32 to vector<16x512xf32>
    %95 = arith.mulf %94, %93 : vector<16x512xf32>
    %cst_46 = arith.constant 5.000000e-01 : f32
    %96 = vector.broadcast %cst_46 : f32 to vector<16x512xf32>
    %97 = arith.addf %95, %96 : vector<16x512xf32>
    %98 = vector.extract_strided_slice %97 {offsets = [0, 0], sizes = [16, 128], strides = [1, 1]} : vector<16x512xf32> to vector<16x128xf32>
    %99 = vector.extract_strided_slice %97 {offsets = [0, 128], sizes = [16, 128], strides = [1, 1]} : vector<16x512xf32> to vector<16x128xf32>
    %100 = vector.extract_strided_slice %97 {offsets = [0, 256], sizes = [16, 128], strides = [1, 1]} : vector<16x512xf32> to vector<16x128xf32>
    %101 = vector.extract_strided_slice %97 {offsets = [0, 384], sizes = [16, 128], strides = [1, 1]} : vector<16x512xf32> to vector<16x128xf32>
    %102 = arith.mulf %99, %69 : vector<16x128xf32>
    %103 = arith.addf %102, %100 : vector<16x128xf32>
    %104 = arith.subf %103, %98 : vector<16x128xf32>
    %cst_47 = arith.constant 5.000000e-01 : f32
    %105 = vector.broadcast %cst_47 : f32 to vector<16x128xf32>
    %106 = arith.mulf %105, %104 : vector<16x128xf32>
    %107 = math.tanh %106 : vector<16x128xf32>
    %cst_48 = arith.constant 5.000000e-01 : f32
    %108 = vector.broadcast %cst_48 : f32 to vector<16x128xf32>
    %109 = arith.mulf %108, %107 : vector<16x128xf32>
    %cst_49 = arith.constant 5.000000e-01 : f32
    %110 = vector.broadcast %cst_49 : f32 to vector<16x128xf32>
    %111 = arith.addf %109, %110 : vector<16x128xf32>
    %112 = arith.subf %111, %101 : vector<16x128xf32>
    %113 = arith.truncf %112 : vector<16x128xf32> to vector<16x128xbf16>
    %114 = arith.index_cast %c2_i32 : i32 to index
    %c0_50 = arith.constant 0 : index
    %c0_51 = arith.constant 0 : index
    %115 = vector.load %arg6[%114, %c0_50, %c0_51] : memref<8x16x128xbf16, #tpu.memory_space<vmem>>, vector<1x16x128xbf16>
    %116 = vector.shape_cast %115 : vector<1x16x128xbf16> to vector<16x128xbf16>
    %117 = vector.shape_cast %113 : vector<16x128xbf16> to vector<1x16x128xbf16>
    tpu.vector_store %arg6[%114, %c0_50, %c0_51], %117 {strides = array<i32>} : memref<8x16x128xbf16, #tpu.memory_space<vmem>>, vector<1x16x128xbf16>,
    %c3_i32 = arith.constant 3 : i32
    %c16_i32_52 = arith.constant 16 : i32
    %118 = arith.muli %c3_i32, %c16_i32_52 : i32
    %119 = tpu.assume_multiple %118, 16 : i32
    %120 = arith.index_cast %119 : i32 to index
    %c0_53 = arith.constant 0 : index
    %121 = vector.load %arg9[%120, %c0_53] : memref<128x512xf32, #tpu.memory_space<vmem>>, vector<16x512xf32>
    %122 = arith.truncf %112 : vector<16x128xf32> to vector<16x128xbf16>
    %c0_54 = arith.constant 0 : index
    %c0_55 = arith.constant 0 : index
    %123 = vector.load %arg4[%c0_54, %c0_55] : memref<128x512xbf16, #tpu.memory_space<vmem>>, vector<128x512xbf16>
    %cst_56 = arith.constant dense<0.000000e+00> : vector<16x512xf32>
    %124 = tpu.matmul %122, %123, %cst_56 {dimension_numbers = #tpu.dot_dimension_numbers<[1], [0], [0], [1], [0, 0, 1, 1], [], []>} : vector<16x128xbf16>, vector<128x512xbf16>, vector<16x512xf32> -> vector<16x512xf32>
    %125 = arith.addf %121, %124 : vector<16x512xf32>
    %cst_57 = arith.constant 5.000000e-01 : f32
    %126 = vector.broadcast %cst_57 : f32 to vector<16x512xf32>
    %127 = arith.mulf %126, %125 : vector<16x512xf32>
    %128 = math.tanh %127 : vector<16x512xf32>
    %cst_58 = arith.constant 5.000000e-01 : f32
    %129 = vector.broadcast %cst_58 : f32 to vector<16x512xf32>
    %130 = arith.mulf %129, %128 : vector<16x512xf32>
    %cst_59 = arith.constant 5.000000e-01 : f32
    %131 = vector.broadcast %cst_59 : f32 to vector<16x512xf32>
    %132 = arith.addf %130, %131 : vector<16x512xf32>
    %133 = vector.extract_strided_slice %132 {offsets = [0, 0], sizes = [16, 128], strides = [1, 1]} : vector<16x512xf32> to vector<16x128xf32>
    %134 = vector.extract_strided_slice %132 {offsets = [0, 128], sizes = [16, 128], strides = [1, 1]} : vector<16x512xf32> to vector<16x128xf32>
    %135 = vector.extract_strided_slice %132 {offsets = [0, 256], sizes = [16, 128], strides = [1, 1]} : vector<16x512xf32> to vector<16x128xf32>
    %136 = vector.extract_strided_slice %132 {offsets = [0, 384], sizes = [16, 128], strides = [1, 1]} : vector<16x512xf32> to vector<16x128xf32>
    %137 = arith.mulf %134, %104 : vector<16x128xf32>
    %138 = arith.addf %137, %135 : vector<16x128xf32>
    %139 = arith.subf %138, %133 : vector<16x128xf32>
    %cst_60 = arith.constant 5.000000e-01 : f32
    %140 = vector.broadcast %cst_60 : f32 to vector<16x128xf32>
    %141 = arith.mulf %140, %139 : vector<16x128xf32>
    %142 = math.tanh %141 : vector<16x128xf32>
    %cst_61 = arith.constant 5.000000e-01 : f32
    %143 = vector.broadcast %cst_61 : f32 to vector<16x128xf32>
    %144 = arith.mulf %143, %142 : vector<16x128xf32>
    %cst_62 = arith.constant 5.000000e-01 : f32
    %145 = vector.broadcast %cst_62 : f32 to vector<16x128xf32>
    %146 = arith.addf %144, %145 : vector<16x128xf32>
    %147 = arith.subf %146, %136 : vector<16x128xf32>
    %148 = arith.truncf %147 : vector<16x128xf32> to vector<16x128xbf16>
    %149 = arith.index_cast %c3_i32 : i32 to index
    %c0_63 = arith.constant 0 : index
    %c0_64 = arith.constant 0 : index
    %150 = vector.load %arg6[%149, %c0_63, %c0_64] : memref<8x16x128xbf16, #tpu.memory_space<vmem>>, vector<1x16x128xbf16>
    %151 = vector.shape_cast %150 : vector<1x16x128xbf16> to vector<16x128xbf16>
    %152 = vector.shape_cast %148 : vector<16x128xbf16> to vector<1x16x128xbf16>
    tpu.vector_store %arg6[%149, %c0_63, %c0_64], %152 {strides = array<i32>} : memref<8x16x128xbf16, #tpu.memory_space<vmem>>, vector<1x16x128xbf16>,
    %c4_i32 = arith.constant 4 : i32
    %c16_i32_65 = arith.constant 16 : i32
    %153 = arith.muli %c4_i32, %c16_i32_65 : i32
    %154 = tpu.assume_multiple %153, 16 : i32
    %155 = arith.index_cast %154 : i32 to index
    %c0_66 = arith.constant 0 : index
    %156 = vector.load %arg9[%155, %c0_66] : memref<128x512xf32, #tpu.memory_space<vmem>>, vector<16x512xf32>
    %157 = arith.truncf %147 : vector<16x128xf32> to vector<16x128xbf16>
    %c0_67 = arith.constant 0 : index
    %c0_68 = arith.constant 0 : index
    %158 = vector.load %arg4[%c0_67, %c0_68] : memref<128x512xbf16, #tpu.memory_space<vmem>>, vector<128x512xbf16>
    %cst_69 = arith.constant dense<0.000000e+00> : vector<16x512xf32>
    %159 = tpu.matmul %157, %158, %cst_69 {dimension_numbers = #tpu.dot_dimension_numbers<[1], [0], [0], [1], [0, 0, 1, 1], [], []>} : vector<16x128xbf16>, vector<128x512xbf16>, vector<16x512xf32> -> vector<16x512xf32>
    %160 = arith.addf %156, %159 : vector<16x512xf32>
    %cst_70 = arith.constant 5.000000e-01 : f32
    %161 = vector.broadcast %cst_70 : f32 to vector<16x512xf32>
    %162 = arith.mulf %161, %160 : vector<16x512xf32>
    %163 = math.tanh %162 : vector<16x512xf32>
    %cst_71 = arith.constant 5.000000e-01 : f32
    %164 = vector.broadcast %cst_71 : f32 to vector<16x512xf32>
    %165 = arith.mulf %164, %163 : vector<16x512xf32>
    %cst_72 = arith.constant 5.000000e-01 : f32
    %166 = vector.broadcast %cst_72 : f32 to vector<16x512xf32>
    %167 = arith.addf %165, %166 : vector<16x512xf32>
    %168 = vector.extract_strided_slice %167 {offsets = [0, 0], sizes = [16, 128], strides = [1, 1]} : vector<16x512xf32> to vector<16x128xf32>
    %169 = vector.extract_strided_slice %167 {offsets = [0, 128], sizes = [16, 128], strides = [1, 1]} : vector<16x512xf32> to vector<16x128xf32>
    %170 = vector.extract_strided_slice %167 {offsets = [0, 256], sizes = [16, 128], strides = [1, 1]} : vector<16x512xf32> to vector<16x128xf32>
    %171 = vector.extract_strided_slice %167 {offsets = [0, 384], sizes = [16, 128], strides = [1, 1]} : vector<16x512xf32> to vector<16x128xf32>
    %172 = arith.mulf %169, %139 : vector<16x128xf32>
    %173 = arith.addf %172, %170 : vector<16x128xf32>
    %174 = arith.subf %173, %168 : vector<16x128xf32>
    %cst_73 = arith.constant 5.000000e-01 : f32
    %175 = vector.broadcast %cst_73 : f32 to vector<16x128xf32>
    %176 = arith.mulf %175, %174 : vector<16x128xf32>
    %177 = math.tanh %176 : vector<16x128xf32>
    %cst_74 = arith.constant 5.000000e-01 : f32
    %178 = vector.broadcast %cst_74 : f32 to vector<16x128xf32>
    %179 = arith.mulf %178, %177 : vector<16x128xf32>
    %cst_75 = arith.constant 5.000000e-01 : f32
    %180 = vector.broadcast %cst_75 : f32 to vector<16x128xf32>
    %181 = arith.addf %179, %180 : vector<16x128xf32>
    %182 = arith.subf %181, %171 : vector<16x128xf32>
    %183 = arith.truncf %182 : vector<16x128xf32> to vector<16x128xbf16>
    %184 = arith.index_cast %c4_i32 : i32 to index
    %c0_76 = arith.constant 0 : index
    %c0_77 = arith.constant 0 : index
    %185 = vector.load %arg6[%184, %c0_76, %c0_77] : memref<8x16x128xbf16, #tpu.memory_space<vmem>>, vector<1x16x128xbf16>
    %186 = vector.shape_cast %185 : vector<1x16x128xbf16> to vector<16x128xbf16>
    %187 = vector.shape_cast %183 : vector<16x128xbf16> to vector<1x16x128xbf16>
    tpu.vector_store %arg6[%184, %c0_76, %c0_77], %187 {strides = array<i32>} : memref<8x16x128xbf16, #tpu.memory_space<vmem>>, vector<1x16x128xbf16>,
    %c5_i32 = arith.constant 5 : i32
    %c16_i32_78 = arith.constant 16 : i32
    %188 = arith.muli %c5_i32, %c16_i32_78 : i32
    %189 = tpu.assume_multiple %188, 16 : i32
    %190 = arith.index_cast %189 : i32 to index
    %c0_79 = arith.constant 0 : index
    %191 = vector.load %arg9[%190, %c0_79] : memref<128x512xf32, #tpu.memory_space<vmem>>, vector<16x512xf32>
    %192 = arith.truncf %182 : vector<16x128xf32> to vector<16x128xbf16>
    %c0_80 = arith.constant 0 : index
    %c0_81 = arith.constant 0 : index
    %193 = vector.load %arg4[%c0_80, %c0_81] : memref<128x512xbf16, #tpu.memory_space<vmem>>, vector<128x512xbf16>
    %cst_82 = arith.constant dense<0.000000e+00> : vector<16x512xf32>
    %194 = tpu.matmul %192, %193, %cst_82 {dimension_numbers = #tpu.dot_dimension_numbers<[1], [0], [0], [1], [0, 0, 1, 1], [], []>} : vector<16x128xbf16>, vector<128x512xbf16>, vector<16x512xf32> -> vector<16x512xf32>
    %195 = arith.addf %191, %194 : vector<16x512xf32>
    %cst_83 = arith.constant 5.000000e-01 : f32
    %196 = vector.broadcast %cst_83 : f32 to vector<16x512xf32>
    %197 = arith.mulf %196, %195 : vector<16x512xf32>
    %198 = math.tanh %197 : vector<16x512xf32>
    %cst_84 = arith.constant 5.000000e-01 : f32
    %199 = vector.broadcast %cst_84 : f32 to vector<16x512xf32>
    %200 = arith.mulf %199, %198 : vector<16x512xf32>
    %cst_85 = arith.constant 5.000000e-01 : f32
    %201 = vector.broadcast %cst_85 : f32 to vector<16x512xf32>
    %202 = arith.addf %200, %201 : vector<16x512xf32>
    %203 = vector.extract_strided_slice %202 {offsets = [0, 0], sizes = [16, 128], strides = [1, 1]} : vector<16x512xf32> to vector<16x128xf32>
    %204 = vector.extract_strided_slice %202 {offsets = [0, 128], sizes = [16, 128], strides = [1, 1]} : vector<16x512xf32> to vector<16x128xf32>
    %205 = vector.extract_strided_slice %202 {offsets = [0, 256], sizes = [16, 128], strides = [1, 1]} : vector<16x512xf32> to vector<16x128xf32>
    %206 = vector.extract_strided_slice %202 {offsets = [0, 384], sizes = [16, 128], strides = [1, 1]} : vector<16x512xf32> to vector<16x128xf32>
    %207 = arith.mulf %204, %174 : vector<16x128xf32>
    %208 = arith.addf %207, %205 : vector<16x128xf32>
    %209 = arith.subf %208, %203 : vector<16x128xf32>
    %cst_86 = arith.constant 5.000000e-01 : f32
    %210 = vector.broadcast %cst_86 : f32 to vector<16x128xf32>
    %211 = arith.mulf %210, %209 : vector<16x128xf32>
    %212 = math.tanh %211 : vector<16x128xf32>
    %cst_87 = arith.constant 5.000000e-01 : f32
    %213 = vector.broadcast %cst_87 : f32 to vector<16x128xf32>
    %214 = arith.mulf %213, %212 : vector<16x128xf32>
    %cst_88 = arith.constant 5.000000e-01 : f32
    %215 = vector.broadcast %cst_88 : f32 to vector<16x128xf32>
    %216 = arith.addf %214, %215 : vector<16x128xf32>
    %217 = arith.subf %216, %206 : vector<16x128xf32>
    %218 = arith.truncf %217 : vector<16x128xf32> to vector<16x128xbf16>
    %219 = arith.index_cast %c5_i32 : i32 to index
    %c0_89 = arith.constant 0 : index
    %c0_90 = arith.constant 0 : index
    %220 = vector.load %arg6[%219, %c0_89, %c0_90] : memref<8x16x128xbf16, #tpu.memory_space<vmem>>, vector<1x16x128xbf16>
    %221 = vector.shape_cast %220 : vector<1x16x128xbf16> to vector<16x128xbf16>
    %222 = vector.shape_cast %218 : vector<16x128xbf16> to vector<1x16x128xbf16>
    tpu.vector_store %arg6[%219, %c0_89, %c0_90], %222 {strides = array<i32>} : memref<8x16x128xbf16, #tpu.memory_space<vmem>>, vector<1x16x128xbf16>,
    %c6_i32 = arith.constant 6 : i32
    %c16_i32_91 = arith.constant 16 : i32
    %223 = arith.muli %c6_i32, %c16_i32_91 : i32
    %224 = tpu.assume_multiple %223, 16 : i32
    %225 = arith.index_cast %224 : i32 to index
    %c0_92 = arith.constant 0 : index
    %226 = vector.load %arg9[%225, %c0_92] : memref<128x512xf32, #tpu.memory_space<vmem>>, vector<16x512xf32>
    %227 = arith.truncf %217 : vector<16x128xf32> to vector<16x128xbf16>
    %c0_93 = arith.constant 0 : index
    %c0_94 = arith.constant 0 : index
    %228 = vector.load %arg4[%c0_93, %c0_94] : memref<128x512xbf16, #tpu.memory_space<vmem>>, vector<128x512xbf16>
    %cst_95 = arith.constant dense<0.000000e+00> : vector<16x512xf32>
    %229 = tpu.matmul %227, %228, %cst_95 {dimension_numbers = #tpu.dot_dimension_numbers<[1], [0], [0], [1], [0, 0, 1, 1], [], []>} : vector<16x128xbf16>, vector<128x512xbf16>, vector<16x512xf32> -> vector<16x512xf32>
    %230 = arith.addf %226, %229 : vector<16x512xf32>
    %cst_96 = arith.constant 5.000000e-01 : f32
    %231 = vector.broadcast %cst_96 : f32 to vector<16x512xf32>
    %232 = arith.mulf %231, %230 : vector<16x512xf32>
    %233 = math.tanh %232 : vector<16x512xf32>
    %cst_97 = arith.constant 5.000000e-01 : f32
    %234 = vector.broadcast %cst_97 : f32 to vector<16x512xf32>
    %235 = arith.mulf %234, %233 : vector<16x512xf32>
    %cst_98 = arith.constant 5.000000e-01 : f32
    %236 = vector.broadcast %cst_98 : f32 to vector<16x512xf32>
    %237 = arith.addf %235, %236 : vector<16x512xf32>
    %238 = vector.extract_strided_slice %237 {offsets = [0, 0], sizes = [16, 128], strides = [1, 1]} : vector<16x512xf32> to vector<16x128xf32>
    %239 = vector.extract_strided_slice %237 {offsets = [0, 128], sizes = [16, 128], strides = [1, 1]} : vector<16x512xf32> to vector<16x128xf32>
    %240 = vector.extract_strided_slice %237 {offsets = [0, 256], sizes = [16, 128], strides = [1, 1]} : vector<16x512xf32> to vector<16x128xf32>
    %241 = vector.extract_strided_slice %237 {offsets = [0, 384], sizes = [16, 128], strides = [1, 1]} : vector<16x512xf32> to vector<16x128xf32>
    %242 = arith.mulf %239, %209 : vector<16x128xf32>
    %243 = arith.addf %242, %240 : vector<16x128xf32>
    %244 = arith.subf %243, %238 : vector<16x128xf32>
    %cst_99 = arith.constant 5.000000e-01 : f32
    %245 = vector.broadcast %cst_99 : f32 to vector<16x128xf32>
    %246 = arith.mulf %245, %244 : vector<16x128xf32>
    %247 = math.tanh %246 : vector<16x128xf32>
    %cst_100 = arith.constant 5.000000e-01 : f32
    %248 = vector.broadcast %cst_100 : f32 to vector<16x128xf32>
    %249 = arith.mulf %248, %247 : vector<16x128xf32>
    %cst_101 = arith.constant 5.000000e-01 : f32
    %250 = vector.broadcast %cst_101 : f32 to vector<16x128xf32>
    %251 = arith.addf %249, %250 : vector<16x128xf32>
    %252 = arith.subf %251, %241 : vector<16x128xf32>
    %253 = arith.truncf %252 : vector<16x128xf32> to vector<16x128xbf16>
    %254 = arith.index_cast %c6_i32 : i32 to index
    %c0_102 = arith.constant 0 : index
    %c0_103 = arith.constant 0 : index
    %255 = vector.load %arg6[%254, %c0_102, %c0_103] : memref<8x16x128xbf16, #tpu.memory_space<vmem>>, vector<1x16x128xbf16>
    %256 = vector.shape_cast %255 : vector<1x16x128xbf16> to vector<16x128xbf16>
    %257 = vector.shape_cast %253 : vector<16x128xbf16> to vector<1x16x128xbf16>
    tpu.vector_store %arg6[%254, %c0_102, %c0_103], %257 {strides = array<i32>} : memref<8x16x128xbf16, #tpu.memory_space<vmem>>, vector<1x16x128xbf16>,
    %c7_i32 = arith.constant 7 : i32
    %c16_i32_104 = arith.constant 16 : i32
    %258 = arith.muli %c7_i32, %c16_i32_104 : i32
    %259 = tpu.assume_multiple %258, 16 : i32
    %260 = arith.index_cast %259 : i32 to index
    %c0_105 = arith.constant 0 : index
    %261 = vector.load %arg9[%260, %c0_105] : memref<128x512xf32, #tpu.memory_space<vmem>>, vector<16x512xf32>
    %262 = arith.truncf %252 : vector<16x128xf32> to vector<16x128xbf16>
    %c0_106 = arith.constant 0 : index
    %c0_107 = arith.constant 0 : index
    %263 = vector.load %arg4[%c0_106, %c0_107] : memref<128x512xbf16, #tpu.memory_space<vmem>>, vector<128x512xbf16>
    %cst_108 = arith.constant dense<0.000000e+00> : vector<16x512xf32>
    %264 = tpu.matmul %262, %263, %cst_108 {dimension_numbers = #tpu.dot_dimension_numbers<[1], [0], [0], [1], [0, 0, 1, 1], [], []>} : vector<16x128xbf16>, vector<128x512xbf16>, vector<16x512xf32> -> vector<16x512xf32>
    %265 = arith.addf %261, %264 : vector<16x512xf32>
    %cst_109 = arith.constant 5.000000e-01 : f32
    %266 = vector.broadcast %cst_109 : f32 to vector<16x512xf32>
    %267 = arith.mulf %266, %265 : vector<16x512xf32>
    %268 = math.tanh %267 : vector<16x512xf32>
    %cst_110 = arith.constant 5.000000e-01 : f32
    %269 = vector.broadcast %cst_110 : f32 to vector<16x512xf32>
    %270 = arith.mulf %269, %268 : vector<16x512xf32>
    %cst_111 = arith.constant 5.000000e-01 : f32
    %271 = vector.broadcast %cst_111 : f32 to vector<16x512xf32>
    %272 = arith.addf %270, %271 : vector<16x512xf32>
    %273 = vector.extract_strided_slice %272 {offsets = [0, 0], sizes = [16, 128], strides = [1, 1]} : vector<16x512xf32> to vector<16x128xf32>
    %274 = vector.extract_strided_slice %272 {offsets = [0, 128], sizes = [16, 128], strides = [1, 1]} : vector<16x512xf32> to vector<16x128xf32>
    %275 = vector.extract_strided_slice %272 {offsets = [0, 256], sizes = [16, 128], strides = [1, 1]} : vector<16x512xf32> to vector<16x128xf32>
    %276 = vector.extract_strided_slice %272 {offsets = [0, 384], sizes = [16, 128], strides = [1, 1]} : vector<16x512xf32> to vector<16x128xf32>
    %277 = arith.mulf %274, %244 : vector<16x128xf32>
    %278 = arith.addf %277, %275 : vector<16x128xf32>
    %279 = arith.subf %278, %273 : vector<16x128xf32>
    %cst_112 = arith.constant 5.000000e-01 : f32
    %280 = vector.broadcast %cst_112 : f32 to vector<16x128xf32>
    %281 = arith.mulf %280, %279 : vector<16x128xf32>
    %282 = math.tanh %281 : vector<16x128xf32>
    %cst_113 = arith.constant 5.000000e-01 : f32
    %283 = vector.broadcast %cst_113 : f32 to vector<16x128xf32>
    %284 = arith.mulf %283, %282 : vector<16x128xf32>
    %cst_114 = arith.constant 5.000000e-01 : f32
    %285 = vector.broadcast %cst_114 : f32 to vector<16x128xf32>
    %286 = arith.addf %284, %285 : vector<16x128xf32>
    %287 = arith.subf %286, %276 : vector<16x128xf32>
    %288 = arith.truncf %287 : vector<16x128xf32> to vector<16x128xbf16>
    %289 = arith.index_cast %c7_i32 : i32 to index
    %c0_115 = arith.constant 0 : index
    %c0_116 = arith.constant 0 : index
    %290 = vector.load %arg6[%289, %c0_115, %c0_116] : memref<8x16x128xbf16, #tpu.memory_space<vmem>>, vector<1x16x128xbf16>
    %291 = vector.shape_cast %290 : vector<1x16x128xbf16> to vector<16x128xbf16>
    %292 = vector.shape_cast %288 : vector<16x128xbf16> to vector<1x16x128xbf16>
    tpu.vector_store %arg6[%289, %c0_115, %c0_116], %292 {strides = array<i32>} : memref<8x16x128xbf16, #tpu.memory_space<vmem>>, vector<1x16x128xbf16>,
    %c8_i32 = arith.constant 8 : i32
    %c0_117 = arith.constant 0 : index
    %c0_118 = arith.constant 0 : index
    %293 = vector.load %arg10[%c0_117, %c0_118] : memref<16x128xf32, #tpu.memory_space<vmem>>, vector<16x128xf32>
    tpu.vector_store %arg10[%c0_117, %c0_118], %287 {strides = array<i32>} : memref<16x128xf32, #tpu.memory_space<vmem>>, vector<16x128xf32>,
    %c0_119 = arith.constant 0 : index
    %c0_120 = arith.constant 0 : index
    %294 = vector.load %arg11[%c0_119, %c0_120] : memref<16x128xf32, #tpu.memory_space<vmem>>, vector<16x128xf32>
    tpu.vector_store %arg11[%c0_119, %c0_120], %279 {strides = array<i32>} : memref<16x128xf32, #tpu.memory_space<vmem>>, vector<16x128xf32>,
    %c0_i32_121 = arith.constant 0 : i32
    %295 = arith.cmpi eq, %arg1, %c0_i32_121 : i32
    %296 = arith.extui %295 : i1 to i32
    %c0_i32_122 = arith.constant 0 : i32
    %297 = arith.cmpi ne, %296, %c0_i32_122 : i32
    scf.if %297 {
      %c0_123 = arith.constant 0 : index
      %c0_124 = arith.constant 0 : index
      %298 = vector.load %arg10[%c0_123, %c0_124] : memref<16x128xf32, #tpu.memory_space<vmem>>, vector<16x128xf32>
      %c0_125 = arith.constant 0 : index
      %c0_126 = arith.constant 0 : index
      %299 = vector.load %arg7[%c0_125, %c0_126] : memref<16x128xf32, #tpu.memory_space<vmem>>, vector<16x128xf32>
      tpu.vector_store %arg7[%c0_125, %c0_126], %298 {strides = array<i32>} : memref<16x128xf32, #tpu.memory_space<vmem>>, vector<16x128xf32>,
      %c0_127 = arith.constant 0 : index
      %c0_128 = arith.constant 0 : index
      %300 = vector.load %arg11[%c0_127, %c0_128] : memref<16x128xf32, #tpu.memory_space<vmem>>, vector<16x128xf32>
      %c0_129 = arith.constant 0 : index
      %c0_130 = arith.constant 0 : index
      %301 = vector.load %arg8[%c0_129, %c0_130] : memref<16x128xf32, #tpu.memory_space<vmem>>, vector<16x128xf32>
      tpu.vector_store %arg8[%c0_129, %c0_130], %300 {strides = array<i32>} : memref<16x128xf32, #tpu.memory_space<vmem>>, vector<16x128xf32>,
    } else {
    }
    return
  }
  func.func @transform_0(%arg0: i32, %arg1: i32) -> (i32, i32, i32) {
    %c0_i32 = arith.constant 0 : i32
    %c0_i32_0 = arith.constant 0 : i32
    return %arg1, %arg0, %c0_i32 : i32, i32, i32
  }
  func.func @transform_1(%arg0: i32, %arg1: i32) -> (i32, i32) {
    %c0_i32 = arith.constant 0 : i32
    %c0_i32_0 = arith.constant 0 : i32
    %c0_i32_1 = arith.constant 0 : i32
    return %c0_i32, %c0_i32_0 : i32, i32
  }
  func.func @transform_2(%arg0: i32, %arg1: i32) -> (i32, i32) {
    %c0_i32 = arith.constant 0 : i32
    %c0_i32_0 = arith.constant 0 : i32
    %c0_i32_1 = arith.constant 0 : i32
    return %c0_i32, %c0_i32_0 : i32, i32
  }
  func.func @transform_3(%arg0: i32, %arg1: i32) -> (i32, i32) {
    %c0_i32 = arith.constant 0 : i32
    %c0_i32_0 = arith.constant 0 : i32
    %c0_i32_1 = arith.constant 0 : i32
    return %c0_i32, %c0_i32_0 : i32, i32
  }
  func.func @transform_4(%arg0: i32, %arg1: i32) -> (i32, i32, i32) {
    %c0_i32 = arith.constant 0 : i32
    %c0_i32_0 = arith.constant 0 : i32
    return %arg1, %arg0, %c0_i32 : i32, i32, i32
  }
  func.func @transform_5(%arg0: i32, %arg1: i32) -> (i32, i32) {
    %c0_i32 = arith.constant 0 : i32
    %c0_i32_0 = arith.constant 0 : i32
    return %arg0, %c0_i32 : i32, i32
  }
  func.func @transform_6(%arg0: i32, %arg1: i32) -> (i32, i32) {
    %c0_i32 = arith.constant 0 : i32
    %c0_i32_0 = arith.constant 0 : i32
    return %arg0, %c0_i32 : i32, i32
  }
}

module attributes {stable_mosaic.version = 11 : i64} {
  func.func @kernel(%arg0: i32, %arg1: i32, %arg2: memref<8x16x128xbf16, #tpu.memory_space<vmem>>, %arg3: memref<128x512xbf16, #tpu.memory_space<vmem>>, %arg4: memref<128x512xbf16, #tpu.memory_space<vmem>>, %arg5: memref<1x512xf32, #tpu.memory_space<vmem>>, %arg6: memref<8x16x128xbf16, #tpu.memory_space<vmem>>, %arg7: memref<16x128xf32, #tpu.memory_space<vmem>>, %arg8: memref<16x128xf32, #tpu.memory_space<vmem>>, %arg9: memref<128x512xf32, #tpu.memory_space<vmem>>, %arg10: memref<16x128xf32, #tpu.memory_space<vmem>>, %arg11: memref<16x128xf32, #tpu.memory_space<vmem>>) attributes {dimension_semantics = [#tpu.dimension_semantics<parallel>, #tpu.dimension_semantics<arbitrary>], iteration_bounds = array<i64: 1, 1>, scalar_prefetch = 0 : i64, scratch_operands = 3 : i64, tpu.core_type = #tpu.core_type<tc>, window_params = [{transform_indices = @transform_0, window_bounds = array<i64: 8, 16, 128>}, {pipeline_mode = #tpu.pipeline_mode<synchronous>, transform_indices = @transform_1, window_bounds = array<i64: 128, 512>}, {pipeline_mode = #tpu.pipeline_mode<synchronous>, transform_indices = @transform_2, window_bounds = array<i64: 128, 512>}, {pipeline_mode = #tpu.pipeline_mode<synchronous>, transform_indices = @transform_3, window_bounds = array<i64: 1, 512>}, {transform_indices = @transform_4, window_bounds = array<i64: 8, 16, 128>}, {transform_indices = @transform_5, window_bounds = array<i64: 16, 128>}, {transform_indices = @transform_6, window_bounds = array<i64: 16, 128>}]} {
    %c0_i32 = arith.constant 0 : i32
    %0 = arith.cmpi eq, %arg1, %c0_i32 : i32
    %1 = arith.extui %0 : i1 to i32
    %c0_i32_0 = arith.constant 0 : i32
    %2 = arith.cmpi ne, %1, %c0_i32_0 : i32
    scf.if %2 {
      %cst_123 = arith.constant 0.000000e+00 : f32
      %298 = vector.broadcast %cst_123 : f32 to vector<16x128xf32>
      %c0_124 = arith.constant 0 : index
      %c0_125 = arith.constant 0 : index
      %299 = vector.load %arg10[%c0_124, %c0_125] : memref<16x128xf32, #tpu.memory_space<vmem>>, vector<16x128xf32>
      tpu.vector_store %arg10[%c0_124, %c0_125], %298 {strides = array<i32>} : memref<16x128xf32, #tpu.memory_space<vmem>>, vector<16x128xf32>,
      %cst_126 = arith.constant 0.000000e+00 : f32
      %300 = vector.broadcast %cst_126 : f32 to vector<16x128xf32>
      %c0_127 = arith.constant 0 : index
      %c0_128 = arith.constant 0 : index
      %301 = vector.load %arg11[%c0_127, %c0_128] : memref<16x128xf32, #tpu.memory_space<vmem>>, vector<16x128xf32>
      tpu.vector_store %arg11[%c0_127, %c0_128], %300 {strides = array<i32>} : memref<16x128xf32, #tpu.memory_space<vmem>>, vector<16x128xf32>,
    } else {
    }
    %c0 = arith.constant 0 : index
    %c0_1 = arith.constant 0 : index
    %c0_2 = arith.constant 0 : index
    %3 = vector.load %arg2[%c0, %c0_1, %c0_2] : memref<8x16x128xbf16, #tpu.memory_space<vmem>>, vector<8x16x128xbf16>
    %4 = vector.shape_cast %3 : vector<8x16x128xbf16> to vector<128x128xbf16>
    %c0_3 = arith.constant 0 : index
    %c0_4 = arith.constant 0 : index
    %5 = vector.load %arg3[%c0_3, %c0_4] : memref<128x512xbf16, #tpu.memory_space<vmem>>, vector<128x512xbf16>
    %cst = arith.constant dense<0.000000e+00> : vector<128x512xf32>
    %6 = tpu.matmul %4, %5, %cst {dimension_numbers = #tpu.dot_dimension_numbers<[1], [0], [0], [1], [0, 0, 1, 1], [], []>} : vector<128x128xbf16>, vector<128x512xbf16>, vector<128x512xf32> -> vector<128x512xf32>
    %c0_5 = arith.constant 0 : index
    %c0_6 = arith.constant 0 : index
    %7 = vector.load %arg5[%c0_5, %c0_6] : memref<1x512xf32, #tpu.memory_space<vmem>>, vector<1x512xf32>
    %8 = vector.broadcast %7 : vector<1x512xf32> to vector<128x512xf32>
    %9 = arith.addf %6, %8 : vector<128x512xf32>
    %c0_7 = arith.constant 0 : index
    %c0_8 = arith.constant 0 : index
    %10 = vector.load %arg9[%c0_7, %c0_8] : memref<128x512xf32, #tpu.memory_space<vmem>>, vector<128x512xf32>
    tpu.vector_store %arg9[%c0_7, %c0_8], %9 {strides = array<i32>} : memref<128x512xf32, #tpu.memory_space<vmem>>, vector<128x512xf32>,
    %c0_9 = arith.constant 0 : index
    %c0_10 = arith.constant 0 : index
    %11 = vector.load %arg10[%c0_9, %c0_10] : memref<16x128xf32, #tpu.memory_space<vmem>>, vector<16x128xf32>
    %c0_11 = arith.constant 0 : index
    %c0_12 = arith.constant 0 : index
    %12 = vector.load %arg11[%c0_11, %c0_12] : memref<16x128xf32, #tpu.memory_space<vmem>>, vector<16x128xf32>
    %c0_i32_13 = arith.constant 0 : i32
    %c16_i32 = arith.constant 16 : i32
    %13 = arith.muli %c0_i32_13, %c16_i32 : i32
    %14 = tpu.assume_multiple %13, 16 : i32
    %15 = arith.index_cast %14 : i32 to index
    %c0_14 = arith.constant 0 : index
    %16 = vector.load %arg9[%15, %c0_14] : memref<128x512xf32, #tpu.memory_space<vmem>>, vector<16x512xf32>
    %17 = arith.truncf %11 : vector<16x128xf32> to vector<16x128xbf16>
    %c0_15 = arith.constant 0 : index
    %c0_16 = arith.constant 0 : index
    %18 = vector.load %arg4[%c0_15, %c0_16] : memref<128x512xbf16, #tpu.memory_space<vmem>>, vector<128x512xbf16>
    %cst_17 = arith.constant dense<0.000000e+00> : vector<16x512xf32>
    %19 = tpu.matmul %17, %18, %cst_17 {dimension_numbers = #tpu.dot_dimension_numbers<[1], [0], [0], [1], [0, 0, 1, 1], [], []>} : vector<16x128xbf16>, vector<128x512xbf16>, vector<16x512xf32> -> vector<16x512xf32>
    %20 = arith.addf %16, %19 : vector<16x512xf32>
    %cst_18 = arith.constant 5.000000e-01 : f32
    %21 = vector.broadcast %cst_18 : f32 to vector<16x512xf32>
    %22 = arith.mulf %21, %20 : vector<16x512xf32>
    %23 = math.tanh %22 : vector<16x512xf32>
    %cst_19 = arith.constant 5.000000e-01 : f32
    %24 = vector.broadcast %cst_19 : f32 to vector<16x512xf32>
    %25 = arith.mulf %24, %23 : vector<16x512xf32>
    %cst_20 = arith.constant 5.000000e-01 : f32
    %26 = vector.broadcast %cst_20 : f32 to vector<16x512xf32>
    %27 = arith.addf %25, %26 : vector<16x512xf32>
    %28 = vector.extract_strided_slice %27 {offsets = [0, 0], sizes = [16, 128], strides = [1, 1]} : vector<16x512xf32> to vector<16x128xf32>
    %29 = vector.extract_strided_slice %27 {offsets = [0, 128], sizes = [16, 128], strides = [1, 1]} : vector<16x512xf32> to vector<16x128xf32>
    %30 = vector.extract_strided_slice %27 {offsets = [0, 256], sizes = [16, 128], strides = [1, 1]} : vector<16x512xf32> to vector<16x128xf32>
    %31 = vector.extract_strided_slice %27 {offsets = [0, 384], sizes = [16, 128], strides = [1, 1]} : vector<16x512xf32> to vector<16x128xf32>
    %32 = arith.mulf %29, %12 : vector<16x128xf32>
    %33 = arith.addf %32, %30 : vector<16x128xf32>
    %34 = arith.subf %33, %28 : vector<16x128xf32>
    %cst_21 = arith.constant 5.000000e-01 : f32
    %35 = vector.broadcast %cst_21 : f32 to vector<16x128xf32>
    %36 = arith.mulf %35, %34 : vector<16x128xf32>
    %37 = math.tanh %36 : vector<16x128xf32>
    %cst_22 = arith.constant 5.000000e-01 : f32
    %38 = vector.broadcast %cst_22 : f32 to vector<16x128xf32>
    %39 = arith.mulf %38, %37 : vector<16x128xf32>
    %cst_23 = arith.constant 5.000000e-01 : f32
    %40 = vector.broadcast %cst_23 : f32 to vector<16x128xf32>
    %41 = arith.addf %39, %40 : vector<16x128xf32>
    %42 = arith.subf %41, %31 : vector<16x128xf32>
    %43 = arith.truncf %42 : vector<16x128xf32> to vector<16x128xbf16>
    %44 = arith.index_cast %c0_i32_13 : i32 to index
    %c0_24 = arith.constant 0 : index
    %c0_25 = arith.constant 0 : index
    %45 = vector.load %arg6[%44, %c0_24, %c0_25] : memref<8x16x128xbf16, #tpu.memory_space<vmem>>, vector<1x16x128xbf16>
    %46 = vector.shape_cast %45 : vector<1x16x128xbf16> to vector<16x128xbf16>
    %47 = vector.shape_cast %43 : vector<16x128xbf16> to vector<1x16x128xbf16>
    tpu.vector_store %arg6[%44, %c0_24, %c0_25], %47 {strides = array<i32>} : memref<8x16x128xbf16, #tpu.memory_space<vmem>>, vector<1x16x128xbf16>,
    %c1_i32 = arith.constant 1 : i32
    %c16_i32_26 = arith.constant 16 : i32
    %48 = arith.muli %c1_i32, %c16_i32_26 : i32
    %49 = tpu.assume_multiple %48, 16 : i32
    %50 = arith.index_cast %49 : i32 to index
    %c0_27 = arith.constant 0 : index
    %51 = vector.load %arg9[%50, %c0_27] : memref<128x512xf32, #tpu.memory_space<vmem>>, vector<16x512xf32>
    %52 = arith.truncf %42 : vector<16x128xf32> to vector<16x128xbf16>
    %c0_28 = arith.constant 0 : index
    %c0_29 = arith.constant 0 : index
    %53 = vector.load %arg4[%c0_28, %c0_29] : memref<128x512xbf16, #tpu.memory_space<vmem>>, vector<128x512xbf16>
    %cst_30 = arith.constant dense<0.000000e+00> : vector<16x512xf32>
    %54 = tpu.matmul %52, %53, %cst_30 {dimension_numbers = #tpu.dot_dimension_numbers<[1], [0], [0], [1], [0, 0, 1, 1], [], []>} : vector<16x128xbf16>, vector<128x512xbf16>, vector<16x512xf32> -> vector<16x512xf32>
    %55 = arith.addf %51, %54 : vector<16x512xf32>
    %cst_31 = arith.constant 5.000000e-01 : f32
    %56 = vector.broadcast %cst_31 : f32 to vector<16x512xf32>
    %57 = arith.mulf %56, %55 : vector<16x512xf32>
    %58 = math.tanh %57 : vector<16x512xf32>
    %cst_32 = arith.constant 5.000000e-01 : f32
    %59 = vector.broadcast %cst_32 : f32 to vector<16x512xf32>
    %60 = arith.mulf %59, %58 : vector<16x512xf32>
    %cst_33 = arith.constant 5.000000e-01 : f32
    %61 = vector.broadcast %cst_33 : f32 to vector<16x512xf32>
    %62 = arith.addf %60, %61 : vector<16x512xf32>
    %63 = vector.extract_strided_slice %62 {offsets = [0, 0], sizes = [16, 128], strides = [1, 1]} : vector<16x512xf32> to vector<16x128xf32>
    %64 = vector.extract_strided_slice %62 {offsets = [0, 128], sizes = [16, 128], strides = [1, 1]} : vector<16x512xf32> to vector<16x128xf32>
    %65 = vector.extract_strided_slice %62 {offsets = [0, 256], sizes = [16, 128], strides = [1, 1]} : vector<16x512xf32> to vector<16x128xf32>
    %66 = vector.extract_strided_slice %62 {offsets = [0, 384], sizes = [16, 128], strides = [1, 1]} : vector<16x512xf32> to vector<16x128xf32>
    %67 = arith.mulf %64, %34 : vector<16x128xf32>
    %68 = arith.addf %67, %65 : vector<16x128xf32>
    %69 = arith.subf %68, %63 : vector<16x128xf32>
    %cst_34 = arith.constant 5.000000e-01 : f32
    %70 = vector.broadcast %cst_34 : f32 to vector<16x128xf32>
    %71 = arith.mulf %70, %69 : vector<16x128xf32>
    %72 = math.tanh %71 : vector<16x128xf32>
    %cst_35 = arith.constant 5.000000e-01 : f32
    %73 = vector.broadcast %cst_35 : f32 to vector<16x128xf32>
    %74 = arith.mulf %73, %72 : vector<16x128xf32>
    %cst_36 = arith.constant 5.000000e-01 : f32
    %75 = vector.broadcast %cst_36 : f32 to vector<16x128xf32>
    %76 = arith.addf %74, %75 : vector<16x128xf32>
    %77 = arith.subf %76, %66 : vector<16x128xf32>
    %78 = arith.truncf %77 : vector<16x128xf32> to vector<16x128xbf16>
    %79 = arith.index_cast %c1_i32 : i32 to index
    %c0_37 = arith.constant 0 : index
    %c0_38 = arith.constant 0 : index
    %80 = vector.load %arg6[%79, %c0_37, %c0_38] : memref<8x16x128xbf16, #tpu.memory_space<vmem>>, vector<1x16x128xbf16>
    %81 = vector.shape_cast %80 : vector<1x16x128xbf16> to vector<16x128xbf16>
    %82 = vector.shape_cast %78 : vector<16x128xbf16> to vector<1x16x128xbf16>
    tpu.vector_store %arg6[%79, %c0_37, %c0_38], %82 {strides = array<i32>} : memref<8x16x128xbf16, #tpu.memory_space<vmem>>, vector<1x16x128xbf16>,
    %c2_i32 = arith.constant 2 : i32
    %c16_i32_39 = arith.constant 16 : i32
    %83 = arith.muli %c2_i32, %c16_i32_39 : i32
    %84 = tpu.assume_multiple %83, 16 : i32
    %85 = arith.index_cast %84 : i32 to index
    %c0_40 = arith.constant 0 : index
    %86 = vector.load %arg9[%85, %c0_40] : memref<128x512xf32, #tpu.memory_space<vmem>>, vector<16x512xf32>
    %87 = arith.truncf %77 : vector<16x128xf32> to vector<16x128xbf16>
    %c0_41 = arith.constant 0 : index
    %c0_42 = arith.constant 0 : index
    %88 = vector.load %arg4[%c0_41, %c0_42] : memref<128x512xbf16, #tpu.memory_space<vmem>>, vector<128x512xbf16>
    %cst_43 = arith.constant dense<0.000000e+00> : vector<16x512xf32>
    %89 = tpu.matmul %87, %88, %cst_43 {dimension_numbers = #tpu.dot_dimension_numbers<[1], [0], [0], [1], [0, 0, 1, 1], [], []>} : vector<16x128xbf16>, vector<128x512xbf16>, vector<16x512xf32> -> vector<16x512xf32>
    %90 = arith.addf %86, %89 : vector<16x512xf32>
    %cst_44 = arith.constant 5.000000e-01 : f32
    %91 = vector.broadcast %cst_44 : f32 to vector<16x512xf32>
    %92 = arith.mulf %91, %90 : vector<16x512xf32>
    %93 = math.tanh %92 : vector<16x512xf32>
    %cst_45 = arith.constant 5.000000e-01 : f32
    %94 = vector.broadcast %cst_45 : f32 to vector<16x512xf32>
    %95 = arith.mulf %94, %93 : vector<16x512xf32>
    %cst_46 = arith.constant 5.000000e-01 : f32
    %96 = vector.broadcast %cst_46 : f32 to vector<16x512xf32>
    %97 = arith.addf %95, %96 : vector<16x512xf32>
    %98 = vector.extract_strided_slice %97 {offsets = [0, 0], sizes = [16, 128], strides = [1, 1]} : vector<16x512xf32> to vector<16x128xf32>
    %99 = vector.extract_strided_slice %97 {offsets = [0, 128], sizes = [16, 128], strides = [1, 1]} : vector<16x512xf32> to vector<16x128xf32>
    %100 = vector.extract_strided_slice %97 {offsets = [0, 256], sizes = [16, 128], strides = [1, 1]} : vector<16x512xf32> to vector<16x128xf32>
    %101 = vector.extract_strided_slice %97 {offsets = [0, 384], sizes = [16, 128], strides = [1, 1]} : vector<16x512xf32> to vector<16x128xf32>
    %102 = arith.mulf %99, %69 : vector<16x128xf32>
    %103 = arith.addf %102, %100 : vector<16x128xf32>
    %104 = arith.subf %103, %98 : vector<16x128xf32>
    %cst_47 = arith.constant 5.000000e-01 : f32
    %105 = vector.broadcast %cst_47 : f32 to vector<16x128xf32>
    %106 = arith.mulf %105, %104 : vector<16x128xf32>
    %107 = math.tanh %106 : vector<16x128xf32>
    %cst_48 = arith.constant 5.000000e-01 : f32
    %108 = vector.broadcast %cst_48 : f32 to vector<16x128xf32>
    %109 = arith.mulf %108, %107 : vector<16x128xf32>
    %cst_49 = arith.constant 5.000000e-01 : f32
    %110 = vector.broadcast %cst_49 : f32 to vector<16x128xf32>
    %111 = arith.addf %109, %110 : vector<16x128xf32>
    %112 = arith.subf %111, %101 : vector<16x128xf32>
    %113 = arith.truncf %112 : vector<16x128xf32> to vector<16x128xbf16>
    %114 = arith.index_cast %c2_i32 : i32 to index
    %c0_50 = arith.constant 0 : index
    %c0_51 = arith.constant 0 : index
    %115 = vector.load %arg6[%114, %c0_50, %c0_51] : memref<8x16x128xbf16, #tpu.memory_space<vmem>>, vector<1x16x128xbf16>
    %116 = vector.shape_cast %115 : vector<1x16x128xbf16> to vector<16x128xbf16>
    %117 = vector.shape_cast %113 : vector<16x128xbf16> to vector<1x16x128xbf16>
    tpu.vector_store %arg6[%114, %c0_50, %c0_51], %117 {strides = array<i32>} : memref<8x16x128xbf16, #tpu.memory_space<vmem>>, vector<1x16x128xbf16>,
    %c3_i32 = arith.constant 3 : i32
    %c16_i32_52 = arith.constant 16 : i32
    %118 = arith.muli %c3_i32, %c16_i32_52 : i32
    %119 = tpu.assume_multiple %118, 16 : i32
    %120 = arith.index_cast %119 : i32 to index
    %c0_53 = arith.constant 0 : index
    %121 = vector.load %arg9[%120, %c0_53] : memref<128x512xf32, #tpu.memory_space<vmem>>, vector<16x512xf32>
    %122 = arith.truncf %112 : vector<16x128xf32> to vector<16x128xbf16>
    %c0_54 = arith.constant 0 : index
    %c0_55 = arith.constant 0 : index
    %123 = vector.load %arg4[%c0_54, %c0_55] : memref<128x512xbf16, #tpu.memory_space<vmem>>, vector<128x512xbf16>
    %cst_56 = arith.constant dense<0.000000e+00> : vector<16x512xf32>
    %124 = tpu.matmul %122, %123, %cst_56 {dimension_numbers = #tpu.dot_dimension_numbers<[1], [0], [0], [1], [0, 0, 1, 1], [], []>} : vector<16x128xbf16>, vector<128x512xbf16>, vector<16x512xf32> -> vector<16x512xf32>
    %125 = arith.addf %121, %124 : vector<16x512xf32>
    %cst_57 = arith.constant 5.000000e-01 : f32
    %126 = vector.broadcast %cst_57 : f32 to vector<16x512xf32>
    %127 = arith.mulf %126, %125 : vector<16x512xf32>
    %128 = math.tanh %127 : vector<16x512xf32>
    %cst_58 = arith.constant 5.000000e-01 : f32
    %129 = vector.broadcast %cst_58 : f32 to vector<16x512xf32>
    %130 = arith.mulf %129, %128 : vector<16x512xf32>
    %cst_59 = arith.constant 5.000000e-01 : f32
    %131 = vector.broadcast %cst_59 : f32 to vector<16x512xf32>
    %132 = arith.addf %130, %131 : vector<16x512xf32>
    %133 = vector.extract_strided_slice %132 {offsets = [0, 0], sizes = [16, 128], strides = [1, 1]} : vector<16x512xf32> to vector<16x128xf32>
    %134 = vector.extract_strided_slice %132 {offsets = [0, 128], sizes = [16, 128], strides = [1, 1]} : vector<16x512xf32> to vector<16x128xf32>
    %135 = vector.extract_strided_slice %132 {offsets = [0, 256], sizes = [16, 128], strides = [1, 1]} : vector<16x512xf32> to vector<16x128xf32>
    %136 = vector.extract_strided_slice %132 {offsets = [0, 384], sizes = [16, 128], strides = [1, 1]} : vector<16x512xf32> to vector<16x128xf32>
    %137 = arith.mulf %134, %104 : vector<16x128xf32>
    %138 = arith.addf %137, %135 : vector<16x128xf32>
    %139 = arith.subf %138, %133 : vector<16x128xf32>
    %cst_60 = arith.constant 5.000000e-01 : f32
    %140 = vector.broadcast %cst_60 : f32 to vector<16x128xf32>
    %141 = arith.mulf %140, %139 : vector<16x128xf32>
    %142 = math.tanh %141 : vector<16x128xf32>
    %cst_61 = arith.constant 5.000000e-01 : f32
    %143 = vector.broadcast %cst_61 : f32 to vector<16x128xf32>
    %144 = arith.mulf %143, %142 : vector<16x128xf32>
    %cst_62 = arith.constant 5.000000e-01 : f32
    %145 = vector.broadcast %cst_62 : f32 to vector<16x128xf32>
    %146 = arith.addf %144, %145 : vector<16x128xf32>
    %147 = arith.subf %146, %136 : vector<16x128xf32>
    %148 = arith.truncf %147 : vector<16x128xf32> to vector<16x128xbf16>
    %149 = arith.index_cast %c3_i32 : i32 to index
    %c0_63 = arith.constant 0 : index
    %c0_64 = arith.constant 0 : index
    %150 = vector.load %arg6[%149, %c0_63, %c0_64] : memref<8x16x128xbf16, #tpu.memory_space<vmem>>, vector<1x16x128xbf16>
    %151 = vector.shape_cast %150 : vector<1x16x128xbf16> to vector<16x128xbf16>
    %152 = vector.shape_cast %148 : vector<16x128xbf16> to vector<1x16x128xbf16>
    tpu.vector_store %arg6[%149, %c0_63, %c0_64], %152 {strides = array<i32>} : memref<8x16x128xbf16, #tpu.memory_space<vmem>>, vector<1x16x128xbf16>,
    %c4_i32 = arith.constant 4 : i32
    %c16_i32_65 = arith.constant 16 : i32
    %153 = arith.muli %c4_i32, %c16_i32_65 : i32
    %154 = tpu.assume_multiple %153, 16 : i32
    %155 = arith.index_cast %154 : i32 to index
    %c0_66 = arith.constant 0 : index
    %156 = vector.load %arg9[%155, %c0_66] : memref<128x512xf32, #tpu.memory_space<vmem>>, vector<16x512xf32>
    %157 = arith.truncf %147 : vector<16x128xf32> to vector<16x128xbf16>
    %c0_67 = arith.constant 0 : index
    %c0_68 = arith.constant 0 : index
    %158 = vector.load %arg4[%c0_67, %c0_68] : memref<128x512xbf16, #tpu.memory_space<vmem>>, vector<128x512xbf16>
    %cst_69 = arith.constant dense<0.000000e+00> : vector<16x512xf32>
    %159 = tpu.matmul %157, %158, %cst_69 {dimension_numbers = #tpu.dot_dimension_numbers<[1], [0], [0], [1], [0, 0, 1, 1], [], []>} : vector<16x128xbf16>, vector<128x512xbf16>, vector<16x512xf32> -> vector<16x512xf32>
    %160 = arith.addf %156, %159 : vector<16x512xf32>
    %cst_70 = arith.constant 5.000000e-01 : f32
    %161 = vector.broadcast %cst_70 : f32 to vector<16x512xf32>
    %162 = arith.mulf %161, %160 : vector<16x512xf32>
    %163 = math.tanh %162 : vector<16x512xf32>
    %cst_71 = arith.constant 5.000000e-01 : f32
    %164 = vector.broadcast %cst_71 : f32 to vector<16x512xf32>
    %165 = arith.mulf %164, %163 : vector<16x512xf32>
    %cst_72 = arith.constant 5.000000e-01 : f32
    %166 = vector.broadcast %cst_72 : f32 to vector<16x512xf32>
    %167 = arith.addf %165, %166 : vector<16x512xf32>
    %168 = vector.extract_strided_slice %167 {offsets = [0, 0], sizes = [16, 128], strides = [1, 1]} : vector<16x512xf32> to vector<16x128xf32>
    %169 = vector.extract_strided_slice %167 {offsets = [0, 128], sizes = [16, 128], strides = [1, 1]} : vector<16x512xf32> to vector<16x128xf32>
    %170 = vector.extract_strided_slice %167 {offsets = [0, 256], sizes = [16, 128], strides = [1, 1]} : vector<16x512xf32> to vector<16x128xf32>
    %171 = vector.extract_strided_slice %167 {offsets = [0, 384], sizes = [16, 128], strides = [1, 1]} : vector<16x512xf32> to vector<16x128xf32>
    %172 = arith.mulf %169, %139 : vector<16x128xf32>
    %173 = arith.addf %172, %170 : vector<16x128xf32>
    %174 = arith.subf %173, %168 : vector<16x128xf32>
    %cst_73 = arith.constant 5.000000e-01 : f32
    %175 = vector.broadcast %cst_73 : f32 to vector<16x128xf32>
    %176 = arith.mulf %175, %174 : vector<16x128xf32>
    %177 = math.tanh %176 : vector<16x128xf32>
    %cst_74 = arith.constant 5.000000e-01 : f32
    %178 = vector.broadcast %cst_74 : f32 to vector<16x128xf32>
    %179 = arith.mulf %178, %177 : vector<16x128xf32>
    %cst_75 = arith.constant 5.000000e-01 : f32
    %180 = vector.broadcast %cst_75 : f32 to vector<16x128xf32>
    %181 = arith.addf %179, %180 : vector<16x128xf32>
    %182 = arith.subf %181, %171 : vector<16x128xf32>
    %183 = arith.truncf %182 : vector<16x128xf32> to vector<16x128xbf16>
    %184 = arith.index_cast %c4_i32 : i32 to index
    %c0_76 = arith.constant 0 : index
    %c0_77 = arith.constant 0 : index
    %185 = vector.load %arg6[%184, %c0_76, %c0_77] : memref<8x16x128xbf16, #tpu.memory_space<vmem>>, vector<1x16x128xbf16>
    %186 = vector.shape_cast %185 : vector<1x16x128xbf16> to vector<16x128xbf16>
    %187 = vector.shape_cast %183 : vector<16x128xbf16> to vector<1x16x128xbf16>
    tpu.vector_store %arg6[%184, %c0_76, %c0_77], %187 {strides = array<i32>} : memref<8x16x128xbf16, #tpu.memory_space<vmem>>, vector<1x16x128xbf16>,
    %c5_i32 = arith.constant 5 : i32
    %c16_i32_78 = arith.constant 16 : i32
    %188 = arith.muli %c5_i32, %c16_i32_78 : i32
    %189 = tpu.assume_multiple %188, 16 : i32
    %190 = arith.index_cast %189 : i32 to index
    %c0_79 = arith.constant 0 : index
    %191 = vector.load %arg9[%190, %c0_79] : memref<128x512xf32, #tpu.memory_space<vmem>>, vector<16x512xf32>
    %192 = arith.truncf %182 : vector<16x128xf32> to vector<16x128xbf16>
    %c0_80 = arith.constant 0 : index
    %c0_81 = arith.constant 0 : index
    %193 = vector.load %arg4[%c0_80, %c0_81] : memref<128x512xbf16, #tpu.memory_space<vmem>>, vector<128x512xbf16>
    %cst_82 = arith.constant dense<0.000000e+00> : vector<16x512xf32>
    %194 = tpu.matmul %192, %193, %cst_82 {dimension_numbers = #tpu.dot_dimension_numbers<[1], [0], [0], [1], [0, 0, 1, 1], [], []>} : vector<16x128xbf16>, vector<128x512xbf16>, vector<16x512xf32> -> vector<16x512xf32>
    %195 = arith.addf %191, %194 : vector<16x512xf32>
    %cst_83 = arith.constant 5.000000e-01 : f32
    %196 = vector.broadcast %cst_83 : f32 to vector<16x512xf32>
    %197 = arith.mulf %196, %195 : vector<16x512xf32>
    %198 = math.tanh %197 : vector<16x512xf32>
    %cst_84 = arith.constant 5.000000e-01 : f32
    %199 = vector.broadcast %cst_84 : f32 to vector<16x512xf32>
    %200 = arith.mulf %199, %198 : vector<16x512xf32>
    %cst_85 = arith.constant 5.000000e-01 : f32
    %201 = vector.broadcast %cst_85 : f32 to vector<16x512xf32>
    %202 = arith.addf %200, %201 : vector<16x512xf32>
    %203 = vector.extract_strided_slice %202 {offsets = [0, 0], sizes = [16, 128], strides = [1, 1]} : vector<16x512xf32> to vector<16x128xf32>
    %204 = vector.extract_strided_slice %202 {offsets = [0, 128], sizes = [16, 128], strides = [1, 1]} : vector<16x512xf32> to vector<16x128xf32>
    %205 = vector.extract_strided_slice %202 {offsets = [0, 256], sizes = [16, 128], strides = [1, 1]} : vector<16x512xf32> to vector<16x128xf32>
    %206 = vector.extract_strided_slice %202 {offsets = [0, 384], sizes = [16, 128], strides = [1, 1]} : vector<16x512xf32> to vector<16x128xf32>
    %207 = arith.mulf %204, %174 : vector<16x128xf32>
    %208 = arith.addf %207, %205 : vector<16x128xf32>
    %209 = arith.subf %208, %203 : vector<16x128xf32>
    %cst_86 = arith.constant 5.000000e-01 : f32
    %210 = vector.broadcast %cst_86 : f32 to vector<16x128xf32>
    %211 = arith.mulf %210, %209 : vector<16x128xf32>
    %212 = math.tanh %211 : vector<16x128xf32>
    %cst_87 = arith.constant 5.000000e-01 : f32
    %213 = vector.broadcast %cst_87 : f32 to vector<16x128xf32>
    %214 = arith.mulf %213, %212 : vector<16x128xf32>
    %cst_88 = arith.constant 5.000000e-01 : f32
    %215 = vector.broadcast %cst_88 : f32 to vector<16x128xf32>
    %216 = arith.addf %214, %215 : vector<16x128xf32>
    %217 = arith.subf %216, %206 : vector<16x128xf32>
    %218 = arith.truncf %217 : vector<16x128xf32> to vector<16x128xbf16>
    %219 = arith.index_cast %c5_i32 : i32 to index
    %c0_89 = arith.constant 0 : index
    %c0_90 = arith.constant 0 : index
    %220 = vector.load %arg6[%219, %c0_89, %c0_90] : memref<8x16x128xbf16, #tpu.memory_space<vmem>>, vector<1x16x128xbf16>
    %221 = vector.shape_cast %220 : vector<1x16x128xbf16> to vector<16x128xbf16>
    %222 = vector.shape_cast %218 : vector<16x128xbf16> to vector<1x16x128xbf16>
    tpu.vector_store %arg6[%219, %c0_89, %c0_90], %222 {strides = array<i32>} : memref<8x16x128xbf16, #tpu.memory_space<vmem>>, vector<1x16x128xbf16>,
    %c6_i32 = arith.constant 6 : i32
    %c16_i32_91 = arith.constant 16 : i32
    %223 = arith.muli %c6_i32, %c16_i32_91 : i32
    %224 = tpu.assume_multiple %223, 16 : i32
    %225 = arith.index_cast %224 : i32 to index
    %c0_92 = arith.constant 0 : index
    %226 = vector.load %arg9[%225, %c0_92] : memref<128x512xf32, #tpu.memory_space<vmem>>, vector<16x512xf32>
    %227 = arith.truncf %217 : vector<16x128xf32> to vector<16x128xbf16>
    %c0_93 = arith.constant 0 : index
    %c0_94 = arith.constant 0 : index
    %228 = vector.load %arg4[%c0_93, %c0_94] : memref<128x512xbf16, #tpu.memory_space<vmem>>, vector<128x512xbf16>
    %cst_95 = arith.constant dense<0.000000e+00> : vector<16x512xf32>
    %229 = tpu.matmul %227, %228, %cst_95 {dimension_numbers = #tpu.dot_dimension_numbers<[1], [0], [0], [1], [0, 0, 1, 1], [], []>} : vector<16x128xbf16>, vector<128x512xbf16>, vector<16x512xf32> -> vector<16x512xf32>
    %230 = arith.addf %226, %229 : vector<16x512xf32>
    %cst_96 = arith.constant 5.000000e-01 : f32
    %231 = vector.broadcast %cst_96 : f32 to vector<16x512xf32>
    %232 = arith.mulf %231, %230 : vector<16x512xf32>
    %233 = math.tanh %232 : vector<16x512xf32>
    %cst_97 = arith.constant 5.000000e-01 : f32
    %234 = vector.broadcast %cst_97 : f32 to vector<16x512xf32>
    %235 = arith.mulf %234, %233 : vector<16x512xf32>
    %cst_98 = arith.constant 5.000000e-01 : f32
    %236 = vector.broadcast %cst_98 : f32 to vector<16x512xf32>
    %237 = arith.addf %235, %236 : vector<16x512xf32>
    %238 = vector.extract_strided_slice %237 {offsets = [0, 0], sizes = [16, 128], strides = [1, 1]} : vector<16x512xf32> to vector<16x128xf32>
    %239 = vector.extract_strided_slice %237 {offsets = [0, 128], sizes = [16, 128], strides = [1, 1]} : vector<16x512xf32> to vector<16x128xf32>
    %240 = vector.extract_strided_slice %237 {offsets = [0, 256], sizes = [16, 128], strides = [1, 1]} : vector<16x512xf32> to vector<16x128xf32>
    %241 = vector.extract_strided_slice %237 {offsets = [0, 384], sizes = [16, 128], strides = [1, 1]} : vector<16x512xf32> to vector<16x128xf32>
    %242 = arith.mulf %239, %209 : vector<16x128xf32>
    %243 = arith.addf %242, %240 : vector<16x128xf32>
    %244 = arith.subf %243, %238 : vector<16x128xf32>
    %cst_99 = arith.constant 5.000000e-01 : f32
    %245 = vector.broadcast %cst_99 : f32 to vector<16x128xf32>
    %246 = arith.mulf %245, %244 : vector<16x128xf32>
    %247 = math.tanh %246 : vector<16x128xf32>
    %cst_100 = arith.constant 5.000000e-01 : f32
    %248 = vector.broadcast %cst_100 : f32 to vector<16x128xf32>
    %249 = arith.mulf %248, %247 : vector<16x128xf32>
    %cst_101 = arith.constant 5.000000e-01 : f32
    %250 = vector.broadcast %cst_101 : f32 to vector<16x128xf32>
    %251 = arith.addf %249, %250 : vector<16x128xf32>
    %252 = arith.subf %251, %241 : vector<16x128xf32>
    %253 = arith.truncf %252 : vector<16x128xf32> to vector<16x128xbf16>
    %254 = arith.index_cast %c6_i32 : i32 to index
    %c0_102 = arith.constant 0 : index
    %c0_103 = arith.constant 0 : index
    %255 = vector.load %arg6[%254, %c0_102, %c0_103] : memref<8x16x128xbf16, #tpu.memory_space<vmem>>, vector<1x16x128xbf16>
    %256 = vector.shape_cast %255 : vector<1x16x128xbf16> to vector<16x128xbf16>
    %257 = vector.shape_cast %253 : vector<16x128xbf16> to vector<1x16x128xbf16>
    tpu.vector_store %arg6[%254, %c0_102, %c0_103], %257 {strides = array<i32>} : memref<8x16x128xbf16, #tpu.memory_space<vmem>>, vector<1x16x128xbf16>,
    %c7_i32 = arith.constant 7 : i32
    %c16_i32_104 = arith.constant 16 : i32
    %258 = arith.muli %c7_i32, %c16_i32_104 : i32
    %259 = tpu.assume_multiple %258, 16 : i32
    %260 = arith.index_cast %259 : i32 to index
    %c0_105 = arith.constant 0 : index
    %261 = vector.load %arg9[%260, %c0_105] : memref<128x512xf32, #tpu.memory_space<vmem>>, vector<16x512xf32>
    %262 = arith.truncf %252 : vector<16x128xf32> to vector<16x128xbf16>
    %c0_106 = arith.constant 0 : index
    %c0_107 = arith.constant 0 : index
    %263 = vector.load %arg4[%c0_106, %c0_107] : memref<128x512xbf16, #tpu.memory_space<vmem>>, vector<128x512xbf16>
    %cst_108 = arith.constant dense<0.000000e+00> : vector<16x512xf32>
    %264 = tpu.matmul %262, %263, %cst_108 {dimension_numbers = #tpu.dot_dimension_numbers<[1], [0], [0], [1], [0, 0, 1, 1], [], []>} : vector<16x128xbf16>, vector<128x512xbf16>, vector<16x512xf32> -> vector<16x512xf32>
    %265 = arith.addf %261, %264 : vector<16x512xf32>
    %cst_109 = arith.constant 5.000000e-01 : f32
    %266 = vector.broadcast %cst_109 : f32 to vector<16x512xf32>
    %267 = arith.mulf %266, %265 : vector<16x512xf32>
    %268 = math.tanh %267 : vector<16x512xf32>
    %cst_110 = arith.constant 5.000000e-01 : f32
    %269 = vector.broadcast %cst_110 : f32 to vector<16x512xf32>
    %270 = arith.mulf %269, %268 : vector<16x512xf32>
    %cst_111 = arith.constant 5.000000e-01 : f32
    %271 = vector.broadcast %cst_111 : f32 to vector<16x512xf32>
    %272 = arith.addf %270, %271 : vector<16x512xf32>
    %273 = vector.extract_strided_slice %272 {offsets = [0, 0], sizes = [16, 128], strides = [1, 1]} : vector<16x512xf32> to vector<16x128xf32>
    %274 = vector.extract_strided_slice %272 {offsets = [0, 128], sizes = [16, 128], strides = [1, 1]} : vector<16x512xf32> to vector<16x128xf32>
    %275 = vector.extract_strided_slice %272 {offsets = [0, 256], sizes = [16, 128], strides = [1, 1]} : vector<16x512xf32> to vector<16x128xf32>
    %276 = vector.extract_strided_slice %272 {offsets = [0, 384], sizes = [16, 128], strides = [1, 1]} : vector<16x512xf32> to vector<16x128xf32>
    %277 = arith.mulf %274, %244 : vector<16x128xf32>
    %278 = arith.addf %277, %275 : vector<16x128xf32>
    %279 = arith.subf %278, %273 : vector<16x128xf32>
    %cst_112 = arith.constant 5.000000e-01 : f32
    %280 = vector.broadcast %cst_112 : f32 to vector<16x128xf32>
    %281 = arith.mulf %280, %279 : vector<16x128xf32>
    %282 = math.tanh %281 : vector<16x128xf32>
    %cst_113 = arith.constant 5.000000e-01 : f32
    %283 = vector.broadcast %cst_113 : f32 to vector<16x128xf32>
    %284 = arith.mulf %283, %282 : vector<16x128xf32>
    %cst_114 = arith.constant 5.000000e-01 : f32
    %285 = vector.broadcast %cst_114 : f32 to vector<16x128xf32>
    %286 = arith.addf %284, %285 : vector<16x128xf32>
    %287 = arith.subf %286, %276 : vector<16x128xf32>
    %288 = arith.truncf %287 : vector<16x128xf32> to vector<16x128xbf16>
    %289 = arith.index_cast %c7_i32 : i32 to index
    %c0_115 = arith.constant 0 : index
    %c0_116 = arith.constant 0 : index
    %290 = vector.load %arg6[%289, %c0_115, %c0_116] : memref<8x16x128xbf16, #tpu.memory_space<vmem>>, vector<1x16x128xbf16>
    %291 = vector.shape_cast %290 : vector<1x16x128xbf16> to vector<16x128xbf16>
    %292 = vector.shape_cast %288 : vector<16x128xbf16> to vector<1x16x128xbf16>
    tpu.vector_store %arg6[%289, %c0_115, %c0_116], %292 {strides = array<i32>} : memref<8x16x128xbf16, #tpu.memory_space<vmem>>, vector<1x16x128xbf16>,
    %c8_i32 = arith.constant 8 : i32
    %c0_117 = arith.constant 0 : index
    %c0_118 = arith.constant 0 : index
    %293 = vector.load %arg10[%c0_117, %c0_118] : memref<16x128xf32, #tpu.memory_space<vmem>>, vector<16x128xf32>
    tpu.vector_store %arg10[%c0_117, %c0_118], %287 {strides = array<i32>} : memref<16x128xf32, #tpu.memory_space<vmem>>, vector<16x128xf32>,
    %c0_119 = arith.constant 0 : index
    %c0_120 = arith.constant 0 : index
    %294 = vector.load %arg11[%c0_119, %c0_120] : memref<16x128xf32, #tpu.memory_space<vmem>>, vector<16x128xf32>
    tpu.vector_store %arg11[%c0_119, %c0_120], %279 {strides = array<i32>} : memref<16x128xf32, #tpu.memory_space<vmem>>, vector<16x128xf32>,
    %c0_i32_121 = arith.constant 0 : i32
    %295 = arith.cmpi eq, %arg1, %c0_i32_121 : i32
    %296 = arith.extui %295 : i1 to i32
    %c0_i32_122 = arith.constant 0 : i32
    %297 = arith.cmpi ne, %296, %c0_i32_122 : i32
    scf.if %297 {
      %c0_123 = arith.constant 0 : index
      %c0_124 = arith.constant 0 : index
      %298 = vector.load %arg10[%c0_123, %c0_124] : memref<16x128xf32, #tpu.memory_space<vmem>>, vector<16x128xf32>
      %c0_125 = arith.constant 0 : index
      %c0_126 = arith.constant 0 : index
      %299 = vector.load %arg7[%c0_125, %c0_126] : memref<16x128xf32, #tpu.memory_space<vmem>>, vector<16x128xf32>
      tpu.vector_store %arg7[%c0_125, %c0_126], %298 {strides = array<i32>} : memref<16x128xf32, #tpu.memory_space<vmem>>, vector<16x128xf32>,
      %c0_127 = arith.constant 0 : index
      %c0_128 = arith.constant 0 : index
      %300 = vector.load %arg11[%c0_127, %c0_128] : memref<16x128xf32, #tpu.memory_space<vmem>>, vector<16x128xf32>
      %c0_129 = arith.constant 0 : index
      %c0_130 = arith.constant 0 : index
      %301 = vector.load %arg8[%c0_129, %c0_130] : memref<16x128xf32, #tpu.memory_space<vmem>>, vector<16x128xf32>
      tpu.vector_store %arg8[%c0_129, %c0_130], %300 {strides = array<i32>} : memref<16x128xf32, #tpu.memory_space<vmem>>, vector<16x128xf32>,
    } else {
    }
    return
  }
  func.func @transform_0(%arg0: i32, %arg1: i32) -> (i32, i32, i32) {
    %c0_i32 = arith.constant 0 : i32
    %c0_i32_0 = arith.constant 0 : i32
    return %arg1, %arg0, %c0_i32 : i32, i32, i32
  }
  func.func @transform_1(%arg0: i32, %arg1: i32) -> (i32, i32) {
    %c0_i32 = arith.constant 0 : i32
    %c0_i32_0 = arith.constant 0 : i32
    %c0_i32_1 = arith.constant 0 : i32
    return %c0_i32, %c0_i32_0 : i32, i32
  }
  func.func @transform_2(%arg0: i32, %arg1: i32) -> (i32, i32) {
    %c0_i32 = arith.constant 0 : i32
    %c0_i32_0 = arith.constant 0 : i32
    %c0_i32_1 = arith.constant 0 : i32
    return %c0_i32, %c0_i32_0 : i32, i32
  }
  func.func @transform_3(%arg0: i32, %arg1: i32) -> (i32, i32) {
    %c0_i32 = arith.constant 0 : i32
    %c0_i32_0 = arith.constant 0 : i32
    %c0_i32_1 = arith.constant 0 : i32
    return %c0_i32, %c0_i32_0 : i32, i32
  }
  func.func @transform_4(%arg0: i32, %arg1: i32) -> (i32, i32, i32) {
    %c0_i32 = arith.constant 0 : i32
    %c0_i32_0 = arith.constant 0 : i32
    return %arg1, %arg0, %c0_i32 : i32, i32, i32
  }
  func.func @transform_5(%arg0: i32, %arg1: i32) -> (i32, i32) {
    %c0_i32 = arith.constant 0 : i32
    %c0_i32_0 = arith.constant 0 : i32
    return %arg0, %c0_i32 : i32, i32
  }
  func.func @transform_6(%arg0: i32, %arg1: i32) -> (i32, i32) {
    %c0_i32 = arith.constant 0 : i32
    %c0_i32_0 = arith.constant 0 : i32
    return %arg0, %c0_i32 : i32, i32
  }
}

</mosaic_0001>

<llo_original>
// kernel: rnn_model_forward.4
$region0: #{rnn_model_forward.4}
  #allocation0 [shape = 'u32[]', space=smem, size = 0x4, offset = 0x4, fixed_abs, tag = 'smem constant byte address 0x4 - core index']
  #allocation1 [shape = 'u32[144,128]{1,0:T(1,128)}', space=vmem, size = 0x12000, scoped, tag = 'internal scratch']
  #allocation2 [shape = 'f32[128,512]{1,0:T(8,128)}', space=vmem, size = 0x40000, scoped, tag = 'scratch operand']
  #allocation3 [shape = 'f32[16,128]{1,0:T(8,128)}', space=vmem, size = 0x2000, scoped, tag = 'scratch operand']
  #allocation4 [shape = 'f32[16,128]{1,0:T(8,128)}', space=vmem, size = 0x2000, scoped, tag = 'scratch operand']
  %s0 = inlined_call_operand.vmem [shape: bf16[8,16,128], index: 0, kind: input, shape index: {}]
  %s1 = inlined_call_operand.vmem [shape: bf16[128,512], index: 1, kind: input, shape index: {}]
  %s2 = inlined_call_operand.vmem [shape: bf16[128,512], index: 2, kind: input, shape index: {}]
  %s3 = inlined_call_operand.vmem [shape: f32[1,512], index: 3, kind: input, shape index: {}]
  %s4 = inlined_call_operand.vmem [shape: bf16[8,16,128], index: 4, kind: output, shape index: {0}]
  %s5 = inlined_call_operand.hbm [shape: f32[16,128], index: 5, kind: output, shape index: {1}]
  %s6 = inlined_call_operand.hbm [shape: f32[16,128], index: 6, kind: output, shape index: {2}]
  %7 = xla_tuple %s4, %s5, %s6
  %s8 = sld [smem:[#allocation0]]
  $region50: #{rnn_model_forward.4} parent=0
    _
  %s10 = ssub.s32 1, %s8
  %s11 = scalar_select 0, %s10, %s8
  $region1: #{rnn_model_forward.4} parent=0
    #allocation5 [shape = 'u8[8192]{0}', space=vmem, size = 0x2000, scoped, tag = 'output window, operand 1, single buffered']
    #allocation6 [shape = 's32[1]{0}', space=sflag, size = 0x4, scoped, tag = 'scoped memory for rnn_model_forward.4']
    #allocation7 [shape = 'u8[8192]{0}', space=vmem, size = 0x2000, scoped, tag = 'output window, operand 2, single buffered']
    #allocation8 [shape = 's32[1]{0}', space=sflag, size = 0x4, scoped, tag = 'scoped memory for rnn_model_forward.4']
    %12 = vsyncpa [#allocation6], 0
    %13 = vsyncpa [#allocation8], 0
    // Predicated region
    $region2: #{rnn_model_forward.4} parent=1 // pred_check
      _
    $region3: #{rnn_model_forward.4} parent=1 // pred_check_branch
      %15 = sbr.rel (0) target = $region5
    $region4: #{rnn_model_forward.4} parent=1 // pred_region
      _
    $region5: #{rnn_model_forward.4} parent=1 // pred_fallthru
      _
    // Predicated region
    $region6: #{rnn_model_forward.4} parent=1 // pred_check
      _
    $region7: #{rnn_model_forward.4} parent=1 // pred_check_branch
      %17 = sbr.rel (0) target = $region9
    $region8: #{rnn_model_forward.4} parent=1 // pred_region
      _
    $region9: #{rnn_model_forward.4} parent=1 // pred_fallthru
      _
    // Predicated region
    $region10: #{rnn_model_forward.4} parent=1 // pred_check
      _
    $region11: #{rnn_model_forward.4} parent=1 // pred_check_branch
      %19 = sbr.rel (0) target = $region13
    $region12: #{rnn_model_forward.4} parent=1 // pred_region
      _
    $region13: #{rnn_model_forward.4} parent=1 // pred_fallthru
      _
    // Predicated region
    $region14: #{rnn_model_forward.4} parent=1 // pred_check
      _
    $region15: #{rnn_model_forward.4} parent=1 // pred_check_branch
      %21 = sbr.rel (0) target = $region17
    $region16: #{rnn_model_forward.4} parent=1 // pred_region
      _
    $region17: #{rnn_model_forward.4} parent=1 // pred_fallthru
      _
    %p23 = scmp.eq.s32.totalorder 0, 0
    // Predicated region
    $region18: #{rnn_model_forward.4} parent=1 // pred_check
      %p24 = pneg %p23
    $region19: #{rnn_model_forward.4} parent=1 // pred_check_branch
      %26 = sbr.rel (%p24) target = $region21
    $region20: #{rnn_model_forward.4} parent=1 // pred_region
      %27 = vst [vmem:[#allocation3] sm:$0xff] 0.0
      %28 = vst [vmem:[#allocation3 + $0x8] sm:$0xff] 0.0
      %29 = vst [vmem:[#allocation4] sm:$0xff] 0.0
      %30 = vst [vmem:[#allocation4 + $0x8] sm:$0xff] 0.0
    $region21: #{rnn_model_forward.4} parent=1 // pred_fallthru
      _
    %v31 = vld [vmem:[%s0] sm:$0xf]
    %v32 = vld [vmem:[%s0 + $0x4] sm:$0xf]
    %v33 = vld [vmem:[%s0 + $0x8] sm:$0xf]
    %v34 = vld [vmem:[%s0 + $0xc] sm:$0xf]
    %v35 = vld [vmem:[%s0 + $0x10] sm:$0xf]
    %v36 = vld [vmem:[%s0 + $0x14] sm:$0xf]
    %v37 = vld [vmem:[%s0 + $0x18] sm:$0xf]
    %v38 = vld [vmem:[%s0 + $0x1c] sm:$0xf]
    %v39 = vld [vmem:[%s0 + $0x20] sm:$0xf]
    %v40 = vld [vmem:[%s0 + $0x24] sm:$0xf]
    %v41 = vld [vmem:[%s0 + $0x28] sm:$0xf]
    %v42 = vld [vmem:[%s0 + $0x2c] sm:$0xf]
    %v43 = vld [vmem:[%s0 + $0x30] sm:$0xf]
    %v44 = vld [vmem:[%s0 + $0x34] sm:$0xf]
    %v45 = vld [vmem:[%s0 + $0x38] sm:$0xf]
    %v46 = vld [vmem:[%s0 + $0x3c] sm:$0xf]
    %v47 = vld [vmem:[%s1] sm:$0xff]
    %v48 = vld [vmem:[%s1 + $0x8] sm:$0xff]
    %v49 = vld [vmem:[%s1 + $0x10] sm:$0xff]
    %v50 = vld [vmem:[%s1 + $0x18] sm:$0xff]
    %v51 = vld [vmem:[%s1 + $0x20] sm:$0xff]
    %v52 = vld [vmem:[%s1 + $0x28] sm:$0xff]
    %v53 = vld [vmem:[%s1 + $0x30] sm:$0xff]
    %v54 = vld [vmem:[%s1 + $0x38] sm:$0xff]
    %v55 = vld [vmem:[%s1 + $0x40] sm:$0xff]
    %v56 = vld [vmem:[%s1 + $0x48] sm:$0xff]
    %v57 = vld [vmem:[%s1 + $0x50] sm:$0xff]
    %v58 = vld [vmem:[%s1 + $0x58] sm:$0xff]
    %v59 = vld [vmem:[%s1 + $0x60] sm:$0xff]
    %v60 = vld [vmem:[%s1 + $0x68] sm:$0xff]
    %v61 = vld [vmem:[%s1 + $0x70] sm:$0xff]
    %v62 = vld [vmem:[%s1 + $0x78] sm:$0xff]
    %v63 = vld [vmem:[%s1 + $0x80] sm:$0xff]
    %v64 = vld [vmem:[%s1 + $0x88] sm:$0xff]
    %v65 = vld [vmem:[%s1 + $0x90] sm:$0xff]
    %v66 = vld [vmem:[%s1 + $0x98] sm:$0xff]
    %v67 = vld [vmem:[%s1 + $0xa0] sm:$0xff]
    %v68 = vld [vmem:[%s1 + $0xa8] sm:$0xff]
    %v69 = vld [vmem:[%s1 + $0xb0] sm:$0xff]
    %v70 = vld [vmem:[%s1 + $0xb8] sm:$0xff]
    %v71 = vld [vmem:[%s1 + $0xc0] sm:$0xff]
    %v72 = vld [vmem:[%s1 + $0xc8] sm:$0xff]
    %v73 = vld [vmem:[%s1 + $0xd0] sm:$0xff]
    %v74 = vld [vmem:[%s1 + $0xd8] sm:$0xff]
    %v75 = vld [vmem:[%s1 + $0xe0] sm:$0xff]
    %v76 = vld [vmem:[%s1 + $0xe8] sm:$0xff]
    %v77 = vld [vmem:[%s1 + $0xf0] sm:$0xff]
    %v78 = vld [vmem:[%s1 + $0xf8] sm:$0xff]
    %v79 = vld [vmem:[%s3] sm:$0xf]
    %v81 = vlaneseq
    %v82 = vshrl.u32 %v81, 7
    %v83 = vsub.s32 0, %v82
    %v84 = vrot.slane %v79, %v83
    %v85 = vlaneseq
    %v86 = vshrl.u32 %v85, 7
    %v87 = vsub.s32 1, %v86
    %v88 = vrot.slane %v79, %v87
    %v89 = vlaneseq
    %v90 = vshrl.u32 %v89, 7
    %v91 = vsub.s32 2, %v90
    %v92 = vrot.slane %v79, %v91
    %v93 = vlaneseq
    %v94 = vshrl.u32 %v93, 7
    %v95 = vsub.s32 3, %v94
    %v96 = vrot.slane %v79, %v95
    %v117 = vunpack.c.l.b16 %v31
    %v118 = vunpack.c.l.b16 %v32
    %v119 = vunpack.c.l.b16 %v33
    %v120 = vunpack.c.l.b16 %v34
    %v121 = vunpack.c.l.b16 %v35
    %v122 = vunpack.c.l.b16 %v36
    %v123 = vunpack.c.l.b16 %v37
    %v124 = vunpack.c.l.b16 %v38
    %v125 = vunpack.c.l.b16 %v39
    %v126 = vunpack.c.l.b16 %v40
    %v127 = vunpack.c.l.b16 %v41
    %v128 = vunpack.c.l.b16 %v42
    %v129 = vunpack.c.l.b16 %v43
    %v130 = vunpack.c.l.b16 %v44
    %v131 = vunpack.c.l.b16 %v45
    %v132 = vunpack.c.l.b16 %v46
    %v133 = vpack.c.b16 %v118, %v117
    %v134 = vpack.c.b16 %v120, %v119
    %v135 = vpack.c.b16 %v122, %v121
    %v136 = vpack.c.b16 %v124, %v123
    %v137 = vpack.c.b16 %v126, %v125
    %v138 = vpack.c.b16 %v128, %v127
    %v139 = vpack.c.b16 %v130, %v129
    %v140 = vpack.c.b16 %v132, %v131
    %v181 = vunpack.c.l.b16 %v47
    %v182 = vunpack.c.h.b16 %v47
    %v183 = vunpack.c.l.b16 %v48
    %v184 = vunpack.c.h.b16 %v48
    %v185 = vunpack.c.l.b16 %v49
    %v186 = vunpack.c.h.b16 %v49
    %v187 = vunpack.c.l.b16 %v50
    %v188 = vunpack.c.h.b16 %v50
    %v189 = vunpack.c.l.b16 %v51
    %v190 = vunpack.c.h.b16 %v51
    %v191 = vunpack.c.l.b16 %v52
    %v192 = vunpack.c.h.b16 %v52
    %v193 = vunpack.c.l.b16 %v53
    %v194 = vunpack.c.h.b16 %v53
    %v195 = vunpack.c.l.b16 %v54
    %v196 = vunpack.c.h.b16 %v54
    %v197 = vunpack.c.l.b16 %v55
    %v198 = vunpack.c.h.b16 %v55
    %v199 = vunpack.c.l.b16 %v56
    %v200 = vunpack.c.h.b16 %v56
    %v201 = vunpack.c.l.b16 %v57
    %v202 = vunpack.c.h.b16 %v57
    %v203 = vunpack.c.l.b16 %v58
    %v204 = vunpack.c.h.b16 %v58
    %v205 = vunpack.c.l.b16 %v59
    %v206 = vunpack.c.h.b16 %v59
    %v207 = vunpack.c.l.b16 %v60
    %v208 = vunpack.c.h.b16 %v60
    %v209 = vunpack.c.l.b16 %v61
    %v210 = vunpack.c.h.b16 %v61
    %v211 = vunpack.c.l.b16 %v62
    %v212 = vunpack.c.h.b16 %v62
    %v213 = vunpack.c.l.b16 %v63
    %v214 = vunpack.c.h.b16 %v63
    %v215 = vunpack.c.l.b16 %v64
    %v216 = vunpack.c.h.b16 %v64
    %v217 = vunpack.c.l.b16 %v65
    %v218 = vunpack.c.h.b16 %v65
    %v219 = vunpack.c.l.b16 %v66
    %v220 = vunpack.c.h.b16 %v66
    %v221 = vunpack.c.l.b16 %v67
    %v222 = vunpack.c.h.b16 %v67
    %v223 = vunpack.c.l.b16 %v68
    %v224 = vunpack.c.h.b16 %v68
    %v225 = vunpack.c.l.b16 %v69
    %v226 = vunpack.c.h.b16 %v69
    %v227 = vunpack.c.l.b16 %v70
    %v228 = vunpack.c.h.b16 %v70
    %v229 = vunpack.c.l.b16 %v71
    %v230 = vunpack.c.h.b16 %v71
    %v231 = vunpack.c.l.b16 %v72
    %v232 = vunpack.c.h.b16 %v72
    %v233 = vunpack.c.l.b16 %v73
    %v234 = vunpack.c.h.b16 %v73
    %v235 = vunpack.c.l.b16 %v74
    %v236 = vunpack.c.h.b16 %v74
    %v237 = vunpack.c.l.b16 %v75
    %v238 = vunpack.c.h.b16 %v75
    %v239 = vunpack.c.l.b16 %v76
    %v240 = vunpack.c.h.b16 %v76
    %v241 = vunpack.c.l.b16 %v77
    %v242 = vunpack.c.h.b16 %v77
    %v243 = vunpack.c.l.b16 %v78
    %v244 = vunpack.c.h.b16 %v78
    %v245 = vpack.c.b16 %v185, %v181
    %v246 = vpack.c.b16 %v186, %v182
    %v247 = vpack.c.b16 %v187, %v183
    %v248 = vpack.c.b16 %v188, %v184
    %v249 = vpack.c.b16 %v193, %v189
    %v250 = vpack.c.b16 %v194, %v190
    %v251 = vpack.c.b16 %v195, %v191
    %v252 = vpack.c.b16 %v196, %v192
    %v253 = vpack.c.b16 %v201, %v197
    %v254 = vpack.c.b16 %v202, %v198
    %v255 = vpack.c.b16 %v203, %v199
    %v256 = vpack.c.b16 %v204, %v200
    %v257 = vpack.c.b16 %v209, %v205
    %v258 = vpack.c.b16 %v210, %v206
    %v259 = vpack.c.b16 %v211, %v207
    %v260 = vpack.c.b16 %v212, %v208
    %v261 = vpack.c.b16 %v217, %v213
    %v262 = vpack.c.b16 %v218, %v214
    %v263 = vpack.c.b16 %v219, %v215
    %v264 = vpack.c.b16 %v220, %v216
    %v265 = vpack.c.b16 %v225, %v221
    %v266 = vpack.c.b16 %v226, %v222
    %v267 = vpack.c.b16 %v227, %v223
    %v268 = vpack.c.b16 %v228, %v224
    %v269 = vpack.c.b16 %v233, %v229
    %v270 = vpack.c.b16 %v234, %v230
    %v271 = vpack.c.b16 %v235, %v231
    %v272 = vpack.c.b16 %v236, %v232
    %v273 = vpack.c.b16 %v241, %v237
    %v274 = vpack.c.b16 %v242, %v238
    %v275 = vpack.c.b16 %v243, %v239
    %v276 = vpack.c.b16 %v244, %v240
    %309 = vmatprep.subr.bf16.mxu0 %v246
    %310 = vmatpush1.bf16.msra.mxu0 %v245
    %311 = vmatprep.subr.bf16.mxu0 %v250
    %312 = vmatpush1.bf16.msra.mxu0 %v249
    %313 = vmatprep.subr.bf16.mxu0 %v254
    %314 = vmatpush1.bf16.msra.mxu0 %v253
    %315 = vmatprep.subr.bf16.mxu0 %v258
    %316 = vmatpush1.bf16.msra.mxu0 %v257
    %317 = vmatprep.subr.bf16.mxu0 %v262
    %318 = vmatpush1.bf16.msra.mxu0 %v261
    %319 = vmatprep.subr.bf16.mxu0 %v266
    %320 = vmatpush1.bf16.msra.mxu0 %v265
    %321 = vmatprep.subr.bf16.mxu0 %v270
    %322 = vmatpush1.bf16.msra.mxu0 %v269
    %323 = vmatprep.subr.bf16.mxu0 %v274
    %324 = vmatpush1.bf16.msra.mxu0 %v273
    %325 = vmatprep.subr.bf16.mxu0 0
    %326 = vmatpush1.bf16.msra.mxu0 0
    %327 = vmatprep.subr.bf16.mxu0 0
    %328 = vmatpush1.bf16.msra.mxu0 0
    %329 = vmatprep.subr.bf16.mxu0 0
    %330 = vmatpush1.bf16.msra.mxu0 0
    %331 = vmatprep.subr.bf16.mxu0 0
    %332 = vmatpush1.bf16.msra.mxu0 0
    %333 = vmatprep.subr.bf16.mxu0 0
    %334 = vmatpush1.bf16.msra.mxu0 0
    %335 = vmatprep.subr.bf16.mxu0 0
    %336 = vmatpush1.bf16.msra.mxu0 0
    %337 = vmatprep.subr.bf16.mxu0 0
    %338 = vmatpush1.bf16.msra.mxu0 0
    %339 = vmatprep.subr.bf16.mxu0 0
    %340 = vmatpush1.bf16.msra.mxu0 0
    %341 = vmatprep.mubr.bf16.mxu0 0
    %342 = vmatmul.mubr.bf16.gmra.mrb[0].mxu0 %v133
    %v343 = vpop.f32.mrb[0].mxu0
    %v344 = vadd.f32 %v84, %v343
    %v345 = vpop.f32.mrb[0].mxu0
    %v346 = vadd.f32 %v88, %v345
    %v347 = vpop.f32.mrb[0].mxu0
    %v348 = vadd.f32 %v84, %v347
    %v349 = vpop.f32.mrb[0].mxu0
    %v350 = vadd.f32 %v88, %v349
    %351 = vmatprep.mubr.bf16.mxu0 0
    %352 = vmatmul.mubr.bf16.gmra.mrb[0].mxu0 %v134
    %v353 = vpop.f32.mrb[0].mxu0
    %v354 = vadd.f32 %v84, %v353
    %v355 = vpop.f32.mrb[0].mxu0
    %v356 = vadd.f32 %v88, %v355
    %v357 = vpop.f32.mrb[0].mxu0
    %v358 = vadd.f32 %v84, %v357
    %v359 = vpop.f32.mrb[0].mxu0
    %v360 = vadd.f32 %v88, %v359
    %361 = vmatprep.mubr.bf16.mxu0 0
    %362 = vmatmul.mubr.bf16.gmra.mrb[0].mxu0 %v135
    %v363 = vpop.f32.mrb[0].mxu0
    %v364 = vadd.f32 %v84, %v363
    %v365 = vpop.f32.mrb[0].mxu0
    %v366 = vadd.f32 %v88, %v365
    %v367 = vpop.f32.mrb[0].mxu0
    %v368 = vadd.f32 %v84, %v367
    %v369 = vpop.f32.mrb[0].mxu0
    %v370 = vadd.f32 %v88, %v369
    %371 = vmatprep.mubr.bf16.mxu0 0
    %372 = vmatmul.mubr.bf16.gmra.mrb[0].mxu0 %v136
    %v373 = vpop.f32.mrb[0].mxu0
    %v374 = vadd.f32 %v84, %v373
    %v375 = vpop.f32.mrb[0].mxu0
    %v376 = vadd.f32 %v88, %v375
    %v377 = vpop.f32.mrb[0].mxu0
    %v378 = vadd.f32 %v84, %v377
    %v379 = vpop.f32.mrb[0].mxu0
    %v380 = vadd.f32 %v88, %v379
    %381 = vmatprep.mubr.bf16.mxu0 0
    %382 = vmatmul.mubr.bf16.gmra.mrb[0].mxu0 %v137
    %v383 = vpop.f32.mrb[0].mxu0
    %v384 = vadd.f32 %v84, %v383
    %v385 = vpop.f32.mrb[0].mxu0
    %v386 = vadd.f32 %v88, %v385
    %v387 = vpop.f32.mrb[0].mxu0
    %v388 = vadd.f32 %v84, %v387
    %v389 = vpop.f32.mrb[0].mxu0
    %v390 = vadd.f32 %v88, %v389
    %391 = vmatprep.mubr.bf16.mxu0 0
    %392 = vmatmul.mubr.bf16.gmra.mrb[0].mxu0 %v138
    %v393 = vpop.f32.mrb[0].mxu0
    %v394 = vadd.f32 %v84, %v393
    %v395 = vpop.f32.mrb[0].mxu0
    %v396 = vadd.f32 %v88, %v395
    %v397 = vpop.f32.mrb[0].mxu0
    %v398 = vadd.f32 %v84, %v397
    %v399 = vpop.f32.mrb[0].mxu0
    %v400 = vadd.f32 %v88, %v399
    %401 = vmatprep.mubr.bf16.mxu0 0
    %402 = vmatmul.mubr.bf16.gmra.mrb[0].mxu0 %v139
    %v403 = vpop.f32.mrb[0].mxu0
    %v404 = vadd.f32 %v84, %v403
    %v405 = vpop.f32.mrb[0].mxu0
    %v406 = vadd.f32 %v88, %v405
    %v407 = vpop.f32.mrb[0].mxu0
    %v408 = vadd.f32 %v84, %v407
    %v409 = vpop.f32.mrb[0].mxu0
    %v410 = vadd.f32 %v88, %v409
    %411 = vmatprep.mubr.bf16.mxu0 0
    %412 = vmatmul.mubr.bf16.gmra.mrb[0].mxu0 %v140
    %v413 = vpop.f32.mrb[0].mxu0
    %v414 = vadd.f32 %v84, %v413
    %v415 = vpop.f32.mrb[0].mxu0
    %v416 = vadd.f32 %v88, %v415
    %v417 = vpop.f32.mrb[0].mxu0
    %v418 = vadd.f32 %v84, %v417
    %v419 = vpop.f32.mrb[0].mxu0
    %v420 = vadd.f32 %v88, %v419
    %421 = vdwg.mxu0
    %422 = vmatprep.subr.bf16.mxu0 %v248
    %423 = vmatpush1.bf16.msra.mxu0 %v247
    %424 = vmatprep.subr.bf16.mxu0 %v252
    %425 = vmatpush1.bf16.msra.mxu0 %v251
    %426 = vmatprep.subr.bf16.mxu0 %v256
    %427 = vmatpush1.bf16.msra.mxu0 %v255
    %428 = vmatprep.subr.bf16.mxu0 %v260
    %429 = vmatpush1.bf16.msra.mxu0 %v259
    %430 = vmatprep.subr.bf16.mxu0 %v264
    %431 = vmatpush1.bf16.msra.mxu0 %v263
    %432 = vmatprep.subr.bf16.mxu0 %v268
    %433 = vmatpush1.bf16.msra.mxu0 %v267
    %434 = vmatprep.subr.bf16.mxu0 %v272
    %435 = vmatpush1.bf16.msra.mxu0 %v271
    %436 = vmatprep.subr.bf16.mxu0 %v276
    %437 = vmatpush1.bf16.msra.mxu0 %v275
    %438 = vmatprep.subr.bf16.mxu0 0
    %439 = vmatpush1.bf16.msra.mxu0 0
    %440 = vmatprep.subr.bf16.mxu0 0
    %441 = vmatpush1.bf16.msra.mxu0 0
    %442 = vmatprep.subr.bf16.mxu0 0
    %443 = vmatpush1.bf16.msra.mxu0 0
    %444 = vmatprep.subr.bf16.mxu0 0
    %445 = vmatpush1.bf16.msra.mxu0 0
    %446 = vmatprep.subr.bf16.mxu0 0
    %447 = vmatpush1.bf16.msra.mxu0 0
    %448 = vmatprep.subr.bf16.mxu0 0
    %449 = vmatpush1.bf16.msra.mxu0 0
    %450 = vmatprep.subr.bf16.mxu0 0
    %451 = vmatpush1.bf16.msra.mxu0 0
    %452 = vmatprep.subr.bf16.mxu0 0
    %453 = vmatpush1.bf16.msra.mxu0 0
    %454 = vmatprep.mubr.bf16.mxu0 0
    %455 = vmatmul.mubr.bf16.gmra.mrb[0].mxu0 %v133
    %v456 = vpop.f32.mrb[0].mxu0
    %v457 = vadd.f32 %v92, %v456
    %v458 = vpop.f32.mrb[0].mxu0
    %v459 = vadd.f32 %v96, %v458
    %v460 = vpop.f32.mrb[0].mxu0
    %v461 = vadd.f32 %v92, %v460
    %v462 = vpop.f32.mrb[0].mxu0
    %v463 = vadd.f32 %v96, %v462
    %464 = vmatprep.mubr.bf16.mxu0 0
    %465 = vmatmul.mubr.bf16.gmra.mrb[0].mxu0 %v134
    %v466 = vpop.f32.mrb[0].mxu0
    %v467 = vadd.f32 %v92, %v466
    %v468 = vpop.f32.mrb[0].mxu0
    %v469 = vadd.f32 %v96, %v468
    %v470 = vpop.f32.mrb[0].mxu0
    %v471 = vadd.f32 %v92, %v470
    %v472 = vpop.f32.mrb[0].mxu0
    %v473 = vadd.f32 %v96, %v472
    %474 = vmatprep.mubr.bf16.mxu0 0
    %475 = vmatmul.mubr.bf16.gmra.mrb[0].mxu0 %v135
    %v476 = vpop.f32.mrb[0].mxu0
    %v477 = vadd.f32 %v92, %v476
    %v478 = vpop.f32.mrb[0].mxu0
    %v479 = vadd.f32 %v96, %v478
    %v480 = vpop.f32.mrb[0].mxu0
    %v481 = vadd.f32 %v92, %v480
    %v482 = vpop.f32.mrb[0].mxu0
    %v483 = vadd.f32 %v96, %v482
    %484 = vmatprep.mubr.bf16.mxu0 0
    %485 = vmatmul.mubr.bf16.gmra.mrb[0].mxu0 %v136
    %v486 = vpop.f32.mrb[0].mxu0
    %v487 = vadd.f32 %v92, %v486
    %v488 = vpop.f32.mrb[0].mxu0
    %v489 = vadd.f32 %v96, %v488
    %v490 = vpop.f32.mrb[0].mxu0
    %v491 = vadd.f32 %v92, %v490
    %v492 = vpop.f32.mrb[0].mxu0
    %v493 = vadd.f32 %v96, %v492
    %494 = vmatprep.mubr.bf16.mxu0 0
    %495 = vmatmul.mubr.bf16.gmra.mrb[0].mxu0 %v137
    %v496 = vpop.f32.mrb[0].mxu0
    %v497 = vadd.f32 %v92, %v496
    %v498 = vpop.f32.mrb[0].mxu0
    %v499 = vadd.f32 %v96, %v498
    %v500 = vpop.f32.mrb[0].mxu0
    %v501 = vadd.f32 %v92, %v500
    %v502 = vpop.f32.mrb[0].mxu0
    %v503 = vadd.f32 %v96, %v502
    %504 = vmatprep.mubr.bf16.mxu0 0
    %505 = vmatmul.mubr.bf16.gmra.mrb[0].mxu0 %v138
    %v506 = vpop.f32.mrb[0].mxu0
    %v507 = vadd.f32 %v92, %v506
    %v508 = vpop.f32.mrb[0].mxu0
    %v509 = vadd.f32 %v96, %v508
    %v510 = vpop.f32.mrb[0].mxu0
    %v511 = vadd.f32 %v92, %v510
    %v512 = vpop.f32.mrb[0].mxu0
    %v513 = vadd.f32 %v96, %v512
    %514 = vmatprep.mubr.bf16.mxu0 0
    %515 = vmatmul.mubr.bf16.gmra.mrb[0].mxu0 %v139
    %v516 = vpop.f32.mrb[0].mxu0
    %v517 = vadd.f32 %v92, %v516
    %v518 = vpop.f32.mrb[0].mxu0
    %v519 = vadd.f32 %v96, %v518
    %v520 = vpop.f32.mrb[0].mxu0
    %v521 = vadd.f32 %v92, %v520
    %v522 = vpop.f32.mrb[0].mxu0
    %v523 = vadd.f32 %v96, %v522
    %524 = vmatprep.mubr.bf16.mxu0 0
    %525 = vmatmul.mubr.bf16.gmra.mrb[0].mxu0 %v140
    %v526 = vpop.f32.mrb[0].mxu0
    %v527 = vadd.f32 %v92, %v526
    %v528 = vpop.f32.mrb[0].mxu0
    %v529 = vadd.f32 %v96, %v528
    %v530 = vpop.f32.mrb[0].mxu0
    %v531 = vadd.f32 %v92, %v530
    %v532 = vpop.f32.mrb[0].mxu0
    %v533 = vadd.f32 %v96, %v532
    %534 = vdwg.mxu0
    %535 = vst [vmem:[#allocation2] sm:$0xff] %v344
    %536 = vst [vmem:[#allocation2 + $0x8] sm:$0xff] %v346
    %537 = vst [vmem:[#allocation2 + $0x10] sm:$0xff] %v457
    %538 = vst [vmem:[#allocation2 + $0x18] sm:$0xff] %v459
    %539 = vst [vmem:[#allocation2 + $0x20] sm:$0xff] %v348
    %540 = vst [vmem:[#allocation2 + $0x28] sm:$0xff] %v350
    %541 = vst [vmem:[#allocation2 + $0x30] sm:$0xff] %v461
    %542 = vst [vmem:[#allocation2 + $0x38] sm:$0xff] %v463
    %543 = vst [vmem:[#allocation2 + $0x40] sm:$0xff] %v354
    %544 = vst [vmem:[#allocation2 + $0x48] sm:$0xff] %v356
    %545 = vst [vmem:[#allocation2 + $0x50] sm:$0xff] %v467
    %546 = vst [vmem:[#allocation2 + $0x58] sm:$0xff] %v469
    %547 = vst [vmem:[#allocation2 + $0x60] sm:$0xff] %v358
    %548 = vst [vmem:[#allocation2 + $0x68] sm:$0xff] %v360
    %549 = vst [vmem:[#allocation2 + $0x70] sm:$0xff] %v471
    %550 = vst [vmem:[#allocation2 + $0x78] sm:$0xff] %v473
    %551 = vst [vmem:[#allocation2 + $0x80] sm:$0xff] %v364
    %552 = vst [vmem:[#allocation2 + $0x88] sm:$0xff] %v366
    %553 = vst [vmem:[#allocation2 + $0x90] sm:$0xff] %v477
    %554 = vst [vmem:[#allocation2 + $0x98] sm:$0xff] %v479
    %555 = vst [vmem:[#allocation2 + $0xa0] sm:$0xff] %v368
    %556 = vst [vmem:[#allocation2 + $0xa8] sm:$0xff] %v370
    %557 = vst [vmem:[#allocation2 + $0xb0] sm:$0xff] %v481
    %558 = vst [vmem:[#allocation2 + $0xb8] sm:$0xff] %v483
    %559 = vst [vmem:[#allocation2 + $0xc0] sm:$0xff] %v374
    %560 = vst [vmem:[#allocation2 + $0xc8] sm:$0xff] %v376
    %561 = vst [vmem:[#allocation2 + $0xd0] sm:$0xff] %v487
    %562 = vst [vmem:[#allocation2 + $0xd8] sm:$0xff] %v489
    %563 = vst [vmem:[#allocation2 + $0xe0] sm:$0xff] %v378
    %564 = vst [vmem:[#allocation2 + $0xe8] sm:$0xff] %v380
    %565 = vst [vmem:[#allocation2 + $0xf0] sm:$0xff] %v491
    %566 = vst [vmem:[#allocation2 + $0xf8] sm:$0xff] %v493
    %567 = vst [vmem:[#allocation2 + $0x100] sm:$0xff] %v384
    %568 = vst [vmem:[#allocation2 + $0x108] sm:$0xff] %v386
    %569 = vst [vmem:[#allocation2 + $0x110] sm:$0xff] %v497
    %570 = vst [vmem:[#allocation2 + $0x118] sm:$0xff] %v499
    %571 = vst [vmem:[#allocation2 + $0x120] sm:$0xff] %v388
    %572 = vst [vmem:[#allocation2 + $0x128] sm:$0xff] %v390
    %573 = vst [vmem:[#allocation2 + $0x130] sm:$0xff] %v501
    %574 = vst [vmem:[#allocation2 + $0x138] sm:$0xff] %v503
    %575 = vst [vmem:[#allocation2 + $0x140] sm:$0xff] %v394
    %576 = vst [vmem:[#allocation2 + $0x148] sm:$0xff] %v396
    %577 = vst [vmem:[#allocation2 + $0x150] sm:$0xff] %v507
    %578 = vst [vmem:[#allocation2 + $0x158] sm:$0xff] %v509
    %579 = vst [vmem:[#allocation2 + $0x160] sm:$0xff] %v398
    %580 = vst [vmem:[#allocation2 + $0x168] sm:$0xff] %v400
    %581 = vst [vmem:[#allocation2 + $0x170] sm:$0xff] %v511
    %582 = vst [vmem:[#allocation2 + $0x178] sm:$0xff] %v513
    %583 = vst [vmem:[#allocation2 + $0x180] sm:$0xff] %v404
    %584 = vst [vmem:[#allocation2 + $0x188] sm:$0xff] %v406
    %585 = vst [vmem:[#allocation2 + $0x190] sm:$0xff] %v517
    %586 = vst [vmem:[#allocation2 + $0x198] sm:$0xff] %v519
    %587 = vst [vmem:[#allocation2 + $0x1a0] sm:$0xff] %v408
    %588 = vst [vmem:[#allocation2 + $0x1a8] sm:$0xff] %v410
    %589 = vst [vmem:[#allocation2 + $0x1b0] sm:$0xff] %v521
    %590 = vst [vmem:[#allocation2 + $0x1b8] sm:$0xff] %v523
    %591 = vst [vmem:[#allocation2 + $0x1c0] sm:$0xff] %v414
    %592 = vst [vmem:[#allocation2 + $0x1c8] sm:$0xff] %v416
    %593 = vst [vmem:[#allocation2 + $0x1d0] sm:$0xff] %v527
    %594 = vst [vmem:[#allocation2 + $0x1d8] sm:$0xff] %v529
    %595 = vst [vmem:[#allocation2 + $0x1e0] sm:$0xff] %v418
    %596 = vst [vmem:[#allocation2 + $0x1e8] sm:$0xff] %v420
    %597 = vst [vmem:[#allocation2 + $0x1f0] sm:$0xff] %v531
    %598 = vst [vmem:[#allocation2 + $0x1f8] sm:$0xff] %v533
    %v599 = vld [vmem:[#allocation3] sm:$0xff]
    %v600 = vld [vmem:[#allocation3 + $0x8] sm:$0xff]
    %v601 = vld [vmem:[#allocation4] sm:$0xff]
    %v602 = vld [vmem:[#allocation4 + $0x8] sm:$0xff]
    %s603 = smul.u32 0, 4
    %s604 = smul.addr %s603, 8
    %s605 = scalar_lea.vmem [#allocation2], %s604
    %v606 = vld [vmem:[%s605] sm:$0xff]
    %v607 = vld [vmem:[%s605 + $0x8] sm:$0xff]
    %v608 = vld [vmem:[%s605 + $0x10] sm:$0xff]
    %v609 = vld [vmem:[%s605 + $0x18] sm:$0xff]
    %v610 = vld [vmem:[%s605 + $0x20] sm:$0xff]
    %v611 = vld [vmem:[%s605 + $0x28] sm:$0xff]
    %v612 = vld [vmem:[%s605 + $0x30] sm:$0xff]
    %v613 = vld [vmem:[%s605 + $0x38] sm:$0xff]
    %v614 = vpack.c.bf16 %v600, %v599
    %v615 = vld [vmem:[%s2] sm:$0xff]
    %v616 = vld [vmem:[%s2 + $0x8] sm:$0xff]
    %v617 = vld [vmem:[%s2 + $0x10] sm:$0xff]
    %v618 = vld [vmem:[%s2 + $0x18] sm:$0xff]
    %v619 = vld [vmem:[%s2 + $0x20] sm:$0xff]
    %v620 = vld [vmem:[%s2 + $0x28] sm:$0xff]
    %v621 = vld [vmem:[%s2 + $0x30] sm:$0xff]
    %v622 = vld [vmem:[%s2 + $0x38] sm:$0xff]
    %v623 = vld [vmem:[%s2 + $0x40] sm:$0xff]
    %v624 = vld [vmem:[%s2 + $0x48] sm:$0xff]
    %v625 = vld [vmem:[%s2 + $0x50] sm:$0xff]
    %v626 = vld [vmem:[%s2 + $0x58] sm:$0xff]
    %v627 = vld [vmem:[%s2 + $0x60] sm:$0xff]
    %v628 = vld [vmem:[%s2 + $0x68] sm:$0xff]
    %v629 = vld [vmem:[%s2 + $0x70] sm:$0xff]
    %v630 = vld [vmem:[%s2 + $0x78] sm:$0xff]
    %v631 = vld [vmem:[%s2 + $0x80] sm:$0xff]
    %v632 = vld [vmem:[%s2 + $0x88] sm:$0xff]
    %v633 = vld [vmem:[%s2 + $0x90] sm:$0xff]
    %v634 = vld [vmem:[%s2 + $0x98] sm:$0xff]
    %v635 = vld [vmem:[%s2 + $0xa0] sm:$0xff]
    %v636 = vld [vmem:[%s2 + $0xa8] sm:$0xff]
    %v637 = vld [vmem:[%s2 + $0xb0] sm:$0xff]
    %v638 = vld [vmem:[%s2 + $0xb8] sm:$0xff]
    %v639 = vld [vmem:[%s2 + $0xc0] sm:$0xff]
    %v640 = vld [vmem:[%s2 + $0xc8] sm:$0xff]
    %v641 = vld [vmem:[%s2 + $0xd0] sm:$0xff]
    %v642 = vld [vmem:[%s2 + $0xd8] sm:$0xff]
    %v643 = vld [vmem:[%s2 + $0xe0] sm:$0xff]
    %v644 = vld [vmem:[%s2 + $0xe8] sm:$0xff]
    %v645 = vld [vmem:[%s2 + $0xf0] sm:$0xff]
    %v646 = vld [vmem:[%s2 + $0xf8] sm:$0xff]
    %v679 = vunpack.c.l.b16 %v615
    %v680 = vunpack.c.h.b16 %v615
    %v681 = vunpack.c.l.b16 %v616
    %v682 = vunpack.c.h.b16 %v616
    %v683 = vunpack.c.l.b16 %v617
    %v684 = vunpack.c.h.b16 %v617
    %v685 = vunpack.c.l.b16 %v618
    %v686 = vunpack.c.h.b16 %v618
    %v687 = vunpack.c.l.b16 %v619
    %v688 = vunpack.c.h.b16 %v619
    %v689 = vunpack.c.l.b16 %v620
    %v690 = vunpack.c.h.b16 %v620
    %v691 = vunpack.c.l.b16 %v621
    %v692 = vunpack.c.h.b16 %v621
    %v693 = vunpack.c.l.b16 %v622
    %v694 = vunpack.c.h.b16 %v622
    %v695 = vunpack.c.l.b16 %v623
    %v696 = vunpack.c.h.b16 %v623
    %v697 = vunpack.c.l.b16 %v624
    %v698 = vunpack.c.h.b16 %v624
    %v699 = vunpack.c.l.b16 %v625
    %v700 = vunpack.c.h.b16 %v625
    %v701 = vunpack.c.l.b16 %v626
    %v702 = vunpack.c.h.b16 %v626
    %v703 = vunpack.c.l.b16 %v627
    %v704 = vunpack.c.h.b16 %v627
    %v705 = vunpack.c.l.b16 %v628
    %v706 = vunpack.c.h.b16 %v628
    %v707 = vunpack.c.l.b16 %v629
    %v708 = vunpack.c.h.b16 %v629
    %v709 = vunpack.c.l.b16 %v630
    %v710 = vunpack.c.h.b16 %v630
    %v711 = vunpack.c.l.b16 %v631
    %v712 = vunpack.c.h.b16 %v631
    %v713 = vunpack.c.l.b16 %v632
    %v714 = vunpack.c.h.b16 %v632
    %v715 = vunpack.c.l.b16 %v633
    %v716 = vunpack.c.h.b16 %v633
    %v717 = vunpack.c.l.b16 %v634
    %v718 = vunpack.c.h.b16 %v634
    %v719 = vunpack.c.l.b16 %v635
    %v720 = vunpack.c.h.b16 %v635
    %v721 = vunpack.c.l.b16 %v636
    %v722 = vunpack.c.h.b16 %v636
    %v723 = vunpack.c.l.b16 %v637
    %v724 = vunpack.c.h.b16 %v637
    %v725 = vunpack.c.l.b16 %v638
    %v726 = vunpack.c.h.b16 %v638
    %v727 = vunpack.c.l.b16 %v639
    %v728 = vunpack.c.h.b16 %v639
    %v729 = vunpack.c.l.b16 %v640
    %v730 = vunpack.c.h.b16 %v640
    %v731 = vunpack.c.l.b16 %v641
    %v732 = vunpack.c.h.b16 %v641
    %v733 = vunpack.c.l.b16 %v642
    %v734 = vunpack.c.h.b16 %v642
    %v735 = vunpack.c.l.b16 %v643
    %v736 = vunpack.c.h.b16 %v643
    %v737 = vunpack.c.l.b16 %v644
    %v738 = vunpack.c.h.b16 %v644
    %v739 = vunpack.c.l.b16 %v645
    %v740 = vunpack.c.h.b16 %v645
    %v741 = vunpack.c.l.b16 %v646
    %v742 = vunpack.c.h.b16 %v646
    %v743 = vpack.c.b16 %v683, %v679
    %v744 = vpack.c.b16 %v684, %v680
    %v745 = vpack.c.b16 %v685, %v681
    %v746 = vpack.c.b16 %v686, %v682
    %v747 = vpack.c.b16 %v691, %v687
    %v748 = vpack.c.b16 %v692, %v688
    %v749 = vpack.c.b16 %v693, %v689
    %v750 = vpack.c.b16 %v694, %v690
    %v751 = vpack.c.b16 %v699, %v695
    %v752 = vpack.c.b16 %v700, %v696
    %v753 = vpack.c.b16 %v701, %v697
    %v754 = vpack.c.b16 %v702, %v698
    %v755 = vpack.c.b16 %v707, %v703
    %v756 = vpack.c.b16 %v708, %v704
    %v757 = vpack.c.b16 %v709, %v705
    %v758 = vpack.c.b16 %v710, %v706
    %v759 = vpack.c.b16 %v715, %v711
    %v760 = vpack.c.b16 %v716, %v712
    %v761 = vpack.c.b16 %v717, %v713
    %v762 = vpack.c.b16 %v718, %v714
    %v763 = vpack.c.b16 %v723, %v719
    %v764 = vpack.c.b16 %v724, %v720
    %v765 = vpack.c.b16 %v725, %v721
    %v766 = vpack.c.b16 %v726, %v722
    %v767 = vpack.c.b16 %v731, %v727
    %v768 = vpack.c.b16 %v732, %v728
    %v769 = vpack.c.b16 %v733, %v729
    %v770 = vpack.c.b16 %v734, %v730
    %v771 = vpack.c.b16 %v739, %v735
    %v772 = vpack.c.b16 %v740, %v736
    %v773 = vpack.c.b16 %v741, %v737
    %v774 = vpack.c.b16 %v742, %v738
    %807 = vmatprep.subr.bf16.mxu0 %v744
    %808 = vmatpush1.bf16.msra.mxu0 %v743
    %809 = vmatprep.subr.bf16.mxu0 %v748
    %810 = vmatpush1.bf16.msra.mxu0 %v747
    %811 = vmatprep.subr.bf16.mxu0 %v752
    %812 = vmatpush1.bf16.msra.mxu0 %v751
    %813 = vmatprep.subr.bf16.mxu0 %v756
    %814 = vmatpush1.bf16.msra.mxu0 %v755
    %815 = vmatprep.subr.bf16.mxu0 %v760
    %816 = vmatpush1.bf16.msra.mxu0 %v759
    %817 = vmatprep.subr.bf16.mxu0 %v764
    %818 = vmatpush1.bf16.msra.mxu0 %v763
    %819 = vmatprep.subr.bf16.mxu0 %v768
    %820 = vmatpush1.bf16.msra.mxu0 %v767
    %821 = vmatprep.subr.bf16.mxu0 %v772
    %822 = vmatpush1.bf16.msra.mxu0 %v771
    %823 = vmatprep.subr.bf16.mxu0 0
    %824 = vmatpush1.bf16.msra.mxu0 0
    %825 = vmatprep.subr.bf16.mxu0 0
    %826 = vmatpush1.bf16.msra.mxu0 0
    %827 = vmatprep.subr.bf16.mxu0 0
    %828 = vmatpush1.bf16.msra.mxu0 0
    %829 = vmatprep.subr.bf16.mxu0 0
    %830 = vmatpush1.bf16.msra.mxu0 0
    %831 = vmatprep.subr.bf16.mxu0 0
    %832 = vmatpush1.bf16.msra.mxu0 0
    %833 = vmatprep.subr.bf16.mxu0 0
    %834 = vmatpush1.bf16.msra.mxu0 0
    %835 = vmatprep.subr.bf16.mxu0 0
    %836 = vmatpush1.bf16.msra.mxu0 0
    %837 = vmatprep.subr.bf16.mxu0 0
    %838 = vmatpush1.bf16.msra.mxu0 0
    %839 = vmatprep.mubr.bf16.mxu0 0
    %840 = vmatmul.mubr.bf16.gmra.mrb[0].mxu0 %v614
    %v841 = vpop.f32.mrb[0].mxu0
    %v842 = vadd.f32 0.0, %v841
    %v843 = vpop.f32.mrb[0].mxu0
    %v844 = vadd.f32 0.0, %v843
    %v845 = vpop.f32.mrb[0].mxu0
    %v846 = vadd.f32 0.0, %v845
    %v847 = vpop.f32.mrb[0].mxu0
    %v848 = vadd.f32 0.0, %v847
    %849 = vdwg.mxu0
    %850 = vmatprep.subr.bf16.mxu0 %v746
    %851 = vmatpush1.bf16.msra.mxu0 %v745
    %852 = vmatprep.subr.bf16.mxu0 %v750
    %853 = vmatpush1.bf16.msra.mxu0 %v749
    %854 = vmatprep.subr.bf16.mxu0 %v754
    %855 = vmatpush1.bf16.msra.mxu0 %v753
    %856 = vmatprep.subr.bf16.mxu0 %v758
    %857 = vmatpush1.bf16.msra.mxu0 %v757
    %858 = vmatprep.subr.bf16.mxu0 %v762
    %859 = vmatpush1.bf16.msra.mxu0 %v761
    %860 = vmatprep.subr.bf16.mxu0 %v766
    %861 = vmatpush1.bf16.msra.mxu0 %v765
    %862 = vmatprep.subr.bf16.mxu0 %v770
    %863 = vmatpush1.bf16.msra.mxu0 %v769
    %864 = vmatprep.subr.bf16.mxu0 %v774
    %865 = vmatpush1.bf16.msra.mxu0 %v773
    %866 = vmatprep.subr.bf16.mxu0 0
    %867 = vmatpush1.bf16.msra.mxu0 0
    %868 = vmatprep.subr.bf16.mxu0 0
    %869 = vmatpush1.bf16.msra.mxu0 0
    %870 = vmatprep.subr.bf16.mxu0 0
    %871 = vmatpush1.bf16.msra.mxu0 0
    %872 = vmatprep.subr.bf16.mxu0 0
    %873 = vmatpush1.bf16.msra.mxu0 0
    %874 = vmatprep.subr.bf16.mxu0 0
    %875 = vmatpush1.bf16.msra.mxu0 0
    %876 = vmatprep.subr.bf16.mxu0 0
    %877 = vmatpush1.bf16.msra.mxu0 0
    %878 = vmatprep.subr.bf16.mxu0 0
    %879 = vmatpush1.bf16.msra.mxu0 0
    %880 = vmatprep.subr.bf16.mxu0 0
    %881 = vmatpush1.bf16.msra.mxu0 0
    %882 = vmatprep.mubr.bf16.mxu0 0
    %883 = vmatmul.mubr.bf16.gmra.mrb[0].mxu0 %v614
    %v884 = vpop.f32.mrb[0].mxu0
    %v885 = vadd.f32 0.0, %v884
    %v886 = vpop.f32.mrb[0].mxu0
    %v887 = vadd.f32 0.0, %v886
    %v888 = vpop.f32.mrb[0].mxu0
    %v889 = vadd.f32 0.0, %v888
    %v890 = vpop.f32.mrb[0].mxu0
    %v891 = vadd.f32 0.0, %v890
    %892 = vdwg.mxu0
    %v893 = vadd.f32 %v606, %v842
    %v894 = vadd.f32 %v607, %v844
    %v895 = vadd.f32 %v608, %v885
    %v896 = vadd.f32 %v609, %v887
    %v897 = vadd.f32 %v610, %v846
    %v898 = vadd.f32 %v611, %v848
    %v899 = vadd.f32 %v612, %v889
    %v900 = vadd.f32 %v613, %v891
    %v901 = vmul.f32 %v893, 0.5
    %v902 = vmul.f32 %v894, 0.5
    %v903 = vmul.f32 %v895, 0.5
    %v904 = vmul.f32 %v896, 0.5
    %v905 = vmul.f32 %v897, 0.5
    %v906 = vmul.f32 %v898, 0.5
    %v907 = vmul.f32 %v899, 0.5
    %v908 = vmul.f32 %v900, 0.5
    %v909 = vtanh.pop %v901
    %v910 = vtanh.pop %v902
    %v911 = vtanh.pop %v903
    %v912 = vtanh.pop %v904
    %v913 = vtanh.pop %v905
    %v914 = vtanh.pop %v906
    %v915 = vtanh.pop %v907
    %v916 = vtanh.pop %v908
    %v917 = vmul.f32 %v909, 0.5
    %v918 = vmul.f32 %v910, 0.5
    %v919 = vmul.f32 %v911, 0.5
    %v920 = vmul.f32 %v912, 0.5
    %v921 = vmul.f32 %v913, 0.5
    %v922 = vmul.f32 %v914, 0.5
    %v923 = vmul.f32 %v915, 0.5
    %v924 = vmul.f32 %v916, 0.5
    %v925 = vadd.f32 %v917, 0.5
    %v926 = vadd.f32 %v918, 0.5
    %v927 = vadd.f32 %v919, 0.5
    %v928 = vadd.f32 %v920, 0.5
    %v929 = vadd.f32 %v921, 0.5
    %v930 = vadd.f32 %v922, 0.5
    %v931 = vadd.f32 %v923, 0.5
    %v932 = vadd.f32 %v924, 0.5
    %v933 = vmul.f32 %v926, %v601
    %v934 = vmul.f32 %v930, %v602
    %v935 = vadd.f32 %v933, %v927
    %v936 = vadd.f32 %v934, %v931
    %v937 = vsub.f32 %v935, %v925
    %v938 = vsub.f32 %v936, %v929
    %v939 = vmul.f32 %v937, 0.5
    %v940 = vmul.f32 %v938, 0.5
    %v941 = vtanh.pop %v939
    %v942 = vtanh.pop %v940
    %v943 = vmul.f32 %v941, 0.5
    %v944 = vmul.f32 %v942, 0.5
    %v945 = vadd.f32 %v943, 0.5
    %v946 = vadd.f32 %v944, 0.5
    %v947 = vsub.f32 %v945, %v928
    %v948 = vsub.f32 %v946, %v932
    %v949 = vpack.c.bf16 %v948, %v947
    %v951 = vunpack.c.l.b16 %v949
    %v952 = vunpack.c.h.b16 %v949
    %v953 = vpack.c.b16 %v951, %v951
    %v954 = vpack.c.b16 %v952, %v952
    %957 = vst [vmem:[%s4] sm:$0xf] %v953
    %958 = vst [vmem:[%s4 + $0x4] sm:$0xf] %v954
    %s959 = smul.u32 2, 4
    %s960 = smul.addr %s959, 8
    %s961 = scalar_lea.vmem [#allocation2], %s960
    %v962 = vld [vmem:[%s961] sm:$0xff]
    %v963 = vld [vmem:[%s961 + $0x8] sm:$0xff]
    %v964 = vld [vmem:[%s961 + $0x10] sm:$0xff]
    %v965 = vld [vmem:[%s961 + $0x18] sm:$0xff]
    %v966 = vld [vmem:[%s961 + $0x20] sm:$0xff]
    %v967 = vld [vmem:[%s961 + $0x28] sm:$0xff]
    %v968 = vld [vmem:[%s961 + $0x30] sm:$0xff]
    %v969 = vld [vmem:[%s961 + $0x38] sm:$0xff]
    %v970 = vld [vmem:[%s2] sm:$0xff]
    %v971 = vld [vmem:[%s2 + $0x8] sm:$0xff]
    %v972 = vld [vmem:[%s2 + $0x10] sm:$0xff]
    %v973 = vld [vmem:[%s2 + $0x18] sm:$0xff]
    %v974 = vld [vmem:[%s2 + $0x20] sm:$0xff]
    %v975 = vld [vmem:[%s2 + $0x28] sm:$0xff]
    %v976 = vld [vmem:[%s2 + $0x30] sm:$0xff]
    %v977 = vld [vmem:[%s2 + $0x38] sm:$0xff]
    %v978 = vld [vmem:[%s2 + $0x40] sm:$0xff]
    %v979 = vld [vmem:[%s2 + $0x48] sm:$0xff]
    %v980 = vld [vmem:[%s2 + $0x50] sm:$0xff]
    %v981 = vld [vmem:[%s2 + $0x58] sm:$0xff]
    %v982 = vld [vmem:[%s2 + $0x60] sm:$0xff]
    %v983 = vld [vmem:[%s2 + $0x68] sm:$0xff]
    %v984 = vld [vmem:[%s2 + $0x70] sm:$0xff]
    %v985 = vld [vmem:[%s2 + $0x78] sm:$0xff]
    %v986 = vld [vmem:[%s2 + $0x80] sm:$0xff]
    %v987 = vld [vmem:[%s2 + $0x88] sm:$0xff]
    %v988 = vld [vmem:[%s2 + $0x90] sm:$0xff]
    %v989 = vld [vmem:[%s2 + $0x98] sm:$0xff]
    %v990 = vld [vmem:[%s2 + $0xa0] sm:$0xff]
    %v991 = vld [vmem:[%s2 + $0xa8] sm:$0xff]
    %v992 = vld [vmem:[%s2 + $0xb0] sm:$0xff]
    %v993 = vld [vmem:[%s2 + $0xb8] sm:$0xff]
    %v994 = vld [vmem:[%s2 + $0xc0] sm:$0xff]
    %v995 = vld [vmem:[%s2 + $0xc8] sm:$0xff]
    %v996 = vld [vmem:[%s2 + $0xd0] sm:$0xff]
    %v997 = vld [vmem:[%s2 + $0xd8] sm:$0xff]
    %v998 = vld [vmem:[%s2 + $0xe0] sm:$0xff]
    %v999 = vld [vmem:[%s2 + $0xe8] sm:$0xff]
    %v1000 = vld [vmem:[%s2 + $0xf0] sm:$0xff]
    %v1001 = vld [vmem:[%s2 + $0xf8] sm:$0xff]
    %v1034 = vunpack.c.l.b16 %v970
    %v1035 = vunpack.c.h.b16 %v970
    %v1036 = vunpack.c.l.b16 %v971
    %v1037 = vunpack.c.h.b16 %v971
    %v1038 = vunpack.c.l.b16 %v972
    %v1039 = vunpack.c.h.b16 %v972
    %v1040 = vunpack.c.l.b16 %v973
    %v1041 = vunpack.c.h.b16 %v973
    %v1042 = vunpack.c.l.b16 %v974
    %v1043 = vunpack.c.h.b16 %v974
    %v1044 = vunpack.c.l.b16 %v975
    %v1045 = vunpack.c.h.b16 %v975
    %v1046 = vunpack.c.l.b16 %v976
    %v1047 = vunpack.c.h.b16 %v976
    %v1048 = vunpack.c.l.b16 %v977
    %v1049 = vunpack.c.h.b16 %v977
    %v1050 = vunpack.c.l.b16 %v978
    %v1051 = vunpack.c.h.b16 %v978
    %v1052 = vunpack.c.l.b16 %v979
    %v1053 = vunpack.c.h.b16 %v979
    %v1054 = vunpack.c.l.b16 %v980
    %v1055 = vunpack.c.h.b16 %v980
    %v1056 = vunpack.c.l.b16 %v981
    %v1057 = vunpack.c.h.b16 %v981
    %v1058 = vunpack.c.l.b16 %v982
    %v1059 = vunpack.c.h.b16 %v982
    %v1060 = vunpack.c.l.b16 %v983
    %v1061 = vunpack.c.h.b16 %v983
    %v1062 = vunpack.c.l.b16 %v984
    %v1063 = vunpack.c.h.b16 %v984
    %v1064 = vunpack.c.l.b16 %v985
    %v1065 = vunpack.c.h.b16 %v985
    %v1066 = vunpack.c.l.b16 %v986
    %v1067 = vunpack.c.h.b16 %v986
    %v1068 = vunpack.c.l.b16 %v987
    %v1069 = vunpack.c.h.b16 %v987
    %v1070 = vunpack.c.l.b16 %v988
    %v1071 = vunpack.c.h.b16 %v988
    %v1072 = vunpack.c.l.b16 %v989
    %v1073 = vunpack.c.h.b16 %v989
    %v1074 = vunpack.c.l.b16 %v990
    %v1075 = vunpack.c.h.b16 %v990
    %v1076 = vunpack.c.l.b16 %v991
    %v1077 = vunpack.c.h.b16 %v991
    %v1078 = vunpack.c.l.b16 %v992
    %v1079 = vunpack.c.h.b16 %v992
    %v1080 = vunpack.c.l.b16 %v993
    %v1081 = vunpack.c.h.b16 %v993
    %v1082 = vunpack.c.l.b16 %v994
    %v1083 = vunpack.c.h.b16 %v994
    %v1084 = vunpack.c.l.b16 %v995
    %v1085 = vunpack.c.h.b16 %v995
    %v1086 = vunpack.c.l.b16 %v996
    %v1087 = vunpack.c.h.b16 %v996
    %v1088 = vunpack.c.l.b16 %v997
    %v1089 = vunpack.c.h.b16 %v997
    %v1090 = vunpack.c.l.b16 %v998
    %v1091 = vunpack.c.h.b16 %v998
    %v1092 = vunpack.c.l.b16 %v999
    %v1093 = vunpack.c.h.b16 %v999
    %v1094 = vunpack.c.l.b16 %v1000
    %v1095 = vunpack.c.h.b16 %v1000
    %v1096 = vunpack.c.l.b16 %v1001
    %v1097 = vunpack.c.h.b16 %v1001
    %v1098 = vpack.c.b16 %v1038, %v1034
    %v1099 = vpack.c.b16 %v1039, %v1035
    %v1100 = vpack.c.b16 %v1040, %v1036
    %v1101 = vpack.c.b16 %v1041, %v1037
    %v1102 = vpack.c.b16 %v1046, %v1042
    %v1103 = vpack.c.b16 %v1047, %v1043
    %v1104 = vpack.c.b16 %v1048, %v1044
    %v1105 = vpack.c.b16 %v1049, %v1045
    %v1106 = vpack.c.b16 %v1054, %v1050
    %v1107 = vpack.c.b16 %v1055, %v1051
    %v1108 = vpack.c.b16 %v1056, %v1052
    %v1109 = vpack.c.b16 %v1057, %v1053
    %v1110 = vpack.c.b16 %v1062, %v1058
    %v1111 = vpack.c.b16 %v1063, %v1059
    %v1112 = vpack.c.b16 %v1064, %v1060
    %v1113 = vpack.c.b16 %v1065, %v1061
    %v1114 = vpack.c.b16 %v1070, %v1066
    %v1115 = vpack.c.b16 %v1071, %v1067
    %v1116 = vpack.c.b16 %v1072, %v1068
    %v1117 = vpack.c.b16 %v1073, %v1069
    %v1118 = vpack.c.b16 %v1078, %v1074
    %v1119 = vpack.c.b16 %v1079, %v1075
    %v1120 = vpack.c.b16 %v1080, %v1076
    %v1121 = vpack.c.b16 %v1081, %v1077
    %v1122 = vpack.c.b16 %v1086, %v1082
    %v1123 = vpack.c.b16 %v1087, %v1083
    %v1124 = vpack.c.b16 %v1088, %v1084
    %v1125 = vpack.c.b16 %v1089, %v1085
    %v1126 = vpack.c.b16 %v1094, %v1090
    %v1127 = vpack.c.b16 %v1095, %v1091
    %v1128 = vpack.c.b16 %v1096, %v1092
    %v1129 = vpack.c.b16 %v1097, %v1093
    %1162 = vmatprep.subr.bf16.mxu0 %v1099
    %1163 = vmatpush1.bf16.msra.mxu0 %v1098
    %1164 = vmatprep.subr.bf16.mxu0 %v1103
    %1165 = vmatpush1.bf16.msra.mxu0 %v1102
    %1166 = vmatprep.subr.bf16.mxu0 %v1107
    %1167 = vmatpush1.bf16.msra.mxu0 %v1106
    %1168 = vmatprep.subr.bf16.mxu0 %v1111
    %1169 = vmatpush1.bf16.msra.mxu0 %v1110
    %1170 = vmatprep.subr.bf16.mxu0 %v1115
    %1171 = vmatpush1.bf16.msra.mxu0 %v1114
    %1172 = vmatprep.subr.bf16.mxu0 %v1119
    %1173 = vmatpush1.bf16.msra.mxu0 %v1118
    %1174 = vmatprep.subr.bf16.mxu0 %v1123
    %1175 = vmatpush1.bf16.msra.mxu0 %v1122
    %1176 = vmatprep.subr.bf16.mxu0 %v1127
    %1177 = vmatpush1.bf16.msra.mxu0 %v1126
    %1178 = vmatprep.subr.bf16.mxu0 0
    %1179 = vmatpush1.bf16.msra.mxu0 0
    %1180 = vmatprep.subr.bf16.mxu0 0
    %1181 = vmatpush1.bf16.msra.mxu0 0
    %1182 = vmatprep.subr.bf16.mxu0 0
    %1183 = vmatpush1.bf16.msra.mxu0 0
    %1184 = vmatprep.subr.bf16.mxu0 0
    %1185 = vmatpush1.bf16.msra.mxu0 0
    %1186 = vmatprep.subr.bf16.mxu0 0
    %1187 = vmatpush1.bf16.msra.mxu0 0
    %1188 = vmatprep.subr.bf16.mxu0 0
    %1189 = vmatpush1.bf16.msra.mxu0 0
    %1190 = vmatprep.subr.bf16.mxu0 0
    %1191 = vmatpush1.bf16.msra.mxu0 0
    %1192 = vmatprep.subr.bf16.mxu0 0
    %1193 = vmatpush1.bf16.msra.mxu0 0
    %1194 = vmatprep.mubr.bf16.mxu0 0
    %1195 = vmatmul.mubr.bf16.gmra.mrb[0].mxu0 %v949
    %v1196 = vpop.f32.mrb[0].mxu0
    %v1197 = vadd.f32 0.0, %v1196
    %v1198 = vpop.f32.mrb[0].mxu0
    %v1199 = vadd.f32 0.0, %v1198
    %v1200 = vpop.f32.mrb[0].mxu0
    %v1201 = vadd.f32 0.0, %v1200
    %v1202 = vpop.f32.mrb[0].mxu0
    %v1203 = vadd.f32 0.0, %v1202
    %1204 = vdwg.mxu0
    %1205 = vmatprep.subr.bf16.mxu0 %v1101
    %1206 = vmatpush1.bf16.msra.mxu0 %v1100
    %1207 = vmatprep.subr.bf16.mxu0 %v1105
    %1208 = vmatpush1.bf16.msra.mxu0 %v1104
    %1209 = vmatprep.subr.bf16.mxu0 %v1109
    %1210 = vmatpush1.bf16.msra.mxu0 %v1108
    %1211 = vmatprep.subr.bf16.mxu0 %v1113
    %1212 = vmatpush1.bf16.msra.mxu0 %v1112
    %1213 = vmatprep.subr.bf16.mxu0 %v1117
    %1214 = vmatpush1.bf16.msra.mxu0 %v1116
    %1215 = vmatprep.subr.bf16.mxu0 %v1121
    %1216 = vmatpush1.bf16.msra.mxu0 %v1120
    %1217 = vmatprep.subr.bf16.mxu0 %v1125
    %1218 = vmatpush1.bf16.msra.mxu0 %v1124
    %1219 = vmatprep.subr.bf16.mxu0 %v1129
    %1220 = vmatpush1.bf16.msra.mxu0 %v1128
    %1221 = vmatprep.subr.bf16.mxu0 0
    %1222 = vmatpush1.bf16.msra.mxu0 0
    %1223 = vmatprep.subr.bf16.mxu0 0
    %1224 = vmatpush1.bf16.msra.mxu0 0
    %1225 = vmatprep.subr.bf16.mxu0 0
    %1226 = vmatpush1.bf16.msra.mxu0 0
    %1227 = vmatprep.subr.bf16.mxu0 0
    %1228 = vmatpush1.bf16.msra.mxu0 0
    %1229 = vmatprep.subr.bf16.mxu0 0
    %1230 = vmatpush1.bf16.msra.mxu0 0
    %1231 = vmatprep.subr.bf16.mxu0 0
    %1232 = vmatpush1.bf16.msra.mxu0 0
    %1233 = vmatprep.subr.bf16.mxu0 0
    %1234 = vmatpush1.bf16.msra.mxu0 0
    %1235 = vmatprep.subr.bf16.mxu0 0
    %1236 = vmatpush1.bf16.msra.mxu0 0
    %1237 = vmatprep.mubr.bf16.mxu0 0
    %1238 = vmatmul.mubr.bf16.gmra.mrb[0].mxu0 %v949
    %v1239 = vpop.f32.mrb[0].mxu0
    %v1240 = vadd.f32 0.0, %v1239
    %v1241 = vpop.f32.mrb[0].mxu0
    %v1242 = vadd.f32 0.0, %v1241
    %v1243 = vpop.f32.mrb[0].mxu0
    %v1244 = vadd.f32 0.0, %v1243
    %v1245 = vpop.f32.mrb[0].mxu0
    %v1246 = vadd.f32 0.0, %v1245
    %1247 = vdwg.mxu0
    %v1248 = vadd.f32 %v962, %v1197
    %v1249 = vadd.f32 %v963, %v1199
    %v1250 = vadd.f32 %v964, %v1240
    %v1251 = vadd.f32 %v965, %v1242
    %v1252 = vadd.f32 %v966, %v1201
    %v1253 = vadd.f32 %v967, %v1203
    %v1254 = vadd.f32 %v968, %v1244
    %v1255 = vadd.f32 %v969, %v1246
    %v1256 = vmul.f32 %v1248, 0.5
    %v1257 = vmul.f32 %v1249, 0.5
    %v1258 = vmul.f32 %v1250, 0.5
    %v1259 = vmul.f32 %v1251, 0.5
    %v1260 = vmul.f32 %v1252, 0.5
    %v1261 = vmul.f32 %v1253, 0.5
    %v1262 = vmul.f32 %v1254, 0.5
    %v1263 = vmul.f32 %v1255, 0.5
    %v1264 = vtanh.pop %v1256
    %v1265 = vtanh.pop %v1257
    %v1266 = vtanh.pop %v1258
    %v1267 = vtanh.pop %v1259
    %v1268 = vtanh.pop %v1260
    %v1269 = vtanh.pop %v1261
    %v1270 = vtanh.pop %v1262
    %v1271 = vtanh.pop %v1263
    %v1272 = vmul.f32 %v1264, 0.5
    %v1273 = vmul.f32 %v1265, 0.5
    %v1274 = vmul.f32 %v1266, 0.5
    %v1275 = vmul.f32 %v1267, 0.5
    %v1276 = vmul.f32 %v1268, 0.5
    %v1277 = vmul.f32 %v1269, 0.5
    %v1278 = vmul.f32 %v1270, 0.5
    %v1279 = vmul.f32 %v1271, 0.5
    %v1280 = vadd.f32 %v1272, 0.5
    %v1281 = vadd.f32 %v1273, 0.5
    %v1282 = vadd.f32 %v1274, 0.5
    %v1283 = vadd.f32 %v1275, 0.5
    %v1284 = vadd.f32 %v1276, 0.5
    %v1285 = vadd.f32 %v1277, 0.5
    %v1286 = vadd.f32 %v1278, 0.5
    %v1287 = vadd.f32 %v1279, 0.5
    %v1288 = vmul.f32 %v1281, %v937
    %v1289 = vmul.f32 %v1285, %v938
    %v1290 = vadd.f32 %v1288, %v1282
    %v1291 = vadd.f32 %v1289, %v1286
    %v1292 = vsub.f32 %v1290, %v1280
    %v1293 = vsub.f32 %v1291, %v1284
    %v1294 = vmul.f32 %v1292, 0.5
    %v1295 = vmul.f32 %v1293, 0.5
    %v1296 = vtanh.pop %v1294
    %v1297 = vtanh.pop %v1295
    %v1298 = vmul.f32 %v1296, 0.5
    %v1299 = vmul.f32 %v1297, 0.5
    %v1300 = vadd.f32 %v1298, 0.5
    %v1301 = vadd.f32 %v1299, 0.5
    %v1302 = vsub.f32 %v1300, %v1283
    %v1303 = vsub.f32 %v1301, %v1287
    %v1304 = vpack.c.bf16 %v1303, %v1302
    %v1306 = vunpack.c.l.b16 %v1304
    %v1307 = vunpack.c.h.b16 %v1304
    %v1308 = vpack.c.b16 %v1306, %v1306
    %v1309 = vpack.c.b16 %v1307, %v1307
    %s1312 = scalar_lea.vmem %s4, 8
    %1313 = vst [vmem:[%s1312] sm:$0xf] %v1308
    %1314 = vst [vmem:[%s1312 + $0x4] sm:$0xf] %v1309
    %s1315 = smul.u32 4, 4
    %s1316 = smul.addr %s1315, 8
    %s1317 = scalar_lea.vmem [#allocation2], %s1316
    %v1318 = vld [vmem:[%s1317] sm:$0xff]
    %v1319 = vld [vmem:[%s1317 + $0x8] sm:$0xff]
    %v1320 = vld [vmem:[%s1317 + $0x10] sm:$0xff]
    %v1321 = vld [vmem:[%s1317 + $0x18] sm:$0xff]
    %v1322 = vld [vmem:[%s1317 + $0x20] sm:$0xff]
    %v1323 = vld [vmem:[%s1317 + $0x28] sm:$0xff]
    %v1324 = vld [vmem:[%s1317 + $0x30] sm:$0xff]
    %v1325 = vld [vmem:[%s1317 + $0x38] sm:$0xff]
    %v1326 = vld [vmem:[%s2] sm:$0xff]
    %v1327 = vld [vmem:[%s2 + $0x8] sm:$0xff]
    %v1328 = vld [vmem:[%s2 + $0x10] sm:$0xff]
    %v1329 = vld [vmem:[%s2 + $0x18] sm:$0xff]
    %v1330 = vld [vmem:[%s2 + $0x20] sm:$0xff]
    %v1331 = vld [vmem:[%s2 + $0x28] sm:$0xff]
    %v1332 = vld [vmem:[%s2 + $0x30] sm:$0xff]
    %v1333 = vld [vmem:[%s2 + $0x38] sm:$0xff]
    %v1334 = vld [vmem:[%s2 + $0x40] sm:$0xff]
    %v1335 = vld [vmem:[%s2 + $0x48] sm:$0xff]
    %v1336 = vld [vmem:[%s2 + $0x50] sm:$0xff]
    %v1337 = vld [vmem:[%s2 + $0x58] sm:$0xff]
    %v1338 = vld [vmem:[%s2 + $0x60] sm:$0xff]
    %v1339 = vld [vmem:[%s2 + $0x68] sm:$0xff]
    %v1340 = vld [vmem:[%s2 + $0x70] sm:$0xff]
    %v1341 = vld [vmem:[%s2 + $0x78] sm:$0xff]
    %v1342 = vld [vmem:[%s2 + $0x80] sm:$0xff]
    %v1343 = vld [vmem:[%s2 + $0x88] sm:$0xff]
    %v1344 = vld [vmem:[%s2 + $0x90] sm:$0xff]
    %v1345 = vld [vmem:[%s2 + $0x98] sm:$0xff]
    %v1346 = vld [vmem:[%s2 + $0xa0] sm:$0xff]
    %v1347 = vld [vmem:[%s2 + $0xa8] sm:$0xff]
    %v1348 = vld [vmem:[%s2 + $0xb0] sm:$0xff]
    %v1349 = vld [vmem:[%s2 + $0xb8] sm:$0xff]
    %v1350 = vld [vmem:[%s2 + $0xc0] sm:$0xff]
    %v1351 = vld [vmem:[%s2 + $0xc8] sm:$0xff]
    %v1352 = vld [vmem:[%s2 + $0xd0] sm:$0xff]
    %v1353 = vld [vmem:[%s2 + $0xd8] sm:$0xff]
    %v1354 = vld [vmem:[%s2 + $0xe0] sm:$0xff]
    %v1355 = vld [vmem:[%s2 + $0xe8] sm:$0xff]
    %v1356 = vld [vmem:[%s2 + $0xf0] sm:$0xff]
    %v1357 = vld [vmem:[%s2 + $0xf8] sm:$0xff]
    %v1390 = vunpack.c.l.b16 %v1326
    %v1391 = vunpack.c.h.b16 %v1326
    %v1392 = vunpack.c.l.b16 %v1327
    %v1393 = vunpack.c.h.b16 %v1327
    %v1394 = vunpack.c.l.b16 %v1328
    %v1395 = vunpack.c.h.b16 %v1328
    %v1396 = vunpack.c.l.b16 %v1329
    %v1397 = vunpack.c.h.b16 %v1329
    %v1398 = vunpack.c.l.b16 %v1330
    %v1399 = vunpack.c.h.b16 %v1330
    %v1400 = vunpack.c.l.b16 %v1331
    %v1401 = vunpack.c.h.b16 %v1331
    %v1402 = vunpack.c.l.b16 %v1332
    %v1403 = vunpack.c.h.b16 %v1332
    %v1404 = vunpack.c.l.b16 %v1333
    %v1405 = vunpack.c.h.b16 %v1333
    %v1406 = vunpack.c.l.b16 %v1334
    %v1407 = vunpack.c.h.b16 %v1334
    %v1408 = vunpack.c.l.b16 %v1335
    %v1409 = vunpack.c.h.b16 %v1335
    %v1410 = vunpack.c.l.b16 %v1336
    %v1411 = vunpack.c.h.b16 %v1336
    %v1412 = vunpack.c.l.b16 %v1337
    %v1413 = vunpack.c.h.b16 %v1337
    %v1414 = vunpack.c.l.b16 %v1338
    %v1415 = vunpack.c.h.b16 %v1338
    %v1416 = vunpack.c.l.b16 %v1339
    %v1417 = vunpack.c.h.b16 %v1339
    %v1418 = vunpack.c.l.b16 %v1340
    %v1419 = vunpack.c.h.b16 %v1340
    %v1420 = vunpack.c.l.b16 %v1341
    %v1421 = vunpack.c.h.b16 %v1341
    %v1422 = vunpack.c.l.b16 %v1342
    %v1423 = vunpack.c.h.b16 %v1342
    %v1424 = vunpack.c.l.b16 %v1343
    %v1425 = vunpack.c.h.b16 %v1343
    %v1426 = vunpack.c.l.b16 %v1344
    %v1427 = vunpack.c.h.b16 %v1344
    %v1428 = vunpack.c.l.b16 %v1345
    %v1429 = vunpack.c.h.b16 %v1345
    %v1430 = vunpack.c.l.b16 %v1346
    %v1431 = vunpack.c.h.b16 %v1346
    %v1432 = vunpack.c.l.b16 %v1347
    %v1433 = vunpack.c.h.b16 %v1347
    %v1434 = vunpack.c.l.b16 %v1348
    %v1435 = vunpack.c.h.b16 %v1348
    %v1436 = vunpack.c.l.b16 %v1349
    %v1437 = vunpack.c.h.b16 %v1349
    %v1438 = vunpack.c.l.b16 %v1350
    %v1439 = vunpack.c.h.b16 %v1350
    %v1440 = vunpack.c.l.b16 %v1351
    %v1441 = vunpack.c.h.b16 %v1351
    %v1442 = vunpack.c.l.b16 %v1352
    %v1443 = vunpack.c.h.b16 %v1352
    %v1444 = vunpack.c.l.b16 %v1353
    %v1445 = vunpack.c.h.b16 %v1353
    %v1446 = vunpack.c.l.b16 %v1354
    %v1447 = vunpack.c.h.b16 %v1354
    %v1448 = vunpack.c.l.b16 %v1355
    %v1449 = vunpack.c.h.b16 %v1355
    %v1450 = vunpack.c.l.b16 %v1356
    %v1451 = vunpack.c.h.b16 %v1356
    %v1452 = vunpack.c.l.b16 %v1357
    %v1453 = vunpack.c.h.b16 %v1357
    %v1454 = vpack.c.b16 %v1394, %v1390
    %v1455 = vpack.c.b16 %v1395, %v1391
    %v1456 = vpack.c.b16 %v1396, %v1392
    %v1457 = vpack.c.b16 %v1397, %v1393
    %v1458 = vpack.c.b16 %v1402, %v1398
    %v1459 = vpack.c.b16 %v1403, %v1399
    %v1460 = vpack.c.b16 %v1404, %v1400
    %v1461 = vpack.c.b16 %v1405, %v1401
    %v1462 = vpack.c.b16 %v1410, %v1406
    %v1463 = vpack.c.b16 %v1411, %v1407
    %v1464 = vpack.c.b16 %v1412, %v1408
    %v1465 = vpack.c.b16 %v1413, %v1409
    %v1466 = vpack.c.b16 %v1418, %v1414
    %v1467 = vpack.c.b16 %v1419, %v1415
    %v1468 = vpack.c.b16 %v1420, %v1416
    %v1469 = vpack.c.b16 %v1421, %v1417
    %v1470 = vpack.c.b16 %v1426, %v1422
    %v1471 = vpack.c.b16 %v1427, %v1423
    %v1472 = vpack.c.b16 %v1428, %v1424
    %v1473 = vpack.c.b16 %v1429, %v1425
    %v1474 = vpack.c.b16 %v1434, %v1430
    %v1475 = vpack.c.b16 %v1435, %v1431
    %v1476 = vpack.c.b16 %v1436, %v1432
    %v1477 = vpack.c.b16 %v1437, %v1433
    %v1478 = vpack.c.b16 %v1442, %v1438
    %v1479 = vpack.c.b16 %v1443, %v1439
    %v1480 = vpack.c.b16 %v1444, %v1440
    %v1481 = vpack.c.b16 %v1445, %v1441
    %v1482 = vpack.c.b16 %v1450, %v1446
    %v1483 = vpack.c.b16 %v1451, %v1447
    %v1484 = vpack.c.b16 %v1452, %v1448
    %v1485 = vpack.c.b16 %v1453, %v1449
    %1518 = vmatprep.subr.bf16.mxu0 %v1455
    %1519 = vmatpush1.bf16.msra.mxu0 %v1454
    %1520 = vmatprep.subr.bf16.mxu0 %v1459
    %1521 = vmatpush1.bf16.msra.mxu0 %v1458
    %1522 = vmatprep.subr.bf16.mxu0 %v1463
    %1523 = vmatpush1.bf16.msra.mxu0 %v1462
    %1524 = vmatprep.subr.bf16.mxu0 %v1467
    %1525 = vmatpush1.bf16.msra.mxu0 %v1466
    %1526 = vmatprep.subr.bf16.mxu0 %v1471
    %1527 = vmatpush1.bf16.msra.mxu0 %v1470
    %1528 = vmatprep.subr.bf16.mxu0 %v1475
    %1529 = vmatpush1.bf16.msra.mxu0 %v1474
    %1530 = vmatprep.subr.bf16.mxu0 %v1479
    %1531 = vmatpush1.bf16.msra.mxu0 %v1478
    %1532 = vmatprep.subr.bf16.mxu0 %v1483
    %1533 = vmatpush1.bf16.msra.mxu0 %v1482
    %1534 = vmatprep.subr.bf16.mxu0 0
    %1535 = vmatpush1.bf16.msra.mxu0 0
    %1536 = vmatprep.subr.bf16.mxu0 0
    %1537 = vmatpush1.bf16.msra.mxu0 0
    %1538 = vmatprep.subr.bf16.mxu0 0
    %1539 = vmatpush1.bf16.msra.mxu0 0
    %1540 = vmatprep.subr.bf16.mxu0 0
    %1541 = vmatpush1.bf16.msra.mxu0 0
    %1542 = vmatprep.subr.bf16.mxu0 0
    %1543 = vmatpush1.bf16.msra.mxu0 0
    %1544 = vmatprep.subr.bf16.mxu0 0
    %1545 = vmatpush1.bf16.msra.mxu0 0
    %1546 = vmatprep.subr.bf16.mxu0 0
    %1547 = vmatpush1.bf16.msra.mxu0 0
    %1548 = vmatprep.subr.bf16.mxu0 0
    %1549 = vmatpush1.bf16.msra.mxu0 0
    %1550 = vmatprep.mubr.bf16.mxu0 0
    %1551 = vmatmul.mubr.bf16.gmra.mrb[0].mxu0 %v1304
    %v1552 = vpop.f32.mrb[0].mxu0
    %v1553 = vadd.f32 0.0, %v1552
    %v1554 = vpop.f32.mrb[0].mxu0
    %v1555 = vadd.f32 0.0, %v1554
    %v1556 = vpop.f32.mrb[0].mxu0
    %v1557 = vadd.f32 0.0, %v1556
    %v1558 = vpop.f32.mrb[0].mxu0
    %v1559 = vadd.f32 0.0, %v1558
    %1560 = vdwg.mxu0
    %1561 = vmatprep.subr.bf16.mxu0 %v1457
    %1562 = vmatpush1.bf16.msra.mxu0 %v1456
    %1563 = vmatprep.subr.bf16.mxu0 %v1461
    %1564 = vmatpush1.bf16.msra.mxu0 %v1460
    %1565 = vmatprep.subr.bf16.mxu0 %v1465
    %1566 = vmatpush1.bf16.msra.mxu0 %v1464
    %1567 = vmatprep.subr.bf16.mxu0 %v1469
    %1568 = vmatpush1.bf16.msra.mxu0 %v1468
    %1569 = vmatprep.subr.bf16.mxu0 %v1473
    %1570 = vmatpush1.bf16.msra.mxu0 %v1472
    %1571 = vmatprep.subr.bf16.mxu0 %v1477
    %1572 = vmatpush1.bf16.msra.mxu0 %v1476
    %1573 = vmatprep.subr.bf16.mxu0 %v1481
    %1574 = vmatpush1.bf16.msra.mxu0 %v1480
    %1575 = vmatprep.subr.bf16.mxu0 %v1485
    %1576 = vmatpush1.bf16.msra.mxu0 %v1484
    %1577 = vmatprep.subr.bf16.mxu0 0
    %1578 = vmatpush1.bf16.msra.mxu0 0
    %1579 = vmatprep.subr.bf16.mxu0 0
    %1580 = vmatpush1.bf16.msra.mxu0 0
    %1581 = vmatprep.subr.bf16.mxu0 0
    %1582 = vmatpush1.bf16.msra.mxu0 0
    %1583 = vmatprep.subr.bf16.mxu0 0
    %1584 = vmatpush1.bf16.msra.mxu0 0
    %1585 = vmatprep.subr.bf16.mxu0 0
    %1586 = vmatpush1.bf16.msra.mxu0 0
    %1587 = vmatprep.subr.bf16.mxu0 0
    %1588 = vmatpush1.bf16.msra.mxu0 0
    %1589 = vmatprep.subr.bf16.mxu0 0
    %1590 = vmatpush1.bf16.msra.mxu0 0
    %1591 = vmatprep.subr.bf16.mxu0 0
    %1592 = vmatpush1.bf16.msra.mxu0 0
    %1593 = vmatprep.mubr.bf16.mxu0 0
    %1594 = vmatmul.mubr.bf16.gmra.mrb[0].mxu0 %v1304
    %v1595 = vpop.f32.mrb[0].mxu0
    %v1596 = vadd.f32 0.0, %v1595
    %v1597 = vpop.f32.mrb[0].mxu0
    %v1598 = vadd.f32 0.0, %v1597
    %v1599 = vpop.f32.mrb[0].mxu0
    %v1600 = vadd.f32 0.0, %v1599
    %v1601 = vpop.f32.mrb[0].mxu0
    %v1602 = vadd.f32 0.0, %v1601
    %1603 = vdwg.mxu0
    %v1604 = vadd.f32 %v1318, %v1553
    %v1605 = vadd.f32 %v1319, %v1555
    %v1606 = vadd.f32 %v1320, %v1596
    %v1607 = vadd.f32 %v1321, %v1598
    %v1608 = vadd.f32 %v1322, %v1557
    %v1609 = vadd.f32 %v1323, %v1559
    %v1610 = vadd.f32 %v1324, %v1600
    %v1611 = vadd.f32 %v1325, %v1602
    %v1612 = vmul.f32 %v1604, 0.5
    %v1613 = vmul.f32 %v1605, 0.5
    %v1614 = vmul.f32 %v1606, 0.5
    %v1615 = vmul.f32 %v1607, 0.5
    %v1616 = vmul.f32 %v1608, 0.5
    %v1617 = vmul.f32 %v1609, 0.5
    %v1618 = vmul.f32 %v1610, 0.5
    %v1619 = vmul.f32 %v1611, 0.5
    %v1620 = vtanh.pop %v1612
    %v1621 = vtanh.pop %v1613
    %v1622 = vtanh.pop %v1614
    %v1623 = vtanh.pop %v1615
    %v1624 = vtanh.pop %v1616
    %v1625 = vtanh.pop %v1617
    %v1626 = vtanh.pop %v1618
    %v1627 = vtanh.pop %v1619
    %v1628 = vmul.f32 %v1620, 0.5
    %v1629 = vmul.f32 %v1621, 0.5
    %v1630 = vmul.f32 %v1622, 0.5
    %v1631 = vmul.f32 %v1623, 0.5
    %v1632 = vmul.f32 %v1624, 0.5
    %v1633 = vmul.f32 %v1625, 0.5
    %v1634 = vmul.f32 %v1626, 0.5
    %v1635 = vmul.f32 %v1627, 0.5
    %v1636 = vadd.f32 %v1628, 0.5
    %v1637 = vadd.f32 %v1629, 0.5
    %v1638 = vadd.f32 %v1630, 0.5
    %v1639 = vadd.f32 %v1631, 0.5
    %v1640 = vadd.f32 %v1632, 0.5
    %v1641 = vadd.f32 %v1633, 0.5
    %v1642 = vadd.f32 %v1634, 0.5
    %v1643 = vadd.f32 %v1635, 0.5
    %v1644 = vmul.f32 %v1637, %v1292
    %v1645 = vmul.f32 %v1641, %v1293
    %v1646 = vadd.f32 %v1644, %v1638
    %v1647 = vadd.f32 %v1645, %v1642
    %v1648 = vsub.f32 %v1646, %v1636
    %v1649 = vsub.f32 %v1647, %v1640
    %v1650 = vmul.f32 %v1648, 0.5
    %v1651 = vmul.f32 %v1649, 0.5
    %v1652 = vtanh.pop %v1650
    %v1653 = vtanh.pop %v1651
    %v1654 = vmul.f32 %v1652, 0.5
    %v1655 = vmul.f32 %v1653, 0.5
    %v1656 = vadd.f32 %v1654, 0.5
    %v1657 = vadd.f32 %v1655, 0.5
    %v1658 = vsub.f32 %v1656, %v1639
    %v1659 = vsub.f32 %v1657, %v1643
    %v1660 = vpack.c.bf16 %v1659, %v1658
    %v1662 = vunpack.c.l.b16 %v1660
    %v1663 = vunpack.c.h.b16 %v1660
    %v1664 = vpack.c.b16 %v1662, %v1662
    %v1665 = vpack.c.b16 %v1663, %v1663
    %s1668 = scalar_lea.vmem %s4, 16
    %1669 = vst [vmem:[%s1668] sm:$0xf] %v1664
    %1670 = vst [vmem:[%s1668 + $0x4] sm:$0xf] %v1665
    %s1671 = smul.u32 6, 4
    %s1672 = smul.addr %s1671, 8
    %s1673 = scalar_lea.vmem [#allocation2], %s1672
    %v1674 = vld [vmem:[%s1673] sm:$0xff]
    %v1675 = vld [vmem:[%s1673 + $0x8] sm:$0xff]
    %v1676 = vld [vmem:[%s1673 + $0x10] sm:$0xff]
    %v1677 = vld [vmem:[%s1673 + $0x18] sm:$0xff]
    %v1678 = vld [vmem:[%s1673 + $0x20] sm:$0xff]
    %v1679 = vld [vmem:[%s1673 + $0x28] sm:$0xff]
    %v1680 = vld [vmem:[%s1673 + $0x30] sm:$0xff]
    %v1681 = vld [vmem:[%s1673 + $0x38] sm:$0xff]
    %v1682 = vld [vmem:[%s2] sm:$0xff]
    %v1683 = vld [vmem:[%s2 + $0x8] sm:$0xff]
    %v1684 = vld [vmem:[%s2 + $0x10] sm:$0xff]
    %v1685 = vld [vmem:[%s2 + $0x18] sm:$0xff]
    %v1686 = vld [vmem:[%s2 + $0x20] sm:$0xff]
    %v1687 = vld [vmem:[%s2 + $0x28] sm:$0xff]
    %v1688 = vld [vmem:[%s2 + $0x30] sm:$0xff]
    %v1689 = vld [vmem:[%s2 + $0x38] sm:$0xff]
    %v1690 = vld [vmem:[%s2 + $0x40] sm:$0xff]
    %v1691 = vld [vmem:[%s2 + $0x48] sm:$0xff]
    %v1692 = vld [vmem:[%s2 + $0x50] sm:$0xff]
    %v1693 = vld [vmem:[%s2 + $0x58] sm:$0xff]
    %v1694 = vld [vmem:[%s2 + $0x60] sm:$0xff]
    %v1695 = vld [vmem:[%s2 + $0x68] sm:$0xff]
    %v1696 = vld [vmem:[%s2 + $0x70] sm:$0xff]
    %v1697 = vld [vmem:[%s2 + $0x78] sm:$0xff]
    %v1698 = vld [vmem:[%s2 + $0x80] sm:$0xff]
    %v1699 = vld [vmem:[%s2 + $0x88] sm:$0xff]
    %v1700 = vld [vmem:[%s2 + $0x90] sm:$0xff]
    %v1701 = vld [vmem:[%s2 + $0x98] sm:$0xff]
    %v1702 = vld [vmem:[%s2 + $0xa0] sm:$0xff]
    %v1703 = vld [vmem:[%s2 + $0xa8] sm:$0xff]
    %v1704 = vld [vmem:[%s2 + $0xb0] sm:$0xff]
    %v1705 = vld [vmem:[%s2 + $0xb8] sm:$0xff]
    %v1706 = vld [vmem:[%s2 + $0xc0] sm:$0xff]
    %v1707 = vld [vmem:[%s2 + $0xc8] sm:$0xff]
    %v1708 = vld [vmem:[%s2 + $0xd0] sm:$0xff]
    %v1709 = vld [vmem:[%s2 + $0xd8] sm:$0xff]
    %v1710 = vld [vmem:[%s2 + $0xe0] sm:$0xff]
    %v1711 = vld [vmem:[%s2 + $0xe8] sm:$0xff]
    %v1712 = vld [vmem:[%s2 + $0xf0] sm:$0xff]
    %v1713 = vld [vmem:[%s2 + $0xf8] sm:$0xff]
    %v1746 = vunpack.c.l.b16 %v1682
    %v1747 = vunpack.c.h.b16 %v1682
    %v1748 = vunpack.c.l.b16 %v1683
    %v1749 = vunpack.c.h.b16 %v1683
    %v1750 = vunpack.c.l.b16 %v1684
    %v1751 = vunpack.c.h.b16 %v1684
    %v1752 = vunpack.c.l.b16 %v1685
    %v1753 = vunpack.c.h.b16 %v1685
    %v1754 = vunpack.c.l.b16 %v1686
    %v1755 = vunpack.c.h.b16 %v1686
    %v1756 = vunpack.c.l.b16 %v1687
    %v1757 = vunpack.c.h.b16 %v1687
    %v1758 = vunpack.c.l.b16 %v1688
    %v1759 = vunpack.c.h.b16 %v1688
    %v1760 = vunpack.c.l.b16 %v1689
    %v1761 = vunpack.c.h.b16 %v1689
    %v1762 = vunpack.c.l.b16 %v1690
    %v1763 = vunpack.c.h.b16 %v1690
    %v1764 = vunpack.c.l.b16 %v1691
    %v1765 = vunpack.c.h.b16 %v1691
    %v1766 = vunpack.c.l.b16 %v1692
    %v1767 = vunpack.c.h.b16 %v1692
    %v1768 = vunpack.c.l.b16 %v1693
    %v1769 = vunpack.c.h.b16 %v1693
    %v1770 = vunpack.c.l.b16 %v1694
    %v1771 = vunpack.c.h.b16 %v1694
    %v1772 = vunpack.c.l.b16 %v1695
    %v1773 = vunpack.c.h.b16 %v1695
    %v1774 = vunpack.c.l.b16 %v1696
    %v1775 = vunpack.c.h.b16 %v1696
    %v1776 = vunpack.c.l.b16 %v1697
    %v1777 = vunpack.c.h.b16 %v1697
    %v1778 = vunpack.c.l.b16 %v1698
    %v1779 = vunpack.c.h.b16 %v1698
    %v1780 = vunpack.c.l.b16 %v1699
    %v1781 = vunpack.c.h.b16 %v1699
    %v1782 = vunpack.c.l.b16 %v1700
    %v1783 = vunpack.c.h.b16 %v1700
    %v1784 = vunpack.c.l.b16 %v1701
    %v1785 = vunpack.c.h.b16 %v1701
    %v1786 = vunpack.c.l.b16 %v1702
    %v1787 = vunpack.c.h.b16 %v1702
    %v1788 = vunpack.c.l.b16 %v1703
    %v1789 = vunpack.c.h.b16 %v1703
    %v1790 = vunpack.c.l.b16 %v1704
    %v1791 = vunpack.c.h.b16 %v1704
    %v1792 = vunpack.c.l.b16 %v1705
    %v1793 = vunpack.c.h.b16 %v1705
    %v1794 = vunpack.c.l.b16 %v1706
    %v1795 = vunpack.c.h.b16 %v1706
    %v1796 = vunpack.c.l.b16 %v1707
    %v1797 = vunpack.c.h.b16 %v1707
    %v1798 = vunpack.c.l.b16 %v1708
    %v1799 = vunpack.c.h.b16 %v1708
    %v1800 = vunpack.c.l.b16 %v1709
    %v1801 = vunpack.c.h.b16 %v1709
    %v1802 = vunpack.c.l.b16 %v1710
    %v1803 = vunpack.c.h.b16 %v1710
    %v1804 = vunpack.c.l.b16 %v1711
    %v1805 = vunpack.c.h.b16 %v1711
    %v1806 = vunpack.c.l.b16 %v1712
    %v1807 = vunpack.c.h.b16 %v1712
    %v1808 = vunpack.c.l.b16 %v1713
    %v1809 = vunpack.c.h.b16 %v1713
    %v1810 = vpack.c.b16 %v1750, %v1746
    %v1811 = vpack.c.b16 %v1751, %v1747
    %v1812 = vpack.c.b16 %v1752, %v1748
    %v1813 = vpack.c.b16 %v1753, %v1749
    %v1814 = vpack.c.b16 %v1758, %v1754
    %v1815 = vpack.c.b16 %v1759, %v1755
    %v1816 = vpack.c.b16 %v1760, %v1756
    %v1817 = vpack.c.b16 %v1761, %v1757
    %v1818 = vpack.c.b16 %v1766, %v1762
    %v1819 = vpack.c.b16 %v1767, %v1763
    %v1820 = vpack.c.b16 %v1768, %v1764
    %v1821 = vpack.c.b16 %v1769, %v1765
    %v1822 = vpack.c.b16 %v1774, %v1770
    %v1823 = vpack.c.b16 %v1775, %v1771
    %v1824 = vpack.c.b16 %v1776, %v1772
    %v1825 = vpack.c.b16 %v1777, %v1773
    %v1826 = vpack.c.b16 %v1782, %v1778
    %v1827 = vpack.c.b16 %v1783, %v1779
    %v1828 = vpack.c.b16 %v1784, %v1780
    %v1829 = vpack.c.b16 %v1785, %v1781
    %v1830 = vpack.c.b16 %v1790, %v1786
    %v1831 = vpack.c.b16 %v1791, %v1787
    %v1832 = vpack.c.b16 %v1792, %v1788
    %v1833 = vpack.c.b16 %v1793, %v1789
    %v1834 = vpack.c.b16 %v1798, %v1794
    %v1835 = vpack.c.b16 %v1799, %v1795
    %v1836 = vpack.c.b16 %v1800, %v1796
    %v1837 = vpack.c.b16 %v1801, %v1797
    %v1838 = vpack.c.b16 %v1806, %v1802
    %v1839 = vpack.c.b16 %v1807, %v1803
    %v1840 = vpack.c.b16 %v1808, %v1804
    %v1841 = vpack.c.b16 %v1809, %v1805
    %1874 = vmatprep.subr.bf16.mxu0 %v1811
    %1875 = vmatpush1.bf16.msra.mxu0 %v1810
    %1876 = vmatprep.subr.bf16.mxu0 %v1815
    %1877 = vmatpush1.bf16.msra.mxu0 %v1814
    %1878 = vmatprep.subr.bf16.mxu0 %v1819
    %1879 = vmatpush1.bf16.msra.mxu0 %v1818
    %1880 = vmatprep.subr.bf16.mxu0 %v1823
    %1881 = vmatpush1.bf16.msra.mxu0 %v1822
    %1882 = vmatprep.subr.bf16.mxu0 %v1827
    %1883 = vmatpush1.bf16.msra.mxu0 %v1826
    %1884 = vmatprep.subr.bf16.mxu0 %v1831
    %1885 = vmatpush1.bf16.msra.mxu0 %v1830
    %1886 = vmatprep.subr.bf16.mxu0 %v1835
    %1887 = vmatpush1.bf16.msra.mxu0 %v1834
    %1888 = vmatprep.subr.bf16.mxu0 %v1839
    %1889 = vmatpush1.bf16.msra.mxu0 %v1838
    %1890 = vmatprep.subr.bf16.mxu0 0
    %1891 = vmatpush1.bf16.msra.mxu0 0
    %1892 = vmatprep.subr.bf16.mxu0 0
    %1893 = vmatpush1.bf16.msra.mxu0 0
    %1894 = vmatprep.subr.bf16.mxu0 0
    %1895 = vmatpush1.bf16.msra.mxu0 0
    %1896 = vmatprep.subr.bf16.mxu0 0
    %1897 = vmatpush1.bf16.msra.mxu0 0
    %1898 = vmatprep.subr.bf16.mxu0 0
    %1899 = vmatpush1.bf16.msra.mxu0 0
    %1900 = vmatprep.subr.bf16.mxu0 0
    %1901 = vmatpush1.bf16.msra.mxu0 0
    %1902 = vmatprep.subr.bf16.mxu0 0
    %1903 = vmatpush1.bf16.msra.mxu0 0
    %1904 = vmatprep.subr.bf16.mxu0 0
    %1905 = vmatpush1.bf16.msra.mxu0 0
    %1906 = vmatprep.mubr.bf16.mxu0 0
    %1907 = vmatmul.mubr.bf16.gmra.mrb[0].mxu0 %v1660
    %v1908 = vpop.f32.mrb[0].mxu0
    %v1909 = vadd.f32 0.0, %v1908
    %v1910 = vpop.f32.mrb[0].mxu0
    %v1911 = vadd.f32 0.0, %v1910
    %v1912 = vpop.f32.mrb[0].mxu0
    %v1913 = vadd.f32 0.0, %v1912
    %v1914 = vpop.f32.mrb[0].mxu0
    %v1915 = vadd.f32 0.0, %v1914
    %1916 = vdwg.mxu0
    %1917 = vmatprep.subr.bf16.mxu0 %v1813
    %1918 = vmatpush1.bf16.msra.mxu0 %v1812
    %1919 = vmatprep.subr.bf16.mxu0 %v1817
    %1920 = vmatpush1.bf16.msra.mxu0 %v1816
    %1921 = vmatprep.subr.bf16.mxu0 %v1821
    %1922 = vmatpush1.bf16.msra.mxu0 %v1820
    %1923 = vmatprep.subr.bf16.mxu0 %v1825
    %1924 = vmatpush1.bf16.msra.mxu0 %v1824
    %1925 = vmatprep.subr.bf16.mxu0 %v1829
    %1926 = vmatpush1.bf16.msra.mxu0 %v1828
    %1927 = vmatprep.subr.bf16.mxu0 %v1833
    %1928 = vmatpush1.bf16.msra.mxu0 %v1832
    %1929 = vmatprep.subr.bf16.mxu0 %v1837
    %1930 = vmatpush1.bf16.msra.mxu0 %v1836
    %1931 = vmatprep.subr.bf16.mxu0 %v1841
    %1932 = vmatpush1.bf16.msra.mxu0 %v1840
    %1933 = vmatprep.subr.bf16.mxu0 0
    %1934 = vmatpush1.bf16.msra.mxu0 0
    %1935 = vmatprep.subr.bf16.mxu0 0
    %1936 = vmatpush1.bf16.msra.mxu0 0
    %1937 = vmatprep.subr.bf16.mxu0 0
    %1938 = vmatpush1.bf16.msra.mxu0 0
    %1939 = vmatprep.subr.bf16.mxu0 0
    %1940 = vmatpush1.bf16.msra.mxu0 0
    %1941 = vmatprep.subr.bf16.mxu0 0
    %1942 = vmatpush1.bf16.msra.mxu0 0
    %1943 = vmatprep.subr.bf16.mxu0 0
    %1944 = vmatpush1.bf16.msra.mxu0 0
    %1945 = vmatprep.subr.bf16.mxu0 0
    %1946 = vmatpush1.bf16.msra.mxu0 0
    %1947 = vmatprep.subr.bf16.mxu0 0
    %1948 = vmatpush1.bf16.msra.mxu0 0
    %1949 = vmatprep.mubr.bf16.mxu0 0
    %1950 = vmatmul.mubr.bf16.gmra.mrb[0].mxu0 %v1660
    %v1951 = vpop.f32.mrb[0].mxu0
    %v1952 = vadd.f32 0.0, %v1951
    %v1953 = vpop.f32.mrb[0].mxu0
    %v1954 = vadd.f32 0.0, %v1953
    %v1955 = vpop.f32.mrb[0].mxu0
    %v1956 = vadd.f32 0.0, %v1955
    %v1957 = vpop.f32.mrb[0].mxu0
    %v1958 = vadd.f32 0.0, %v1957
    %1959 = vdwg.mxu0
    %v1960 = vadd.f32 %v1674, %v1909
    %v1961 = vadd.f32 %v1675, %v1911
    %v1962 = vadd.f32 %v1676, %v1952
    %v1963 = vadd.f32 %v1677, %v1954
    %v1964 = vadd.f32 %v1678, %v1913
    %v1965 = vadd.f32 %v1679, %v1915
    %v1966 = vadd.f32 %v1680, %v1956
    %v1967 = vadd.f32 %v1681, %v1958
    %v1968 = vmul.f32 %v1960, 0.5
    %v1969 = vmul.f32 %v1961, 0.5
    %v1970 = vmul.f32 %v1962, 0.5
    %v1971 = vmul.f32 %v1963, 0.5
    %v1972 = vmul.f32 %v1964, 0.5
    %v1973 = vmul.f32 %v1965, 0.5
    %v1974 = vmul.f32 %v1966, 0.5
    %v1975 = vmul.f32 %v1967, 0.5
    %v1976 = vtanh.pop %v1968
    %v1977 = vtanh.pop %v1969
    %v1978 = vtanh.pop %v1970
    %v1979 = vtanh.pop %v1971
    %v1980 = vtanh.pop %v1972
    %v1981 = vtanh.pop %v1973
    %v1982 = vtanh.pop %v1974
    %v1983 = vtanh.pop %v1975
    %v1984 = vmul.f32 %v1976, 0.5
    %v1985 = vmul.f32 %v1977, 0.5
    %v1986 = vmul.f32 %v1978, 0.5
    %v1987 = vmul.f32 %v1979, 0.5
    %v1988 = vmul.f32 %v1980, 0.5
    %v1989 = vmul.f32 %v1981, 0.5
    %v1990 = vmul.f32 %v1982, 0.5
    %v1991 = vmul.f32 %v1983, 0.5
    %v1992 = vadd.f32 %v1984, 0.5
    %v1993 = vadd.f32 %v1985, 0.5
    %v1994 = vadd.f32 %v1986, 0.5
    %v1995 = vadd.f32 %v1987, 0.5
    %v1996 = vadd.f32 %v1988, 0.5
    %v1997 = vadd.f32 %v1989, 0.5
    %v1998 = vadd.f32 %v1990, 0.5
    %v1999 = vadd.f32 %v1991, 0.5
    %v2000 = vmul.f32 %v1993, %v1648
    %v2001 = vmul.f32 %v1997, %v1649
    %v2002 = vadd.f32 %v2000, %v1994
    %v2003 = vadd.f32 %v2001, %v1998
    %v2004 = vsub.f32 %v2002, %v1992
    %v2005 = vsub.f32 %v2003, %v1996
    %v2006 = vmul.f32 %v2004, 0.5
    %v2007 = vmul.f32 %v2005, 0.5
    %v2008 = vtanh.pop %v2006
    %v2009 = vtanh.pop %v2007
    %v2010 = vmul.f32 %v2008, 0.5
    %v2011 = vmul.f32 %v2009, 0.5
    %v2012 = vadd.f32 %v2010, 0.5
    %v2013 = vadd.f32 %v2011, 0.5
    %v2014 = vsub.f32 %v2012, %v1995
    %v2015 = vsub.f32 %v2013, %v1999
    %v2016 = vpack.c.bf16 %v2015, %v2014
    %v2018 = vunpack.c.l.b16 %v2016
    %v2019 = vunpack.c.h.b16 %v2016
    %v2020 = vpack.c.b16 %v2018, %v2018
    %v2021 = vpack.c.b16 %v2019, %v2019
    %s2024 = scalar_lea.vmem %s4, 24
    %2025 = vst [vmem:[%s2024] sm:$0xf] %v2020
    %2026 = vst [vmem:[%s2024 + $0x4] sm:$0xf] %v2021
    %s2027 = smul.u32 8, 4
    %s2028 = smul.addr %s2027, 8
    %s2029 = scalar_lea.vmem [#allocation2], %s2028
    %v2030 = vld [vmem:[%s2029] sm:$0xff]
    %v2031 = vld [vmem:[%s2029 + $0x8] sm:$0xff]
    %v2032 = vld [vmem:[%s2029 + $0x10] sm:$0xff]
    %v2033 = vld [vmem:[%s2029 + $0x18] sm:$0xff]
    %v2034 = vld [vmem:[%s2029 + $0x20] sm:$0xff]
    %v2035 = vld [vmem:[%s2029 + $0x28] sm:$0xff]
    %v2036 = vld [vmem:[%s2029 + $0x30] sm:$0xff]
    %v2037 = vld [vmem:[%s2029 + $0x38] sm:$0xff]
    %v2038 = vld [vmem:[%s2] sm:$0xff]
    %v2039 = vld [vmem:[%s2 + $0x8] sm:$0xff]
    %v2040 = vld [vmem:[%s2 + $0x10] sm:$0xff]
    %v2041 = vld [vmem:[%s2 + $0x18] sm:$0xff]
    %v2042 = vld [vmem:[%s2 + $0x20] sm:$0xff]
    %v2043 = vld [vmem:[%s2 + $0x28] sm:$0xff]
    %v2044 = vld [vmem:[%s2 + $0x30] sm:$0xff]
    %v2045 = vld [vmem:[%s2 + $0x38] sm:$0xff]
    %v2046 = vld [vmem:[%s2 + $0x40] sm:$0xff]
    %v2047 = vld [vmem:[%s2 + $0x48] sm:$0xff]
    %v2048 = vld [vmem:[%s2 + $0x50] sm:$0xff]
    %v2049 = vld [vmem:[%s2 + $0x58] sm:$0xff]
    %v2050 = vld [vmem:[%s2 + $0x60] sm:$0xff]
    %v2051 = vld [vmem:[%s2 + $0x68] sm:$0xff]
    %v2052 = vld [vmem:[%s2 + $0x70] sm:$0xff]
    %v2053 = vld [vmem:[%s2 + $0x78] sm:$0xff]
    %v2054 = vld [vmem:[%s2 + $0x80] sm:$0xff]
    %v2055 = vld [vmem:[%s2 + $0x88] sm:$0xff]
    %v2056 = vld [vmem:[%s2 + $0x90] sm:$0xff]
    %v2057 = vld [vmem:[%s2 + $0x98] sm:$0xff]
    %v2058 = vld [vmem:[%s2 + $0xa0] sm:$0xff]
    %v2059 = vld [vmem:[%s2 + $0xa8] sm:$0xff]
    %v2060 = vld [vmem:[%s2 + $0xb0] sm:$0xff]
    %v2061 = vld [vmem:[%s2 + $0xb8] sm:$0xff]
    %v2062 = vld [vmem:[%s2 + $0xc0] sm:$0xff]
    %v2063 = vld [vmem:[%s2 + $0xc8] sm:$0xff]
    %v2064 = vld [vmem:[%s2 + $0xd0] sm:$0xff]
    %v2065 = vld [vmem:[%s2 + $0xd8] sm:$0xff]
    %v2066 = vld [vmem:[%s2 + $0xe0] sm:$0xff]
    %v2067 = vld [vmem:[%s2 + $0xe8] sm:$0xff]
    %v2068 = vld [vmem:[%s2 + $0xf0] sm:$0xff]
    %v2069 = vld [vmem:[%s2 + $0xf8] sm:$0xff]
    %v2102 = vunpack.c.l.b16 %v2038
    %v2103 = vunpack.c.h.b16 %v2038
    %v2104 = vunpack.c.l.b16 %v2039
    %v2105 = vunpack.c.h.b16 %v2039
    %v2106 = vunpack.c.l.b16 %v2040
    %v2107 = vunpack.c.h.b16 %v2040
    %v2108 = vunpack.c.l.b16 %v2041
    %v2109 = vunpack.c.h.b16 %v2041
    %v2110 = vunpack.c.l.b16 %v2042
    %v2111 = vunpack.c.h.b16 %v2042
    %v2112 = vunpack.c.l.b16 %v2043
    %v2113 = vunpack.c.h.b16 %v2043
    %v2114 = vunpack.c.l.b16 %v2044
    %v2115 = vunpack.c.h.b16 %v2044
    %v2116 = vunpack.c.l.b16 %v2045
    %v2117 = vunpack.c.h.b16 %v2045
    %v2118 = vunpack.c.l.b16 %v2046
    %v2119 = vunpack.c.h.b16 %v2046
    %v2120 = vunpack.c.l.b16 %v2047
    %v2121 = vunpack.c.h.b16 %v2047
    %v2122 = vunpack.c.l.b16 %v2048
    %v2123 = vunpack.c.h.b16 %v2048
    %v2124 = vunpack.c.l.b16 %v2049
    %v2125 = vunpack.c.h.b16 %v2049
    %v2126 = vunpack.c.l.b16 %v2050
    %v2127 = vunpack.c.h.b16 %v2050
    %v2128 = vunpack.c.l.b16 %v2051
    %v2129 = vunpack.c.h.b16 %v2051
    %v2130 = vunpack.c.l.b16 %v2052
    %v2131 = vunpack.c.h.b16 %v2052
    %v2132 = vunpack.c.l.b16 %v2053
    %v2133 = vunpack.c.h.b16 %v2053
    %v2134 = vunpack.c.l.b16 %v2054
    %v2135 = vunpack.c.h.b16 %v2054
    %v2136 = vunpack.c.l.b16 %v2055
    %v2137 = vunpack.c.h.b16 %v2055
    %v2138 = vunpack.c.l.b16 %v2056
    %v2139 = vunpack.c.h.b16 %v2056
    %v2140 = vunpack.c.l.b16 %v2057
    %v2141 = vunpack.c.h.b16 %v2057
    %v2142 = vunpack.c.l.b16 %v2058
    %v2143 = vunpack.c.h.b16 %v2058
    %v2144 = vunpack.c.l.b16 %v2059
    %v2145 = vunpack.c.h.b16 %v2059
    %v2146 = vunpack.c.l.b16 %v2060
    %v2147 = vunpack.c.h.b16 %v2060
    %v2148 = vunpack.c.l.b16 %v2061
    %v2149 = vunpack.c.h.b16 %v2061
    %v2150 = vunpack.c.l.b16 %v2062
    %v2151 = vunpack.c.h.b16 %v2062
    %v2152 = vunpack.c.l.b16 %v2063
    %v2153 = vunpack.c.h.b16 %v2063
    %v2154 = vunpack.c.l.b16 %v2064
    %v2155 = vunpack.c.h.b16 %v2064
    %v2156 = vunpack.c.l.b16 %v2065
    %v2157 = vunpack.c.h.b16 %v2065
    %v2158 = vunpack.c.l.b16 %v2066
    %v2159 = vunpack.c.h.b16 %v2066
    %v2160 = vunpack.c.l.b16 %v2067
    %v2161 = vunpack.c.h.b16 %v2067
    %v2162 = vunpack.c.l.b16 %v2068
    %v2163 = vunpack.c.h.b16 %v2068
    %v2164 = vunpack.c.l.b16 %v2069
    %v2165 = vunpack.c.h.b16 %v2069
    %v2166 = vpack.c.b16 %v2106, %v2102
    %v2167 = vpack.c.b16 %v2107, %v2103
    %v2168 = vpack.c.b16 %v2108, %v2104
    %v2169 = vpack.c.b16 %v2109, %v2105
    %v2170 = vpack.c.b16 %v2114, %v2110
    %v2171 = vpack.c.b16 %v2115, %v2111
    %v2172 = vpack.c.b16 %v2116, %v2112
    %v2173 = vpack.c.b16 %v2117, %v2113
    %v2174 = vpack.c.b16 %v2122, %v2118
    %v2175 = vpack.c.b16 %v2123, %v2119
    %v2176 = vpack.c.b16 %v2124, %v2120
    %v2177 = vpack.c.b16 %v2125, %v2121
    %v2178 = vpack.c.b16 %v2130, %v2126
    %v2179 = vpack.c.b16 %v2131, %v2127
    %v2180 = vpack.c.b16 %v2132, %v2128
    %v2181 = vpack.c.b16 %v2133, %v2129
    %v2182 = vpack.c.b16 %v2138, %v2134
    %v2183 = vpack.c.b16 %v2139, %v2135
    %v2184 = vpack.c.b16 %v2140, %v2136
    %v2185 = vpack.c.b16 %v2141, %v2137
    %v2186 = vpack.c.b16 %v2146, %v2142
    %v2187 = vpack.c.b16 %v2147, %v2143
    %v2188 = vpack.c.b16 %v2148, %v2144
    %v2189 = vpack.c.b16 %v2149, %v2145
    %v2190 = vpack.c.b16 %v2154, %v2150
    %v2191 = vpack.c.b16 %v2155, %v2151
    %v2192 = vpack.c.b16 %v2156, %v2152
    %v2193 = vpack.c.b16 %v2157, %v2153
    %v2194 = vpack.c.b16 %v2162, %v2158
    %v2195 = vpack.c.b16 %v2163, %v2159
    %v2196 = vpack.c.b16 %v2164, %v2160
    %v2197 = vpack.c.b16 %v2165, %v2161
    %2230 = vmatprep.subr.bf16.mxu0 %v2167
    %2231 = vmatpush1.bf16.msra.mxu0 %v2166
    %2232 = vmatprep.subr.bf16.mxu0 %v2171
    %2233 = vmatpush1.bf16.msra.mxu0 %v2170
    %2234 = vmatprep.subr.bf16.mxu0 %v2175
    %2235 = vmatpush1.bf16.msra.mxu0 %v2174
    %2236 = vmatprep.subr.bf16.mxu0 %v2179
    %2237 = vmatpush1.bf16.msra.mxu0 %v2178
    %2238 = vmatprep.subr.bf16.mxu0 %v2183
    %2239 = vmatpush1.bf16.msra.mxu0 %v2182
    %2240 = vmatprep.subr.bf16.mxu0 %v2187
    %2241 = vmatpush1.bf16.msra.mxu0 %v2186
    %2242 = vmatprep.subr.bf16.mxu0 %v2191
    %2243 = vmatpush1.bf16.msra.mxu0 %v2190
    %2244 = vmatprep.subr.bf16.mxu0 %v2195
    %2245 = vmatpush1.bf16.msra.mxu0 %v2194
    %2246 = vmatprep.subr.bf16.mxu0 0
    %2247 = vmatpush1.bf16.msra.mxu0 0
    %2248 = vmatprep.subr.bf16.mxu0 0
    %2249 = vmatpush1.bf16.msra.mxu0 0
    %2250 = vmatprep.subr.bf16.mxu0 0
    %2251 = vmatpush1.bf16.msra.mxu0 0
    %2252 = vmatprep.subr.bf16.mxu0 0
    %2253 = vmatpush1.bf16.msra.mxu0 0
    %2254 = vmatprep.subr.bf16.mxu0 0
    %2255 = vmatpush1.bf16.msra.mxu0 0
    %2256 = vmatprep.subr.bf16.mxu0 0
    %2257 = vmatpush1.bf16.msra.mxu0 0
    %2258 = vmatprep.subr.bf16.mxu0 0
    %2259 = vmatpush1.bf16.msra.mxu0 0
    %2260 = vmatprep.subr.bf16.mxu0 0
    %2261 = vmatpush1.bf16.msra.mxu0 0
    %2262 = vmatprep.mubr.bf16.mxu0 0
    %2263 = vmatmul.mubr.bf16.gmra.mrb[0].mxu0 %v2016
    %v2264 = vpop.f32.mrb[0].mxu0
    %v2265 = vadd.f32 0.0, %v2264
    %v2266 = vpop.f32.mrb[0].mxu0
    %v2267 = vadd.f32 0.0, %v2266
    %v2268 = vpop.f32.mrb[0].mxu0
    %v2269 = vadd.f32 0.0, %v2268
    %v2270 = vpop.f32.mrb[0].mxu0
    %v2271 = vadd.f32 0.0, %v2270
    %2272 = vdwg.mxu0
    %2273 = vmatprep.subr.bf16.mxu0 %v2169
    %2274 = vmatpush1.bf16.msra.mxu0 %v2168
    %2275 = vmatprep.subr.bf16.mxu0 %v2173
    %2276 = vmatpush1.bf16.msra.mxu0 %v2172
    %2277 = vmatprep.subr.bf16.mxu0 %v2177
    %2278 = vmatpush1.bf16.msra.mxu0 %v2176
    %2279 = vmatprep.subr.bf16.mxu0 %v2181
    %2280 = vmatpush1.bf16.msra.mxu0 %v2180
    %2281 = vmatprep.subr.bf16.mxu0 %v2185
    %2282 = vmatpush1.bf16.msra.mxu0 %v2184
    %2283 = vmatprep.subr.bf16.mxu0 %v2189
    %2284 = vmatpush1.bf16.msra.mxu0 %v2188
    %2285 = vmatprep.subr.bf16.mxu0 %v2193
    %2286 = vmatpush1.bf16.msra.mxu0 %v2192
    %2287 = vmatprep.subr.bf16.mxu0 %v2197
    %2288 = vmatpush1.bf16.msra.mxu0 %v2196
    %2289 = vmatprep.subr.bf16.mxu0 0
    %2290 = vmatpush1.bf16.msra.mxu0 0
    %2291 = vmatprep.subr.bf16.mxu0 0
    %2292 = vmatpush1.bf16.msra.mxu0 0
    %2293 = vmatprep.subr.bf16.mxu0 0
    %2294 = vmatpush1.bf16.msra.mxu0 0
    %2295 = vmatprep.subr.bf16.mxu0 0
    %2296 = vmatpush1.bf16.msra.mxu0 0
    %2297 = vmatprep.subr.bf16.mxu0 0
    %2298 = vmatpush1.bf16.msra.mxu0 0
    %2299 = vmatprep.subr.bf16.mxu0 0
    %2300 = vmatpush1.bf16.msra.mxu0 0
    %2301 = vmatprep.subr.bf16.mxu0 0
    %2302 = vmatpush1.bf16.msra.mxu0 0
    %2303 = vmatprep.subr.bf16.mxu0 0
    %2304 = vmatpush1.bf16.msra.mxu0 0
    %2305 = vmatprep.mubr.bf16.mxu0 0
    %2306 = vmatmul.mubr.bf16.gmra.mrb[0].mxu0 %v2016
    %v2307 = vpop.f32.mrb[0].mxu0
    %v2308 = vadd.f32 0.0, %v2307
    %v2309 = vpop.f32.mrb[0].mxu0
    %v2310 = vadd.f32 0.0, %v2309
    %v2311 = vpop.f32.mrb[0].mxu0
    %v2312 = vadd.f32 0.0, %v2311
    %v2313 = vpop.f32.mrb[0].mxu0
    %v2314 = vadd.f32 0.0, %v2313
    %2315 = vdwg.mxu0
    %v2316 = vadd.f32 %v2030, %v2265
    %v2317 = vadd.f32 %v2031, %v2267
    %v2318 = vadd.f32 %v2032, %v2308
    %v2319 = vadd.f32 %v2033, %v2310
    %v2320 = vadd.f32 %v2034, %v2269
    %v2321 = vadd.f32 %v2035, %v2271
    %v2322 = vadd.f32 %v2036, %v2312
    %v2323 = vadd.f32 %v2037, %v2314
    %v2324 = vmul.f32 %v2316, 0.5
    %v2325 = vmul.f32 %v2317, 0.5
    %v2326 = vmul.f32 %v2318, 0.5
    %v2327 = vmul.f32 %v2319, 0.5
    %v2328 = vmul.f32 %v2320, 0.5
    %v2329 = vmul.f32 %v2321, 0.5
    %v2330 = vmul.f32 %v2322, 0.5
    %v2331 = vmul.f32 %v2323, 0.5
    %v2332 = vtanh.pop %v2324
    %v2333 = vtanh.pop %v2325
    %v2334 = vtanh.pop %v2326
    %v2335 = vtanh.pop %v2327
    %v2336 = vtanh.pop %v2328
    %v2337 = vtanh.pop %v2329
    %v2338 = vtanh.pop %v2330
    %v2339 = vtanh.pop %v2331
    %v2340 = vmul.f32 %v2332, 0.5
    %v2341 = vmul.f32 %v2333, 0.5
    %v2342 = vmul.f32 %v2334, 0.5
    %v2343 = vmul.f32 %v2335, 0.5
    %v2344 = vmul.f32 %v2336, 0.5
    %v2345 = vmul.f32 %v2337, 0.5
    %v2346 = vmul.f32 %v2338, 0.5
    %v2347 = vmul.f32 %v2339, 0.5
    %v2348 = vadd.f32 %v2340, 0.5
    %v2349 = vadd.f32 %v2341, 0.5
    %v2350 = vadd.f32 %v2342, 0.5
    %v2351 = vadd.f32 %v2343, 0.5
    %v2352 = vadd.f32 %v2344, 0.5
    %v2353 = vadd.f32 %v2345, 0.5
    %v2354 = vadd.f32 %v2346, 0.5
    %v2355 = vadd.f32 %v2347, 0.5
    %v2356 = vmul.f32 %v2349, %v2004
    %v2357 = vmul.f32 %v2353, %v2005
    %v2358 = vadd.f32 %v2356, %v2350
    %v2359 = vadd.f32 %v2357, %v2354
    %v2360 = vsub.f32 %v2358, %v2348
    %v2361 = vsub.f32 %v2359, %v2352
    %v2362 = vmul.f32 %v2360, 0.5
    %v2363 = vmul.f32 %v2361, 0.5
    %v2364 = vtanh.pop %v2362
    %v2365 = vtanh.pop %v2363
    %v2366 = vmul.f32 %v2364, 0.5
    %v2367 = vmul.f32 %v2365, 0.5
    %v2368 = vadd.f32 %v2366, 0.5
    %v2369 = vadd.f32 %v2367, 0.5
    %v2370 = vsub.f32 %v2368, %v2351
    %v2371 = vsub.f32 %v2369, %v2355
    %v2372 = vpack.c.bf16 %v2371, %v2370
    %v2374 = vunpack.c.l.b16 %v2372
    %v2375 = vunpack.c.h.b16 %v2372
    %v2376 = vpack.c.b16 %v2374, %v2374
    %v2377 = vpack.c.b16 %v2375, %v2375
    %s2380 = scalar_lea.vmem %s4, 32
    %2381 = vst [vmem:[%s2380] sm:$0xf] %v2376
    %2382 = vst [vmem:[%s2380 + $0x4] sm:$0xf] %v2377
    %s2383 = smul.u32 10, 4
    %s2384 = smul.addr %s2383, 8
    %s2385 = scalar_lea.vmem [#allocation2], %s2384
    %v2386 = vld [vmem:[%s2385] sm:$0xff]
    %v2387 = vld [vmem:[%s2385 + $0x8] sm:$0xff]
    %v2388 = vld [vmem:[%s2385 + $0x10] sm:$0xff]
    %v2389 = vld [vmem:[%s2385 + $0x18] sm:$0xff]
    %v2390 = vld [vmem:[%s2385 + $0x20] sm:$0xff]
    %v2391 = vld [vmem:[%s2385 + $0x28] sm:$0xff]
    %v2392 = vld [vmem:[%s2385 + $0x30] sm:$0xff]
    %v2393 = vld [vmem:[%s2385 + $0x38] sm:$0xff]
    %v2394 = vld [vmem:[%s2] sm:$0xff]
    %v2395 = vld [vmem:[%s2 + $0x8] sm:$0xff]
    %v2396 = vld [vmem:[%s2 + $0x10] sm:$0xff]
    %v2397 = vld [vmem:[%s2 + $0x18] sm:$0xff]
    %v2398 = vld [vmem:[%s2 + $0x20] sm:$0xff]
    %v2399 = vld [vmem:[%s2 + $0x28] sm:$0xff]
    %v2400 = vld [vmem:[%s2 + $0x30] sm:$0xff]
    %v2401 = vld [vmem:[%s2 + $0x38] sm:$0xff]
    %v2402 = vld [vmem:[%s2 + $0x40] sm:$0xff]
    %v2403 = vld [vmem:[%s2 + $0x48] sm:$0xff]
    %v2404 = vld [vmem:[%s2 + $0x50] sm:$0xff]
    %v2405 = vld [vmem:[%s2 + $0x58] sm:$0xff]
    %v2406 = vld [vmem:[%s2 + $0x60] sm:$0xff]
    %v2407 = vld [vmem:[%s2 + $0x68] sm:$0xff]
    %v2408 = vld [vmem:[%s2 + $0x70] sm:$0xff]
    %v2409 = vld [vmem:[%s2 + $0x78] sm:$0xff]
    %v2410 = vld [vmem:[%s2 + $0x80] sm:$0xff]
    %v2411 = vld [vmem:[%s2 + $0x88] sm:$0xff]
    %v2412 = vld [vmem:[%s2 + $0x90] sm:$0xff]
    %v2413 = vld [vmem:[%s2 + $0x98] sm:$0xff]
    %v2414 = vld [vmem:[%s2 + $0xa0] sm:$0xff]
    %v2415 = vld [vmem:[%s2 + $0xa8] sm:$0xff]
    %v2416 = vld [vmem:[%s2 + $0xb0] sm:$0xff]
    %v2417 = vld [vmem:[%s2 + $0xb8] sm:$0xff]
    %v2418 = vld [vmem:[%s2 + $0xc0] sm:$0xff]
    %v2419 = vld [vmem:[%s2 + $0xc8] sm:$0xff]
    %v2420 = vld [vmem:[%s2 + $0xd0] sm:$0xff]
    %v2421 = vld [vmem:[%s2 + $0xd8] sm:$0xff]
    %v2422 = vld [vmem:[%s2 + $0xe0] sm:$0xff]
    %v2423 = vld [vmem:[%s2 + $0xe8] sm:$0xff]
    %v2424 = vld [vmem:[%s2 + $0xf0] sm:$0xff]
    %v2425 = vld [vmem:[%s2 + $0xf8] sm:$0xff]
    %v2458 = vunpack.c.l.b16 %v2394
    %v2459 = vunpack.c.h.b16 %v2394
    %v2460 = vunpack.c.l.b16 %v2395
    %v2461 = vunpack.c.h.b16 %v2395
    %v2462 = vunpack.c.l.b16 %v2396
    %v2463 = vunpack.c.h.b16 %v2396
    %v2464 = vunpack.c.l.b16 %v2397
    %v2465 = vunpack.c.h.b16 %v2397
    %v2466 = vunpack.c.l.b16 %v2398
    %v2467 = vunpack.c.h.b16 %v2398
    %v2468 = vunpack.c.l.b16 %v2399
    %v2469 = vunpack.c.h.b16 %v2399
    %v2470 = vunpack.c.l.b16 %v2400
    %v2471 = vunpack.c.h.b16 %v2400
    %v2472 = vunpack.c.l.b16 %v2401
    %v2473 = vunpack.c.h.b16 %v2401
    %v2474 = vunpack.c.l.b16 %v2402
    %v2475 = vunpack.c.h.b16 %v2402
    %v2476 = vunpack.c.l.b16 %v2403
    %v2477 = vunpack.c.h.b16 %v2403
    %v2478 = vunpack.c.l.b16 %v2404
    %v2479 = vunpack.c.h.b16 %v2404
    %v2480 = vunpack.c.l.b16 %v2405
    %v2481 = vunpack.c.h.b16 %v2405
    %v2482 = vunpack.c.l.b16 %v2406
    %v2483 = vunpack.c.h.b16 %v2406
    %v2484 = vunpack.c.l.b16 %v2407
    %v2485 = vunpack.c.h.b16 %v2407
    %v2486 = vunpack.c.l.b16 %v2408
    %v2487 = vunpack.c.h.b16 %v2408
    %v2488 = vunpack.c.l.b16 %v2409
    %v2489 = vunpack.c.h.b16 %v2409
    %v2490 = vunpack.c.l.b16 %v2410
    %v2491 = vunpack.c.h.b16 %v2410
    %v2492 = vunpack.c.l.b16 %v2411
    %v2493 = vunpack.c.h.b16 %v2411
    %v2494 = vunpack.c.l.b16 %v2412
    %v2495 = vunpack.c.h.b16 %v2412
    %v2496 = vunpack.c.l.b16 %v2413
    %v2497 = vunpack.c.h.b16 %v2413
    %v2498 = vunpack.c.l.b16 %v2414
    %v2499 = vunpack.c.h.b16 %v2414
    %v2500 = vunpack.c.l.b16 %v2415
    %v2501 = vunpack.c.h.b16 %v2415
    %v2502 = vunpack.c.l.b16 %v2416
    %v2503 = vunpack.c.h.b16 %v2416
    %v2504 = vunpack.c.l.b16 %v2417
    %v2505 = vunpack.c.h.b16 %v2417
    %v2506 = vunpack.c.l.b16 %v2418
    %v2507 = vunpack.c.h.b16 %v2418
    %v2508 = vunpack.c.l.b16 %v2419
    %v2509 = vunpack.c.h.b16 %v2419
    %v2510 = vunpack.c.l.b16 %v2420
    %v2511 = vunpack.c.h.b16 %v2420
    %v2512 = vunpack.c.l.b16 %v2421
    %v2513 = vunpack.c.h.b16 %v2421
    %v2514 = vunpack.c.l.b16 %v2422
    %v2515 = vunpack.c.h.b16 %v2422
    %v2516 = vunpack.c.l.b16 %v2423
    %v2517 = vunpack.c.h.b16 %v2423
    %v2518 = vunpack.c.l.b16 %v2424
    %v2519 = vunpack.c.h.b16 %v2424
    %v2520 = vunpack.c.l.b16 %v2425
    %v2521 = vunpack.c.h.b16 %v2425
    %v2522 = vpack.c.b16 %v2462, %v2458
    %v2523 = vpack.c.b16 %v2463, %v2459
    %v2524 = vpack.c.b16 %v2464, %v2460
    %v2525 = vpack.c.b16 %v2465, %v2461
    %v2526 = vpack.c.b16 %v2470, %v2466
    %v2527 = vpack.c.b16 %v2471, %v2467
    %v2528 = vpack.c.b16 %v2472, %v2468
    %v2529 = vpack.c.b16 %v2473, %v2469
    %v2530 = vpack.c.b16 %v2478, %v2474
    %v2531 = vpack.c.b16 %v2479, %v2475
    %v2532 = vpack.c.b16 %v2480, %v2476
    %v2533 = vpack.c.b16 %v2481, %v2477
    %v2534 = vpack.c.b16 %v2486, %v2482
    %v2535 = vpack.c.b16 %v2487, %v2483
    %v2536 = vpack.c.b16 %v2488, %v2484
    %v2537 = vpack.c.b16 %v2489, %v2485
    %v2538 = vpack.c.b16 %v2494, %v2490
    %v2539 = vpack.c.b16 %v2495, %v2491
    %v2540 = vpack.c.b16 %v2496, %v2492
    %v2541 = vpack.c.b16 %v2497, %v2493
    %v2542 = vpack.c.b16 %v2502, %v2498
    %v2543 = vpack.c.b16 %v2503, %v2499
    %v2544 = vpack.c.b16 %v2504, %v2500
    %v2545 = vpack.c.b16 %v2505, %v2501
    %v2546 = vpack.c.b16 %v2510, %v2506
    %v2547 = vpack.c.b16 %v2511, %v2507
    %v2548 = vpack.c.b16 %v2512, %v2508
    %v2549 = vpack.c.b16 %v2513, %v2509
    %v2550 = vpack.c.b16 %v2518, %v2514
    %v2551 = vpack.c.b16 %v2519, %v2515
    %v2552 = vpack.c.b16 %v2520, %v2516
    %v2553 = vpack.c.b16 %v2521, %v2517
    %2586 = vmatprep.subr.bf16.mxu0 %v2523
    %2587 = vmatpush1.bf16.msra.mxu0 %v2522
    %2588 = vmatprep.subr.bf16.mxu0 %v2527
    %2589 = vmatpush1.bf16.msra.mxu0 %v2526
    %2590 = vmatprep.subr.bf16.mxu0 %v2531
    %2591 = vmatpush1.bf16.msra.mxu0 %v2530
    %2592 = vmatprep.subr.bf16.mxu0 %v2535
    %2593 = vmatpush1.bf16.msra.mxu0 %v2534
    %2594 = vmatprep.subr.bf16.mxu0 %v2539
    %2595 = vmatpush1.bf16.msra.mxu0 %v2538
    %2596 = vmatprep.subr.bf16.mxu0 %v2543
    %2597 = vmatpush1.bf16.msra.mxu0 %v2542
    %2598 = vmatprep.subr.bf16.mxu0 %v2547
    %2599 = vmatpush1.bf16.msra.mxu0 %v2546
    %2600 = vmatprep.subr.bf16.mxu0 %v2551
    %2601 = vmatpush1.bf16.msra.mxu0 %v2550
    %2602 = vmatprep.subr.bf16.mxu0 0
    %2603 = vmatpush1.bf16.msra.mxu0 0
    %2604 = vmatprep.subr.bf16.mxu0 0
    %2605 = vmatpush1.bf16.msra.mxu0 0
    %2606 = vmatprep.subr.bf16.mxu0 0
    %2607 = vmatpush1.bf16.msra.mxu0 0
    %2608 = vmatprep.subr.bf16.mxu0 0
    %2609 = vmatpush1.bf16.msra.mxu0 0
    %2610 = vmatprep.subr.bf16.mxu0 0
    %2611 = vmatpush1.bf16.msra.mxu0 0
    %2612 = vmatprep.subr.bf16.mxu0 0
    %2613 = vmatpush1.bf16.msra.mxu0 0
    %2614 = vmatprep.subr.bf16.mxu0 0
    %2615 = vmatpush1.bf16.msra.mxu0 0
    %2616 = vmatprep.subr.bf16.mxu0 0
    %2617 = vmatpush1.bf16.msra.mxu0 0
    %2618 = vmatprep.mubr.bf16.mxu0 0
    %2619 = vmatmul.mubr.bf16.gmra.mrb[0].mxu0 %v2372
    %v2620 = vpop.f32.mrb[0].mxu0
    %v2621 = vadd.f32 0.0, %v2620
    %v2622 = vpop.f32.mrb[0].mxu0
    %v2623 = vadd.f32 0.0, %v2622
    %v2624 = vpop.f32.mrb[0].mxu0
    %v2625 = vadd.f32 0.0, %v2624
    %v2626 = vpop.f32.mrb[0].mxu0
    %v2627 = vadd.f32 0.0, %v2626
    %2628 = vdwg.mxu0
    %2629 = vmatprep.subr.bf16.mxu0 %v2525
    %2630 = vmatpush1.bf16.msra.mxu0 %v2524
    %2631 = vmatprep.subr.bf16.mxu0 %v2529
    %2632 = vmatpush1.bf16.msra.mxu0 %v2528
    %2633 = vmatprep.subr.bf16.mxu0 %v2533
    %2634 = vmatpush1.bf16.msra.mxu0 %v2532
    %2635 = vmatprep.subr.bf16.mxu0 %v2537
    %2636 = vmatpush1.bf16.msra.mxu0 %v2536
    %2637 = vmatprep.subr.bf16.mxu0 %v2541
    %2638 = vmatpush1.bf16.msra.mxu0 %v2540
    %2639 = vmatprep.subr.bf16.mxu0 %v2545
    %2640 = vmatpush1.bf16.msra.mxu0 %v2544
    %2641 = vmatprep.subr.bf16.mxu0 %v2549
    %2642 = vmatpush1.bf16.msra.mxu0 %v2548
    %2643 = vmatprep.subr.bf16.mxu0 %v2553
    %2644 = vmatpush1.bf16.msra.mxu0 %v2552
    %2645 = vmatprep.subr.bf16.mxu0 0
    %2646 = vmatpush1.bf16.msra.mxu0 0
    %2647 = vmatprep.subr.bf16.mxu0 0
    %2648 = vmatpush1.bf16.msra.mxu0 0
    %2649 = vmatprep.subr.bf16.mxu0 0
    %2650 = vmatpush1.bf16.msra.mxu0 0
    %2651 = vmatprep.subr.bf16.mxu0 0
    %2652 = vmatpush1.bf16.msra.mxu0 0
    %2653 = vmatprep.subr.bf16.mxu0 0
    %2654 = vmatpush1.bf16.msra.mxu0 0
    %2655 = vmatprep.subr.bf16.mxu0 0
    %2656 = vmatpush1.bf16.msra.mxu0 0
    %2657 = vmatprep.subr.bf16.mxu0 0
    %2658 = vmatpush1.bf16.msra.mxu0 0
    %2659 = vmatprep.subr.bf16.mxu0 0
    %2660 = vmatpush1.bf16.msra.mxu0 0
    %2661 = vmatprep.mubr.bf16.mxu0 0
    %2662 = vmatmul.mubr.bf16.gmra.mrb[0].mxu0 %v2372
    %v2663 = vpop.f32.mrb[0].mxu0
    %v2664 = vadd.f32 0.0, %v2663
    %v2665 = vpop.f32.mrb[0].mxu0
    %v2666 = vadd.f32 0.0, %v2665
    %v2667 = vpop.f32.mrb[0].mxu0
    %v2668 = vadd.f32 0.0, %v2667
    %v2669 = vpop.f32.mrb[0].mxu0
    %v2670 = vadd.f32 0.0, %v2669
    %2671 = vdwg.mxu0
    %v2672 = vadd.f32 %v2386, %v2621
    %v2673 = vadd.f32 %v2387, %v2623
    %v2674 = vadd.f32 %v2388, %v2664
    %v2675 = vadd.f32 %v2389, %v2666
    %v2676 = vadd.f32 %v2390, %v2625
    %v2677 = vadd.f32 %v2391, %v2627
    %v2678 = vadd.f32 %v2392, %v2668
    %v2679 = vadd.f32 %v2393, %v2670
    %v2680 = vmul.f32 %v2672, 0.5
    %v2681 = vmul.f32 %v2673, 0.5
    %v2682 = vmul.f32 %v2674, 0.5
    %v2683 = vmul.f32 %v2675, 0.5
    %v2684 = vmul.f32 %v2676, 0.5
    %v2685 = vmul.f32 %v2677, 0.5
    %v2686 = vmul.f32 %v2678, 0.5
    %v2687 = vmul.f32 %v2679, 0.5
    %v2688 = vtanh.pop %v2680
    %v2689 = vtanh.pop %v2681
    %v2690 = vtanh.pop %v2682
    %v2691 = vtanh.pop %v2683
    %v2692 = vtanh.pop %v2684
    %v2693 = vtanh.pop %v2685
    %v2694 = vtanh.pop %v2686
    %v2695 = vtanh.pop %v2687
    %v2696 = vmul.f32 %v2688, 0.5
    %v2697 = vmul.f32 %v2689, 0.5
    %v2698 = vmul.f32 %v2690, 0.5
    %v2699 = vmul.f32 %v2691, 0.5
    %v2700 = vmul.f32 %v2692, 0.5
    %v2701 = vmul.f32 %v2693, 0.5
    %v2702 = vmul.f32 %v2694, 0.5
    %v2703 = vmul.f32 %v2695, 0.5
    %v2704 = vadd.f32 %v2696, 0.5
    %v2705 = vadd.f32 %v2697, 0.5
    %v2706 = vadd.f32 %v2698, 0.5
    %v2707 = vadd.f32 %v2699, 0.5
    %v2708 = vadd.f32 %v2700, 0.5
    %v2709 = vadd.f32 %v2701, 0.5
    %v2710 = vadd.f32 %v2702, 0.5
    %v2711 = vadd.f32 %v2703, 0.5
    %v2712 = vmul.f32 %v2705, %v2360
    %v2713 = vmul.f32 %v2709, %v2361
    %v2714 = vadd.f32 %v2712, %v2706
    %v2715 = vadd.f32 %v2713, %v2710
    %v2716 = vsub.f32 %v2714, %v2704
    %v2717 = vsub.f32 %v2715, %v2708
    %v2718 = vmul.f32 %v2716, 0.5
    %v2719 = vmul.f32 %v2717, 0.5
    %v2720 = vtanh.pop %v2718
    %v2721 = vtanh.pop %v2719
    %v2722 = vmul.f32 %v2720, 0.5
    %v2723 = vmul.f32 %v2721, 0.5
    %v2724 = vadd.f32 %v2722, 0.5
    %v2725 = vadd.f32 %v2723, 0.5
    %v2726 = vsub.f32 %v2724, %v2707
    %v2727 = vsub.f32 %v2725, %v2711
    %v2728 = vpack.c.bf16 %v2727, %v2726
    %v2730 = vunpack.c.l.b16 %v2728
    %v2731 = vunpack.c.h.b16 %v2728
    %v2732 = vpack.c.b16 %v2730, %v2730
    %v2733 = vpack.c.b16 %v2731, %v2731
    %s2736 = scalar_lea.vmem %s4, 40
    %2737 = vst [vmem:[%s2736] sm:$0xf] %v2732
    %2738 = vst [vmem:[%s2736 + $0x4] sm:$0xf] %v2733
    %s2739 = smul.u32 12, 4
    %s2740 = smul.addr %s2739, 8
    %s2741 = scalar_lea.vmem [#allocation2], %s2740
    %v2742 = vld [vmem:[%s2741] sm:$0xff]
    %v2743 = vld [vmem:[%s2741 + $0x8] sm:$0xff]
    %v2744 = vld [vmem:[%s2741 + $0x10] sm:$0xff]
    %v2745 = vld [vmem:[%s2741 + $0x18] sm:$0xff]
    %v2746 = vld [vmem:[%s2741 + $0x20] sm:$0xff]
    %v2747 = vld [vmem:[%s2741 + $0x28] sm:$0xff]
    %v2748 = vld [vmem:[%s2741 + $0x30] sm:$0xff]
    %v2749 = vld [vmem:[%s2741 + $0x38] sm:$0xff]
    %v2750 = vld [vmem:[%s2] sm:$0xff]
    %v2751 = vld [vmem:[%s2 + $0x8] sm:$0xff]
    %v2752 = vld [vmem:[%s2 + $0x10] sm:$0xff]
    %v2753 = vld [vmem:[%s2 + $0x18] sm:$0xff]
    %v2754 = vld [vmem:[%s2 + $0x20] sm:$0xff]
    %v2755 = vld [vmem:[%s2 + $0x28] sm:$0xff]
    %v2756 = vld [vmem:[%s2 + $0x30] sm:$0xff]
    %v2757 = vld [vmem:[%s2 + $0x38] sm:$0xff]
    %v2758 = vld [vmem:[%s2 + $0x40] sm:$0xff]
    %v2759 = vld [vmem:[%s2 + $0x48] sm:$0xff]
    %v2760 = vld [vmem:[%s2 + $0x50] sm:$0xff]
    %v2761 = vld [vmem:[%s2 + $0x58] sm:$0xff]
    %v2762 = vld [vmem:[%s2 + $0x60] sm:$0xff]
    %v2763 = vld [vmem:[%s2 + $0x68] sm:$0xff]
    %v2764 = vld [vmem:[%s2 + $0x70] sm:$0xff]
    %v2765 = vld [vmem:[%s2 + $0x78] sm:$0xff]
    %v2766 = vld [vmem:[%s2 + $0x80] sm:$0xff]
    %v2767 = vld [vmem:[%s2 + $0x88] sm:$0xff]
    %v2768 = vld [vmem:[%s2 + $0x90] sm:$0xff]
    %v2769 = vld [vmem:[%s2 + $0x98] sm:$0xff]
    %v2770 = vld [vmem:[%s2 + $0xa0] sm:$0xff]
    %v2771 = vld [vmem:[%s2 + $0xa8] sm:$0xff]
    %v2772 = vld [vmem:[%s2 + $0xb0] sm:$0xff]
    %v2773 = vld [vmem:[%s2 + $0xb8] sm:$0xff]
    %v2774 = vld [vmem:[%s2 + $0xc0] sm:$0xff]
    %v2775 = vld [vmem:[%s2 + $0xc8] sm:$0xff]
    %v2776 = vld [vmem:[%s2 + $0xd0] sm:$0xff]
    %v2777 = vld [vmem:[%s2 + $0xd8] sm:$0xff]
    %v2778 = vld [vmem:[%s2 + $0xe0] sm:$0xff]
    %v2779 = vld [vmem:[%s2 + $0xe8] sm:$0xff]
    %v2780 = vld [vmem:[%s2 + $0xf0] sm:$0xff]
    %v2781 = vld [vmem:[%s2 + $0xf8] sm:$0xff]
    %v2814 = vunpack.c.l.b16 %v2750
    %v2815 = vunpack.c.h.b16 %v2750
    %v2816 = vunpack.c.l.b16 %v2751
    %v2817 = vunpack.c.h.b16 %v2751
    %v2818 = vunpack.c.l.b16 %v2752
    %v2819 = vunpack.c.h.b16 %v2752
    %v2820 = vunpack.c.l.b16 %v2753
    %v2821 = vunpack.c.h.b16 %v2753
    %v2822 = vunpack.c.l.b16 %v2754
    %v2823 = vunpack.c.h.b16 %v2754
    %v2824 = vunpack.c.l.b16 %v2755
    %v2825 = vunpack.c.h.b16 %v2755
    %v2826 = vunpack.c.l.b16 %v2756
    %v2827 = vunpack.c.h.b16 %v2756
    %v2828 = vunpack.c.l.b16 %v2757
    %v2829 = vunpack.c.h.b16 %v2757
    %v2830 = vunpack.c.l.b16 %v2758
    %v2831 = vunpack.c.h.b16 %v2758
    %v2832 = vunpack.c.l.b16 %v2759
    %v2833 = vunpack.c.h.b16 %v2759
    %v2834 = vunpack.c.l.b16 %v2760
    %v2835 = vunpack.c.h.b16 %v2760
    %v2836 = vunpack.c.l.b16 %v2761
    %v2837 = vunpack.c.h.b16 %v2761
    %v2838 = vunpack.c.l.b16 %v2762
    %v2839 = vunpack.c.h.b16 %v2762
    %v2840 = vunpack.c.l.b16 %v2763
    %v2841 = vunpack.c.h.b16 %v2763
    %v2842 = vunpack.c.l.b16 %v2764
    %v2843 = vunpack.c.h.b16 %v2764
    %v2844 = vunpack.c.l.b16 %v2765
    %v2845 = vunpack.c.h.b16 %v2765
    %v2846 = vunpack.c.l.b16 %v2766
    %v2847 = vunpack.c.h.b16 %v2766
    %v2848 = vunpack.c.l.b16 %v2767
    %v2849 = vunpack.c.h.b16 %v2767
    %v2850 = vunpack.c.l.b16 %v2768
    %v2851 = vunpack.c.h.b16 %v2768
    %v2852 = vunpack.c.l.b16 %v2769
    %v2853 = vunpack.c.h.b16 %v2769
    %v2854 = vunpack.c.l.b16 %v2770
    %v2855 = vunpack.c.h.b16 %v2770
    %v2856 = vunpack.c.l.b16 %v2771
    %v2857 = vunpack.c.h.b16 %v2771
    %v2858 = vunpack.c.l.b16 %v2772
    %v2859 = vunpack.c.h.b16 %v2772
    %v2860 = vunpack.c.l.b16 %v2773
    %v2861 = vunpack.c.h.b16 %v2773
    %v2862 = vunpack.c.l.b16 %v2774
    %v2863 = vunpack.c.h.b16 %v2774
    %v2864 = vunpack.c.l.b16 %v2775
    %v2865 = vunpack.c.h.b16 %v2775
    %v2866 = vunpack.c.l.b16 %v2776
    %v2867 = vunpack.c.h.b16 %v2776
    %v2868 = vunpack.c.l.b16 %v2777
    %v2869 = vunpack.c.h.b16 %v2777
    %v2870 = vunpack.c.l.b16 %v2778
    %v2871 = vunpack.c.h.b16 %v2778
    %v2872 = vunpack.c.l.b16 %v2779
    %v2873 = vunpack.c.h.b16 %v2779
    %v2874 = vunpack.c.l.b16 %v2780
    %v2875 = vunpack.c.h.b16 %v2780
    %v2876 = vunpack.c.l.b16 %v2781
    %v2877 = vunpack.c.h.b16 %v2781
    %v2878 = vpack.c.b16 %v2818, %v2814
    %v2879 = vpack.c.b16 %v2819, %v2815
    %v2880 = vpack.c.b16 %v2820, %v2816
    %v2881 = vpack.c.b16 %v2821, %v2817
    %v2882 = vpack.c.b16 %v2826, %v2822
    %v2883 = vpack.c.b16 %v2827, %v2823
    %v2884 = vpack.c.b16 %v2828, %v2824
    %v2885 = vpack.c.b16 %v2829, %v2825
    %v2886 = vpack.c.b16 %v2834, %v2830
    %v2887 = vpack.c.b16 %v2835, %v2831
    %v2888 = vpack.c.b16 %v2836, %v2832
    %v2889 = vpack.c.b16 %v2837, %v2833
    %v2890 = vpack.c.b16 %v2842, %v2838
    %v2891 = vpack.c.b16 %v2843, %v2839
    %v2892 = vpack.c.b16 %v2844, %v2840
    %v2893 = vpack.c.b16 %v2845, %v2841
    %v2894 = vpack.c.b16 %v2850, %v2846
    %v2895 = vpack.c.b16 %v2851, %v2847
    %v2896 = vpack.c.b16 %v2852, %v2848
    %v2897 = vpack.c.b16 %v2853, %v2849
    %v2898 = vpack.c.b16 %v2858, %v2854
    %v2899 = vpack.c.b16 %v2859, %v2855
    %v2900 = vpack.c.b16 %v2860, %v2856
    %v2901 = vpack.c.b16 %v2861, %v2857
    %v2902 = vpack.c.b16 %v2866, %v2862
    %v2903 = vpack.c.b16 %v2867, %v2863
    %v2904 = vpack.c.b16 %v2868, %v2864
    %v2905 = vpack.c.b16 %v2869, %v2865
    %v2906 = vpack.c.b16 %v2874, %v2870
    %v2907 = vpack.c.b16 %v2875, %v2871
    %v2908 = vpack.c.b16 %v2876, %v2872
    %v2909 = vpack.c.b16 %v2877, %v2873
    %2942 = vmatprep.subr.bf16.mxu0 %v2879
    %2943 = vmatpush1.bf16.msra.mxu0 %v2878
    %2944 = vmatprep.subr.bf16.mxu0 %v2883
    %2945 = vmatpush1.bf16.msra.mxu0 %v2882
    %2946 = vmatprep.subr.bf16.mxu0 %v2887
    %2947 = vmatpush1.bf16.msra.mxu0 %v2886
    %2948 = vmatprep.subr.bf16.mxu0 %v2891
    %2949 = vmatpush1.bf16.msra.mxu0 %v2890
    %2950 = vmatprep.subr.bf16.mxu0 %v2895
    %2951 = vmatpush1.bf16.msra.mxu0 %v2894
    %2952 = vmatprep.subr.bf16.mxu0 %v2899
    %2953 = vmatpush1.bf16.msra.mxu0 %v2898
    %2954 = vmatprep.subr.bf16.mxu0 %v2903
    %2955 = vmatpush1.bf16.msra.mxu0 %v2902
    %2956 = vmatprep.subr.bf16.mxu0 %v2907
    %2957 = vmatpush1.bf16.msra.mxu0 %v2906
    %2958 = vmatprep.subr.bf16.mxu0 0
    %2959 = vmatpush1.bf16.msra.mxu0 0
    %2960 = vmatprep.subr.bf16.mxu0 0
    %2961 = vmatpush1.bf16.msra.mxu0 0
    %2962 = vmatprep.subr.bf16.mxu0 0
    %2963 = vmatpush1.bf16.msra.mxu0 0
    %2964 = vmatprep.subr.bf16.mxu0 0
    %2965 = vmatpush1.bf16.msra.mxu0 0
    %2966 = vmatprep.subr.bf16.mxu0 0
    %2967 = vmatpush1.bf16.msra.mxu0 0
    %2968 = vmatprep.subr.bf16.mxu0 0
    %2969 = vmatpush1.bf16.msra.mxu0 0
    %2970 = vmatprep.subr.bf16.mxu0 0
    %2971 = vmatpush1.bf16.msra.mxu0 0
    %2972 = vmatprep.subr.bf16.mxu0 0
    %2973 = vmatpush1.bf16.msra.mxu0 0
    %2974 = vmatprep.mubr.bf16.mxu0 0
    %2975 = vmatmul.mubr.bf16.gmra.mrb[0].mxu0 %v2728
    %v2976 = vpop.f32.mrb[0].mxu0
    %v2977 = vadd.f32 0.0, %v2976
    %v2978 = vpop.f32.mrb[0].mxu0
    %v2979 = vadd.f32 0.0, %v2978
    %v2980 = vpop.f32.mrb[0].mxu0
    %v2981 = vadd.f32 0.0, %v2980
    %v2982 = vpop.f32.mrb[0].mxu0
    %v2983 = vadd.f32 0.0, %v2982
    %2984 = vdwg.mxu0
    %2985 = vmatprep.subr.bf16.mxu0 %v2881
    %2986 = vmatpush1.bf16.msra.mxu0 %v2880
    %2987 = vmatprep.subr.bf16.mxu0 %v2885
    %2988 = vmatpush1.bf16.msra.mxu0 %v2884
    %2989 = vmatprep.subr.bf16.mxu0 %v2889
    %2990 = vmatpush1.bf16.msra.mxu0 %v2888
    %2991 = vmatprep.subr.bf16.mxu0 %v2893
    %2992 = vmatpush1.bf16.msra.mxu0 %v2892
    %2993 = vmatprep.subr.bf16.mxu0 %v2897
    %2994 = vmatpush1.bf16.msra.mxu0 %v2896
    %2995 = vmatprep.subr.bf16.mxu0 %v2901
    %2996 = vmatpush1.bf16.msra.mxu0 %v2900
    %2997 = vmatprep.subr.bf16.mxu0 %v2905
    %2998 = vmatpush1.bf16.msra.mxu0 %v2904
    %2999 = vmatprep.subr.bf16.mxu0 %v2909
    %3000 = vmatpush1.bf16.msra.mxu0 %v2908
    %3001 = vmatprep.subr.bf16.mxu0 0
    %3002 = vmatpush1.bf16.msra.mxu0 0
    %3003 = vmatprep.subr.bf16.mxu0 0
    %3004 = vmatpush1.bf16.msra.mxu0 0
    %3005 = vmatprep.subr.bf16.mxu0 0
    %3006 = vmatpush1.bf16.msra.mxu0 0
    %3007 = vmatprep.subr.bf16.mxu0 0
    %3008 = vmatpush1.bf16.msra.mxu0 0
    %3009 = vmatprep.subr.bf16.mxu0 0
    %3010 = vmatpush1.bf16.msra.mxu0 0
    %3011 = vmatprep.subr.bf16.mxu0 0
    %3012 = vmatpush1.bf16.msra.mxu0 0
    %3013 = vmatprep.subr.bf16.mxu0 0
    %3014 = vmatpush1.bf16.msra.mxu0 0
    %3015 = vmatprep.subr.bf16.mxu0 0
    %3016 = vmatpush1.bf16.msra.mxu0 0
    %3017 = vmatprep.mubr.bf16.mxu0 0
    %3018 = vmatmul.mubr.bf16.gmra.mrb[0].mxu0 %v2728
    %v3019 = vpop.f32.mrb[0].mxu0
    %v3020 = vadd.f32 0.0, %v3019
    %v3021 = vpop.f32.mrb[0].mxu0
    %v3022 = vadd.f32 0.0, %v3021
    %v3023 = vpop.f32.mrb[0].mxu0
    %v3024 = vadd.f32 0.0, %v3023
    %v3025 = vpop.f32.mrb[0].mxu0
    %v3026 = vadd.f32 0.0, %v3025
    %3027 = vdwg.mxu0
    %v3028 = vadd.f32 %v2742, %v2977
    %v3029 = vadd.f32 %v2743, %v2979
    %v3030 = vadd.f32 %v2744, %v3020
    %v3031 = vadd.f32 %v2745, %v3022
    %v3032 = vadd.f32 %v2746, %v2981
    %v3033 = vadd.f32 %v2747, %v2983
    %v3034 = vadd.f32 %v2748, %v3024
    %v3035 = vadd.f32 %v2749, %v3026
    %v3036 = vmul.f32 %v3028, 0.5
    %v3037 = vmul.f32 %v3029, 0.5
    %v3038 = vmul.f32 %v3030, 0.5
    %v3039 = vmul.f32 %v3031, 0.5
    %v3040 = vmul.f32 %v3032, 0.5
    %v3041 = vmul.f32 %v3033, 0.5
    %v3042 = vmul.f32 %v3034, 0.5
    %v3043 = vmul.f32 %v3035, 0.5
    %v3044 = vtanh.pop %v3036
    %v3045 = vtanh.pop %v3037
    %v3046 = vtanh.pop %v3038
    %v3047 = vtanh.pop %v3039
    %v3048 = vtanh.pop %v3040
    %v3049 = vtanh.pop %v3041
    %v3050 = vtanh.pop %v3042
    %v3051 = vtanh.pop %v3043
    %v3052 = vmul.f32 %v3044, 0.5
    %v3053 = vmul.f32 %v3045, 0.5
    %v3054 = vmul.f32 %v3046, 0.5
    %v3055 = vmul.f32 %v3047, 0.5
    %v3056 = vmul.f32 %v3048, 0.5
    %v3057 = vmul.f32 %v3049, 0.5
    %v3058 = vmul.f32 %v3050, 0.5
    %v3059 = vmul.f32 %v3051, 0.5
    %v3060 = vadd.f32 %v3052, 0.5
    %v3061 = vadd.f32 %v3053, 0.5
    %v3062 = vadd.f32 %v3054, 0.5
    %v3063 = vadd.f32 %v3055, 0.5
    %v3064 = vadd.f32 %v3056, 0.5
    %v3065 = vadd.f32 %v3057, 0.5
    %v3066 = vadd.f32 %v3058, 0.5
    %v3067 = vadd.f32 %v3059, 0.5
    %v3068 = vmul.f32 %v3061, %v2716
    %v3069 = vmul.f32 %v3065, %v2717
    %v3070 = vadd.f32 %v3068, %v3062
    %v3071 = vadd.f32 %v3069, %v3066
    %v3072 = vsub.f32 %v3070, %v3060
    %v3073 = vsub.f32 %v3071, %v3064
    %v3074 = vmul.f32 %v3072, 0.5
    %v3075 = vmul.f32 %v3073, 0.5
    %v3076 = vtanh.pop %v3074
    %v3077 = vtanh.pop %v3075
    %v3078 = vmul.f32 %v3076, 0.5
    %v3079 = vmul.f32 %v3077, 0.5
    %v3080 = vadd.f32 %v3078, 0.5
    %v3081 = vadd.f32 %v3079, 0.5
    %v3082 = vsub.f32 %v3080, %v3063
    %v3083 = vsub.f32 %v3081, %v3067
    %v3084 = vpack.c.bf16 %v3083, %v3082
    %v3086 = vunpack.c.l.b16 %v3084
    %v3087 = vunpack.c.h.b16 %v3084
    %v3088 = vpack.c.b16 %v3086, %v3086
    %v3089 = vpack.c.b16 %v3087, %v3087
    %s3092 = scalar_lea.vmem %s4, 48
    %3093 = vst [vmem:[%s3092] sm:$0xf] %v3088
    %3094 = vst [vmem:[%s3092 + $0x4] sm:$0xf] %v3089
    %s3095 = smul.u32 14, 4
    %s3096 = smul.addr %s3095, 8
    %s3097 = scalar_lea.vmem [#allocation2], %s3096
    %v3098 = vld [vmem:[%s3097] sm:$0xff]
    %v3099 = vld [vmem:[%s3097 + $0x8] sm:$0xff]
    %v3100 = vld [vmem:[%s3097 + $0x10] sm:$0xff]
    %v3101 = vld [vmem:[%s3097 + $0x18] sm:$0xff]
    %v3102 = vld [vmem:[%s3097 + $0x20] sm:$0xff]
    %v3103 = vld [vmem:[%s3097 + $0x28] sm:$0xff]
    %v3104 = vld [vmem:[%s3097 + $0x30] sm:$0xff]
    %v3105 = vld [vmem:[%s3097 + $0x38] sm:$0xff]
    %v3106 = vld [vmem:[%s2] sm:$0xff]
    %v3107 = vld [vmem:[%s2 + $0x8] sm:$0xff]
    %v3108 = vld [vmem:[%s2 + $0x10] sm:$0xff]
    %v3109 = vld [vmem:[%s2 + $0x18] sm:$0xff]
    %v3110 = vld [vmem:[%s2 + $0x20] sm:$0xff]
    %v3111 = vld [vmem:[%s2 + $0x28] sm:$0xff]
    %v3112 = vld [vmem:[%s2 + $0x30] sm:$0xff]
    %v3113 = vld [vmem:[%s2 + $0x38] sm:$0xff]
    %v3114 = vld [vmem:[%s2 + $0x40] sm:$0xff]
    %v3115 = vld [vmem:[%s2 + $0x48] sm:$0xff]
    %v3116 = vld [vmem:[%s2 + $0x50] sm:$0xff]
    %v3117 = vld [vmem:[%s2 + $0x58] sm:$0xff]
    %v3118 = vld [vmem:[%s2 + $0x60] sm:$0xff]
    %v3119 = vld [vmem:[%s2 + $0x68] sm:$0xff]
    %v3120 = vld [vmem:[%s2 + $0x70] sm:$0xff]
    %v3121 = vld [vmem:[%s2 + $0x78] sm:$0xff]
    %v3122 = vld [vmem:[%s2 + $0x80] sm:$0xff]
    %v3123 = vld [vmem:[%s2 + $0x88] sm:$0xff]
    %v3124 = vld [vmem:[%s2 + $0x90] sm:$0xff]
    %v3125 = vld [vmem:[%s2 + $0x98] sm:$0xff]
    %v3126 = vld [vmem:[%s2 + $0xa0] sm:$0xff]
    %v3127 = vld [vmem:[%s2 + $0xa8] sm:$0xff]
    %v3128 = vld [vmem:[%s2 + $0xb0] sm:$0xff]
    %v3129 = vld [vmem:[%s2 + $0xb8] sm:$0xff]
    %v3130 = vld [vmem:[%s2 + $0xc0] sm:$0xff]
    %v3131 = vld [vmem:[%s2 + $0xc8] sm:$0xff]
    %v3132 = vld [vmem:[%s2 + $0xd0] sm:$0xff]
    %v3133 = vld [vmem:[%s2 + $0xd8] sm:$0xff]
    %v3134 = vld [vmem:[%s2 + $0xe0] sm:$0xff]
    %v3135 = vld [vmem:[%s2 + $0xe8] sm:$0xff]
    %v3136 = vld [vmem:[%s2 + $0xf0] sm:$0xff]
    %v3137 = vld [vmem:[%s2 + $0xf8] sm:$0xff]
    %v3170 = vunpack.c.l.b16 %v3106
    %v3171 = vunpack.c.h.b16 %v3106
    %v3172 = vunpack.c.l.b16 %v3107
    %v3173 = vunpack.c.h.b16 %v3107
    %v3174 = vunpack.c.l.b16 %v3108
    %v3175 = vunpack.c.h.b16 %v3108
    %v3176 = vunpack.c.l.b16 %v3109
    %v3177 = vunpack.c.h.b16 %v3109
    %v3178 = vunpack.c.l.b16 %v3110
    %v3179 = vunpack.c.h.b16 %v3110
    %v3180 = vunpack.c.l.b16 %v3111
    %v3181 = vunpack.c.h.b16 %v3111
    %v3182 = vunpack.c.l.b16 %v3112
    %v3183 = vunpack.c.h.b16 %v3112
    %v3184 = vunpack.c.l.b16 %v3113
    %v3185 = vunpack.c.h.b16 %v3113
    %v3186 = vunpack.c.l.b16 %v3114
    %v3187 = vunpack.c.h.b16 %v3114
    %v3188 = vunpack.c.l.b16 %v3115
    %v3189 = vunpack.c.h.b16 %v3115
    %v3190 = vunpack.c.l.b16 %v3116
    %v3191 = vunpack.c.h.b16 %v3116
    %v3192 = vunpack.c.l.b16 %v3117
    %v3193 = vunpack.c.h.b16 %v3117
    %v3194 = vunpack.c.l.b16 %v3118
    %v3195 = vunpack.c.h.b16 %v3118
    %v3196 = vunpack.c.l.b16 %v3119
    %v3197 = vunpack.c.h.b16 %v3119
    %v3198 = vunpack.c.l.b16 %v3120
    %v3199 = vunpack.c.h.b16 %v3120
    %v3200 = vunpack.c.l.b16 %v3121
    %v3201 = vunpack.c.h.b16 %v3121
    %v3202 = vunpack.c.l.b16 %v3122
    %v3203 = vunpack.c.h.b16 %v3122
    %v3204 = vunpack.c.l.b16 %v3123
    %v3205 = vunpack.c.h.b16 %v3123
    %v3206 = vunpack.c.l.b16 %v3124
    %v3207 = vunpack.c.h.b16 %v3124
    %v3208 = vunpack.c.l.b16 %v3125
    %v3209 = vunpack.c.h.b16 %v3125
    %v3210 = vunpack.c.l.b16 %v3126
    %v3211 = vunpack.c.h.b16 %v3126
    %v3212 = vunpack.c.l.b16 %v3127
    %v3213 = vunpack.c.h.b16 %v3127
    %v3214 = vunpack.c.l.b16 %v3128
    %v3215 = vunpack.c.h.b16 %v3128
    %v3216 = vunpack.c.l.b16 %v3129
    %v3217 = vunpack.c.h.b16 %v3129
    %v3218 = vunpack.c.l.b16 %v3130
    %v3219 = vunpack.c.h.b16 %v3130
    %v3220 = vunpack.c.l.b16 %v3131
    %v3221 = vunpack.c.h.b16 %v3131
    %v3222 = vunpack.c.l.b16 %v3132
    %v3223 = vunpack.c.h.b16 %v3132
    %v3224 = vunpack.c.l.b16 %v3133
    %v3225 = vunpack.c.h.b16 %v3133
    %v3226 = vunpack.c.l.b16 %v3134
    %v3227 = vunpack.c.h.b16 %v3134
    %v3228 = vunpack.c.l.b16 %v3135
    %v3229 = vunpack.c.h.b16 %v3135
    %v3230 = vunpack.c.l.b16 %v3136
    %v3231 = vunpack.c.h.b16 %v3136
    %v3232 = vunpack.c.l.b16 %v3137
    %v3233 = vunpack.c.h.b16 %v3137
    %v3234 = vpack.c.b16 %v3174, %v3170
    %v3235 = vpack.c.b16 %v3175, %v3171
    %v3236 = vpack.c.b16 %v3176, %v3172
    %v3237 = vpack.c.b16 %v3177, %v3173
    %v3238 = vpack.c.b16 %v3182, %v3178
    %v3239 = vpack.c.b16 %v3183, %v3179
    %v3240 = vpack.c.b16 %v3184, %v3180
    %v3241 = vpack.c.b16 %v3185, %v3181
    %v3242 = vpack.c.b16 %v3190, %v3186
    %v3243 = vpack.c.b16 %v3191, %v3187
    %v3244 = vpack.c.b16 %v3192, %v3188
    %v3245 = vpack.c.b16 %v3193, %v3189
    %v3246 = vpack.c.b16 %v3198, %v3194
    %v3247 = vpack.c.b16 %v3199, %v3195
    %v3248 = vpack.c.b16 %v3200, %v3196
    %v3249 = vpack.c.b16 %v3201, %v3197
    %v3250 = vpack.c.b16 %v3206, %v3202
    %v3251 = vpack.c.b16 %v3207, %v3203
    %v3252 = vpack.c.b16 %v3208, %v3204
    %v3253 = vpack.c.b16 %v3209, %v3205
    %v3254 = vpack.c.b16 %v3214, %v3210
    %v3255 = vpack.c.b16 %v3215, %v3211
    %v3256 = vpack.c.b16 %v3216, %v3212
    %v3257 = vpack.c.b16 %v3217, %v3213
    %v3258 = vpack.c.b16 %v3222, %v3218
    %v3259 = vpack.c.b16 %v3223, %v3219
    %v3260 = vpack.c.b16 %v3224, %v3220
    %v3261 = vpack.c.b16 %v3225, %v3221
    %v3262 = vpack.c.b16 %v3230, %v3226
    %v3263 = vpack.c.b16 %v3231, %v3227
    %v3264 = vpack.c.b16 %v3232, %v3228
    %v3265 = vpack.c.b16 %v3233, %v3229
    %3298 = vmatprep.subr.bf16.mxu0 %v3235
    %3299 = vmatpush1.bf16.msra.mxu0 %v3234
    %3300 = vmatprep.subr.bf16.mxu0 %v3239
    %3301 = vmatpush1.bf16.msra.mxu0 %v3238
    %3302 = vmatprep.subr.bf16.mxu0 %v3243
    %3303 = vmatpush1.bf16.msra.mxu0 %v3242
    %3304 = vmatprep.subr.bf16.mxu0 %v3247
    %3305 = vmatpush1.bf16.msra.mxu0 %v3246
    %3306 = vmatprep.subr.bf16.mxu0 %v3251
    %3307 = vmatpush1.bf16.msra.mxu0 %v3250
    %3308 = vmatprep.subr.bf16.mxu0 %v3255
    %3309 = vmatpush1.bf16.msra.mxu0 %v3254
    %3310 = vmatprep.subr.bf16.mxu0 %v3259
    %3311 = vmatpush1.bf16.msra.mxu0 %v3258
    %3312 = vmatprep.subr.bf16.mxu0 %v3263
    %3313 = vmatpush1.bf16.msra.mxu0 %v3262
    %3314 = vmatprep.subr.bf16.mxu0 0
    %3315 = vmatpush1.bf16.msra.mxu0 0
    %3316 = vmatprep.subr.bf16.mxu0 0
    %3317 = vmatpush1.bf16.msra.mxu0 0
    %3318 = vmatprep.subr.bf16.mxu0 0
    %3319 = vmatpush1.bf16.msra.mxu0 0
    %3320 = vmatprep.subr.bf16.mxu0 0
    %3321 = vmatpush1.bf16.msra.mxu0 0
    %3322 = vmatprep.subr.bf16.mxu0 0
    %3323 = vmatpush1.bf16.msra.mxu0 0
    %3324 = vmatprep.subr.bf16.mxu0 0
    %3325 = vmatpush1.bf16.msra.mxu0 0
    %3326 = vmatprep.subr.bf16.mxu0 0
    %3327 = vmatpush1.bf16.msra.mxu0 0
    %3328 = vmatprep.subr.bf16.mxu0 0
    %3329 = vmatpush1.bf16.msra.mxu0 0
    %3330 = vmatprep.mubr.bf16.mxu0 0
    %3331 = vmatmul.mubr.bf16.gmra.mrb[0].mxu0 %v3084
    %v3332 = vpop.f32.mrb[0].mxu0
    %v3333 = vadd.f32 0.0, %v3332
    %v3334 = vpop.f32.mrb[0].mxu0
    %v3335 = vadd.f32 0.0, %v3334
    %v3336 = vpop.f32.mrb[0].mxu0
    %v3337 = vadd.f32 0.0, %v3336
    %v3338 = vpop.f32.mrb[0].mxu0
    %v3339 = vadd.f32 0.0, %v3338
    %3340 = vdwg.mxu0
    %3341 = vmatprep.subr.bf16.mxu0 %v3237
    %3342 = vmatpush1.bf16.msra.mxu0 %v3236
    %3343 = vmatprep.subr.bf16.mxu0 %v3241
    %3344 = vmatpush1.bf16.msra.mxu0 %v3240
    %3345 = vmatprep.subr.bf16.mxu0 %v3245
    %3346 = vmatpush1.bf16.msra.mxu0 %v3244
    %3347 = vmatprep.subr.bf16.mxu0 %v3249
    %3348 = vmatpush1.bf16.msra.mxu0 %v3248
    %3349 = vmatprep.subr.bf16.mxu0 %v3253
    %3350 = vmatpush1.bf16.msra.mxu0 %v3252
    %3351 = vmatprep.subr.bf16.mxu0 %v3257
    %3352 = vmatpush1.bf16.msra.mxu0 %v3256
    %3353 = vmatprep.subr.bf16.mxu0 %v3261
    %3354 = vmatpush1.bf16.msra.mxu0 %v3260
    %3355 = vmatprep.subr.bf16.mxu0 %v3265
    %3356 = vmatpush1.bf16.msra.mxu0 %v3264
    %3357 = vmatprep.subr.bf16.mxu0 0
    %3358 = vmatpush1.bf16.msra.mxu0 0
    %3359 = vmatprep.subr.bf16.mxu0 0
    %3360 = vmatpush1.bf16.msra.mxu0 0
    %3361 = vmatprep.subr.bf16.mxu0 0
    %3362 = vmatpush1.bf16.msra.mxu0 0
    %3363 = vmatprep.subr.bf16.mxu0 0
    %3364 = vmatpush1.bf16.msra.mxu0 0
    %3365 = vmatprep.subr.bf16.mxu0 0
    %3366 = vmatpush1.bf16.msra.mxu0 0
    %3367 = vmatprep.subr.bf16.mxu0 0
    %3368 = vmatpush1.bf16.msra.mxu0 0
    %3369 = vmatprep.subr.bf16.mxu0 0
    %3370 = vmatpush1.bf16.msra.mxu0 0
    %3371 = vmatprep.subr.bf16.mxu0 0
    %3372 = vmatpush1.bf16.msra.mxu0 0
    %3373 = vmatprep.mubr.bf16.mxu0 0
    %3374 = vmatmul.mubr.bf16.gmra.mrb[0].mxu0 %v3084
    %v3375 = vpop.f32.mrb[0].mxu0
    %v3376 = vadd.f32 0.0, %v3375
    %v3377 = vpop.f32.mrb[0].mxu0
    %v3378 = vadd.f32 0.0, %v3377
    %v3379 = vpop.f32.mrb[0].mxu0
    %v3380 = vadd.f32 0.0, %v3379
    %v3381 = vpop.f32.mrb[0].mxu0
    %v3382 = vadd.f32 0.0, %v3381
    %3383 = vdwg.mxu0
    %v3384 = vadd.f32 %v3098, %v3333
    %v3385 = vadd.f32 %v3099, %v3335
    %v3386 = vadd.f32 %v3100, %v3376
    %v3387 = vadd.f32 %v3101, %v3378
    %v3388 = vadd.f32 %v3102, %v3337
    %v3389 = vadd.f32 %v3103, %v3339
    %v3390 = vadd.f32 %v3104, %v3380
    %v3391 = vadd.f32 %v3105, %v3382
    %v3392 = vmul.f32 %v3384, 0.5
    %v3393 = vmul.f32 %v3385, 0.5
    %v3394 = vmul.f32 %v3386, 0.5
    %v3395 = vmul.f32 %v3387, 0.5
    %v3396 = vmul.f32 %v3388, 0.5
    %v3397 = vmul.f32 %v3389, 0.5
    %v3398 = vmul.f32 %v3390, 0.5
    %v3399 = vmul.f32 %v3391, 0.5
    %v3400 = vtanh.pop %v3392
    %v3401 = vtanh.pop %v3393
    %v3402 = vtanh.pop %v3394
    %v3403 = vtanh.pop %v3395
    %v3404 = vtanh.pop %v3396
    %v3405 = vtanh.pop %v3397
    %v3406 = vtanh.pop %v3398
    %v3407 = vtanh.pop %v3399
    %v3408 = vmul.f32 %v3400, 0.5
    %v3409 = vmul.f32 %v3401, 0.5
    %v3410 = vmul.f32 %v3402, 0.5
    %v3411 = vmul.f32 %v3403, 0.5
    %v3412 = vmul.f32 %v3404, 0.5
    %v3413 = vmul.f32 %v3405, 0.5
    %v3414 = vmul.f32 %v3406, 0.5
    %v3415 = vmul.f32 %v3407, 0.5
    %v3416 = vadd.f32 %v3408, 0.5
    %v3417 = vadd.f32 %v3409, 0.5
    %v3418 = vadd.f32 %v3410, 0.5
    %v3419 = vadd.f32 %v3411, 0.5
    %v3420 = vadd.f32 %v3412, 0.5
    %v3421 = vadd.f32 %v3413, 0.5
    %v3422 = vadd.f32 %v3414, 0.5
    %v3423 = vadd.f32 %v3415, 0.5
    %v3424 = vmul.f32 %v3417, %v3072
    %v3425 = vmul.f32 %v3421, %v3073
    %v3426 = vadd.f32 %v3424, %v3418
    %v3427 = vadd.f32 %v3425, %v3422
    %v3428 = vsub.f32 %v3426, %v3416
    %v3429 = vsub.f32 %v3427, %v3420
    %v3430 = vmul.f32 %v3428, 0.5
    %v3431 = vmul.f32 %v3429, 0.5
    %v3432 = vtanh.pop %v3430
    %v3433 = vtanh.pop %v3431
    %v3434 = vmul.f32 %v3432, 0.5
    %v3435 = vmul.f32 %v3433, 0.5
    %v3436 = vadd.f32 %v3434, 0.5
    %v3437 = vadd.f32 %v3435, 0.5
    %v3438 = vsub.f32 %v3436, %v3419
    %v3439 = vsub.f32 %v3437, %v3423
    %v3440 = vpack.c.bf16 %v3439, %v3438
    %v3442 = vunpack.c.l.b16 %v3440
    %v3443 = vunpack.c.h.b16 %v3440
    %v3444 = vpack.c.b16 %v3442, %v3442
    %v3445 = vpack.c.b16 %v3443, %v3443
    %s3448 = scalar_lea.vmem %s4, 56
    %3449 = vst [vmem:[%s3448] sm:$0xf] %v3444
    %3450 = vst [vmem:[%s3448 + $0x4] sm:$0xf] %v3445
    %3451 = vst [vmem:[#allocation3] sm:$0xff] %v3438
    %3452 = vst [vmem:[#allocation3 + $0x8] sm:$0xff] %v3439
    %3453 = vst [vmem:[#allocation4] sm:$0xff] %v3428
    %3454 = vst [vmem:[#allocation4 + $0x8] sm:$0xff] %v3429
    // Predicated region
    $region22: #{rnn_model_forward.4} parent=1 // pred_check
      %p3455 = pneg %p23
    $region23: #{rnn_model_forward.4} parent=1 // pred_check_branch
      %3457 = sbr.rel (%p3455) target = $region25
    $region24: #{rnn_model_forward.4} parent=1 // pred_region
      %v3458 = vld [vmem:[#allocation3] sm:$0xff]
      %v3459 = vld [vmem:[#allocation3 + $0x8] sm:$0xff]
      %3460 = vst [vmem:[#allocation5] sm:$0xff] %v3458
      %3461 = vst [vmem:[#allocation5 + $0x8] sm:$0xff] %v3459
      %v3462 = vld [vmem:[#allocation4] sm:$0xff]
      %v3463 = vld [vmem:[#allocation4 + $0x8] sm:$0xff]
      %3464 = vst [vmem:[#allocation7] sm:$0xff] %v3462
      %3465 = vst [vmem:[#allocation7 + $0x8] sm:$0xff] %v3463
    $region25: #{rnn_model_forward.4} parent=1 // pred_fallthru
      _
    // Predicated region
    $region26: #{rnn_model_forward.4} parent=1 // pred_check
      _
    $region27: #{rnn_model_forward.4} parent=1 // pred_check_branch
      %3467 = sbr.rel (0) target = $region29
    $region28: #{rnn_model_forward.4} parent=1 // pred_region
      _
    $region29: #{rnn_model_forward.4} parent=1 // pred_fallthru
      _
    // Predicated region
    $region30: #{rnn_model_forward.4} parent=1 // pred_check
      _
    $region31: #{rnn_model_forward.4} parent=1 // pred_check_branch
      %3469 = sbr.rel (0) target = $region33
    $region32: #{rnn_model_forward.4} parent=1 // pred_region
      %s3471 = ssub.s32 256, 256
      %3472 = vsyncadd [#allocation6], %s3471
      %s3473 = sshll.u32 [#allocation5], 4
      %s3474 = int_to_ptr.vmem [resolvable:$true] %s3473
      %3479 = dma.vmem_to_hbm [thread:$0]  %s3474, 256, %s5, [#allocation6], 128, 128, 8
    $region33: #{rnn_model_forward.4} parent=1 // pred_fallthru
      _
    // Predicated region
    $region34: #{rnn_model_forward.4} parent=1 // pred_check
      _
    $region35: #{rnn_model_forward.4} parent=1 // pred_check_branch
      %3481 = sbr.rel (0) target = $region37
    $region36: #{rnn_model_forward.4} parent=1 // pred_region
      %s3483 = ssub.s32 256, 256
      %3484 = vsyncadd [#allocation8], %s3483
      %s3485 = sshll.u32 [#allocation7], 4
      %s3486 = int_to_ptr.vmem [resolvable:$true] %s3485
      %3491 = dma.vmem_to_hbm [thread:$0]  %s3486, 256, %s6, [#allocation8], 128, 128, 8
    $region37: #{rnn_model_forward.4} parent=1 // pred_fallthru
      _
    // Predicated region
    $region38: #{rnn_model_forward.4} parent=1 // pred_check
      _
    $region39: #{rnn_model_forward.4} parent=1 // pred_check_branch
      %3493 = sbr.rel (0) target = $region41
    $region40: #{rnn_model_forward.4} parent=1 // pred_region
      _
    $region41: #{rnn_model_forward.4} parent=1 // pred_fallthru
      _
    // Predicated region
    $region42: #{rnn_model_forward.4} parent=1 // pred_check
      _
    $region43: #{rnn_model_forward.4} parent=1 // pred_check_branch
      %3495 = sbr.rel (0) target = $region45
    $region44: #{rnn_model_forward.4} parent=1 // pred_region
      %3496 = dma.done [#allocation6], 256
    $region45: #{rnn_model_forward.4} parent=1 // pred_fallthru
      _
    // Predicated region
    $region46: #{rnn_model_forward.4} parent=1 // pred_check
      _
    $region47: #{rnn_model_forward.4} parent=1 // pred_check_branch
      %3498 = sbr.rel (0) target = $region49
    $region48: #{rnn_model_forward.4} parent=1 // pred_region
      %3499 = dma.done [#allocation8], 256
    $region49: #{rnn_model_forward.4} parent=1 // pred_fallthru
      _
    %3500 = vsyncpa [#allocation6], 1
    %3501 = vsyncpa [#allocation8], 1

// kernel: rnn_model_forward.6
$region0: #{rnn_model_forward.6}
  #allocation0 [shape = 'u32[]', space=smem, size = 0x4, offset = 0x4, fixed_abs, tag = 'smem constant byte address 0x4 - core index']
  #allocation1 [shape = 'u32[144,128]{1,0:T(1,128)}', space=vmem, size = 0x12000, scoped, tag = 'internal scratch']
  #allocation2 [shape = 'f32[128,512]{1,0:T(8,128)}', space=vmem, size = 0x40000, scoped, tag = 'scratch operand']
  #allocation3 [shape = 'f32[16,128]{1,0:T(8,128)}', space=vmem, size = 0x2000, scoped, tag = 'scratch operand']
  #allocation4 [shape = 'f32[16,128]{1,0:T(8,128)}', space=vmem, size = 0x2000, scoped, tag = 'scratch operand']
  %s0 = inlined_call_operand.vmem [shape: bf16[8,16,128], index: 0, kind: input, shape index: {}]
  %s1 = inlined_call_operand.vmem [shape: bf16[128,512], index: 1, kind: input, shape index: {}]
  %s2 = inlined_call_operand.vmem [shape: bf16[128,512], index: 2, kind: input, shape index: {}]
  %s3 = inlined_call_operand.vmem [shape: f32[1,512], index: 3, kind: input, shape index: {}]
  %s4 = inlined_call_operand.vmem [shape: bf16[8,16,128], index: 4, kind: output, shape index: {0}]
  %s5 = inlined_call_operand.vmem [shape: f32[16,128], index: 5, kind: output, shape index: {1}]
  %s6 = inlined_call_operand.vmem [shape: f32[16,128], index: 6, kind: output, shape index: {2}]
  %7 = xla_tuple %s4, %s5, %s6
  %s8 = sld [smem:[#allocation0]]
  $region50: #{rnn_model_forward.6} parent=0
    _
  %s10 = ssub.s32 1, %s8
  %s11 = scalar_select 0, %s10, %s8
  // Predicated region
  $region2: #{rnn_model_forward.6} parent=0 // pred_check
    _
  $region3: #{rnn_model_forward.6} parent=0 // pred_check_branch
    %13 = sbr.rel (0) target = $region5
  $region4: #{rnn_model_forward.6} parent=0 // pred_region
    _
  $region5: #{rnn_model_forward.6} parent=0 // pred_fallthru
    _
  // Predicated region
  $region6: #{rnn_model_forward.6} parent=0 // pred_check
    _
  $region7: #{rnn_model_forward.6} parent=0 // pred_check_branch
    %15 = sbr.rel (0) target = $region9
  $region8: #{rnn_model_forward.6} parent=0 // pred_region
    _
  $region9: #{rnn_model_forward.6} parent=0 // pred_fallthru
    _
  // Predicated region
  $region10: #{rnn_model_forward.6} parent=0 // pred_check
    _
  $region11: #{rnn_model_forward.6} parent=0 // pred_check_branch
    %17 = sbr.rel (0) target = $region13
  $region12: #{rnn_model_forward.6} parent=0 // pred_region
    _
  $region13: #{rnn_model_forward.6} parent=0 // pred_fallthru
    _
  // Predicated region
  $region14: #{rnn_model_forward.6} parent=0 // pred_check
    _
  $region15: #{rnn_model_forward.6} parent=0 // pred_check_branch
    %19 = sbr.rel (0) target = $region17
  $region16: #{rnn_model_forward.6} parent=0 // pred_region
    _
  $region17: #{rnn_model_forward.6} parent=0 // pred_fallthru
    _
  %p21 = scmp.eq.s32.totalorder 0, 0
  // Predicated region
  $region18: #{rnn_model_forward.6} parent=0 // pred_check
    %p22 = pneg %p21
  $region19: #{rnn_model_forward.6} parent=0 // pred_check_branch
    %24 = sbr.rel (%p22) target = $region21
  $region20: #{rnn_model_forward.6} parent=0 // pred_region
    %25 = vst [vmem:[#allocation3] sm:$0xff] 0.0
    %26 = vst [vmem:[#allocation3 + $0x8] sm:$0xff] 0.0
    %27 = vst [vmem:[#allocation4] sm:$0xff] 0.0
    %28 = vst [vmem:[#allocation4 + $0x8] sm:$0xff] 0.0
  $region21: #{rnn_model_forward.6} parent=0 // pred_fallthru
    _
  %v29 = vld [vmem:[%s0] sm:$0xf]
  %v30 = vld [vmem:[%s0 + $0x4] sm:$0xf]
  %v31 = vld [vmem:[%s0 + $0x8] sm:$0xf]
  %v32 = vld [vmem:[%s0 + $0xc] sm:$0xf]
  %v33 = vld [vmem:[%s0 + $0x10] sm:$0xf]
  %v34 = vld [vmem:[%s0 + $0x14] sm:$0xf]
  %v35 = vld [vmem:[%s0 + $0x18] sm:$0xf]
  %v36 = vld [vmem:[%s0 + $0x1c] sm:$0xf]
  %v37 = vld [vmem:[%s0 + $0x20] sm:$0xf]
  %v38 = vld [vmem:[%s0 + $0x24] sm:$0xf]
  %v39 = vld [vmem:[%s0 + $0x28] sm:$0xf]
  %v40 = vld [vmem:[%s0 + $0x2c] sm:$0xf]
  %v41 = vld [vmem:[%s0 + $0x30] sm:$0xf]
  %v42 = vld [vmem:[%s0 + $0x34] sm:$0xf]
  %v43 = vld [vmem:[%s0 + $0x38] sm:$0xf]
  %v44 = vld [vmem:[%s0 + $0x3c] sm:$0xf]
  %v45 = vld [vmem:[%s1] sm:$0xff]
  %v46 = vld [vmem:[%s1 + $0x8] sm:$0xff]
  %v47 = vld [vmem:[%s1 + $0x10] sm:$0xff]
  %v48 = vld [vmem:[%s1 + $0x18] sm:$0xff]
  %v49 = vld [vmem:[%s1 + $0x20] sm:$0xff]
  %v50 = vld [vmem:[%s1 + $0x28] sm:$0xff]
  %v51 = vld [vmem:[%s1 + $0x30] sm:$0xff]
  %v52 = vld [vmem:[%s1 + $0x38] sm:$0xff]
  %v53 = vld [vmem:[%s1 + $0x40] sm:$0xff]
  %v54 = vld [vmem:[%s1 + $0x48] sm:$0xff]
  %v55 = vld [vmem:[%s1 + $0x50] sm:$0xff]
  %v56 = vld [vmem:[%s1 + $0x58] sm:$0xff]
  %v57 = vld [vmem:[%s1 + $0x60] sm:$0xff]
  %v58 = vld [vmem:[%s1 + $0x68] sm:$0xff]
  %v59 = vld [vmem:[%s1 + $0x70] sm:$0xff]
  %v60 = vld [vmem:[%s1 + $0x78] sm:$0xff]
  %v61 = vld [vmem:[%s1 + $0x80] sm:$0xff]
  %v62 = vld [vmem:[%s1 + $0x88] sm:$0xff]
  %v63 = vld [vmem:[%s1 + $0x90] sm:$0xff]
  %v64 = vld [vmem:[%s1 + $0x98] sm:$0xff]
  %v65 = vld [vmem:[%s1 + $0xa0] sm:$0xff]
  %v66 = vld [vmem:[%s1 + $0xa8] sm:$0xff]
  %v67 = vld [vmem:[%s1 + $0xb0] sm:$0xff]
  %v68 = vld [vmem:[%s1 + $0xb8] sm:$0xff]
  %v69 = vld [vmem:[%s1 + $0xc0] sm:$0xff]
  %v70 = vld [vmem:[%s1 + $0xc8] sm:$0xff]
  %v71 = vld [vmem:[%s1 + $0xd0] sm:$0xff]
  %v72 = vld [vmem:[%s1 + $0xd8] sm:$0xff]
  %v73 = vld [vmem:[%s1 + $0xe0] sm:$0xff]
  %v74 = vld [vmem:[%s1 + $0xe8] sm:$0xff]
  %v75 = vld [vmem:[%s1 + $0xf0] sm:$0xff]
  %v76 = vld [vmem:[%s1 + $0xf8] sm:$0xff]
  %v77 = vld [vmem:[%s3] sm:$0xf]
  %v79 = vlaneseq
  %v80 = vshrl.u32 %v79, 7
  %v81 = vsub.s32 0, %v80
  %v82 = vrot.slane %v77, %v81
  %v83 = vlaneseq
  %v84 = vshrl.u32 %v83, 7
  %v85 = vsub.s32 1, %v84
  %v86 = vrot.slane %v77, %v85
  %v87 = vlaneseq
  %v88 = vshrl.u32 %v87, 7
  %v89 = vsub.s32 2, %v88
  %v90 = vrot.slane %v77, %v89
  %v91 = vlaneseq
  %v92 = vshrl.u32 %v91, 7
  %v93 = vsub.s32 3, %v92
  %v94 = vrot.slane %v77, %v93
  %v115 = vunpack.c.l.b16 %v29
  %v116 = vunpack.c.l.b16 %v30
  %v117 = vunpack.c.l.b16 %v31
  %v118 = vunpack.c.l.b16 %v32
  %v119 = vunpack.c.l.b16 %v33
  %v120 = vunpack.c.l.b16 %v34
  %v121 = vunpack.c.l.b16 %v35
  %v122 = vunpack.c.l.b16 %v36
  %v123 = vunpack.c.l.b16 %v37
  %v124 = vunpack.c.l.b16 %v38
  %v125 = vunpack.c.l.b16 %v39
  %v126 = vunpack.c.l.b16 %v40
  %v127 = vunpack.c.l.b16 %v41
  %v128 = vunpack.c.l.b16 %v42
  %v129 = vunpack.c.l.b16 %v43
  %v130 = vunpack.c.l.b16 %v44
  %v131 = vpack.c.b16 %v116, %v115
  %v132 = vpack.c.b16 %v118, %v117
  %v133 = vpack.c.b16 %v120, %v119
  %v134 = vpack.c.b16 %v122, %v121
  %v135 = vpack.c.b16 %v124, %v123
  %v136 = vpack.c.b16 %v126, %v125
  %v137 = vpack.c.b16 %v128, %v127
  %v138 = vpack.c.b16 %v130, %v129
  %v179 = vunpack.c.l.b16 %v45
  %v180 = vunpack.c.h.b16 %v45
  %v181 = vunpack.c.l.b16 %v46
  %v182 = vunpack.c.h.b16 %v46
  %v183 = vunpack.c.l.b16 %v47
  %v184 = vunpack.c.h.b16 %v47
  %v185 = vunpack.c.l.b16 %v48
  %v186 = vunpack.c.h.b16 %v48
  %v187 = vunpack.c.l.b16 %v49
  %v188 = vunpack.c.h.b16 %v49
  %v189 = vunpack.c.l.b16 %v50
  %v190 = vunpack.c.h.b16 %v50
  %v191 = vunpack.c.l.b16 %v51
  %v192 = vunpack.c.h.b16 %v51
  %v193 = vunpack.c.l.b16 %v52
  %v194 = vunpack.c.h.b16 %v52
  %v195 = vunpack.c.l.b16 %v53
  %v196 = vunpack.c.h.b16 %v53
  %v197 = vunpack.c.l.b16 %v54
  %v198 = vunpack.c.h.b16 %v54
  %v199 = vunpack.c.l.b16 %v55
  %v200 = vunpack.c.h.b16 %v55
  %v201 = vunpack.c.l.b16 %v56
  %v202 = vunpack.c.h.b16 %v56
  %v203 = vunpack.c.l.b16 %v57
  %v204 = vunpack.c.h.b16 %v57
  %v205 = vunpack.c.l.b16 %v58
  %v206 = vunpack.c.h.b16 %v58
  %v207 = vunpack.c.l.b16 %v59
  %v208 = vunpack.c.h.b16 %v59
  %v209 = vunpack.c.l.b16 %v60
  %v210 = vunpack.c.h.b16 %v60
  %v211 = vunpack.c.l.b16 %v61
  %v212 = vunpack.c.h.b16 %v61
  %v213 = vunpack.c.l.b16 %v62
  %v214 = vunpack.c.h.b16 %v62
  %v215 = vunpack.c.l.b16 %v63
  %v216 = vunpack.c.h.b16 %v63
  %v217 = vunpack.c.l.b16 %v64
  %v218 = vunpack.c.h.b16 %v64
  %v219 = vunpack.c.l.b16 %v65
  %v220 = vunpack.c.h.b16 %v65
  %v221 = vunpack.c.l.b16 %v66
  %v222 = vunpack.c.h.b16 %v66
  %v223 = vunpack.c.l.b16 %v67
  %v224 = vunpack.c.h.b16 %v67
  %v225 = vunpack.c.l.b16 %v68
  %v226 = vunpack.c.h.b16 %v68
  %v227 = vunpack.c.l.b16 %v69
  %v228 = vunpack.c.h.b16 %v69
  %v229 = vunpack.c.l.b16 %v70
  %v230 = vunpack.c.h.b16 %v70
  %v231 = vunpack.c.l.b16 %v71
  %v232 = vunpack.c.h.b16 %v71
  %v233 = vunpack.c.l.b16 %v72
  %v234 = vunpack.c.h.b16 %v72
  %v235 = vunpack.c.l.b16 %v73
  %v236 = vunpack.c.h.b16 %v73
  %v237 = vunpack.c.l.b16 %v74
  %v238 = vunpack.c.h.b16 %v74
  %v239 = vunpack.c.l.b16 %v75
  %v240 = vunpack.c.h.b16 %v75
  %v241 = vunpack.c.l.b16 %v76
  %v242 = vunpack.c.h.b16 %v76
  %v243 = vpack.c.b16 %v183, %v179
  %v244 = vpack.c.b16 %v184, %v180
  %v245 = vpack.c.b16 %v185, %v181
  %v246 = vpack.c.b16 %v186, %v182
  %v247 = vpack.c.b16 %v191, %v187
  %v248 = vpack.c.b16 %v192, %v188
  %v249 = vpack.c.b16 %v193, %v189
  %v250 = vpack.c.b16 %v194, %v190
  %v251 = vpack.c.b16 %v199, %v195
  %v252 = vpack.c.b16 %v200, %v196
  %v253 = vpack.c.b16 %v201, %v197
  %v254 = vpack.c.b16 %v202, %v198
  %v255 = vpack.c.b16 %v207, %v203
  %v256 = vpack.c.b16 %v208, %v204
  %v257 = vpack.c.b16 %v209, %v205
  %v258 = vpack.c.b16 %v210, %v206
  %v259 = vpack.c.b16 %v215, %v211
  %v260 = vpack.c.b16 %v216, %v212
  %v261 = vpack.c.b16 %v217, %v213
  %v262 = vpack.c.b16 %v218, %v214
  %v263 = vpack.c.b16 %v223, %v219
  %v264 = vpack.c.b16 %v224, %v220
  %v265 = vpack.c.b16 %v225, %v221
  %v266 = vpack.c.b16 %v226, %v222
  %v267 = vpack.c.b16 %v231, %v227
  %v268 = vpack.c.b16 %v232, %v228
  %v269 = vpack.c.b16 %v233, %v229
  %v270 = vpack.c.b16 %v234, %v230
  %v271 = vpack.c.b16 %v239, %v235
  %v272 = vpack.c.b16 %v240, %v236
  %v273 = vpack.c.b16 %v241, %v237
  %v274 = vpack.c.b16 %v242, %v238
  %307 = vmatprep.subr.bf16.mxu0 %v244
  %308 = vmatpush1.bf16.msra.mxu0 %v243
  %309 = vmatprep.subr.bf16.mxu0 %v248
  %310 = vmatpush1.bf16.msra.mxu0 %v247
  %311 = vmatprep.subr.bf16.mxu0 %v252
  %312 = vmatpush1.bf16.msra.mxu0 %v251
  %313 = vmatprep.subr.bf16.mxu0 %v256
  %314 = vmatpush1.bf16.msra.mxu0 %v255
  %315 = vmatprep.subr.bf16.mxu0 %v260
  %316 = vmatpush1.bf16.msra.mxu0 %v259
  %317 = vmatprep.subr.bf16.mxu0 %v264
  %318 = vmatpush1.bf16.msra.mxu0 %v263
  %319 = vmatprep.subr.bf16.mxu0 %v268
  %320 = vmatpush1.bf16.msra.mxu0 %v267
  %321 = vmatprep.subr.bf16.mxu0 %v272
  %322 = vmatpush1.bf16.msra.mxu0 %v271
  %323 = vmatprep.subr.bf16.mxu0 0
  %324 = vmatpush1.bf16.msra.mxu0 0
  %325 = vmatprep.subr.bf16.mxu0 0
  %326 = vmatpush1.bf16.msra.mxu0 0
  %327 = vmatprep.subr.bf16.mxu0 0
  %328 = vmatpush1.bf16.msra.mxu0 0
  %329 = vmatprep.subr.bf16.mxu0 0
  %330 = vmatpush1.bf16.msra.mxu0 0
  %331 = vmatprep.subr.bf16.mxu0 0
  %332 = vmatpush1.bf16.msra.mxu0 0
  %333 = vmatprep.subr.bf16.mxu0 0
  %334 = vmatpush1.bf16.msra.mxu0 0
  %335 = vmatprep.subr.bf16.mxu0 0
  %336 = vmatpush1.bf16.msra.mxu0 0
  %337 = vmatprep.subr.bf16.mxu0 0
  %338 = vmatpush1.bf16.msra.mxu0 0
  %339 = vmatprep.mubr.bf16.mxu0 0
  %340 = vmatmul.mubr.bf16.gmra.mrb[0].mxu0 %v131
  %v341 = vpop.f32.mrb[0].mxu0
  %v342 = vadd.f32 %v82, %v341
  %v343 = vpop.f32.mrb[0].mxu0
  %v344 = vadd.f32 %v86, %v343
  %v345 = vpop.f32.mrb[0].mxu0
  %v346 = vadd.f32 %v82, %v345
  %v347 = vpop.f32.mrb[0].mxu0
  %v348 = vadd.f32 %v86, %v347
  %349 = vmatprep.mubr.bf16.mxu0 0
  %350 = vmatmul.mubr.bf16.gmra.mrb[0].mxu0 %v132
  %v351 = vpop.f32.mrb[0].mxu0
  %v352 = vadd.f32 %v82, %v351
  %v353 = vpop.f32.mrb[0].mxu0
  %v354 = vadd.f32 %v86, %v353
  %v355 = vpop.f32.mrb[0].mxu0
  %v356 = vadd.f32 %v82, %v355
  %v357 = vpop.f32.mrb[0].mxu0
  %v358 = vadd.f32 %v86, %v357
  %359 = vmatprep.mubr.bf16.mxu0 0
  %360 = vmatmul.mubr.bf16.gmra.mrb[0].mxu0 %v133
  %v361 = vpop.f32.mrb[0].mxu0
  %v362 = vadd.f32 %v82, %v361
  %v363 = vpop.f32.mrb[0].mxu0
  %v364 = vadd.f32 %v86, %v363
  %v365 = vpop.f32.mrb[0].mxu0
  %v366 = vadd.f32 %v82, %v365
  %v367 = vpop.f32.mrb[0].mxu0
  %v368 = vadd.f32 %v86, %v367
  %369 = vmatprep.mubr.bf16.mxu0 0
  %370 = vmatmul.mubr.bf16.gmra.mrb[0].mxu0 %v134
  %v371 = vpop.f32.mrb[0].mxu0
  %v372 = vadd.f32 %v82, %v371
  %v373 = vpop.f32.mrb[0].mxu0
  %v374 = vadd.f32 %v86, %v373
  %v375 = vpop.f32.mrb[0].mxu0
  %v376 = vadd.f32 %v82, %v375
  %v377 = vpop.f32.mrb[0].mxu0
  %v378 = vadd.f32 %v86, %v377
  %379 = vmatprep.mubr.bf16.mxu0 0
  %380 = vmatmul.mubr.bf16.gmra.mrb[0].mxu0 %v135
  %v381 = vpop.f32.mrb[0].mxu0
  %v382 = vadd.f32 %v82, %v381
  %v383 = vpop.f32.mrb[0].mxu0
  %v384 = vadd.f32 %v86, %v383
  %v385 = vpop.f32.mrb[0].mxu0
  %v386 = vadd.f32 %v82, %v385
  %v387 = vpop.f32.mrb[0].mxu0
  %v388 = vadd.f32 %v86, %v387
  %389 = vmatprep.mubr.bf16.mxu0 0
  %390 = vmatmul.mubr.bf16.gmra.mrb[0].mxu0 %v136
  %v391 = vpop.f32.mrb[0].mxu0
  %v392 = vadd.f32 %v82, %v391
  %v393 = vpop.f32.mrb[0].mxu0
  %v394 = vadd.f32 %v86, %v393
  %v395 = vpop.f32.mrb[0].mxu0
  %v396 = vadd.f32 %v82, %v395
  %v397 = vpop.f32.mrb[0].mxu0
  %v398 = vadd.f32 %v86, %v397
  %399 = vmatprep.mubr.bf16.mxu0 0
  %400 = vmatmul.mubr.bf16.gmra.mrb[0].mxu0 %v137
  %v401 = vpop.f32.mrb[0].mxu0
  %v402 = vadd.f32 %v82, %v401
  %v403 = vpop.f32.mrb[0].mxu0
  %v404 = vadd.f32 %v86, %v403
  %v405 = vpop.f32.mrb[0].mxu0
  %v406 = vadd.f32 %v82, %v405
  %v407 = vpop.f32.mrb[0].mxu0
  %v408 = vadd.f32 %v86, %v407
  %409 = vmatprep.mubr.bf16.mxu0 0
  %410 = vmatmul.mubr.bf16.gmra.mrb[0].mxu0 %v138
  %v411 = vpop.f32.mrb[0].mxu0
  %v412 = vadd.f32 %v82, %v411
  %v413 = vpop.f32.mrb[0].mxu0
  %v414 = vadd.f32 %v86, %v413
  %v415 = vpop.f32.mrb[0].mxu0
  %v416 = vadd.f32 %v82, %v415
  %v417 = vpop.f32.mrb[0].mxu0
  %v418 = vadd.f32 %v86, %v417
  %419 = vdwg.mxu0
  %420 = vmatprep.subr.bf16.mxu0 %v246
  %421 = vmatpush1.bf16.msra.mxu0 %v245
  %422 = vmatprep.subr.bf16.mxu0 %v250
  %423 = vmatpush1.bf16.msra.mxu0 %v249
  %424 = vmatprep.subr.bf16.mxu0 %v254
  %425 = vmatpush1.bf16.msra.mxu0 %v253
  %426 = vmatprep.subr.bf16.mxu0 %v258
  %427 = vmatpush1.bf16.msra.mxu0 %v257
  %428 = vmatprep.subr.bf16.mxu0 %v262
  %429 = vmatpush1.bf16.msra.mxu0 %v261
  %430 = vmatprep.subr.bf16.mxu0 %v266
  %431 = vmatpush1.bf16.msra.mxu0 %v265
  %432 = vmatprep.subr.bf16.mxu0 %v270
  %433 = vmatpush1.bf16.msra.mxu0 %v269
  %434 = vmatprep.subr.bf16.mxu0 %v274
  %435 = vmatpush1.bf16.msra.mxu0 %v273
  %436 = vmatprep.subr.bf16.mxu0 0
  %437 = vmatpush1.bf16.msra.mxu0 0
  %438 = vmatprep.subr.bf16.mxu0 0
  %439 = vmatpush1.bf16.msra.mxu0 0
  %440 = vmatprep.subr.bf16.mxu0 0
  %441 = vmatpush1.bf16.msra.mxu0 0
  %442 = vmatprep.subr.bf16.mxu0 0
  %443 = vmatpush1.bf16.msra.mxu0 0
  %444 = vmatprep.subr.bf16.mxu0 0
  %445 = vmatpush1.bf16.msra.mxu0 0
  %446 = vmatprep.subr.bf16.mxu0 0
  %447 = vmatpush1.bf16.msra.mxu0 0
  %448 = vmatprep.subr.bf16.mxu0 0
  %449 = vmatpush1.bf16.msra.mxu0 0
  %450 = vmatprep.subr.bf16.mxu0 0
  %451 = vmatpush1.bf16.msra.mxu0 0
  %452 = vmatprep.mubr.bf16.mxu0 0
  %453 = vmatmul.mubr.bf16.gmra.mrb[0].mxu0 %v131
  %v454 = vpop.f32.mrb[0].mxu0
  %v455 = vadd.f32 %v90, %v454
  %v456 = vpop.f32.mrb[0].mxu0
  %v457 = vadd.f32 %v94, %v456
  %v458 = vpop.f32.mrb[0].mxu0
  %v459 = vadd.f32 %v90, %v458
  %v460 = vpop.f32.mrb[0].mxu0
  %v461 = vadd.f32 %v94, %v460
  %462 = vmatprep.mubr.bf16.mxu0 0
  %463 = vmatmul.mubr.bf16.gmra.mrb[0].mxu0 %v132
  %v464 = vpop.f32.mrb[0].mxu0
  %v465 = vadd.f32 %v90, %v464
  %v466 = vpop.f32.mrb[0].mxu0
  %v467 = vadd.f32 %v94, %v466
  %v468 = vpop.f32.mrb[0].mxu0
  %v469 = vadd.f32 %v90, %v468
  %v470 = vpop.f32.mrb[0].mxu0
  %v471 = vadd.f32 %v94, %v470
  %472 = vmatprep.mubr.bf16.mxu0 0
  %473 = vmatmul.mubr.bf16.gmra.mrb[0].mxu0 %v133
  %v474 = vpop.f32.mrb[0].mxu0
  %v475 = vadd.f32 %v90, %v474
  %v476 = vpop.f32.mrb[0].mxu0
  %v477 = vadd.f32 %v94, %v476
  %v478 = vpop.f32.mrb[0].mxu0
  %v479 = vadd.f32 %v90, %v478
  %v480 = vpop.f32.mrb[0].mxu0
  %v481 = vadd.f32 %v94, %v480
  %482 = vmatprep.mubr.bf16.mxu0 0
  %483 = vmatmul.mubr.bf16.gmra.mrb[0].mxu0 %v134
  %v484 = vpop.f32.mrb[0].mxu0
  %v485 = vadd.f32 %v90, %v484
  %v486 = vpop.f32.mrb[0].mxu0
  %v487 = vadd.f32 %v94, %v486
  %v488 = vpop.f32.mrb[0].mxu0
  %v489 = vadd.f32 %v90, %v488
  %v490 = vpop.f32.mrb[0].mxu0
  %v491 = vadd.f32 %v94, %v490
  %492 = vmatprep.mubr.bf16.mxu0 0
  %493 = vmatmul.mubr.bf16.gmra.mrb[0].mxu0 %v135
  %v494 = vpop.f32.mrb[0].mxu0
  %v495 = vadd.f32 %v90, %v494
  %v496 = vpop.f32.mrb[0].mxu0
  %v497 = vadd.f32 %v94, %v496
  %v498 = vpop.f32.mrb[0].mxu0
  %v499 = vadd.f32 %v90, %v498
  %v500 = vpop.f32.mrb[0].mxu0
  %v501 = vadd.f32 %v94, %v500
  %502 = vmatprep.mubr.bf16.mxu0 0
  %503 = vmatmul.mubr.bf16.gmra.mrb[0].mxu0 %v136
  %v504 = vpop.f32.mrb[0].mxu0
  %v505 = vadd.f32 %v90, %v504
  %v506 = vpop.f32.mrb[0].mxu0
  %v507 = vadd.f32 %v94, %v506
  %v508 = vpop.f32.mrb[0].mxu0
  %v509 = vadd.f32 %v90, %v508
  %v510 = vpop.f32.mrb[0].mxu0
  %v511 = vadd.f32 %v94, %v510
  %512 = vmatprep.mubr.bf16.mxu0 0
  %513 = vmatmul.mubr.bf16.gmra.mrb[0].mxu0 %v137
  %v514 = vpop.f32.mrb[0].mxu0
  %v515 = vadd.f32 %v90, %v514
  %v516 = vpop.f32.mrb[0].mxu0
  %v517 = vadd.f32 %v94, %v516
  %v518 = vpop.f32.mrb[0].mxu0
  %v519 = vadd.f32 %v90, %v518
  %v520 = vpop.f32.mrb[0].mxu0
  %v521 = vadd.f32 %v94, %v520
  %522 = vmatprep.mubr.bf16.mxu0 0
  %523 = vmatmul.mubr.bf16.gmra.mrb[0].mxu0 %v138
  %v524 = vpop.f32.mrb[0].mxu0
  %v525 = vadd.f32 %v90, %v524
  %v526 = vpop.f32.mrb[0].mxu0
  %v527 = vadd.f32 %v94, %v526
  %v528 = vpop.f32.mrb[0].mxu0
  %v529 = vadd.f32 %v90, %v528
  %v530 = vpop.f32.mrb[0].mxu0
  %v531 = vadd.f32 %v94, %v530
  %532 = vdwg.mxu0
  %533 = vst [vmem:[#allocation2] sm:$0xff] %v342
  %534 = vst [vmem:[#allocation2 + $0x8] sm:$0xff] %v344
  %535 = vst [vmem:[#allocation2 + $0x10] sm:$0xff] %v455
  %536 = vst [vmem:[#allocation2 + $0x18] sm:$0xff] %v457
  %537 = vst [vmem:[#allocation2 + $0x20] sm:$0xff] %v346
  %538 = vst [vmem:[#allocation2 + $0x28] sm:$0xff] %v348
  %539 = vst [vmem:[#allocation2 + $0x30] sm:$0xff] %v459
  %540 = vst [vmem:[#allocation2 + $0x38] sm:$0xff] %v461
  %541 = vst [vmem:[#allocation2 + $0x40] sm:$0xff] %v352
  %542 = vst [vmem:[#allocation2 + $0x48] sm:$0xff] %v354
  %543 = vst [vmem:[#allocation2 + $0x50] sm:$0xff] %v465
  %544 = vst [vmem:[#allocation2 + $0x58] sm:$0xff] %v467
  %545 = vst [vmem:[#allocation2 + $0x60] sm:$0xff] %v356
  %546 = vst [vmem:[#allocation2 + $0x68] sm:$0xff] %v358
  %547 = vst [vmem:[#allocation2 + $0x70] sm:$0xff] %v469
  %548 = vst [vmem:[#allocation2 + $0x78] sm:$0xff] %v471
  %549 = vst [vmem:[#allocation2 + $0x80] sm:$0xff] %v362
  %550 = vst [vmem:[#allocation2 + $0x88] sm:$0xff] %v364
  %551 = vst [vmem:[#allocation2 + $0x90] sm:$0xff] %v475
  %552 = vst [vmem:[#allocation2 + $0x98] sm:$0xff] %v477
  %553 = vst [vmem:[#allocation2 + $0xa0] sm:$0xff] %v366
  %554 = vst [vmem:[#allocation2 + $0xa8] sm:$0xff] %v368
  %555 = vst [vmem:[#allocation2 + $0xb0] sm:$0xff] %v479
  %556 = vst [vmem:[#allocation2 + $0xb8] sm:$0xff] %v481
  %557 = vst [vmem:[#allocation2 + $0xc0] sm:$0xff] %v372
  %558 = vst [vmem:[#allocation2 + $0xc8] sm:$0xff] %v374
  %559 = vst [vmem:[#allocation2 + $0xd0] sm:$0xff] %v485
  %560 = vst [vmem:[#allocation2 + $0xd8] sm:$0xff] %v487
  %561 = vst [vmem:[#allocation2 + $0xe0] sm:$0xff] %v376
  %562 = vst [vmem:[#allocation2 + $0xe8] sm:$0xff] %v378
  %563 = vst [vmem:[#allocation2 + $0xf0] sm:$0xff] %v489
  %564 = vst [vmem:[#allocation2 + $0xf8] sm:$0xff] %v491
  %565 = vst [vmem:[#allocation2 + $0x100] sm:$0xff] %v382
  %566 = vst [vmem:[#allocation2 + $0x108] sm:$0xff] %v384
  %567 = vst [vmem:[#allocation2 + $0x110] sm:$0xff] %v495
  %568 = vst [vmem:[#allocation2 + $0x118] sm:$0xff] %v497
  %569 = vst [vmem:[#allocation2 + $0x120] sm:$0xff] %v386
  %570 = vst [vmem:[#allocation2 + $0x128] sm:$0xff] %v388
  %571 = vst [vmem:[#allocation2 + $0x130] sm:$0xff] %v499
  %572 = vst [vmem:[#allocation2 + $0x138] sm:$0xff] %v501
  %573 = vst [vmem:[#allocation2 + $0x140] sm:$0xff] %v392
  %574 = vst [vmem:[#allocation2 + $0x148] sm:$0xff] %v394
  %575 = vst [vmem:[#allocation2 + $0x150] sm:$0xff] %v505
  %576 = vst [vmem:[#allocation2 + $0x158] sm:$0xff] %v507
  %577 = vst [vmem:[#allocation2 + $0x160] sm:$0xff] %v396
  %578 = vst [vmem:[#allocation2 + $0x168] sm:$0xff] %v398
  %579 = vst [vmem:[#allocation2 + $0x170] sm:$0xff] %v509
  %580 = vst [vmem:[#allocation2 + $0x178] sm:$0xff] %v511
  %581 = vst [vmem:[#allocation2 + $0x180] sm:$0xff] %v402
  %582 = vst [vmem:[#allocation2 + $0x188] sm:$0xff] %v404
  %583 = vst [vmem:[#allocation2 + $0x190] sm:$0xff] %v515
  %584 = vst [vmem:[#allocation2 + $0x198] sm:$0xff] %v517
  %585 = vst [vmem:[#allocation2 + $0x1a0] sm:$0xff] %v406
  %586 = vst [vmem:[#allocation2 + $0x1a8] sm:$0xff] %v408
  %587 = vst [vmem:[#allocation2 + $0x1b0] sm:$0xff] %v519
  %588 = vst [vmem:[#allocation2 + $0x1b8] sm:$0xff] %v521
  %589 = vst [vmem:[#allocation2 + $0x1c0] sm:$0xff] %v412
  %590 = vst [vmem:[#allocation2 + $0x1c8] sm:$0xff] %v414
  %591 = vst [vmem:[#allocation2 + $0x1d0] sm:$0xff] %v525
  %592 = vst [vmem:[#allocation2 + $0x1d8] sm:$0xff] %v527
  %593 = vst [vmem:[#allocation2 + $0x1e0] sm:$0xff] %v416
  %594 = vst [vmem:[#allocation2 + $0x1e8] sm:$0xff] %v418
  %595 = vst [vmem:[#allocation2 + $0x1f0] sm:$0xff] %v529
  %596 = vst [vmem:[#allocation2 + $0x1f8] sm:$0xff] %v531
  %v597 = vld [vmem:[#allocation3] sm:$0xff]
  %v598 = vld [vmem:[#allocation3 + $0x8] sm:$0xff]
  %v599 = vld [vmem:[#allocation4] sm:$0xff]
  %v600 = vld [vmem:[#allocation4 + $0x8] sm:$0xff]
  %s601 = smul.u32 0, 4
  %s602 = smul.addr %s601, 8
  %s603 = scalar_lea.vmem [#allocation2], %s602
  %v604 = vld [vmem:[%s603] sm:$0xff]
  %v605 = vld [vmem:[%s603 + $0x8] sm:$0xff]
  %v606 = vld [vmem:[%s603 + $0x10] sm:$0xff]
  %v607 = vld [vmem:[%s603 + $0x18] sm:$0xff]
  %v608 = vld [vmem:[%s603 + $0x20] sm:$0xff]
  %v609 = vld [vmem:[%s603 + $0x28] sm:$0xff]
  %v610 = vld [vmem:[%s603 + $0x30] sm:$0xff]
  %v611 = vld [vmem:[%s603 + $0x38] sm:$0xff]
  %v612 = vpack.c.bf16 %v598, %v597
  %v613 = vld [vmem:[%s2] sm:$0xff]
  %v614 = vld [vmem:[%s2 + $0x8] sm:$0xff]
  %v615 = vld [vmem:[%s2 + $0x10] sm:$0xff]
  %v616 = vld [vmem:[%s2 + $0x18] sm:$0xff]
  %v617 = vld [vmem:[%s2 + $0x20] sm:$0xff]
  %v618 = vld [vmem:[%s2 + $0x28] sm:$0xff]
  %v619 = vld [vmem:[%s2 + $0x30] sm:$0xff]
  %v620 = vld [vmem:[%s2 + $0x38] sm:$0xff]
  %v621 = vld [vmem:[%s2 + $0x40] sm:$0xff]
  %v622 = vld [vmem:[%s2 + $0x48] sm:$0xff]
  %v623 = vld [vmem:[%s2 + $0x50] sm:$0xff]
  %v624 = vld [vmem:[%s2 + $0x58] sm:$0xff]
  %v625 = vld [vmem:[%s2 + $0x60] sm:$0xff]
  %v626 = vld [vmem:[%s2 + $0x68] sm:$0xff]
  %v627 = vld [vmem:[%s2 + $0x70] sm:$0xff]
  %v628 = vld [vmem:[%s2 + $0x78] sm:$0xff]
  %v629 = vld [vmem:[%s2 + $0x80] sm:$0xff]
  %v630 = vld [vmem:[%s2 + $0x88] sm:$0xff]
  %v631 = vld [vmem:[%s2 + $0x90] sm:$0xff]
  %v632 = vld [vmem:[%s2 + $0x98] sm:$0xff]
  %v633 = vld [vmem:[%s2 + $0xa0] sm:$0xff]
  %v634 = vld [vmem:[%s2 + $0xa8] sm:$0xff]
  %v635 = vld [vmem:[%s2 + $0xb0] sm:$0xff]
  %v636 = vld [vmem:[%s2 + $0xb8] sm:$0xff]
  %v637 = vld [vmem:[%s2 + $0xc0] sm:$0xff]
  %v638 = vld [vmem:[%s2 + $0xc8] sm:$0xff]
  %v639 = vld [vmem:[%s2 + $0xd0] sm:$0xff]
  %v640 = vld [vmem:[%s2 + $0xd8] sm:$0xff]
  %v641 = vld [vmem:[%s2 + $0xe0] sm:$0xff]
  %v642 = vld [vmem:[%s2 + $0xe8] sm:$0xff]
  %v643 = vld [vmem:[%s2 + $0xf0] sm:$0xff]
  %v644 = vld [vmem:[%s2 + $0xf8] sm:$0xff]
  %v677 = vunpack.c.l.b16 %v613
  %v678 = vunpack.c.h.b16 %v613
  %v679 = vunpack.c.l.b16 %v614
  %v680 = vunpack.c.h.b16 %v614
  %v681 = vunpack.c.l.b16 %v615
  %v682 = vunpack.c.h.b16 %v615
  %v683 = vunpack.c.l.b16 %v616
  %v684 = vunpack.c.h.b16 %v616
  %v685 = vunpack.c.l.b16 %v617
  %v686 = vunpack.c.h.b16 %v617
  %v687 = vunpack.c.l.b16 %v618
  %v688 = vunpack.c.h.b16 %v618
  %v689 = vunpack.c.l.b16 %v619
  %v690 = vunpack.c.h.b16 %v619
  %v691 = vunpack.c.l.b16 %v620
  %v692 = vunpack.c.h.b16 %v620
  %v693 = vunpack.c.l.b16 %v621
  %v694 = vunpack.c.h.b16 %v621
  %v695 = vunpack.c.l.b16 %v622
  %v696 = vunpack.c.h.b16 %v622
  %v697 = vunpack.c.l.b16 %v623
  %v698 = vunpack.c.h.b16 %v623
  %v699 = vunpack.c.l.b16 %v624
  %v700 = vunpack.c.h.b16 %v624
  %v701 = vunpack.c.l.b16 %v625
  %v702 = vunpack.c.h.b16 %v625
  %v703 = vunpack.c.l.b16 %v626
  %v704 = vunpack.c.h.b16 %v626
  %v705 = vunpack.c.l.b16 %v627
  %v706 = vunpack.c.h.b16 %v627
  %v707 = vunpack.c.l.b16 %v628
  %v708 = vunpack.c.h.b16 %v628
  %v709 = vunpack.c.l.b16 %v629
  %v710 = vunpack.c.h.b16 %v629
  %v711 = vunpack.c.l.b16 %v630
  %v712 = vunpack.c.h.b16 %v630
  %v713 = vunpack.c.l.b16 %v631
  %v714 = vunpack.c.h.b16 %v631
  %v715 = vunpack.c.l.b16 %v632
  %v716 = vunpack.c.h.b16 %v632
  %v717 = vunpack.c.l.b16 %v633
  %v718 = vunpack.c.h.b16 %v633
  %v719 = vunpack.c.l.b16 %v634
  %v720 = vunpack.c.h.b16 %v634
  %v721 = vunpack.c.l.b16 %v635
  %v722 = vunpack.c.h.b16 %v635
  %v723 = vunpack.c.l.b16 %v636
  %v724 = vunpack.c.h.b16 %v636
  %v725 = vunpack.c.l.b16 %v637
  %v726 = vunpack.c.h.b16 %v637
  %v727 = vunpack.c.l.b16 %v638
  %v728 = vunpack.c.h.b16 %v638
  %v729 = vunpack.c.l.b16 %v639
  %v730 = vunpack.c.h.b16 %v639
  %v731 = vunpack.c.l.b16 %v640
  %v732 = vunpack.c.h.b16 %v640
  %v733 = vunpack.c.l.b16 %v641
  %v734 = vunpack.c.h.b16 %v641
  %v735 = vunpack.c.l.b16 %v642
  %v736 = vunpack.c.h.b16 %v642
  %v737 = vunpack.c.l.b16 %v643
  %v738 = vunpack.c.h.b16 %v643
  %v739 = vunpack.c.l.b16 %v644
  %v740 = vunpack.c.h.b16 %v644
  %v741 = vpack.c.b16 %v681, %v677
  %v742 = vpack.c.b16 %v682, %v678
  %v743 = vpack.c.b16 %v683, %v679
  %v744 = vpack.c.b16 %v684, %v680
  %v745 = vpack.c.b16 %v689, %v685
  %v746 = vpack.c.b16 %v690, %v686
  %v747 = vpack.c.b16 %v691, %v687
  %v748 = vpack.c.b16 %v692, %v688
  %v749 = vpack.c.b16 %v697, %v693
  %v750 = vpack.c.b16 %v698, %v694
  %v751 = vpack.c.b16 %v699, %v695
  %v752 = vpack.c.b16 %v700, %v696
  %v753 = vpack.c.b16 %v705, %v701
  %v754 = vpack.c.b16 %v706, %v702
  %v755 = vpack.c.b16 %v707, %v703
  %v756 = vpack.c.b16 %v708, %v704
  %v757 = vpack.c.b16 %v713, %v709
  %v758 = vpack.c.b16 %v714, %v710
  %v759 = vpack.c.b16 %v715, %v711
  %v760 = vpack.c.b16 %v716, %v712
  %v761 = vpack.c.b16 %v721, %v717
  %v762 = vpack.c.b16 %v722, %v718
  %v763 = vpack.c.b16 %v723, %v719
  %v764 = vpack.c.b16 %v724, %v720
  %v765 = vpack.c.b16 %v729, %v725
  %v766 = vpack.c.b16 %v730, %v726
  %v767 = vpack.c.b16 %v731, %v727
  %v768 = vpack.c.b16 %v732, %v728
  %v769 = vpack.c.b16 %v737, %v733
  %v770 = vpack.c.b16 %v738, %v734
  %v771 = vpack.c.b16 %v739, %v735
  %v772 = vpack.c.b16 %v740, %v736
  %805 = vmatprep.subr.bf16.mxu0 %v742
  %806 = vmatpush1.bf16.msra.mxu0 %v741
  %807 = vmatprep.subr.bf16.mxu0 %v746
  %808 = vmatpush1.bf16.msra.mxu0 %v745
  %809 = vmatprep.subr.bf16.mxu0 %v750
  %810 = vmatpush1.bf16.msra.mxu0 %v749
  %811 = vmatprep.subr.bf16.mxu0 %v754
  %812 = vmatpush1.bf16.msra.mxu0 %v753
  %813 = vmatprep.subr.bf16.mxu0 %v758
  %814 = vmatpush1.bf16.msra.mxu0 %v757
  %815 = vmatprep.subr.bf16.mxu0 %v762
  %816 = vmatpush1.bf16.msra.mxu0 %v761
  %817 = vmatprep.subr.bf16.mxu0 %v766
  %818 = vmatpush1.bf16.msra.mxu0 %v765
  %819 = vmatprep.subr.bf16.mxu0 %v770
  %820 = vmatpush1.bf16.msra.mxu0 %v769
  %821 = vmatprep.subr.bf16.mxu0 0
  %822 = vmatpush1.bf16.msra.mxu0 0
  %823 = vmatprep.subr.bf16.mxu0 0
  %824 = vmatpush1.bf16.msra.mxu0 0
  %825 = vmatprep.subr.bf16.mxu0 0
  %826 = vmatpush1.bf16.msra.mxu0 0
  %827 = vmatprep.subr.bf16.mxu0 0
  %828 = vmatpush1.bf16.msra.mxu0 0
  %829 = vmatprep.subr.bf16.mxu0 0
  %830 = vmatpush1.bf16.msra.mxu0 0
  %831 = vmatprep.subr.bf16.mxu0 0
  %832 = vmatpush1.bf16.msra.mxu0 0
  %833 = vmatprep.subr.bf16.mxu0 0
  %834 = vmatpush1.bf16.msra.mxu0 0
  %835 = vmatprep.subr.bf16.mxu0 0
  %836 = vmatpush1.bf16.msra.mxu0 0
  %837 = vmatprep.mubr.bf16.mxu0 0
  %838 = vmatmul.mubr.bf16.gmra.mrb[0].mxu0 %v612
  %v839 = vpop.f32.mrb[0].mxu0
  %v840 = vadd.f32 0.0, %v839
  %v841 = vpop.f32.mrb[0].mxu0
  %v842 = vadd.f32 0.0, %v841
  %v843 = vpop.f32.mrb[0].mxu0
  %v844 = vadd.f32 0.0, %v843
  %v845 = vpop.f32.mrb[0].mxu0
  %v846 = vadd.f32 0.0, %v845
  %847 = vdwg.mxu0
  %848 = vmatprep.subr.bf16.mxu0 %v744
  %849 = vmatpush1.bf16.msra.mxu0 %v743
  %850 = vmatprep.subr.bf16.mxu0 %v748
  %851 = vmatpush1.bf16.msra.mxu0 %v747
  %852 = vmatprep.subr.bf16.mxu0 %v752
  %853 = vmatpush1.bf16.msra.mxu0 %v751
  %854 = vmatprep.subr.bf16.mxu0 %v756
  %855 = vmatpush1.bf16.msra.mxu0 %v755
  %856 = vmatprep.subr.bf16.mxu0 %v760
  %857 = vmatpush1.bf16.msra.mxu0 %v759
  %858 = vmatprep.subr.bf16.mxu0 %v764
  %859 = vmatpush1.bf16.msra.mxu0 %v763
  %860 = vmatprep.subr.bf16.mxu0 %v768
  %861 = vmatpush1.bf16.msra.mxu0 %v767
  %862 = vmatprep.subr.bf16.mxu0 %v772
  %863 = vmatpush1.bf16.msra.mxu0 %v771
  %864 = vmatprep.subr.bf16.mxu0 0
  %865 = vmatpush1.bf16.msra.mxu0 0
  %866 = vmatprep.subr.bf16.mxu0 0
  %867 = vmatpush1.bf16.msra.mxu0 0
  %868 = vmatprep.subr.bf16.mxu0 0
  %869 = vmatpush1.bf16.msra.mxu0 0
  %870 = vmatprep.subr.bf16.mxu0 0
  %871 = vmatpush1.bf16.msra.mxu0 0
  %872 = vmatprep.subr.bf16.mxu0 0
  %873 = vmatpush1.bf16.msra.mxu0 0
  %874 = vmatprep.subr.bf16.mxu0 0
  %875 = vmatpush1.bf16.msra.mxu0 0
  %876 = vmatprep.subr.bf16.mxu0 0
  %877 = vmatpush1.bf16.msra.mxu0 0
  %878 = vmatprep.subr.bf16.mxu0 0
  %879 = vmatpush1.bf16.msra.mxu0 0
  %880 = vmatprep.mubr.bf16.mxu0 0
  %881 = vmatmul.mubr.bf16.gmra.mrb[0].mxu0 %v612
  %v882 = vpop.f32.mrb[0].mxu0
  %v883 = vadd.f32 0.0, %v882
  %v884 = vpop.f32.mrb[0].mxu0
  %v885 = vadd.f32 0.0, %v884
  %v886 = vpop.f32.mrb[0].mxu0
  %v887 = vadd.f32 0.0, %v886
  %v888 = vpop.f32.mrb[0].mxu0
  %v889 = vadd.f32 0.0, %v888
  %890 = vdwg.mxu0
  %v891 = vadd.f32 %v604, %v840
  %v892 = vadd.f32 %v605, %v842
  %v893 = vadd.f32 %v606, %v883
  %v894 = vadd.f32 %v607, %v885
  %v895 = vadd.f32 %v608, %v844
  %v896 = vadd.f32 %v609, %v846
  %v897 = vadd.f32 %v610, %v887
  %v898 = vadd.f32 %v611, %v889
  %v899 = vmul.f32 %v891, 0.5
  %v900 = vmul.f32 %v892, 0.5
  %v901 = vmul.f32 %v893, 0.5
  %v902 = vmul.f32 %v894, 0.5
  %v903 = vmul.f32 %v895, 0.5
  %v904 = vmul.f32 %v896, 0.5
  %v905 = vmul.f32 %v897, 0.5
  %v906 = vmul.f32 %v898, 0.5
  %v907 = vtanh.pop %v899
  %v908 = vtanh.pop %v900
  %v909 = vtanh.pop %v901
  %v910 = vtanh.pop %v902
  %v911 = vtanh.pop %v903
  %v912 = vtanh.pop %v904
  %v913 = vtanh.pop %v905
  %v914 = vtanh.pop %v906
  %v915 = vmul.f32 %v907, 0.5
  %v916 = vmul.f32 %v908, 0.5
  %v917 = vmul.f32 %v909, 0.5
  %v918 = vmul.f32 %v910, 0.5
  %v919 = vmul.f32 %v911, 0.5
  %v920 = vmul.f32 %v912, 0.5
  %v921 = vmul.f32 %v913, 0.5
  %v922 = vmul.f32 %v914, 0.5
  %v923 = vadd.f32 %v915, 0.5
  %v924 = vadd.f32 %v916, 0.5
  %v925 = vadd.f32 %v917, 0.5
  %v926 = vadd.f32 %v918, 0.5
  %v927 = vadd.f32 %v919, 0.5
  %v928 = vadd.f32 %v920, 0.5
  %v929 = vadd.f32 %v921, 0.5
  %v930 = vadd.f32 %v922, 0.5
  %v931 = vmul.f32 %v924, %v599
  %v932 = vmul.f32 %v928, %v600
  %v933 = vadd.f32 %v931, %v925
  %v934 = vadd.f32 %v932, %v929
  %v935 = vsub.f32 %v933, %v923
  %v936 = vsub.f32 %v934, %v927
  %v937 = vmul.f32 %v935, 0.5
  %v938 = vmul.f32 %v936, 0.5
  %v939 = vtanh.pop %v937
  %v940 = vtanh.pop %v938
  %v941 = vmul.f32 %v939, 0.5
  %v942 = vmul.f32 %v940, 0.5
  %v943 = vadd.f32 %v941, 0.5
  %v944 = vadd.f32 %v942, 0.5
  %v945 = vsub.f32 %v943, %v926
  %v946 = vsub.f32 %v944, %v930
  %v947 = vpack.c.bf16 %v946, %v945
  %v949 = vunpack.c.l.b16 %v947
  %v950 = vunpack.c.h.b16 %v947
  %v951 = vpack.c.b16 %v949, %v949
  %v952 = vpack.c.b16 %v950, %v950
  %955 = vst [vmem:[%s4] sm:$0xf] %v951
  %956 = vst [vmem:[%s4 + $0x4] sm:$0xf] %v952
  %s957 = smul.u32 2, 4
  %s958 = smul.addr %s957, 8
  %s959 = scalar_lea.vmem [#allocation2], %s958
  %v960 = vld [vmem:[%s959] sm:$0xff]
  %v961 = vld [vmem:[%s959 + $0x8] sm:$0xff]
  %v962 = vld [vmem:[%s959 + $0x10] sm:$0xff]
  %v963 = vld [vmem:[%s959 + $0x18] sm:$0xff]
  %v964 = vld [vmem:[%s959 + $0x20] sm:$0xff]
  %v965 = vld [vmem:[%s959 + $0x28] sm:$0xff]
  %v966 = vld [vmem:[%s959 + $0x30] sm:$0xff]
  %v967 = vld [vmem:[%s959 + $0x38] sm:$0xff]
  %v968 = vld [vmem:[%s2] sm:$0xff]
  %v969 = vld [vmem:[%s2 + $0x8] sm:$0xff]
  %v970 = vld [vmem:[%s2 + $0x10] sm:$0xff]
  %v971 = vld [vmem:[%s2 + $0x18] sm:$0xff]
  %v972 = vld [vmem:[%s2 + $0x20] sm:$0xff]
  %v973 = vld [vmem:[%s2 + $0x28] sm:$0xff]
  %v974 = vld [vmem:[%s2 + $0x30] sm:$0xff]
  %v975 = vld [vmem:[%s2 + $0x38] sm:$0xff]
  %v976 = vld [vmem:[%s2 + $0x40] sm:$0xff]
  %v977 = vld [vmem:[%s2 + $0x48] sm:$0xff]
  %v978 = vld [vmem:[%s2 + $0x50] sm:$0xff]
  %v979 = vld [vmem:[%s2 + $0x58] sm:$0xff]
  %v980 = vld [vmem:[%s2 + $0x60] sm:$0xff]
  %v981 = vld [vmem:[%s2 + $0x68] sm:$0xff]
  %v982 = vld [vmem:[%s2 + $0x70] sm:$0xff]
  %v983 = vld [vmem:[%s2 + $0x78] sm:$0xff]
  %v984 = vld [vmem:[%s2 + $0x80] sm:$0xff]
  %v985 = vld [vmem:[%s2 + $0x88] sm:$0xff]
  %v986 = vld [vmem:[%s2 + $0x90] sm:$0xff]
  %v987 = vld [vmem:[%s2 + $0x98] sm:$0xff]
  %v988 = vld [vmem:[%s2 + $0xa0] sm:$0xff]
  %v989 = vld [vmem:[%s2 + $0xa8] sm:$0xff]
  %v990 = vld [vmem:[%s2 + $0xb0] sm:$0xff]
  %v991 = vld [vmem:[%s2 + $0xb8] sm:$0xff]
  %v992 = vld [vmem:[%s2 + $0xc0] sm:$0xff]
  %v993 = vld [vmem:[%s2 + $0xc8] sm:$0xff]
  %v994 = vld [vmem:[%s2 + $0xd0] sm:$0xff]
  %v995 = vld [vmem:[%s2 + $0xd8] sm:$0xff]
  %v996 = vld [vmem:[%s2 + $0xe0] sm:$0xff]
  %v997 = vld [vmem:[%s2 + $0xe8] sm:$0xff]
  %v998 = vld [vmem:[%s2 + $0xf0] sm:$0xff]
  %v999 = vld [vmem:[%s2 + $0xf8] sm:$0xff]
  %v1032 = vunpack.c.l.b16 %v968
  %v1033 = vunpack.c.h.b16 %v968
  %v1034 = vunpack.c.l.b16 %v969
  %v1035 = vunpack.c.h.b16 %v969
  %v1036 = vunpack.c.l.b16 %v970
  %v1037 = vunpack.c.h.b16 %v970
  %v1038 = vunpack.c.l.b16 %v971
  %v1039 = vunpack.c.h.b16 %v971
  %v1040 = vunpack.c.l.b16 %v972
  %v1041 = vunpack.c.h.b16 %v972
  %v1042 = vunpack.c.l.b16 %v973
  %v1043 = vunpack.c.h.b16 %v973
  %v1044 = vunpack.c.l.b16 %v974
  %v1045 = vunpack.c.h.b16 %v974
  %v1046 = vunpack.c.l.b16 %v975
  %v1047 = vunpack.c.h.b16 %v975
  %v1048 = vunpack.c.l.b16 %v976
  %v1049 = vunpack.c.h.b16 %v976
  %v1050 = vunpack.c.l.b16 %v977
  %v1051 = vunpack.c.h.b16 %v977
  %v1052 = vunpack.c.l.b16 %v978
  %v1053 = vunpack.c.h.b16 %v978
  %v1054 = vunpack.c.l.b16 %v979
  %v1055 = vunpack.c.h.b16 %v979
  %v1056 = vunpack.c.l.b16 %v980
  %v1057 = vunpack.c.h.b16 %v980
  %v1058 = vunpack.c.l.b16 %v981
  %v1059 = vunpack.c.h.b16 %v981
  %v1060 = vunpack.c.l.b16 %v982
  %v1061 = vunpack.c.h.b16 %v982
  %v1062 = vunpack.c.l.b16 %v983
  %v1063 = vunpack.c.h.b16 %v983
  %v1064 = vunpack.c.l.b16 %v984
  %v1065 = vunpack.c.h.b16 %v984
  %v1066 = vunpack.c.l.b16 %v985
  %v1067 = vunpack.c.h.b16 %v985
  %v1068 = vunpack.c.l.b16 %v986
  %v1069 = vunpack.c.h.b16 %v986
  %v1070 = vunpack.c.l.b16 %v987
  %v1071 = vunpack.c.h.b16 %v987
  %v1072 = vunpack.c.l.b16 %v988
  %v1073 = vunpack.c.h.b16 %v988
  %v1074 = vunpack.c.l.b16 %v989
  %v1075 = vunpack.c.h.b16 %v989
  %v1076 = vunpack.c.l.b16 %v990
  %v1077 = vunpack.c.h.b16 %v990
  %v1078 = vunpack.c.l.b16 %v991
  %v1079 = vunpack.c.h.b16 %v991
  %v1080 = vunpack.c.l.b16 %v992
  %v1081 = vunpack.c.h.b16 %v992
  %v1082 = vunpack.c.l.b16 %v993
  %v1083 = vunpack.c.h.b16 %v993
  %v1084 = vunpack.c.l.b16 %v994
  %v1085 = vunpack.c.h.b16 %v994
  %v1086 = vunpack.c.l.b16 %v995
  %v1087 = vunpack.c.h.b16 %v995
  %v1088 = vunpack.c.l.b16 %v996
  %v1089 = vunpack.c.h.b16 %v996
  %v1090 = vunpack.c.l.b16 %v997
  %v1091 = vunpack.c.h.b16 %v997
  %v1092 = vunpack.c.l.b16 %v998
  %v1093 = vunpack.c.h.b16 %v998
  %v1094 = vunpack.c.l.b16 %v999
  %v1095 = vunpack.c.h.b16 %v999
  %v1096 = vpack.c.b16 %v1036, %v1032
  %v1097 = vpack.c.b16 %v1037, %v1033
  %v1098 = vpack.c.b16 %v1038, %v1034
  %v1099 = vpack.c.b16 %v1039, %v1035
  %v1100 = vpack.c.b16 %v1044, %v1040
  %v1101 = vpack.c.b16 %v1045, %v1041
  %v1102 = vpack.c.b16 %v1046, %v1042
  %v1103 = vpack.c.b16 %v1047, %v1043
  %v1104 = vpack.c.b16 %v1052, %v1048
  %v1105 = vpack.c.b16 %v1053, %v1049
  %v1106 = vpack.c.b16 %v1054, %v1050
  %v1107 = vpack.c.b16 %v1055, %v1051
  %v1108 = vpack.c.b16 %v1060, %v1056
  %v1109 = vpack.c.b16 %v1061, %v1057
  %v1110 = vpack.c.b16 %v1062, %v1058
  %v1111 = vpack.c.b16 %v1063, %v1059
  %v1112 = vpack.c.b16 %v1068, %v1064
  %v1113 = vpack.c.b16 %v1069, %v1065
  %v1114 = vpack.c.b16 %v1070, %v1066
  %v1115 = vpack.c.b16 %v1071, %v1067
  %v1116 = vpack.c.b16 %v1076, %v1072
  %v1117 = vpack.c.b16 %v1077, %v1073
  %v1118 = vpack.c.b16 %v1078, %v1074
  %v1119 = vpack.c.b16 %v1079, %v1075
  %v1120 = vpack.c.b16 %v1084, %v1080
  %v1121 = vpack.c.b16 %v1085, %v1081
  %v1122 = vpack.c.b16 %v1086, %v1082
  %v1123 = vpack.c.b16 %v1087, %v1083
  %v1124 = vpack.c.b16 %v1092, %v1088
  %v1125 = vpack.c.b16 %v1093, %v1089
  %v1126 = vpack.c.b16 %v1094, %v1090
  %v1127 = vpack.c.b16 %v1095, %v1091
  %1160 = vmatprep.subr.bf16.mxu0 %v1097
  %1161 = vmatpush1.bf16.msra.mxu0 %v1096
  %1162 = vmatprep.subr.bf16.mxu0 %v1101
  %1163 = vmatpush1.bf16.msra.mxu0 %v1100
  %1164 = vmatprep.subr.bf16.mxu0 %v1105
  %1165 = vmatpush1.bf16.msra.mxu0 %v1104
  %1166 = vmatprep.subr.bf16.mxu0 %v1109
  %1167 = vmatpush1.bf16.msra.mxu0 %v1108
  %1168 = vmatprep.subr.bf16.mxu0 %v1113
  %1169 = vmatpush1.bf16.msra.mxu0 %v1112
  %1170 = vmatprep.subr.bf16.mxu0 %v1117
  %1171 = vmatpush1.bf16.msra.mxu0 %v1116
  %1172 = vmatprep.subr.bf16.mxu0 %v1121
  %1173 = vmatpush1.bf16.msra.mxu0 %v1120
  %1174 = vmatprep.subr.bf16.mxu0 %v1125
  %1175 = vmatpush1.bf16.msra.mxu0 %v1124
  %1176 = vmatprep.subr.bf16.mxu0 0
  %1177 = vmatpush1.bf16.msra.mxu0 0
  %1178 = vmatprep.subr.bf16.mxu0 0
  %1179 = vmatpush1.bf16.msra.mxu0 0
  %1180 = vmatprep.subr.bf16.mxu0 0
  %1181 = vmatpush1.bf16.msra.mxu0 0
  %1182 = vmatprep.subr.bf16.mxu0 0
  %1183 = vmatpush1.bf16.msra.mxu0 0
  %1184 = vmatprep.subr.bf16.mxu0 0
  %1185 = vmatpush1.bf16.msra.mxu0 0
  %1186 = vmatprep.subr.bf16.mxu0 0
  %1187 = vmatpush1.bf16.msra.mxu0 0
  %1188 = vmatprep.subr.bf16.mxu0 0
  %1189 = vmatpush1.bf16.msra.mxu0 0
  %1190 = vmatprep.subr.bf16.mxu0 0
  %1191 = vmatpush1.bf16.msra.mxu0 0
  %1192 = vmatprep.mubr.bf16.mxu0 0
  %1193 = vmatmul.mubr.bf16.gmra.mrb[0].mxu0 %v947
  %v1194 = vpop.f32.mrb[0].mxu0
  %v1195 = vadd.f32 0.0, %v1194
  %v1196 = vpop.f32.mrb[0].mxu0
  %v1197 = vadd.f32 0.0, %v1196
  %v1198 = vpop.f32.mrb[0].mxu0
  %v1199 = vadd.f32 0.0, %v1198
  %v1200 = vpop.f32.mrb[0].mxu0
  %v1201 = vadd.f32 0.0, %v1200
  %1202 = vdwg.mxu0
  %1203 = vmatprep.subr.bf16.mxu0 %v1099
  %1204 = vmatpush1.bf16.msra.mxu0 %v1098
  %1205 = vmatprep.subr.bf16.mxu0 %v1103
  %1206 = vmatpush1.bf16.msra.mxu0 %v1102
  %1207 = vmatprep.subr.bf16.mxu0 %v1107
  %1208 = vmatpush1.bf16.msra.mxu0 %v1106
  %1209 = vmatprep.subr.bf16.mxu0 %v1111
  %1210 = vmatpush1.bf16.msra.mxu0 %v1110
  %1211 = vmatprep.subr.bf16.mxu0 %v1115
  %1212 = vmatpush1.bf16.msra.mxu0 %v1114
  %1213 = vmatprep.subr.bf16.mxu0 %v1119
  %1214 = vmatpush1.bf16.msra.mxu0 %v1118
  %1215 = vmatprep.subr.bf16.mxu0 %v1123
  %1216 = vmatpush1.bf16.msra.mxu0 %v1122
  %1217 = vmatprep.subr.bf16.mxu0 %v1127
  %1218 = vmatpush1.bf16.msra.mxu0 %v1126
  %1219 = vmatprep.subr.bf16.mxu0 0
  %1220 = vmatpush1.bf16.msra.mxu0 0
  %1221 = vmatprep.subr.bf16.mxu0 0
  %1222 = vmatpush1.bf16.msra.mxu0 0
  %1223 = vmatprep.subr.bf16.mxu0 0
  %1224 = vmatpush1.bf16.msra.mxu0 0
  %1225 = vmatprep.subr.bf16.mxu0 0
  %1226 = vmatpush1.bf16.msra.mxu0 0
  %1227 = vmatprep.subr.bf16.mxu0 0
  %1228 = vmatpush1.bf16.msra.mxu0 0
  %1229 = vmatprep.subr.bf16.mxu0 0
  %1230 = vmatpush1.bf16.msra.mxu0 0
  %1231 = vmatprep.subr.bf16.mxu0 0
  %1232 = vmatpush1.bf16.msra.mxu0 0
  %1233 = vmatprep.subr.bf16.mxu0 0
  %1234 = vmatpush1.bf16.msra.mxu0 0
  %1235 = vmatprep.mubr.bf16.mxu0 0
  %1236 = vmatmul.mubr.bf16.gmra.mrb[0].mxu0 %v947
  %v1237 = vpop.f32.mrb[0].mxu0
  %v1238 = vadd.f32 0.0, %v1237
  %v1239 = vpop.f32.mrb[0].mxu0
  %v1240 = vadd.f32 0.0, %v1239
  %v1241 = vpop.f32.mrb[0].mxu0
  %v1242 = vadd.f32 0.0, %v1241
  %v1243 = vpop.f32.mrb[0].mxu0
  %v1244 = vadd.f32 0.0, %v1243
  %1245 = vdwg.mxu0
  %v1246 = vadd.f32 %v960, %v1195
  %v1247 = vadd.f32 %v961, %v1197
  %v1248 = vadd.f32 %v962, %v1238
  %v1249 = vadd.f32 %v963, %v1240
  %v1250 = vadd.f32 %v964, %v1199
  %v1251 = vadd.f32 %v965, %v1201
  %v1252 = vadd.f32 %v966, %v1242
  %v1253 = vadd.f32 %v967, %v1244
  %v1254 = vmul.f32 %v1246, 0.5
  %v1255 = vmul.f32 %v1247, 0.5
  %v1256 = vmul.f32 %v1248, 0.5
  %v1257 = vmul.f32 %v1249, 0.5
  %v1258 = vmul.f32 %v1250, 0.5
  %v1259 = vmul.f32 %v1251, 0.5
  %v1260 = vmul.f32 %v1252, 0.5
  %v1261 = vmul.f32 %v1253, 0.5
  %v1262 = vtanh.pop %v1254
  %v1263 = vtanh.pop %v1255
  %v1264 = vtanh.pop %v1256
  %v1265 = vtanh.pop %v1257
  %v1266 = vtanh.pop %v1258
  %v1267 = vtanh.pop %v1259
  %v1268 = vtanh.pop %v1260
  %v1269 = vtanh.pop %v1261
  %v1270 = vmul.f32 %v1262, 0.5
  %v1271 = vmul.f32 %v1263, 0.5
  %v1272 = vmul.f32 %v1264, 0.5
  %v1273 = vmul.f32 %v1265, 0.5
  %v1274 = vmul.f32 %v1266, 0.5
  %v1275 = vmul.f32 %v1267, 0.5
  %v1276 = vmul.f32 %v1268, 0.5
  %v1277 = vmul.f32 %v1269, 0.5
  %v1278 = vadd.f32 %v1270, 0.5
  %v1279 = vadd.f32 %v1271, 0.5
  %v1280 = vadd.f32 %v1272, 0.5
  %v1281 = vadd.f32 %v1273, 0.5
  %v1282 = vadd.f32 %v1274, 0.5
  %v1283 = vadd.f32 %v1275, 0.5
  %v1284 = vadd.f32 %v1276, 0.5
  %v1285 = vadd.f32 %v1277, 0.5
  %v1286 = vmul.f32 %v1279, %v935
  %v1287 = vmul.f32 %v1283, %v936
  %v1288 = vadd.f32 %v1286, %v1280
  %v1289 = vadd.f32 %v1287, %v1284
  %v1290 = vsub.f32 %v1288, %v1278
  %v1291 = vsub.f32 %v1289, %v1282
  %v1292 = vmul.f32 %v1290, 0.5
  %v1293 = vmul.f32 %v1291, 0.5
  %v1294 = vtanh.pop %v1292
  %v1295 = vtanh.pop %v1293
  %v1296 = vmul.f32 %v1294, 0.5
  %v1297 = vmul.f32 %v1295, 0.5
  %v1298 = vadd.f32 %v1296, 0.5
  %v1299 = vadd.f32 %v1297, 0.5
  %v1300 = vsub.f32 %v1298, %v1281
  %v1301 = vsub.f32 %v1299, %v1285
  %v1302 = vpack.c.bf16 %v1301, %v1300
  %v1304 = vunpack.c.l.b16 %v1302
  %v1305 = vunpack.c.h.b16 %v1302
  %v1306 = vpack.c.b16 %v1304, %v1304
  %v1307 = vpack.c.b16 %v1305, %v1305
  %s1310 = scalar_lea.vmem %s4, 8
  %1311 = vst [vmem:[%s1310] sm:$0xf] %v1306
  %1312 = vst [vmem:[%s1310 + $0x4] sm:$0xf] %v1307
  %s1313 = smul.u32 4, 4
  %s1314 = smul.addr %s1313, 8
  %s1315 = scalar_lea.vmem [#allocation2], %s1314
  %v1316 = vld [vmem:[%s1315] sm:$0xff]
  %v1317 = vld [vmem:[%s1315 + $0x8] sm:$0xff]
  %v1318 = vld [vmem:[%s1315 + $0x10] sm:$0xff]
  %v1319 = vld [vmem:[%s1315 + $0x18] sm:$0xff]
  %v1320 = vld [vmem:[%s1315 + $0x20] sm:$0xff]
  %v1321 = vld [vmem:[%s1315 + $0x28] sm:$0xff]
  %v1322 = vld [vmem:[%s1315 + $0x30] sm:$0xff]
  %v1323 = vld [vmem:[%s1315 + $0x38] sm:$0xff]
  %v1324 = vld [vmem:[%s2] sm:$0xff]
  %v1325 = vld [vmem:[%s2 + $0x8] sm:$0xff]
  %v1326 = vld [vmem:[%s2 + $0x10] sm:$0xff]
  %v1327 = vld [vmem:[%s2 + $0x18] sm:$0xff]
  %v1328 = vld [vmem:[%s2 + $0x20] sm:$0xff]
  %v1329 = vld [vmem:[%s2 + $0x28] sm:$0xff]
  %v1330 = vld [vmem:[%s2 + $0x30] sm:$0xff]
  %v1331 = vld [vmem:[%s2 + $0x38] sm:$0xff]
  %v1332 = vld [vmem:[%s2 + $0x40] sm:$0xff]
  %v1333 = vld [vmem:[%s2 + $0x48] sm:$0xff]
  %v1334 = vld [vmem:[%s2 + $0x50] sm:$0xff]
  %v1335 = vld [vmem:[%s2 + $0x58] sm:$0xff]
  %v1336 = vld [vmem:[%s2 + $0x60] sm:$0xff]
  %v1337 = vld [vmem:[%s2 + $0x68] sm:$0xff]
  %v1338 = vld [vmem:[%s2 + $0x70] sm:$0xff]
  %v1339 = vld [vmem:[%s2 + $0x78] sm:$0xff]
  %v1340 = vld [vmem:[%s2 + $0x80] sm:$0xff]
  %v1341 = vld [vmem:[%s2 + $0x88] sm:$0xff]
  %v1342 = vld [vmem:[%s2 + $0x90] sm:$0xff]
  %v1343 = vld [vmem:[%s2 + $0x98] sm:$0xff]
  %v1344 = vld [vmem:[%s2 + $0xa0] sm:$0xff]
  %v1345 = vld [vmem:[%s2 + $0xa8] sm:$0xff]
  %v1346 = vld [vmem:[%s2 + $0xb0] sm:$0xff]
  %v1347 = vld [vmem:[%s2 + $0xb8] sm:$0xff]
  %v1348 = vld [vmem:[%s2 + $0xc0] sm:$0xff]
  %v1349 = vld [vmem:[%s2 + $0xc8] sm:$0xff]
  %v1350 = vld [vmem:[%s2 + $0xd0] sm:$0xff]
  %v1351 = vld [vmem:[%s2 + $0xd8] sm:$0xff]
  %v1352 = vld [vmem:[%s2 + $0xe0] sm:$0xff]
  %v1353 = vld [vmem:[%s2 + $0xe8] sm:$0xff]
  %v1354 = vld [vmem:[%s2 + $0xf0] sm:$0xff]
  %v1355 = vld [vmem:[%s2 + $0xf8] sm:$0xff]
  %v1388 = vunpack.c.l.b16 %v1324
  %v1389 = vunpack.c.h.b16 %v1324
  %v1390 = vunpack.c.l.b16 %v1325
  %v1391 = vunpack.c.h.b16 %v1325
  %v1392 = vunpack.c.l.b16 %v1326
  %v1393 = vunpack.c.h.b16 %v1326
  %v1394 = vunpack.c.l.b16 %v1327
  %v1395 = vunpack.c.h.b16 %v1327
  %v1396 = vunpack.c.l.b16 %v1328
  %v1397 = vunpack.c.h.b16 %v1328
  %v1398 = vunpack.c.l.b16 %v1329
  %v1399 = vunpack.c.h.b16 %v1329
  %v1400 = vunpack.c.l.b16 %v1330
  %v1401 = vunpack.c.h.b16 %v1330
  %v1402 = vunpack.c.l.b16 %v1331
  %v1403 = vunpack.c.h.b16 %v1331
  %v1404 = vunpack.c.l.b16 %v1332
  %v1405 = vunpack.c.h.b16 %v1332
  %v1406 = vunpack.c.l.b16 %v1333
  %v1407 = vunpack.c.h.b16 %v1333
  %v1408 = vunpack.c.l.b16 %v1334
  %v1409 = vunpack.c.h.b16 %v1334
  %v1410 = vunpack.c.l.b16 %v1335
  %v1411 = vunpack.c.h.b16 %v1335
  %v1412 = vunpack.c.l.b16 %v1336
  %v1413 = vunpack.c.h.b16 %v1336
  %v1414 = vunpack.c.l.b16 %v1337
  %v1415 = vunpack.c.h.b16 %v1337
  %v1416 = vunpack.c.l.b16 %v1338
  %v1417 = vunpack.c.h.b16 %v1338
  %v1418 = vunpack.c.l.b16 %v1339
  %v1419 = vunpack.c.h.b16 %v1339
  %v1420 = vunpack.c.l.b16 %v1340
  %v1421 = vunpack.c.h.b16 %v1340
  %v1422 = vunpack.c.l.b16 %v1341
  %v1423 = vunpack.c.h.b16 %v1341
  %v1424 = vunpack.c.l.b16 %v1342
  %v1425 = vunpack.c.h.b16 %v1342
  %v1426 = vunpack.c.l.b16 %v1343
  %v1427 = vunpack.c.h.b16 %v1343
  %v1428 = vunpack.c.l.b16 %v1344
  %v1429 = vunpack.c.h.b16 %v1344
  %v1430 = vunpack.c.l.b16 %v1345
  %v1431 = vunpack.c.h.b16 %v1345
  %v1432 = vunpack.c.l.b16 %v1346
  %v1433 = vunpack.c.h.b16 %v1346
  %v1434 = vunpack.c.l.b16 %v1347
  %v1435 = vunpack.c.h.b16 %v1347
  %v1436 = vunpack.c.l.b16 %v1348
  %v1437 = vunpack.c.h.b16 %v1348
  %v1438 = vunpack.c.l.b16 %v1349
  %v1439 = vunpack.c.h.b16 %v1349
  %v1440 = vunpack.c.l.b16 %v1350
  %v1441 = vunpack.c.h.b16 %v1350
  %v1442 = vunpack.c.l.b16 %v1351
  %v1443 = vunpack.c.h.b16 %v1351
  %v1444 = vunpack.c.l.b16 %v1352
  %v1445 = vunpack.c.h.b16 %v1352
  %v1446 = vunpack.c.l.b16 %v1353
  %v1447 = vunpack.c.h.b16 %v1353
  %v1448 = vunpack.c.l.b16 %v1354
  %v1449 = vunpack.c.h.b16 %v1354
  %v1450 = vunpack.c.l.b16 %v1355
  %v1451 = vunpack.c.h.b16 %v1355
  %v1452 = vpack.c.b16 %v1392, %v1388
  %v1453 = vpack.c.b16 %v1393, %v1389
  %v1454 = vpack.c.b16 %v1394, %v1390
  %v1455 = vpack.c.b16 %v1395, %v1391
  %v1456 = vpack.c.b16 %v1400, %v1396
  %v1457 = vpack.c.b16 %v1401, %v1397
  %v1458 = vpack.c.b16 %v1402, %v1398
  %v1459 = vpack.c.b16 %v1403, %v1399
  %v1460 = vpack.c.b16 %v1408, %v1404
  %v1461 = vpack.c.b16 %v1409, %v1405
  %v1462 = vpack.c.b16 %v1410, %v1406
  %v1463 = vpack.c.b16 %v1411, %v1407
  %v1464 = vpack.c.b16 %v1416, %v1412
  %v1465 = vpack.c.b16 %v1417, %v1413
  %v1466 = vpack.c.b16 %v1418, %v1414
  %v1467 = vpack.c.b16 %v1419, %v1415
  %v1468 = vpack.c.b16 %v1424, %v1420
  %v1469 = vpack.c.b16 %v1425, %v1421
  %v1470 = vpack.c.b16 %v1426, %v1422
  %v1471 = vpack.c.b16 %v1427, %v1423
  %v1472 = vpack.c.b16 %v1432, %v1428
  %v1473 = vpack.c.b16 %v1433, %v1429
  %v1474 = vpack.c.b16 %v1434, %v1430
  %v1475 = vpack.c.b16 %v1435, %v1431
  %v1476 = vpack.c.b16 %v1440, %v1436
  %v1477 = vpack.c.b16 %v1441, %v1437
  %v1478 = vpack.c.b16 %v1442, %v1438
  %v1479 = vpack.c.b16 %v1443, %v1439
  %v1480 = vpack.c.b16 %v1448, %v1444
  %v1481 = vpack.c.b16 %v1449, %v1445
  %v1482 = vpack.c.b16 %v1450, %v1446
  %v1483 = vpack.c.b16 %v1451, %v1447
  %1516 = vmatprep.subr.bf16.mxu0 %v1453
  %1517 = vmatpush1.bf16.msra.mxu0 %v1452
  %1518 = vmatprep.subr.bf16.mxu0 %v1457
  %1519 = vmatpush1.bf16.msra.mxu0 %v1456
  %1520 = vmatprep.subr.bf16.mxu0 %v1461
  %1521 = vmatpush1.bf16.msra.mxu0 %v1460
  %1522 = vmatprep.subr.bf16.mxu0 %v1465
  %1523 = vmatpush1.bf16.msra.mxu0 %v1464
  %1524 = vmatprep.subr.bf16.mxu0 %v1469
  %1525 = vmatpush1.bf16.msra.mxu0 %v1468
  %1526 = vmatprep.subr.bf16.mxu0 %v1473
  %1527 = vmatpush1.bf16.msra.mxu0 %v1472
  %1528 = vmatprep.subr.bf16.mxu0 %v1477
  %1529 = vmatpush1.bf16.msra.mxu0 %v1476
  %1530 = vmatprep.subr.bf16.mxu0 %v1481
  %1531 = vmatpush1.bf16.msra.mxu0 %v1480
  %1532 = vmatprep.subr.bf16.mxu0 0
  %1533 = vmatpush1.bf16.msra.mxu0 0
  %1534 = vmatprep.subr.bf16.mxu0 0
  %1535 = vmatpush1.bf16.msra.mxu0 0
  %1536 = vmatprep.subr.bf16.mxu0 0
  %1537 = vmatpush1.bf16.msra.mxu0 0
  %1538 = vmatprep.subr.bf16.mxu0 0
  %1539 = vmatpush1.bf16.msra.mxu0 0
  %1540 = vmatprep.subr.bf16.mxu0 0
  %1541 = vmatpush1.bf16.msra.mxu0 0
  %1542 = vmatprep.subr.bf16.mxu0 0
  %1543 = vmatpush1.bf16.msra.mxu0 0
  %1544 = vmatprep.subr.bf16.mxu0 0
  %1545 = vmatpush1.bf16.msra.mxu0 0
  %1546 = vmatprep.subr.bf16.mxu0 0
  %1547 = vmatpush1.bf16.msra.mxu0 0
  %1548 = vmatprep.mubr.bf16.mxu0 0
  %1549 = vmatmul.mubr.bf16.gmra.mrb[0].mxu0 %v1302
  %v1550 = vpop.f32.mrb[0].mxu0
  %v1551 = vadd.f32 0.0, %v1550
  %v1552 = vpop.f32.mrb[0].mxu0
  %v1553 = vadd.f32 0.0, %v1552
  %v1554 = vpop.f32.mrb[0].mxu0
  %v1555 = vadd.f32 0.0, %v1554
  %v1556 = vpop.f32.mrb[0].mxu0
  %v1557 = vadd.f32 0.0, %v1556
  %1558 = vdwg.mxu0
  %1559 = vmatprep.subr.bf16.mxu0 %v1455
  %1560 = vmatpush1.bf16.msra.mxu0 %v1454
  %1561 = vmatprep.subr.bf16.mxu0 %v1459
  %1562 = vmatpush1.bf16.msra.mxu0 %v1458
  %1563 = vmatprep.subr.bf16.mxu0 %v1463
  %1564 = vmatpush1.bf16.msra.mxu0 %v1462
  %1565 = vmatprep.subr.bf16.mxu0 %v1467
  %1566 = vmatpush1.bf16.msra.mxu0 %v1466
  %1567 = vmatprep.subr.bf16.mxu0 %v1471
  %1568 = vmatpush1.bf16.msra.mxu0 %v1470
  %1569 = vmatprep.subr.bf16.mxu0 %v1475
  %1570 = vmatpush1.bf16.msra.mxu0 %v1474
  %1571 = vmatprep.subr.bf16.mxu0 %v1479
  %1572 = vmatpush1.bf16.msra.mxu0 %v1478
  %1573 = vmatprep.subr.bf16.mxu0 %v1483
  %1574 = vmatpush1.bf16.msra.mxu0 %v1482
  %1575 = vmatprep.subr.bf16.mxu0 0
  %1576 = vmatpush1.bf16.msra.mxu0 0
  %1577 = vmatprep.subr.bf16.mxu0 0
  %1578 = vmatpush1.bf16.msra.mxu0 0
  %1579 = vmatprep.subr.bf16.mxu0 0
  %1580 = vmatpush1.bf16.msra.mxu0 0
  %1581 = vmatprep.subr.bf16.mxu0 0
  %1582 = vmatpush1.bf16.msra.mxu0 0
  %1583 = vmatprep.subr.bf16.mxu0 0
  %1584 = vmatpush1.bf16.msra.mxu0 0
  %1585 = vmatprep.subr.bf16.mxu0 0
  %1586 = vmatpush1.bf16.msra.mxu0 0
  %1587 = vmatprep.subr.bf16.mxu0 0
  %1588 = vmatpush1.bf16.msra.mxu0 0
  %1589 = vmatprep.subr.bf16.mxu0 0
  %1590 = vmatpush1.bf16.msra.mxu0 0
  %1591 = vmatprep.mubr.bf16.mxu0 0
  %1592 = vmatmul.mubr.bf16.gmra.mrb[0].mxu0 %v1302
  %v1593 = vpop.f32.mrb[0].mxu0
  %v1594 = vadd.f32 0.0, %v1593
  %v1595 = vpop.f32.mrb[0].mxu0
  %v1596 = vadd.f32 0.0, %v1595
  %v1597 = vpop.f32.mrb[0].mxu0
  %v1598 = vadd.f32 0.0, %v1597
  %v1599 = vpop.f32.mrb[0].mxu0
  %v1600 = vadd.f32 0.0, %v1599
  %1601 = vdwg.mxu0
  %v1602 = vadd.f32 %v1316, %v1551
  %v1603 = vadd.f32 %v1317, %v1553
  %v1604 = vadd.f32 %v1318, %v1594
  %v1605 = vadd.f32 %v1319, %v1596
  %v1606 = vadd.f32 %v1320, %v1555
  %v1607 = vadd.f32 %v1321, %v1557
  %v1608 = vadd.f32 %v1322, %v1598
  %v1609 = vadd.f32 %v1323, %v1600
  %v1610 = vmul.f32 %v1602, 0.5
  %v1611 = vmul.f32 %v1603, 0.5
  %v1612 = vmul.f32 %v1604, 0.5
  %v1613 = vmul.f32 %v1605, 0.5
  %v1614 = vmul.f32 %v1606, 0.5
  %v1615 = vmul.f32 %v1607, 0.5
  %v1616 = vmul.f32 %v1608, 0.5
  %v1617 = vmul.f32 %v1609, 0.5
  %v1618 = vtanh.pop %v1610
  %v1619 = vtanh.pop %v1611
  %v1620 = vtanh.pop %v1612
  %v1621 = vtanh.pop %v1613
  %v1622 = vtanh.pop %v1614
  %v1623 = vtanh.pop %v1615
  %v1624 = vtanh.pop %v1616
  %v1625 = vtanh.pop %v1617
  %v1626 = vmul.f32 %v1618, 0.5
  %v1627 = vmul.f32 %v1619, 0.5
  %v1628 = vmul.f32 %v1620, 0.5
  %v1629 = vmul.f32 %v1621, 0.5
  %v1630 = vmul.f32 %v1622, 0.5
  %v1631 = vmul.f32 %v1623, 0.5
  %v1632 = vmul.f32 %v1624, 0.5
  %v1633 = vmul.f32 %v1625, 0.5
  %v1634 = vadd.f32 %v1626, 0.5
  %v1635 = vadd.f32 %v1627, 0.5
  %v1636 = vadd.f32 %v1628, 0.5
  %v1637 = vadd.f32 %v1629, 0.5
  %v1638 = vadd.f32 %v1630, 0.5
  %v1639 = vadd.f32 %v1631, 0.5
  %v1640 = vadd.f32 %v1632, 0.5
  %v1641 = vadd.f32 %v1633, 0.5
  %v1642 = vmul.f32 %v1635, %v1290
  %v1643 = vmul.f32 %v1639, %v1291
  %v1644 = vadd.f32 %v1642, %v1636
  %v1645 = vadd.f32 %v1643, %v1640
  %v1646 = vsub.f32 %v1644, %v1634
  %v1647 = vsub.f32 %v1645, %v1638
  %v1648 = vmul.f32 %v1646, 0.5
  %v1649 = vmul.f32 %v1647, 0.5
  %v1650 = vtanh.pop %v1648
  %v1651 = vtanh.pop %v1649
  %v1652 = vmul.f32 %v1650, 0.5
  %v1653 = vmul.f32 %v1651, 0.5
  %v1654 = vadd.f32 %v1652, 0.5
  %v1655 = vadd.f32 %v1653, 0.5
  %v1656 = vsub.f32 %v1654, %v1637
  %v1657 = vsub.f32 %v1655, %v1641
  %v1658 = vpack.c.bf16 %v1657, %v1656
  %v1660 = vunpack.c.l.b16 %v1658
  %v1661 = vunpack.c.h.b16 %v1658
  %v1662 = vpack.c.b16 %v1660, %v1660
  %v1663 = vpack.c.b16 %v1661, %v1661
  %s1666 = scalar_lea.vmem %s4, 16
  %1667 = vst [vmem:[%s1666] sm:$0xf] %v1662
  %1668 = vst [vmem:[%s1666 + $0x4] sm:$0xf] %v1663
  %s1669 = smul.u32 6, 4
  %s1670 = smul.addr %s1669, 8
  %s1671 = scalar_lea.vmem [#allocation2], %s1670
  %v1672 = vld [vmem:[%s1671] sm:$0xff]
  %v1673 = vld [vmem:[%s1671 + $0x8] sm:$0xff]
  %v1674 = vld [vmem:[%s1671 + $0x10] sm:$0xff]
  %v1675 = vld [vmem:[%s1671 + $0x18] sm:$0xff]
  %v1676 = vld [vmem:[%s1671 + $0x20] sm:$0xff]
  %v1677 = vld [vmem:[%s1671 + $0x28] sm:$0xff]
  %v1678 = vld [vmem:[%s1671 + $0x30] sm:$0xff]
  %v1679 = vld [vmem:[%s1671 + $0x38] sm:$0xff]
  %v1680 = vld [vmem:[%s2] sm:$0xff]
  %v1681 = vld [vmem:[%s2 + $0x8] sm:$0xff]
  %v1682 = vld [vmem:[%s2 + $0x10] sm:$0xff]
  %v1683 = vld [vmem:[%s2 + $0x18] sm:$0xff]
  %v1684 = vld [vmem:[%s2 + $0x20] sm:$0xff]
  %v1685 = vld [vmem:[%s2 + $0x28] sm:$0xff]
  %v1686 = vld [vmem:[%s2 + $0x30] sm:$0xff]
  %v1687 = vld [vmem:[%s2 + $0x38] sm:$0xff]
  %v1688 = vld [vmem:[%s2 + $0x40] sm:$0xff]
  %v1689 = vld [vmem:[%s2 + $0x48] sm:$0xff]
  %v1690 = vld [vmem:[%s2 + $0x50] sm:$0xff]
  %v1691 = vld [vmem:[%s2 + $0x58] sm:$0xff]
  %v1692 = vld [vmem:[%s2 + $0x60] sm:$0xff]
  %v1693 = vld [vmem:[%s2 + $0x68] sm:$0xff]
  %v1694 = vld [vmem:[%s2 + $0x70] sm:$0xff]
  %v1695 = vld [vmem:[%s2 + $0x78] sm:$0xff]
  %v1696 = vld [vmem:[%s2 + $0x80] sm:$0xff]
  %v1697 = vld [vmem:[%s2 + $0x88] sm:$0xff]
  %v1698 = vld [vmem:[%s2 + $0x90] sm:$0xff]
  %v1699 = vld [vmem:[%s2 + $0x98] sm:$0xff]
  %v1700 = vld [vmem:[%s2 + $0xa0] sm:$0xff]
  %v1701 = vld [vmem:[%s2 + $0xa8] sm:$0xff]
  %v1702 = vld [vmem:[%s2 + $0xb0] sm:$0xff]
  %v1703 = vld [vmem:[%s2 + $0xb8] sm:$0xff]
  %v1704 = vld [vmem:[%s2 + $0xc0] sm:$0xff]
  %v1705 = vld [vmem:[%s2 + $0xc8] sm:$0xff]
  %v1706 = vld [vmem:[%s2 + $0xd0] sm:$0xff]
  %v1707 = vld [vmem:[%s2 + $0xd8] sm:$0xff]
  %v1708 = vld [vmem:[%s2 + $0xe0] sm:$0xff]
  %v1709 = vld [vmem:[%s2 + $0xe8] sm:$0xff]
  %v1710 = vld [vmem:[%s2 + $0xf0] sm:$0xff]
  %v1711 = vld [vmem:[%s2 + $0xf8] sm:$0xff]
  %v1744 = vunpack.c.l.b16 %v1680
  %v1745 = vunpack.c.h.b16 %v1680
  %v1746 = vunpack.c.l.b16 %v1681
  %v1747 = vunpack.c.h.b16 %v1681
  %v1748 = vunpack.c.l.b16 %v1682
  %v1749 = vunpack.c.h.b16 %v1682
  %v1750 = vunpack.c.l.b16 %v1683
  %v1751 = vunpack.c.h.b16 %v1683
  %v1752 = vunpack.c.l.b16 %v1684
  %v1753 = vunpack.c.h.b16 %v1684
  %v1754 = vunpack.c.l.b16 %v1685
  %v1755 = vunpack.c.h.b16 %v1685
  %v1756 = vunpack.c.l.b16 %v1686
  %v1757 = vunpack.c.h.b16 %v1686
  %v1758 = vunpack.c.l.b16 %v1687
  %v1759 = vunpack.c.h.b16 %v1687
  %v1760 = vunpack.c.l.b16 %v1688
  %v1761 = vunpack.c.h.b16 %v1688
  %v1762 = vunpack.c.l.b16 %v1689
  %v1763 = vunpack.c.h.b16 %v1689
  %v1764 = vunpack.c.l.b16 %v1690
  %v1765 = vunpack.c.h.b16 %v1690
  %v1766 = vunpack.c.l.b16 %v1691
  %v1767 = vunpack.c.h.b16 %v1691
  %v1768 = vunpack.c.l.b16 %v1692
  %v1769 = vunpack.c.h.b16 %v1692
  %v1770 = vunpack.c.l.b16 %v1693
  %v1771 = vunpack.c.h.b16 %v1693
  %v1772 = vunpack.c.l.b16 %v1694
  %v1773 = vunpack.c.h.b16 %v1694
  %v1774 = vunpack.c.l.b16 %v1695
  %v1775 = vunpack.c.h.b16 %v1695
  %v1776 = vunpack.c.l.b16 %v1696
  %v1777 = vunpack.c.h.b16 %v1696
  %v1778 = vunpack.c.l.b16 %v1697
  %v1779 = vunpack.c.h.b16 %v1697
  %v1780 = vunpack.c.l.b16 %v1698
  %v1781 = vunpack.c.h.b16 %v1698
  %v1782 = vunpack.c.l.b16 %v1699
  %v1783 = vunpack.c.h.b16 %v1699
  %v1784 = vunpack.c.l.b16 %v1700
  %v1785 = vunpack.c.h.b16 %v1700
  %v1786 = vunpack.c.l.b16 %v1701
  %v1787 = vunpack.c.h.b16 %v1701
  %v1788 = vunpack.c.l.b16 %v1702
  %v1789 = vunpack.c.h.b16 %v1702
  %v1790 = vunpack.c.l.b16 %v1703
  %v1791 = vunpack.c.h.b16 %v1703
  %v1792 = vunpack.c.l.b16 %v1704
  %v1793 = vunpack.c.h.b16 %v1704
  %v1794 = vunpack.c.l.b16 %v1705
  %v1795 = vunpack.c.h.b16 %v1705
  %v1796 = vunpack.c.l.b16 %v1706
  %v1797 = vunpack.c.h.b16 %v1706
  %v1798 = vunpack.c.l.b16 %v1707
  %v1799 = vunpack.c.h.b16 %v1707
  %v1800 = vunpack.c.l.b16 %v1708
  %v1801 = vunpack.c.h.b16 %v1708
  %v1802 = vunpack.c.l.b16 %v1709
  %v1803 = vunpack.c.h.b16 %v1709
  %v1804 = vunpack.c.l.b16 %v1710
  %v1805 = vunpack.c.h.b16 %v1710
  %v1806 = vunpack.c.l.b16 %v1711
  %v1807 = vunpack.c.h.b16 %v1711
  %v1808 = vpack.c.b16 %v1748, %v1744
  %v1809 = vpack.c.b16 %v1749, %v1745
  %v1810 = vpack.c.b16 %v1750, %v1746
  %v1811 = vpack.c.b16 %v1751, %v1747
  %v1812 = vpack.c.b16 %v1756, %v1752
  %v1813 = vpack.c.b16 %v1757, %v1753
  %v1814 = vpack.c.b16 %v1758, %v1754
  %v1815 = vpack.c.b16 %v1759, %v1755
  %v1816 = vpack.c.b16 %v1764, %v1760
  %v1817 = vpack.c.b16 %v1765, %v1761
  %v1818 = vpack.c.b16 %v1766, %v1762
  %v1819 = vpack.c.b16 %v1767, %v1763
  %v1820 = vpack.c.b16 %v1772, %v1768
  %v1821 = vpack.c.b16 %v1773, %v1769
  %v1822 = vpack.c.b16 %v1774, %v1770
  %v1823 = vpack.c.b16 %v1775, %v1771
  %v1824 = vpack.c.b16 %v1780, %v1776
  %v1825 = vpack.c.b16 %v1781, %v1777
  %v1826 = vpack.c.b16 %v1782, %v1778
  %v1827 = vpack.c.b16 %v1783, %v1779
  %v1828 = vpack.c.b16 %v1788, %v1784
  %v1829 = vpack.c.b16 %v1789, %v1785
  %v1830 = vpack.c.b16 %v1790, %v1786
  %v1831 = vpack.c.b16 %v1791, %v1787
  %v1832 = vpack.c.b16 %v1796, %v1792
  %v1833 = vpack.c.b16 %v1797, %v1793
  %v1834 = vpack.c.b16 %v1798, %v1794
  %v1835 = vpack.c.b16 %v1799, %v1795
  %v1836 = vpack.c.b16 %v1804, %v1800
  %v1837 = vpack.c.b16 %v1805, %v1801
  %v1838 = vpack.c.b16 %v1806, %v1802
  %v1839 = vpack.c.b16 %v1807, %v1803
  %1872 = vmatprep.subr.bf16.mxu0 %v1809
  %1873 = vmatpush1.bf16.msra.mxu0 %v1808
  %1874 = vmatprep.subr.bf16.mxu0 %v1813
  %1875 = vmatpush1.bf16.msra.mxu0 %v1812
  %1876 = vmatprep.subr.bf16.mxu0 %v1817
  %1877 = vmatpush1.bf16.msra.mxu0 %v1816
  %1878 = vmatprep.subr.bf16.mxu0 %v1821
  %1879 = vmatpush1.bf16.msra.mxu0 %v1820
  %1880 = vmatprep.subr.bf16.mxu0 %v1825
  %1881 = vmatpush1.bf16.msra.mxu0 %v1824
  %1882 = vmatprep.subr.bf16.mxu0 %v1829
  %1883 = vmatpush1.bf16.msra.mxu0 %v1828
  %1884 = vmatprep.subr.bf16.mxu0 %v1833
  %1885 = vmatpush1.bf16.msra.mxu0 %v1832
  %1886 = vmatprep.subr.bf16.mxu0 %v1837
  %1887 = vmatpush1.bf16.msra.mxu0 %v1836
  %1888 = vmatprep.subr.bf16.mxu0 0
  %1889 = vmatpush1.bf16.msra.mxu0 0
  %1890 = vmatprep.subr.bf16.mxu0 0
  %1891 = vmatpush1.bf16.msra.mxu0 0
  %1892 = vmatprep.subr.bf16.mxu0 0
  %1893 = vmatpush1.bf16.msra.mxu0 0
  %1894 = vmatprep.subr.bf16.mxu0 0
  %1895 = vmatpush1.bf16.msra.mxu0 0
  %1896 = vmatprep.subr.bf16.mxu0 0
  %1897 = vmatpush1.bf16.msra.mxu0 0
  %1898 = vmatprep.subr.bf16.mxu0 0
  %1899 = vmatpush1.bf16.msra.mxu0 0
  %1900 = vmatprep.subr.bf16.mxu0 0
  %1901 = vmatpush1.bf16.msra.mxu0 0
  %1902 = vmatprep.subr.bf16.mxu0 0
  %1903 = vmatpush1.bf16.msra.mxu0 0
  %1904 = vmatprep.mubr.bf16.mxu0 0
  %1905 = vmatmul.mubr.bf16.gmra.mrb[0].mxu0 %v1658
  %v1906 = vpop.f32.mrb[0].mxu0
  %v1907 = vadd.f32 0.0, %v1906
  %v1908 = vpop.f32.mrb[0].mxu0
  %v1909 = vadd.f32 0.0, %v1908
  %v1910 = vpop.f32.mrb[0].mxu0
  %v1911 = vadd.f32 0.0, %v1910
  %v1912 = vpop.f32.mrb[0].mxu0
  %v1913 = vadd.f32 0.0, %v1912
  %1914 = vdwg.mxu0
  %1915 = vmatprep.subr.bf16.mxu0 %v1811
  %1916 = vmatpush1.bf16.msra.mxu0 %v1810
  %1917 = vmatprep.subr.bf16.mxu0 %v1815
  %1918 = vmatpush1.bf16.msra.mxu0 %v1814
  %1919 = vmatprep.subr.bf16.mxu0 %v1819
  %1920 = vmatpush1.bf16.msra.mxu0 %v1818
  %1921 = vmatprep.subr.bf16.mxu0 %v1823
  %1922 = vmatpush1.bf16.msra.mxu0 %v1822
  %1923 = vmatprep.subr.bf16.mxu0 %v1827
  %1924 = vmatpush1.bf16.msra.mxu0 %v1826
  %1925 = vmatprep.subr.bf16.mxu0 %v1831
  %1926 = vmatpush1.bf16.msra.mxu0 %v1830
  %1927 = vmatprep.subr.bf16.mxu0 %v1835
  %1928 = vmatpush1.bf16.msra.mxu0 %v1834
  %1929 = vmatprep.subr.bf16.mxu0 %v1839
  %1930 = vmatpush1.bf16.msra.mxu0 %v1838
  %1931 = vmatprep.subr.bf16.mxu0 0
  %1932 = vmatpush1.bf16.msra.mxu0 0
  %1933 = vmatprep.subr.bf16.mxu0 0
  %1934 = vmatpush1.bf16.msra.mxu0 0
  %1935 = vmatprep.subr.bf16.mxu0 0
  %1936 = vmatpush1.bf16.msra.mxu0 0
  %1937 = vmatprep.subr.bf16.mxu0 0
  %1938 = vmatpush1.bf16.msra.mxu0 0
  %1939 = vmatprep.subr.bf16.mxu0 0
  %1940 = vmatpush1.bf16.msra.mxu0 0
  %1941 = vmatprep.subr.bf16.mxu0 0
  %1942 = vmatpush1.bf16.msra.mxu0 0
  %1943 = vmatprep.subr.bf16.mxu0 0
  %1944 = vmatpush1.bf16.msra.mxu0 0
  %1945 = vmatprep.subr.bf16.mxu0 0
  %1946 = vmatpush1.bf16.msra.mxu0 0
  %1947 = vmatprep.mubr.bf16.mxu0 0
  %1948 = vmatmul.mubr.bf16.gmra.mrb[0].mxu0 %v1658
  %v1949 = vpop.f32.mrb[0].mxu0
  %v1950 = vadd.f32 0.0, %v1949
  %v1951 = vpop.f32.mrb[0].mxu0
  %v1952 = vadd.f32 0.0, %v1951
  %v1953 = vpop.f32.mrb[0].mxu0
  %v1954 = vadd.f32 0.0, %v1953
  %v1955 = vpop.f32.mrb[0].mxu0
  %v1956 = vadd.f32 0.0, %v1955
  %1957 = vdwg.mxu0
  %v1958 = vadd.f32 %v1672, %v1907
  %v1959 = vadd.f32 %v1673, %v1909
  %v1960 = vadd.f32 %v1674, %v1950
  %v1961 = vadd.f32 %v1675, %v1952
  %v1962 = vadd.f32 %v1676, %v1911
  %v1963 = vadd.f32 %v1677, %v1913
  %v1964 = vadd.f32 %v1678, %v1954
  %v1965 = vadd.f32 %v1679, %v1956
  %v1966 = vmul.f32 %v1958, 0.5
  %v1967 = vmul.f32 %v1959, 0.5
  %v1968 = vmul.f32 %v1960, 0.5
  %v1969 = vmul.f32 %v1961, 0.5
  %v1970 = vmul.f32 %v1962, 0.5
  %v1971 = vmul.f32 %v1963, 0.5
  %v1972 = vmul.f32 %v1964, 0.5
  %v1973 = vmul.f32 %v1965, 0.5
  %v1974 = vtanh.pop %v1966
  %v1975 = vtanh.pop %v1967
  %v1976 = vtanh.pop %v1968
  %v1977 = vtanh.pop %v1969
  %v1978 = vtanh.pop %v1970
  %v1979 = vtanh.pop %v1971
  %v1980 = vtanh.pop %v1972
  %v1981 = vtanh.pop %v1973
  %v1982 = vmul.f32 %v1974, 0.5
  %v1983 = vmul.f32 %v1975, 0.5
  %v1984 = vmul.f32 %v1976, 0.5
  %v1985 = vmul.f32 %v1977, 0.5
  %v1986 = vmul.f32 %v1978, 0.5
  %v1987 = vmul.f32 %v1979, 0.5
  %v1988 = vmul.f32 %v1980, 0.5
  %v1989 = vmul.f32 %v1981, 0.5
  %v1990 = vadd.f32 %v1982, 0.5
  %v1991 = vadd.f32 %v1983, 0.5
  %v1992 = vadd.f32 %v1984, 0.5
  %v1993 = vadd.f32 %v1985, 0.5
  %v1994 = vadd.f32 %v1986, 0.5
  %v1995 = vadd.f32 %v1987, 0.5
  %v1996 = vadd.f32 %v1988, 0.5
  %v1997 = vadd.f32 %v1989, 0.5
  %v1998 = vmul.f32 %v1991, %v1646
  %v1999 = vmul.f32 %v1995, %v1647
  %v2000 = vadd.f32 %v1998, %v1992
  %v2001 = vadd.f32 %v1999, %v1996
  %v2002 = vsub.f32 %v2000, %v1990
  %v2003 = vsub.f32 %v2001, %v1994
  %v2004 = vmul.f32 %v2002, 0.5
  %v2005 = vmul.f32 %v2003, 0.5
  %v2006 = vtanh.pop %v2004
  %v2007 = vtanh.pop %v2005
  %v2008 = vmul.f32 %v2006, 0.5
  %v2009 = vmul.f32 %v2007, 0.5
  %v2010 = vadd.f32 %v2008, 0.5
  %v2011 = vadd.f32 %v2009, 0.5
  %v2012 = vsub.f32 %v2010, %v1993
  %v2013 = vsub.f32 %v2011, %v1997
  %v2014 = vpack.c.bf16 %v2013, %v2012
  %v2016 = vunpack.c.l.b16 %v2014
  %v2017 = vunpack.c.h.b16 %v2014
  %v2018 = vpack.c.b16 %v2016, %v2016
  %v2019 = vpack.c.b16 %v2017, %v2017
  %s2022 = scalar_lea.vmem %s4, 24
  %2023 = vst [vmem:[%s2022] sm:$0xf] %v2018
  %2024 = vst [vmem:[%s2022 + $0x4] sm:$0xf] %v2019
  %s2025 = smul.u32 8, 4
  %s2026 = smul.addr %s2025, 8
  %s2027 = scalar_lea.vmem [#allocation2], %s2026
  %v2028 = vld [vmem:[%s2027] sm:$0xff]
  %v2029 = vld [vmem:[%s2027 + $0x8] sm:$0xff]
  %v2030 = vld [vmem:[%s2027 + $0x10] sm:$0xff]
  %v2031 = vld [vmem:[%s2027 + $0x18] sm:$0xff]
  %v2032 = vld [vmem:[%s2027 + $0x20] sm:$0xff]
  %v2033 = vld [vmem:[%s2027 + $0x28] sm:$0xff]
  %v2034 = vld [vmem:[%s2027 + $0x30] sm:$0xff]
  %v2035 = vld [vmem:[%s2027 + $0x38] sm:$0xff]
  %v2036 = vld [vmem:[%s2] sm:$0xff]
  %v2037 = vld [vmem:[%s2 + $0x8] sm:$0xff]
  %v2038 = vld [vmem:[%s2 + $0x10] sm:$0xff]
  %v2039 = vld [vmem:[%s2 + $0x18] sm:$0xff]
  %v2040 = vld [vmem:[%s2 + $0x20] sm:$0xff]
  %v2041 = vld [vmem:[%s2 + $0x28] sm:$0xff]
  %v2042 = vld [vmem:[%s2 + $0x30] sm:$0xff]
  %v2043 = vld [vmem:[%s2 + $0x38] sm:$0xff]
  %v2044 = vld [vmem:[%s2 + $0x40] sm:$0xff]
  %v2045 = vld [vmem:[%s2 + $0x48] sm:$0xff]
  %v2046 = vld [vmem:[%s2 + $0x50] sm:$0xff]
  %v2047 = vld [vmem:[%s2 + $0x58] sm:$0xff]
  %v2048 = vld [vmem:[%s2 + $0x60] sm:$0xff]
  %v2049 = vld [vmem:[%s2 + $0x68] sm:$0xff]
  %v2050 = vld [vmem:[%s2 + $0x70] sm:$0xff]
  %v2051 = vld [vmem:[%s2 + $0x78] sm:$0xff]
  %v2052 = vld [vmem:[%s2 + $0x80] sm:$0xff]
  %v2053 = vld [vmem:[%s2 + $0x88] sm:$0xff]
  %v2054 = vld [vmem:[%s2 + $0x90] sm:$0xff]
  %v2055 = vld [vmem:[%s2 + $0x98] sm:$0xff]
  %v2056 = vld [vmem:[%s2 + $0xa0] sm:$0xff]
  %v2057 = vld [vmem:[%s2 + $0xa8] sm:$0xff]
  %v2058 = vld [vmem:[%s2 + $0xb0] sm:$0xff]
  %v2059 = vld [vmem:[%s2 + $0xb8] sm:$0xff]
  %v2060 = vld [vmem:[%s2 + $0xc0] sm:$0xff]
  %v2061 = vld [vmem:[%s2 + $0xc8] sm:$0xff]
  %v2062 = vld [vmem:[%s2 + $0xd0] sm:$0xff]
  %v2063 = vld [vmem:[%s2 + $0xd8] sm:$0xff]
  %v2064 = vld [vmem:[%s2 + $0xe0] sm:$0xff]
  %v2065 = vld [vmem:[%s2 + $0xe8] sm:$0xff]
  %v2066 = vld [vmem:[%s2 + $0xf0] sm:$0xff]
  %v2067 = vld [vmem:[%s2 + $0xf8] sm:$0xff]
  %v2100 = vunpack.c.l.b16 %v2036
  %v2101 = vunpack.c.h.b16 %v2036
  %v2102 = vunpack.c.l.b16 %v2037
  %v2103 = vunpack.c.h.b16 %v2037
  %v2104 = vunpack.c.l.b16 %v2038
  %v2105 = vunpack.c.h.b16 %v2038
  %v2106 = vunpack.c.l.b16 %v2039
  %v2107 = vunpack.c.h.b16 %v2039
  %v2108 = vunpack.c.l.b16 %v2040
  %v2109 = vunpack.c.h.b16 %v2040
  %v2110 = vunpack.c.l.b16 %v2041
  %v2111 = vunpack.c.h.b16 %v2041
  %v2112 = vunpack.c.l.b16 %v2042
  %v2113 = vunpack.c.h.b16 %v2042
  %v2114 = vunpack.c.l.b16 %v2043
  %v2115 = vunpack.c.h.b16 %v2043
  %v2116 = vunpack.c.l.b16 %v2044
  %v2117 = vunpack.c.h.b16 %v2044
  %v2118 = vunpack.c.l.b16 %v2045
  %v2119 = vunpack.c.h.b16 %v2045
  %v2120 = vunpack.c.l.b16 %v2046
  %v2121 = vunpack.c.h.b16 %v2046
  %v2122 = vunpack.c.l.b16 %v2047
  %v2123 = vunpack.c.h.b16 %v2047
  %v2124 = vunpack.c.l.b16 %v2048
  %v2125 = vunpack.c.h.b16 %v2048
  %v2126 = vunpack.c.l.b16 %v2049
  %v2127 = vunpack.c.h.b16 %v2049
  %v2128 = vunpack.c.l.b16 %v2050
  %v2129 = vunpack.c.h.b16 %v2050
  %v2130 = vunpack.c.l.b16 %v2051
  %v2131 = vunpack.c.h.b16 %v2051
  %v2132 = vunpack.c.l.b16 %v2052
  %v2133 = vunpack.c.h.b16 %v2052
  %v2134 = vunpack.c.l.b16 %v2053
  %v2135 = vunpack.c.h.b16 %v2053
  %v2136 = vunpack.c.l.b16 %v2054
  %v2137 = vunpack.c.h.b16 %v2054
  %v2138 = vunpack.c.l.b16 %v2055
  %v2139 = vunpack.c.h.b16 %v2055
  %v2140 = vunpack.c.l.b16 %v2056
  %v2141 = vunpack.c.h.b16 %v2056
  %v2142 = vunpack.c.l.b16 %v2057
  %v2143 = vunpack.c.h.b16 %v2057
  %v2144 = vunpack.c.l.b16 %v2058
  %v2145 = vunpack.c.h.b16 %v2058
  %v2146 = vunpack.c.l.b16 %v2059
  %v2147 = vunpack.c.h.b16 %v2059
  %v2148 = vunpack.c.l.b16 %v2060
  %v2149 = vunpack.c.h.b16 %v2060
  %v2150 = vunpack.c.l.b16 %v2061
  %v2151 = vunpack.c.h.b16 %v2061
  %v2152 = vunpack.c.l.b16 %v2062
  %v2153 = vunpack.c.h.b16 %v2062
  %v2154 = vunpack.c.l.b16 %v2063
  %v2155 = vunpack.c.h.b16 %v2063
  %v2156 = vunpack.c.l.b16 %v2064
  %v2157 = vunpack.c.h.b16 %v2064
  %v2158 = vunpack.c.l.b16 %v2065
  %v2159 = vunpack.c.h.b16 %v2065
  %v2160 = vunpack.c.l.b16 %v2066
  %v2161 = vunpack.c.h.b16 %v2066
  %v2162 = vunpack.c.l.b16 %v2067
  %v2163 = vunpack.c.h.b16 %v2067
  %v2164 = vpack.c.b16 %v2104, %v2100
  %v2165 = vpack.c.b16 %v2105, %v2101
  %v2166 = vpack.c.b16 %v2106, %v2102
  %v2167 = vpack.c.b16 %v2107, %v2103
  %v2168 = vpack.c.b16 %v2112, %v2108
  %v2169 = vpack.c.b16 %v2113, %v2109
  %v2170 = vpack.c.b16 %v2114, %v2110
  %v2171 = vpack.c.b16 %v2115, %v2111
  %v2172 = vpack.c.b16 %v2120, %v2116
  %v2173 = vpack.c.b16 %v2121, %v2117
  %v2174 = vpack.c.b16 %v2122, %v2118
  %v2175 = vpack.c.b16 %v2123, %v2119
  %v2176 = vpack.c.b16 %v2128, %v2124
  %v2177 = vpack.c.b16 %v2129, %v2125
  %v2178 = vpack.c.b16 %v2130, %v2126
  %v2179 = vpack.c.b16 %v2131, %v2127
  %v2180 = vpack.c.b16 %v2136, %v2132
  %v2181 = vpack.c.b16 %v2137, %v2133
  %v2182 = vpack.c.b16 %v2138, %v2134
  %v2183 = vpack.c.b16 %v2139, %v2135
  %v2184 = vpack.c.b16 %v2144, %v2140
  %v2185 = vpack.c.b16 %v2145, %v2141
  %v2186 = vpack.c.b16 %v2146, %v2142
  %v2187 = vpack.c.b16 %v2147, %v2143
  %v2188 = vpack.c.b16 %v2152, %v2148
  %v2189 = vpack.c.b16 %v2153, %v2149
  %v2190 = vpack.c.b16 %v2154, %v2150
  %v2191 = vpack.c.b16 %v2155, %v2151
  %v2192 = vpack.c.b16 %v2160, %v2156
  %v2193 = vpack.c.b16 %v2161, %v2157
  %v2194 = vpack.c.b16 %v2162, %v2158
  %v2195 = vpack.c.b16 %v2163, %v2159
  %2228 = vmatprep.subr.bf16.mxu0 %v2165
  %2229 = vmatpush1.bf16.msra.mxu0 %v2164
  %2230 = vmatprep.subr.bf16.mxu0 %v2169
  %2231 = vmatpush1.bf16.msra.mxu0 %v2168
  %2232 = vmatprep.subr.bf16.mxu0 %v2173
  %2233 = vmatpush1.bf16.msra.mxu0 %v2172
  %2234 = vmatprep.subr.bf16.mxu0 %v2177
  %2235 = vmatpush1.bf16.msra.mxu0 %v2176
  %2236 = vmatprep.subr.bf16.mxu0 %v2181
  %2237 = vmatpush1.bf16.msra.mxu0 %v2180
  %2238 = vmatprep.subr.bf16.mxu0 %v2185
  %2239 = vmatpush1.bf16.msra.mxu0 %v2184
  %2240 = vmatprep.subr.bf16.mxu0 %v2189
  %2241 = vmatpush1.bf16.msra.mxu0 %v2188
  %2242 = vmatprep.subr.bf16.mxu0 %v2193
  %2243 = vmatpush1.bf16.msra.mxu0 %v2192
  %2244 = vmatprep.subr.bf16.mxu0 0
  %2245 = vmatpush1.bf16.msra.mxu0 0
  %2246 = vmatprep.subr.bf16.mxu0 0
  %2247 = vmatpush1.bf16.msra.mxu0 0
  %2248 = vmatprep.subr.bf16.mxu0 0
  %2249 = vmatpush1.bf16.msra.mxu0 0
  %2250 = vmatprep.subr.bf16.mxu0 0
  %2251 = vmatpush1.bf16.msra.mxu0 0
  %2252 = vmatprep.subr.bf16.mxu0 0
  %2253 = vmatpush1.bf16.msra.mxu0 0
  %2254 = vmatprep.subr.bf16.mxu0 0
  %2255 = vmatpush1.bf16.msra.mxu0 0
  %2256 = vmatprep.subr.bf16.mxu0 0
  %2257 = vmatpush1.bf16.msra.mxu0 0
  %2258 = vmatprep.subr.bf16.mxu0 0
  %2259 = vmatpush1.bf16.msra.mxu0 0
  %2260 = vmatprep.mubr.bf16.mxu0 0
  %2261 = vmatmul.mubr.bf16.gmra.mrb[0].mxu0 %v2014
  %v2262 = vpop.f32.mrb[0].mxu0
  %v2263 = vadd.f32 0.0, %v2262
  %v2264 = vpop.f32.mrb[0].mxu0
  %v2265 = vadd.f32 0.0, %v2264
  %v2266 = vpop.f32.mrb[0].mxu0
  %v2267 = vadd.f32 0.0, %v2266
  %v2268 = vpop.f32.mrb[0].mxu0
  %v2269 = vadd.f32 0.0, %v2268
  %2270 = vdwg.mxu0
  %2271 = vmatprep.subr.bf16.mxu0 %v2167
  %2272 = vmatpush1.bf16.msra.mxu0 %v2166
  %2273 = vmatprep.subr.bf16.mxu0 %v2171
  %2274 = vmatpush1.bf16.msra.mxu0 %v2170
  %2275 = vmatprep.subr.bf16.mxu0 %v2175
  %2276 = vmatpush1.bf16.msra.mxu0 %v2174
  %2277 = vmatprep.subr.bf16.mxu0 %v2179
  %2278 = vmatpush1.bf16.msra.mxu0 %v2178
  %2279 = vmatprep.subr.bf16.mxu0 %v2183
  %2280 = vmatpush1.bf16.msra.mxu0 %v2182
  %2281 = vmatprep.subr.bf16.mxu0 %v2187
  %2282 = vmatpush1.bf16.msra.mxu0 %v2186
  %2283 = vmatprep.subr.bf16.mxu0 %v2191
  %2284 = vmatpush1.bf16.msra.mxu0 %v2190
  %2285 = vmatprep.subr.bf16.mxu0 %v2195
  %2286 = vmatpush1.bf16.msra.mxu0 %v2194
  %2287 = vmatprep.subr.bf16.mxu0 0
  %2288 = vmatpush1.bf16.msra.mxu0 0
  %2289 = vmatprep.subr.bf16.mxu0 0
  %2290 = vmatpush1.bf16.msra.mxu0 0
  %2291 = vmatprep.subr.bf16.mxu0 0
  %2292 = vmatpush1.bf16.msra.mxu0 0
  %2293 = vmatprep.subr.bf16.mxu0 0
  %2294 = vmatpush1.bf16.msra.mxu0 0
  %2295 = vmatprep.subr.bf16.mxu0 0
  %2296 = vmatpush1.bf16.msra.mxu0 0
  %2297 = vmatprep.subr.bf16.mxu0 0
  %2298 = vmatpush1.bf16.msra.mxu0 0
  %2299 = vmatprep.subr.bf16.mxu0 0
  %2300 = vmatpush1.bf16.msra.mxu0 0
  %2301 = vmatprep.subr.bf16.mxu0 0
  %2302 = vmatpush1.bf16.msra.mxu0 0
  %2303 = vmatprep.mubr.bf16.mxu0 0
  %2304 = vmatmul.mubr.bf16.gmra.mrb[0].mxu0 %v2014
  %v2305 = vpop.f32.mrb[0].mxu0
  %v2306 = vadd.f32 0.0, %v2305
  %v2307 = vpop.f32.mrb[0].mxu0
  %v2308 = vadd.f32 0.0, %v2307
  %v2309 = vpop.f32.mrb[0].mxu0
  %v2310 = vadd.f32 0.0, %v2309
  %v2311 = vpop.f32.mrb[0].mxu0
  %v2312 = vadd.f32 0.0, %v2311
  %2313 = vdwg.mxu0
  %v2314 = vadd.f32 %v2028, %v2263
  %v2315 = vadd.f32 %v2029, %v2265
  %v2316 = vadd.f32 %v2030, %v2306
  %v2317 = vadd.f32 %v2031, %v2308
  %v2318 = vadd.f32 %v2032, %v2267
  %v2319 = vadd.f32 %v2033, %v2269
  %v2320 = vadd.f32 %v2034, %v2310
  %v2321 = vadd.f32 %v2035, %v2312
  %v2322 = vmul.f32 %v2314, 0.5
  %v2323 = vmul.f32 %v2315, 0.5
  %v2324 = vmul.f32 %v2316, 0.5
  %v2325 = vmul.f32 %v2317, 0.5
  %v2326 = vmul.f32 %v2318, 0.5
  %v2327 = vmul.f32 %v2319, 0.5
  %v2328 = vmul.f32 %v2320, 0.5
  %v2329 = vmul.f32 %v2321, 0.5
  %v2330 = vtanh.pop %v2322
  %v2331 = vtanh.pop %v2323
  %v2332 = vtanh.pop %v2324
  %v2333 = vtanh.pop %v2325
  %v2334 = vtanh.pop %v2326
  %v2335 = vtanh.pop %v2327
  %v2336 = vtanh.pop %v2328
  %v2337 = vtanh.pop %v2329
  %v2338 = vmul.f32 %v2330, 0.5
  %v2339 = vmul.f32 %v2331, 0.5
  %v2340 = vmul.f32 %v2332, 0.5
  %v2341 = vmul.f32 %v2333, 0.5
  %v2342 = vmul.f32 %v2334, 0.5
  %v2343 = vmul.f32 %v2335, 0.5
  %v2344 = vmul.f32 %v2336, 0.5
  %v2345 = vmul.f32 %v2337, 0.5
  %v2346 = vadd.f32 %v2338, 0.5
  %v2347 = vadd.f32 %v2339, 0.5
  %v2348 = vadd.f32 %v2340, 0.5
  %v2349 = vadd.f32 %v2341, 0.5
  %v2350 = vadd.f32 %v2342, 0.5
  %v2351 = vadd.f32 %v2343, 0.5
  %v2352 = vadd.f32 %v2344, 0.5
  %v2353 = vadd.f32 %v2345, 0.5
  %v2354 = vmul.f32 %v2347, %v2002
  %v2355 = vmul.f32 %v2351, %v2003
  %v2356 = vadd.f32 %v2354, %v2348
  %v2357 = vadd.f32 %v2355, %v2352
  %v2358 = vsub.f32 %v2356, %v2346
  %v2359 = vsub.f32 %v2357, %v2350
  %v2360 = vmul.f32 %v2358, 0.5
  %v2361 = vmul.f32 %v2359, 0.5
  %v2362 = vtanh.pop %v2360
  %v2363 = vtanh.pop %v2361
  %v2364 = vmul.f32 %v2362, 0.5
  %v2365 = vmul.f32 %v2363, 0.5
  %v2366 = vadd.f32 %v2364, 0.5
  %v2367 = vadd.f32 %v2365, 0.5
  %v2368 = vsub.f32 %v2366, %v2349
  %v2369 = vsub.f32 %v2367, %v2353
  %v2370 = vpack.c.bf16 %v2369, %v2368
  %v2372 = vunpack.c.l.b16 %v2370
  %v2373 = vunpack.c.h.b16 %v2370
  %v2374 = vpack.c.b16 %v2372, %v2372
  %v2375 = vpack.c.b16 %v2373, %v2373
  %s2378 = scalar_lea.vmem %s4, 32
  %2379 = vst [vmem:[%s2378] sm:$0xf] %v2374
  %2380 = vst [vmem:[%s2378 + $0x4] sm:$0xf] %v2375
  %s2381 = smul.u32 10, 4
  %s2382 = smul.addr %s2381, 8
  %s2383 = scalar_lea.vmem [#allocation2], %s2382
  %v2384 = vld [vmem:[%s2383] sm:$0xff]
  %v2385 = vld [vmem:[%s2383 + $0x8] sm:$0xff]
  %v2386 = vld [vmem:[%s2383 + $0x10] sm:$0xff]
  %v2387 = vld [vmem:[%s2383 + $0x18] sm:$0xff]
  %v2388 = vld [vmem:[%s2383 + $0x20] sm:$0xff]
  %v2389 = vld [vmem:[%s2383 + $0x28] sm:$0xff]
  %v2390 = vld [vmem:[%s2383 + $0x30] sm:$0xff]
  %v2391 = vld [vmem:[%s2383 + $0x38] sm:$0xff]
  %v2392 = vld [vmem:[%s2] sm:$0xff]
  %v2393 = vld [vmem:[%s2 + $0x8] sm:$0xff]
  %v2394 = vld [vmem:[%s2 + $0x10] sm:$0xff]
  %v2395 = vld [vmem:[%s2 + $0x18] sm:$0xff]
  %v2396 = vld [vmem:[%s2 + $0x20] sm:$0xff]
  %v2397 = vld [vmem:[%s2 + $0x28] sm:$0xff]
  %v2398 = vld [vmem:[%s2 + $0x30] sm:$0xff]
  %v2399 = vld [vmem:[%s2 + $0x38] sm:$0xff]
  %v2400 = vld [vmem:[%s2 + $0x40] sm:$0xff]
  %v2401 = vld [vmem:[%s2 + $0x48] sm:$0xff]
  %v2402 = vld [vmem:[%s2 + $0x50] sm:$0xff]
  %v2403 = vld [vmem:[%s2 + $0x58] sm:$0xff]
  %v2404 = vld [vmem:[%s2 + $0x60] sm:$0xff]
  %v2405 = vld [vmem:[%s2 + $0x68] sm:$0xff]
  %v2406 = vld [vmem:[%s2 + $0x70] sm:$0xff]
  %v2407 = vld [vmem:[%s2 + $0x78] sm:$0xff]
  %v2408 = vld [vmem:[%s2 + $0x80] sm:$0xff]
  %v2409 = vld [vmem:[%s2 + $0x88] sm:$0xff]
  %v2410 = vld [vmem:[%s2 + $0x90] sm:$0xff]
  %v2411 = vld [vmem:[%s2 + $0x98] sm:$0xff]
  %v2412 = vld [vmem:[%s2 + $0xa0] sm:$0xff]
  %v2413 = vld [vmem:[%s2 + $0xa8] sm:$0xff]
  %v2414 = vld [vmem:[%s2 + $0xb0] sm:$0xff]
  %v2415 = vld [vmem:[%s2 + $0xb8] sm:$0xff]
  %v2416 = vld [vmem:[%s2 + $0xc0] sm:$0xff]
  %v2417 = vld [vmem:[%s2 + $0xc8] sm:$0xff]
  %v2418 = vld [vmem:[%s2 + $0xd0] sm:$0xff]
  %v2419 = vld [vmem:[%s2 + $0xd8] sm:$0xff]
  %v2420 = vld [vmem:[%s2 + $0xe0] sm:$0xff]
  %v2421 = vld [vmem:[%s2 + $0xe8] sm:$0xff]
  %v2422 = vld [vmem:[%s2 + $0xf0] sm:$0xff]
  %v2423 = vld [vmem:[%s2 + $0xf8] sm:$0xff]
  %v2456 = vunpack.c.l.b16 %v2392
  %v2457 = vunpack.c.h.b16 %v2392
  %v2458 = vunpack.c.l.b16 %v2393
  %v2459 = vunpack.c.h.b16 %v2393
  %v2460 = vunpack.c.l.b16 %v2394
  %v2461 = vunpack.c.h.b16 %v2394
  %v2462 = vunpack.c.l.b16 %v2395
  %v2463 = vunpack.c.h.b16 %v2395
  %v2464 = vunpack.c.l.b16 %v2396
  %v2465 = vunpack.c.h.b16 %v2396
  %v2466 = vunpack.c.l.b16 %v2397
  %v2467 = vunpack.c.h.b16 %v2397
  %v2468 = vunpack.c.l.b16 %v2398
  %v2469 = vunpack.c.h.b16 %v2398
  %v2470 = vunpack.c.l.b16 %v2399
  %v2471 = vunpack.c.h.b16 %v2399
  %v2472 = vunpack.c.l.b16 %v2400
  %v2473 = vunpack.c.h.b16 %v2400
  %v2474 = vunpack.c.l.b16 %v2401
  %v2475 = vunpack.c.h.b16 %v2401
  %v2476 = vunpack.c.l.b16 %v2402
  %v2477 = vunpack.c.h.b16 %v2402
  %v2478 = vunpack.c.l.b16 %v2403
  %v2479 = vunpack.c.h.b16 %v2403
  %v2480 = vunpack.c.l.b16 %v2404
  %v2481 = vunpack.c.h.b16 %v2404
  %v2482 = vunpack.c.l.b16 %v2405
  %v2483 = vunpack.c.h.b16 %v2405
  %v2484 = vunpack.c.l.b16 %v2406
  %v2485 = vunpack.c.h.b16 %v2406
  %v2486 = vunpack.c.l.b16 %v2407
  %v2487 = vunpack.c.h.b16 %v2407
  %v2488 = vunpack.c.l.b16 %v2408
  %v2489 = vunpack.c.h.b16 %v2408
  %v2490 = vunpack.c.l.b16 %v2409
  %v2491 = vunpack.c.h.b16 %v2409
  %v2492 = vunpack.c.l.b16 %v2410
  %v2493 = vunpack.c.h.b16 %v2410
  %v2494 = vunpack.c.l.b16 %v2411
  %v2495 = vunpack.c.h.b16 %v2411
  %v2496 = vunpack.c.l.b16 %v2412
  %v2497 = vunpack.c.h.b16 %v2412
  %v2498 = vunpack.c.l.b16 %v2413
  %v2499 = vunpack.c.h.b16 %v2413
  %v2500 = vunpack.c.l.b16 %v2414
  %v2501 = vunpack.c.h.b16 %v2414
  %v2502 = vunpack.c.l.b16 %v2415
  %v2503 = vunpack.c.h.b16 %v2415
  %v2504 = vunpack.c.l.b16 %v2416
  %v2505 = vunpack.c.h.b16 %v2416
  %v2506 = vunpack.c.l.b16 %v2417
  %v2507 = vunpack.c.h.b16 %v2417
  %v2508 = vunpack.c.l.b16 %v2418
  %v2509 = vunpack.c.h.b16 %v2418
  %v2510 = vunpack.c.l.b16 %v2419
  %v2511 = vunpack.c.h.b16 %v2419
  %v2512 = vunpack.c.l.b16 %v2420
  %v2513 = vunpack.c.h.b16 %v2420
  %v2514 = vunpack.c.l.b16 %v2421
  %v2515 = vunpack.c.h.b16 %v2421
  %v2516 = vunpack.c.l.b16 %v2422
  %v2517 = vunpack.c.h.b16 %v2422
  %v2518 = vunpack.c.l.b16 %v2423
  %v2519 = vunpack.c.h.b16 %v2423
  %v2520 = vpack.c.b16 %v2460, %v2456
  %v2521 = vpack.c.b16 %v2461, %v2457
  %v2522 = vpack.c.b16 %v2462, %v2458
  %v2523 = vpack.c.b16 %v2463, %v2459
  %v2524 = vpack.c.b16 %v2468, %v2464
  %v2525 = vpack.c.b16 %v2469, %v2465
  %v2526 = vpack.c.b16 %v2470, %v2466
  %v2527 = vpack.c.b16 %v2471, %v2467
  %v2528 = vpack.c.b16 %v2476, %v2472
  %v2529 = vpack.c.b16 %v2477, %v2473
  %v2530 = vpack.c.b16 %v2478, %v2474
  %v2531 = vpack.c.b16 %v2479, %v2475
  %v2532 = vpack.c.b16 %v2484, %v2480
  %v2533 = vpack.c.b16 %v2485, %v2481
  %v2534 = vpack.c.b16 %v2486, %v2482
  %v2535 = vpack.c.b16 %v2487, %v2483
  %v2536 = vpack.c.b16 %v2492, %v2488
  %v2537 = vpack.c.b16 %v2493, %v2489
  %v2538 = vpack.c.b16 %v2494, %v2490
  %v2539 = vpack.c.b16 %v2495, %v2491
  %v2540 = vpack.c.b16 %v2500, %v2496
  %v2541 = vpack.c.b16 %v2501, %v2497
  %v2542 = vpack.c.b16 %v2502, %v2498
  %v2543 = vpack.c.b16 %v2503, %v2499
  %v2544 = vpack.c.b16 %v2508, %v2504
  %v2545 = vpack.c.b16 %v2509, %v2505
  %v2546 = vpack.c.b16 %v2510, %v2506
  %v2547 = vpack.c.b16 %v2511, %v2507
  %v2548 = vpack.c.b16 %v2516, %v2512
  %v2549 = vpack.c.b16 %v2517, %v2513
  %v2550 = vpack.c.b16 %v2518, %v2514
  %v2551 = vpack.c.b16 %v2519, %v2515
  %2584 = vmatprep.subr.bf16.mxu0 %v2521
  %2585 = vmatpush1.bf16.msra.mxu0 %v2520
  %2586 = vmatprep.subr.bf16.mxu0 %v2525
  %2587 = vmatpush1.bf16.msra.mxu0 %v2524
  %2588 = vmatprep.subr.bf16.mxu0 %v2529
  %2589 = vmatpush1.bf16.msra.mxu0 %v2528
  %2590 = vmatprep.subr.bf16.mxu0 %v2533
  %2591 = vmatpush1.bf16.msra.mxu0 %v2532
  %2592 = vmatprep.subr.bf16.mxu0 %v2537
  %2593 = vmatpush1.bf16.msra.mxu0 %v2536
  %2594 = vmatprep.subr.bf16.mxu0 %v2541
  %2595 = vmatpush1.bf16.msra.mxu0 %v2540
  %2596 = vmatprep.subr.bf16.mxu0 %v2545
  %2597 = vmatpush1.bf16.msra.mxu0 %v2544
  %2598 = vmatprep.subr.bf16.mxu0 %v2549
  %2599 = vmatpush1.bf16.msra.mxu0 %v2548
  %2600 = vmatprep.subr.bf16.mxu0 0
  %2601 = vmatpush1.bf16.msra.mxu0 0
  %2602 = vmatprep.subr.bf16.mxu0 0
  %2603 = vmatpush1.bf16.msra.mxu0 0
  %2604 = vmatprep.subr.bf16.mxu0 0
  %2605 = vmatpush1.bf16.msra.mxu0 0
  %2606 = vmatprep.subr.bf16.mxu0 0
  %2607 = vmatpush1.bf16.msra.mxu0 0
  %2608 = vmatprep.subr.bf16.mxu0 0
  %2609 = vmatpush1.bf16.msra.mxu0 0
  %2610 = vmatprep.subr.bf16.mxu0 0
  %2611 = vmatpush1.bf16.msra.mxu0 0
  %2612 = vmatprep.subr.bf16.mxu0 0
  %2613 = vmatpush1.bf16.msra.mxu0 0
  %2614 = vmatprep.subr.bf16.mxu0 0
  %2615 = vmatpush1.bf16.msra.mxu0 0
  %2616 = vmatprep.mubr.bf16.mxu0 0
  %2617 = vmatmul.mubr.bf16.gmra.mrb[0].mxu0 %v2370
  %v2618 = vpop.f32.mrb[0].mxu0
  %v2619 = vadd.f32 0.0, %v2618
  %v2620 = vpop.f32.mrb[0].mxu0
  %v2621 = vadd.f32 0.0, %v2620
  %v2622 = vpop.f32.mrb[0].mxu0
  %v2623 = vadd.f32 0.0, %v2622
  %v2624 = vpop.f32.mrb[0].mxu0
  %v2625 = vadd.f32 0.0, %v2624
  %2626 = vdwg.mxu0
  %2627 = vmatprep.subr.bf16.mxu0 %v2523
  %2628 = vmatpush1.bf16.msra.mxu0 %v2522
  %2629 = vmatprep.subr.bf16.mxu0 %v2527
  %2630 = vmatpush1.bf16.msra.mxu0 %v2526
  %2631 = vmatprep.subr.bf16.mxu0 %v2531
  %2632 = vmatpush1.bf16.msra.mxu0 %v2530
  %2633 = vmatprep.subr.bf16.mxu0 %v2535
  %2634 = vmatpush1.bf16.msra.mxu0 %v2534
  %2635 = vmatprep.subr.bf16.mxu0 %v2539
  %2636 = vmatpush1.bf16.msra.mxu0 %v2538
  %2637 = vmatprep.subr.bf16.mxu0 %v2543
  %2638 = vmatpush1.bf16.msra.mxu0 %v2542
  %2639 = vmatprep.subr.bf16.mxu0 %v2547
  %2640 = vmatpush1.bf16.msra.mxu0 %v2546
  %2641 = vmatprep.subr.bf16.mxu0 %v2551
  %2642 = vmatpush1.bf16.msra.mxu0 %v2550
  %2643 = vmatprep.subr.bf16.mxu0 0
  %2644 = vmatpush1.bf16.msra.mxu0 0
  %2645 = vmatprep.subr.bf16.mxu0 0
  %2646 = vmatpush1.bf16.msra.mxu0 0
  %2647 = vmatprep.subr.bf16.mxu0 0
  %2648 = vmatpush1.bf16.msra.mxu0 0
  %2649 = vmatprep.subr.bf16.mxu0 0
  %2650 = vmatpush1.bf16.msra.mxu0 0
  %2651 = vmatprep.subr.bf16.mxu0 0
  %2652 = vmatpush1.bf16.msra.mxu0 0
  %2653 = vmatprep.subr.bf16.mxu0 0
  %2654 = vmatpush1.bf16.msra.mxu0 0
  %2655 = vmatprep.subr.bf16.mxu0 0
  %2656 = vmatpush1.bf16.msra.mxu0 0
  %2657 = vmatprep.subr.bf16.mxu0 0
  %2658 = vmatpush1.bf16.msra.mxu0 0
  %2659 = vmatprep.mubr.bf16.mxu0 0
  %2660 = vmatmul.mubr.bf16.gmra.mrb[0].mxu0 %v2370
  %v2661 = vpop.f32.mrb[0].mxu0
  %v2662 = vadd.f32 0.0, %v2661
  %v2663 = vpop.f32.mrb[0].mxu0
  %v2664 = vadd.f32 0.0, %v2663
  %v2665 = vpop.f32.mrb[0].mxu0
  %v2666 = vadd.f32 0.0, %v2665
  %v2667 = vpop.f32.mrb[0].mxu0
  %v2668 = vadd.f32 0.0, %v2667
  %2669 = vdwg.mxu0
  %v2670 = vadd.f32 %v2384, %v2619
  %v2671 = vadd.f32 %v2385, %v2621
  %v2672 = vadd.f32 %v2386, %v2662
  %v2673 = vadd.f32 %v2387, %v2664
  %v2674 = vadd.f32 %v2388, %v2623
  %v2675 = vadd.f32 %v2389, %v2625
  %v2676 = vadd.f32 %v2390, %v2666
  %v2677 = vadd.f32 %v2391, %v2668
  %v2678 = vmul.f32 %v2670, 0.5
  %v2679 = vmul.f32 %v2671, 0.5
  %v2680 = vmul.f32 %v2672, 0.5
  %v2681 = vmul.f32 %v2673, 0.5
  %v2682 = vmul.f32 %v2674, 0.5
  %v2683 = vmul.f32 %v2675, 0.5
  %v2684 = vmul.f32 %v2676, 0.5
  %v2685 = vmul.f32 %v2677, 0.5
  %v2686 = vtanh.pop %v2678
  %v2687 = vtanh.pop %v2679
  %v2688 = vtanh.pop %v2680
  %v2689 = vtanh.pop %v2681
  %v2690 = vtanh.pop %v2682
  %v2691 = vtanh.pop %v2683
  %v2692 = vtanh.pop %v2684
  %v2693 = vtanh.pop %v2685
  %v2694 = vmul.f32 %v2686, 0.5
  %v2695 = vmul.f32 %v2687, 0.5
  %v2696 = vmul.f32 %v2688, 0.5
  %v2697 = vmul.f32 %v2689, 0.5
  %v2698 = vmul.f32 %v2690, 0.5
  %v2699 = vmul.f32 %v2691, 0.5
  %v2700 = vmul.f32 %v2692, 0.5
  %v2701 = vmul.f32 %v2693, 0.5
  %v2702 = vadd.f32 %v2694, 0.5
  %v2703 = vadd.f32 %v2695, 0.5
  %v2704 = vadd.f32 %v2696, 0.5
  %v2705 = vadd.f32 %v2697, 0.5
  %v2706 = vadd.f32 %v2698, 0.5
  %v2707 = vadd.f32 %v2699, 0.5
  %v2708 = vadd.f32 %v2700, 0.5
  %v2709 = vadd.f32 %v2701, 0.5
  %v2710 = vmul.f32 %v2703, %v2358
  %v2711 = vmul.f32 %v2707, %v2359
  %v2712 = vadd.f32 %v2710, %v2704
  %v2713 = vadd.f32 %v2711, %v2708
  %v2714 = vsub.f32 %v2712, %v2702
  %v2715 = vsub.f32 %v2713, %v2706
  %v2716 = vmul.f32 %v2714, 0.5
  %v2717 = vmul.f32 %v2715, 0.5
  %v2718 = vtanh.pop %v2716
  %v2719 = vtanh.pop %v2717
  %v2720 = vmul.f32 %v2718, 0.5
  %v2721 = vmul.f32 %v2719, 0.5
  %v2722 = vadd.f32 %v2720, 0.5
  %v2723 = vadd.f32 %v2721, 0.5
  %v2724 = vsub.f32 %v2722, %v2705
  %v2725 = vsub.f32 %v2723, %v2709
  %v2726 = vpack.c.bf16 %v2725, %v2724
  %v2728 = vunpack.c.l.b16 %v2726
  %v2729 = vunpack.c.h.b16 %v2726
  %v2730 = vpack.c.b16 %v2728, %v2728
  %v2731 = vpack.c.b16 %v2729, %v2729
  %s2734 = scalar_lea.vmem %s4, 40
  %2735 = vst [vmem:[%s2734] sm:$0xf] %v2730
  %2736 = vst [vmem:[%s2734 + $0x4] sm:$0xf] %v2731
  %s2737 = smul.u32 12, 4
  %s2738 = smul.addr %s2737, 8
  %s2739 = scalar_lea.vmem [#allocation2], %s2738
  %v2740 = vld [vmem:[%s2739] sm:$0xff]
  %v2741 = vld [vmem:[%s2739 + $0x8] sm:$0xff]
  %v2742 = vld [vmem:[%s2739 + $0x10] sm:$0xff]
  %v2743 = vld [vmem:[%s2739 + $0x18] sm:$0xff]
  %v2744 = vld [vmem:[%s2739 + $0x20] sm:$0xff]
  %v2745 = vld [vmem:[%s2739 + $0x28] sm:$0xff]
  %v2746 = vld [vmem:[%s2739 + $0x30] sm:$0xff]
  %v2747 = vld [vmem:[%s2739 + $0x38] sm:$0xff]
  %v2748 = vld [vmem:[%s2] sm:$0xff]
  %v2749 = vld [vmem:[%s2 + $0x8] sm:$0xff]
  %v2750 = vld [vmem:[%s2 + $0x10] sm:$0xff]
  %v2751 = vld [vmem:[%s2 + $0x18] sm:$0xff]
  %v2752 = vld [vmem:[%s2 + $0x20] sm:$0xff]
  %v2753 = vld [vmem:[%s2 + $0x28] sm:$0xff]
  %v2754 = vld [vmem:[%s2 + $0x30] sm:$0xff]
  %v2755 = vld [vmem:[%s2 + $0x38] sm:$0xff]
  %v2756 = vld [vmem:[%s2 + $0x40] sm:$0xff]
  %v2757 = vld [vmem:[%s2 + $0x48] sm:$0xff]
  %v2758 = vld [vmem:[%s2 + $0x50] sm:$0xff]
  %v2759 = vld [vmem:[%s2 + $0x58] sm:$0xff]
  %v2760 = vld [vmem:[%s2 + $0x60] sm:$0xff]
  %v2761 = vld [vmem:[%s2 + $0x68] sm:$0xff]
  %v2762 = vld [vmem:[%s2 + $0x70] sm:$0xff]
  %v2763 = vld [vmem:[%s2 + $0x78] sm:$0xff]
  %v2764 = vld [vmem:[%s2 + $0x80] sm:$0xff]
  %v2765 = vld [vmem:[%s2 + $0x88] sm:$0xff]
  %v2766 = vld [vmem:[%s2 + $0x90] sm:$0xff]
  %v2767 = vld [vmem:[%s2 + $0x98] sm:$0xff]
  %v2768 = vld [vmem:[%s2 + $0xa0] sm:$0xff]
  %v2769 = vld [vmem:[%s2 + $0xa8] sm:$0xff]
  %v2770 = vld [vmem:[%s2 + $0xb0] sm:$0xff]
  %v2771 = vld [vmem:[%s2 + $0xb8] sm:$0xff]
  %v2772 = vld [vmem:[%s2 + $0xc0] sm:$0xff]
  %v2773 = vld [vmem:[%s2 + $0xc8] sm:$0xff]
  %v2774 = vld [vmem:[%s2 + $0xd0] sm:$0xff]
  %v2775 = vld [vmem:[%s2 + $0xd8] sm:$0xff]
  %v2776 = vld [vmem:[%s2 + $0xe0] sm:$0xff]
  %v2777 = vld [vmem:[%s2 + $0xe8] sm:$0xff]
  %v2778 = vld [vmem:[%s2 + $0xf0] sm:$0xff]
  %v2779 = vld [vmem:[%s2 + $0xf8] sm:$0xff]
  %v2812 = vunpack.c.l.b16 %v2748
  %v2813 = vunpack.c.h.b16 %v2748
  %v2814 = vunpack.c.l.b16 %v2749
  %v2815 = vunpack.c.h.b16 %v2749
  %v2816 = vunpack.c.l.b16 %v2750
  %v2817 = vunpack.c.h.b16 %v2750
  %v2818 = vunpack.c.l.b16 %v2751
  %v2819 = vunpack.c.h.b16 %v2751
  %v2820 = vunpack.c.l.b16 %v2752
  %v2821 = vunpack.c.h.b16 %v2752
  %v2822 = vunpack.c.l.b16 %v2753
  %v2823 = vunpack.c.h.b16 %v2753
  %v2824 = vunpack.c.l.b16 %v2754
  %v2825 = vunpack.c.h.b16 %v2754
  %v2826 = vunpack.c.l.b16 %v2755
  %v2827 = vunpack.c.h.b16 %v2755
  %v2828 = vunpack.c.l.b16 %v2756
  %v2829 = vunpack.c.h.b16 %v2756
  %v2830 = vunpack.c.l.b16 %v2757
  %v2831 = vunpack.c.h.b16 %v2757
  %v2832 = vunpack.c.l.b16 %v2758
  %v2833 = vunpack.c.h.b16 %v2758
  %v2834 = vunpack.c.l.b16 %v2759
  %v2835 = vunpack.c.h.b16 %v2759
  %v2836 = vunpack.c.l.b16 %v2760
  %v2837 = vunpack.c.h.b16 %v2760
  %v2838 = vunpack.c.l.b16 %v2761
  %v2839 = vunpack.c.h.b16 %v2761
  %v2840 = vunpack.c.l.b16 %v2762
  %v2841 = vunpack.c.h.b16 %v2762
  %v2842 = vunpack.c.l.b16 %v2763
  %v2843 = vunpack.c.h.b16 %v2763
  %v2844 = vunpack.c.l.b16 %v2764
  %v2845 = vunpack.c.h.b16 %v2764
  %v2846 = vunpack.c.l.b16 %v2765
  %v2847 = vunpack.c.h.b16 %v2765
  %v2848 = vunpack.c.l.b16 %v2766
  %v2849 = vunpack.c.h.b16 %v2766
  %v2850 = vunpack.c.l.b16 %v2767
  %v2851 = vunpack.c.h.b16 %v2767
  %v2852 = vunpack.c.l.b16 %v2768
  %v2853 = vunpack.c.h.b16 %v2768
  %v2854 = vunpack.c.l.b16 %v2769
  %v2855 = vunpack.c.h.b16 %v2769
  %v2856 = vunpack.c.l.b16 %v2770
  %v2857 = vunpack.c.h.b16 %v2770
  %v2858 = vunpack.c.l.b16 %v2771
  %v2859 = vunpack.c.h.b16 %v2771
  %v2860 = vunpack.c.l.b16 %v2772
  %v2861 = vunpack.c.h.b16 %v2772
  %v2862 = vunpack.c.l.b16 %v2773
  %v2863 = vunpack.c.h.b16 %v2773
  %v2864 = vunpack.c.l.b16 %v2774
  %v2865 = vunpack.c.h.b16 %v2774
  %v2866 = vunpack.c.l.b16 %v2775
  %v2867 = vunpack.c.h.b16 %v2775
  %v2868 = vunpack.c.l.b16 %v2776
  %v2869 = vunpack.c.h.b16 %v2776
  %v2870 = vunpack.c.l.b16 %v2777
  %v2871 = vunpack.c.h.b16 %v2777
  %v2872 = vunpack.c.l.b16 %v2778
  %v2873 = vunpack.c.h.b16 %v2778
  %v2874 = vunpack.c.l.b16 %v2779
  %v2875 = vunpack.c.h.b16 %v2779
  %v2876 = vpack.c.b16 %v2816, %v2812
  %v2877 = vpack.c.b16 %v2817, %v2813
  %v2878 = vpack.c.b16 %v2818, %v2814
  %v2879 = vpack.c.b16 %v2819, %v2815
  %v2880 = vpack.c.b16 %v2824, %v2820
  %v2881 = vpack.c.b16 %v2825, %v2821
  %v2882 = vpack.c.b16 %v2826, %v2822
  %v2883 = vpack.c.b16 %v2827, %v2823
  %v2884 = vpack.c.b16 %v2832, %v2828
  %v2885 = vpack.c.b16 %v2833, %v2829
  %v2886 = vpack.c.b16 %v2834, %v2830
  %v2887 = vpack.c.b16 %v2835, %v2831
  %v2888 = vpack.c.b16 %v2840, %v2836
  %v2889 = vpack.c.b16 %v2841, %v2837
  %v2890 = vpack.c.b16 %v2842, %v2838
  %v2891 = vpack.c.b16 %v2843, %v2839
  %v2892 = vpack.c.b16 %v2848, %v2844
  %v2893 = vpack.c.b16 %v2849, %v2845
  %v2894 = vpack.c.b16 %v2850, %v2846
  %v2895 = vpack.c.b16 %v2851, %v2847
  %v2896 = vpack.c.b16 %v2856, %v2852
  %v2897 = vpack.c.b16 %v2857, %v2853
  %v2898 = vpack.c.b16 %v2858, %v2854
  %v2899 = vpack.c.b16 %v2859, %v2855
  %v2900 = vpack.c.b16 %v2864, %v2860
  %v2901 = vpack.c.b16 %v2865, %v2861
  %v2902 = vpack.c.b16 %v2866, %v2862
  %v2903 = vpack.c.b16 %v2867, %v2863
  %v2904 = vpack.c.b16 %v2872, %v2868
  %v2905 = vpack.c.b16 %v2873, %v2869
  %v2906 = vpack.c.b16 %v2874, %v2870
  %v2907 = vpack.c.b16 %v2875, %v2871
  %2940 = vmatprep.subr.bf16.mxu0 %v2877
  %2941 = vmatpush1.bf16.msra.mxu0 %v2876
  %2942 = vmatprep.subr.bf16.mxu0 %v2881
  %2943 = vmatpush1.bf16.msra.mxu0 %v2880
  %2944 = vmatprep.subr.bf16.mxu0 %v2885
  %2945 = vmatpush1.bf16.msra.mxu0 %v2884
  %2946 = vmatprep.subr.bf16.mxu0 %v2889
  %2947 = vmatpush1.bf16.msra.mxu0 %v2888
  %2948 = vmatprep.subr.bf16.mxu0 %v2893
  %2949 = vmatpush1.bf16.msra.mxu0 %v2892
  %2950 = vmatprep.subr.bf16.mxu0 %v2897
  %2951 = vmatpush1.bf16.msra.mxu0 %v2896
  %2952 = vmatprep.subr.bf16.mxu0 %v2901
  %2953 = vmatpush1.bf16.msra.mxu0 %v2900
  %2954 = vmatprep.subr.bf16.mxu0 %v2905
  %2955 = vmatpush1.bf16.msra.mxu0 %v2904
  %2956 = vmatprep.subr.bf16.mxu0 0
  %2957 = vmatpush1.bf16.msra.mxu0 0
  %2958 = vmatprep.subr.bf16.mxu0 0
  %2959 = vmatpush1.bf16.msra.mxu0 0
  %2960 = vmatprep.subr.bf16.mxu0 0
  %2961 = vmatpush1.bf16.msra.mxu0 0
  %2962 = vmatprep.subr.bf16.mxu0 0
  %2963 = vmatpush1.bf16.msra.mxu0 0
  %2964 = vmatprep.subr.bf16.mxu0 0
  %2965 = vmatpush1.bf16.msra.mxu0 0
  %2966 = vmatprep.subr.bf16.mxu0 0
  %2967 = vmatpush1.bf16.msra.mxu0 0
  %2968 = vmatprep.subr.bf16.mxu0 0
  %2969 = vmatpush1.bf16.msra.mxu0 0
  %2970 = vmatprep.subr.bf16.mxu0 0
  %2971 = vmatpush1.bf16.msra.mxu0 0
  %2972 = vmatprep.mubr.bf16.mxu0 0
  %2973 = vmatmul.mubr.bf16.gmra.mrb[0].mxu0 %v2726
  %v2974 = vpop.f32.mrb[0].mxu0
  %v2975 = vadd.f32 0.0, %v2974
  %v2976 = vpop.f32.mrb[0].mxu0
  %v2977 = vadd.f32 0.0, %v2976
  %v2978 = vpop.f32.mrb[0].mxu0
  %v2979 = vadd.f32 0.0, %v2978
  %v2980 = vpop.f32.mrb[0].mxu0
  %v2981 = vadd.f32 0.0, %v2980
  %2982 = vdwg.mxu0
  %2983 = vmatprep.subr.bf16.mxu0 %v2879
  %2984 = vmatpush1.bf16.msra.mxu0 %v2878
  %2985 = vmatprep.subr.bf16.mxu0 %v2883
  %2986 = vmatpush1.bf16.msra.mxu0 %v2882
  %2987 = vmatprep.subr.bf16.mxu0 %v2887
  %2988 = vmatpush1.bf16.msra.mxu0 %v2886
  %2989 = vmatprep.subr.bf16.mxu0 %v2891
  %2990 = vmatpush1.bf16.msra.mxu0 %v2890
  %2991 = vmatprep.subr.bf16.mxu0 %v2895
  %2992 = vmatpush1.bf16.msra.mxu0 %v2894
  %2993 = vmatprep.subr.bf16.mxu0 %v2899
  %2994 = vmatpush1.bf16.msra.mxu0 %v2898
  %2995 = vmatprep.subr.bf16.mxu0 %v2903
  %2996 = vmatpush1.bf16.msra.mxu0 %v2902
  %2997 = vmatprep.subr.bf16.mxu0 %v2907
  %2998 = vmatpush1.bf16.msra.mxu0 %v2906
  %2999 = vmatprep.subr.bf16.mxu0 0
  %3000 = vmatpush1.bf16.msra.mxu0 0
  %3001 = vmatprep.subr.bf16.mxu0 0
  %3002 = vmatpush1.bf16.msra.mxu0 0
  %3003 = vmatprep.subr.bf16.mxu0 0
  %3004 = vmatpush1.bf16.msra.mxu0 0
  %3005 = vmatprep.subr.bf16.mxu0 0
  %3006 = vmatpush1.bf16.msra.mxu0 0
  %3007 = vmatprep.subr.bf16.mxu0 0
  %3008 = vmatpush1.bf16.msra.mxu0 0
  %3009 = vmatprep.subr.bf16.mxu0 0
  %3010 = vmatpush1.bf16.msra.mxu0 0
  %3011 = vmatprep.subr.bf16.mxu0 0
  %3012 = vmatpush1.bf16.msra.mxu0 0
  %3013 = vmatprep.subr.bf16.mxu0 0
  %3014 = vmatpush1.bf16.msra.mxu0 0
  %3015 = vmatprep.mubr.bf16.mxu0 0
  %3016 = vmatmul.mubr.bf16.gmra.mrb[0].mxu0 %v2726
  %v3017 = vpop.f32.mrb[0].mxu0
  %v3018 = vadd.f32 0.0, %v3017
  %v3019 = vpop.f32.mrb[0].mxu0
  %v3020 = vadd.f32 0.0, %v3019
  %v3021 = vpop.f32.mrb[0].mxu0
  %v3022 = vadd.f32 0.0, %v3021
  %v3023 = vpop.f32.mrb[0].mxu0
  %v3024 = vadd.f32 0.0, %v3023
  %3025 = vdwg.mxu0
  %v3026 = vadd.f32 %v2740, %v2975
  %v3027 = vadd.f32 %v2741, %v2977
  %v3028 = vadd.f32 %v2742, %v3018
  %v3029 = vadd.f32 %v2743, %v3020
  %v3030 = vadd.f32 %v2744, %v2979
  %v3031 = vadd.f32 %v2745, %v2981
  %v3032 = vadd.f32 %v2746, %v3022
  %v3033 = vadd.f32 %v2747, %v3024
  %v3034 = vmul.f32 %v3026, 0.5
  %v3035 = vmul.f32 %v3027, 0.5
  %v3036 = vmul.f32 %v3028, 0.5
  %v3037 = vmul.f32 %v3029, 0.5
  %v3038 = vmul.f32 %v3030, 0.5
  %v3039 = vmul.f32 %v3031, 0.5
  %v3040 = vmul.f32 %v3032, 0.5
  %v3041 = vmul.f32 %v3033, 0.5
  %v3042 = vtanh.pop %v3034
  %v3043 = vtanh.pop %v3035
  %v3044 = vtanh.pop %v3036
  %v3045 = vtanh.pop %v3037
  %v3046 = vtanh.pop %v3038
  %v3047 = vtanh.pop %v3039
  %v3048 = vtanh.pop %v3040
  %v3049 = vtanh.pop %v3041
  %v3050 = vmul.f32 %v3042, 0.5
  %v3051 = vmul.f32 %v3043, 0.5
  %v3052 = vmul.f32 %v3044, 0.5
  %v3053 = vmul.f32 %v3045, 0.5
  %v3054 = vmul.f32 %v3046, 0.5
  %v3055 = vmul.f32 %v3047, 0.5
  %v3056 = vmul.f32 %v3048, 0.5
  %v3057 = vmul.f32 %v3049, 0.5
  %v3058 = vadd.f32 %v3050, 0.5
  %v3059 = vadd.f32 %v3051, 0.5
  %v3060 = vadd.f32 %v3052, 0.5
  %v3061 = vadd.f32 %v3053, 0.5
  %v3062 = vadd.f32 %v3054, 0.5
  %v3063 = vadd.f32 %v3055, 0.5
  %v3064 = vadd.f32 %v3056, 0.5
  %v3065 = vadd.f32 %v3057, 0.5
  %v3066 = vmul.f32 %v3059, %v2714
  %v3067 = vmul.f32 %v3063, %v2715
  %v3068 = vadd.f32 %v3066, %v3060
  %v3069 = vadd.f32 %v3067, %v3064
  %v3070 = vsub.f32 %v3068, %v3058
  %v3071 = vsub.f32 %v3069, %v3062
  %v3072 = vmul.f32 %v3070, 0.5
  %v3073 = vmul.f32 %v3071, 0.5
  %v3074 = vtanh.pop %v3072
  %v3075 = vtanh.pop %v3073
  %v3076 = vmul.f32 %v3074, 0.5
  %v3077 = vmul.f32 %v3075, 0.5
  %v3078 = vadd.f32 %v3076, 0.5
  %v3079 = vadd.f32 %v3077, 0.5
  %v3080 = vsub.f32 %v3078, %v3061
  %v3081 = vsub.f32 %v3079, %v3065
  %v3082 = vpack.c.bf16 %v3081, %v3080
  %v3084 = vunpack.c.l.b16 %v3082
  %v3085 = vunpack.c.h.b16 %v3082
  %v3086 = vpack.c.b16 %v3084, %v3084
  %v3087 = vpack.c.b16 %v3085, %v3085
  %s3090 = scalar_lea.vmem %s4, 48
  %3091 = vst [vmem:[%s3090] sm:$0xf] %v3086
  %3092 = vst [vmem:[%s3090 + $0x4] sm:$0xf] %v3087
  %s3093 = smul.u32 14, 4
  %s3094 = smul.addr %s3093, 8
  %s3095 = scalar_lea.vmem [#allocation2], %s3094
  %v3096 = vld [vmem:[%s3095] sm:$0xff]
  %v3097 = vld [vmem:[%s3095 + $0x8] sm:$0xff]
  %v3098 = vld [vmem:[%s3095 + $0x10] sm:$0xff]
  %v3099 = vld [vmem:[%s3095 + $0x18] sm:$0xff]
  %v3100 = vld [vmem:[%s3095 + $0x20] sm:$0xff]
  %v3101 = vld [vmem:[%s3095 + $0x28] sm:$0xff]
  %v3102 = vld [vmem:[%s3095 + $0x30] sm:$0xff]
  %v3103 = vld [vmem:[%s3095 + $0x38] sm:$0xff]
  %v3104 = vld [vmem:[%s2] sm:$0xff]
  %v3105 = vld [vmem:[%s2 + $0x8] sm:$0xff]
  %v3106 = vld [vmem:[%s2 + $0x10] sm:$0xff]
  %v3107 = vld [vmem:[%s2 + $0x18] sm:$0xff]
  %v3108 = vld [vmem:[%s2 + $0x20] sm:$0xff]
  %v3109 = vld [vmem:[%s2 + $0x28] sm:$0xff]
  %v3110 = vld [vmem:[%s2 + $0x30] sm:$0xff]
  %v3111 = vld [vmem:[%s2 + $0x38] sm:$0xff]
  %v3112 = vld [vmem:[%s2 + $0x40] sm:$0xff]
  %v3113 = vld [vmem:[%s2 + $0x48] sm:$0xff]
  %v3114 = vld [vmem:[%s2 + $0x50] sm:$0xff]
  %v3115 = vld [vmem:[%s2 + $0x58] sm:$0xff]
  %v3116 = vld [vmem:[%s2 + $0x60] sm:$0xff]
  %v3117 = vld [vmem:[%s2 + $0x68] sm:$0xff]
  %v3118 = vld [vmem:[%s2 + $0x70] sm:$0xff]
  %v3119 = vld [vmem:[%s2 + $0x78] sm:$0xff]
  %v3120 = vld [vmem:[%s2 + $0x80] sm:$0xff]
  %v3121 = vld [vmem:[%s2 + $0x88] sm:$0xff]
  %v3122 = vld [vmem:[%s2 + $0x90] sm:$0xff]
  %v3123 = vld [vmem:[%s2 + $0x98] sm:$0xff]
  %v3124 = vld [vmem:[%s2 + $0xa0] sm:$0xff]
  %v3125 = vld [vmem:[%s2 + $0xa8] sm:$0xff]
  %v3126 = vld [vmem:[%s2 + $0xb0] sm:$0xff]
  %v3127 = vld [vmem:[%s2 + $0xb8] sm:$0xff]
  %v3128 = vld [vmem:[%s2 + $0xc0] sm:$0xff]
  %v3129 = vld [vmem:[%s2 + $0xc8] sm:$0xff]
  %v3130 = vld [vmem:[%s2 + $0xd0] sm:$0xff]
  %v3131 = vld [vmem:[%s2 + $0xd8] sm:$0xff]
  %v3132 = vld [vmem:[%s2 + $0xe0] sm:$0xff]
  %v3133 = vld [vmem:[%s2 + $0xe8] sm:$0xff]
  %v3134 = vld [vmem:[%s2 + $0xf0] sm:$0xff]
  %v3135 = vld [vmem:[%s2 + $0xf8] sm:$0xff]
  %v3168 = vunpack.c.l.b16 %v3104
  %v3169 = vunpack.c.h.b16 %v3104
  %v3170 = vunpack.c.l.b16 %v3105
  %v3171 = vunpack.c.h.b16 %v3105
  %v3172 = vunpack.c.l.b16 %v3106
  %v3173 = vunpack.c.h.b16 %v3106
  %v3174 = vunpack.c.l.b16 %v3107
  %v3175 = vunpack.c.h.b16 %v3107
  %v3176 = vunpack.c.l.b16 %v3108
  %v3177 = vunpack.c.h.b16 %v3108
  %v3178 = vunpack.c.l.b16 %v3109
  %v3179 = vunpack.c.h.b16 %v3109
  %v3180 = vunpack.c.l.b16 %v3110
  %v3181 = vunpack.c.h.b16 %v3110
  %v3182 = vunpack.c.l.b16 %v3111
  %v3183 = vunpack.c.h.b16 %v3111
  %v3184 = vunpack.c.l.b16 %v3112
  %v3185 = vunpack.c.h.b16 %v3112
  %v3186 = vunpack.c.l.b16 %v3113
  %v3187 = vunpack.c.h.b16 %v3113
  %v3188 = vunpack.c.l.b16 %v3114
  %v3189 = vunpack.c.h.b16 %v3114
  %v3190 = vunpack.c.l.b16 %v3115
  %v3191 = vunpack.c.h.b16 %v3115
  %v3192 = vunpack.c.l.b16 %v3116
  %v3193 = vunpack.c.h.b16 %v3116
  %v3194 = vunpack.c.l.b16 %v3117
  %v3195 = vunpack.c.h.b16 %v3117
  %v3196 = vunpack.c.l.b16 %v3118
  %v3197 = vunpack.c.h.b16 %v3118
  %v3198 = vunpack.c.l.b16 %v3119
  %v3199 = vunpack.c.h.b16 %v3119
  %v3200 = vunpack.c.l.b16 %v3120
  %v3201 = vunpack.c.h.b16 %v3120
  %v3202 = vunpack.c.l.b16 %v3121
  %v3203 = vunpack.c.h.b16 %v3121
  %v3204 = vunpack.c.l.b16 %v3122
  %v3205 = vunpack.c.h.b16 %v3122
  %v3206 = vunpack.c.l.b16 %v3123
  %v3207 = vunpack.c.h.b16 %v3123
  %v3208 = vunpack.c.l.b16 %v3124
  %v3209 = vunpack.c.h.b16 %v3124
  %v3210 = vunpack.c.l.b16 %v3125
  %v3211 = vunpack.c.h.b16 %v3125
  %v3212 = vunpack.c.l.b16 %v3126
  %v3213 = vunpack.c.h.b16 %v3126
  %v3214 = vunpack.c.l.b16 %v3127
  %v3215 = vunpack.c.h.b16 %v3127
  %v3216 = vunpack.c.l.b16 %v3128
  %v3217 = vunpack.c.h.b16 %v3128
  %v3218 = vunpack.c.l.b16 %v3129
  %v3219 = vunpack.c.h.b16 %v3129
  %v3220 = vunpack.c.l.b16 %v3130
  %v3221 = vunpack.c.h.b16 %v3130
  %v3222 = vunpack.c.l.b16 %v3131
  %v3223 = vunpack.c.h.b16 %v3131
  %v3224 = vunpack.c.l.b16 %v3132
  %v3225 = vunpack.c.h.b16 %v3132
  %v3226 = vunpack.c.l.b16 %v3133
  %v3227 = vunpack.c.h.b16 %v3133
  %v3228 = vunpack.c.l.b16 %v3134
  %v3229 = vunpack.c.h.b16 %v3134
  %v3230 = vunpack.c.l.b16 %v3135
  %v3231 = vunpack.c.h.b16 %v3135
  %v3232 = vpack.c.b16 %v3172, %v3168
  %v3233 = vpack.c.b16 %v3173, %v3169
  %v3234 = vpack.c.b16 %v3174, %v3170
  %v3235 = vpack.c.b16 %v3175, %v3171
  %v3236 = vpack.c.b16 %v3180, %v3176
  %v3237 = vpack.c.b16 %v3181, %v3177
  %v3238 = vpack.c.b16 %v3182, %v3178
  %v3239 = vpack.c.b16 %v3183, %v3179
  %v3240 = vpack.c.b16 %v3188, %v3184
  %v3241 = vpack.c.b16 %v3189, %v3185
  %v3242 = vpack.c.b16 %v3190, %v3186
  %v3243 = vpack.c.b16 %v3191, %v3187
  %v3244 = vpack.c.b16 %v3196, %v3192
  %v3245 = vpack.c.b16 %v3197, %v3193
  %v3246 = vpack.c.b16 %v3198, %v3194
  %v3247 = vpack.c.b16 %v3199, %v3195
  %v3248 = vpack.c.b16 %v3204, %v3200
  %v3249 = vpack.c.b16 %v3205, %v3201
  %v3250 = vpack.c.b16 %v3206, %v3202
  %v3251 = vpack.c.b16 %v3207, %v3203
  %v3252 = vpack.c.b16 %v3212, %v3208
  %v3253 = vpack.c.b16 %v3213, %v3209
  %v3254 = vpack.c.b16 %v3214, %v3210
  %v3255 = vpack.c.b16 %v3215, %v3211
  %v3256 = vpack.c.b16 %v3220, %v3216
  %v3257 = vpack.c.b16 %v3221, %v3217
  %v3258 = vpack.c.b16 %v3222, %v3218
  %v3259 = vpack.c.b16 %v3223, %v3219
  %v3260 = vpack.c.b16 %v3228, %v3224
  %v3261 = vpack.c.b16 %v3229, %v3225
  %v3262 = vpack.c.b16 %v3230, %v3226
  %v3263 = vpack.c.b16 %v3231, %v3227
  %3296 = vmatprep.subr.bf16.mxu0 %v3233
  %3297 = vmatpush1.bf16.msra.mxu0 %v3232
  %3298 = vmatprep.subr.bf16.mxu0 %v3237
  %3299 = vmatpush1.bf16.msra.mxu0 %v3236
  %3300 = vmatprep.subr.bf16.mxu0 %v3241
  %3301 = vmatpush1.bf16.msra.mxu0 %v3240
  %3302 = vmatprep.subr.bf16.mxu0 %v3245
  %3303 = vmatpush1.bf16.msra.mxu0 %v3244
  %3304 = vmatprep.subr.bf16.mxu0 %v3249
  %3305 = vmatpush1.bf16.msra.mxu0 %v3248
  %3306 = vmatprep.subr.bf16.mxu0 %v3253
  %3307 = vmatpush1.bf16.msra.mxu0 %v3252
  %3308 = vmatprep.subr.bf16.mxu0 %v3257
  %3309 = vmatpush1.bf16.msra.mxu0 %v3256
  %3310 = vmatprep.subr.bf16.mxu0 %v3261
  %3311 = vmatpush1.bf16.msra.mxu0 %v3260
  %3312 = vmatprep.subr.bf16.mxu0 0
  %3313 = vmatpush1.bf16.msra.mxu0 0
  %3314 = vmatprep.subr.bf16.mxu0 0
  %3315 = vmatpush1.bf16.msra.mxu0 0
  %3316 = vmatprep.subr.bf16.mxu0 0
  %3317 = vmatpush1.bf16.msra.mxu0 0
  %3318 = vmatprep.subr.bf16.mxu0 0
  %3319 = vmatpush1.bf16.msra.mxu0 0
  %3320 = vmatprep.subr.bf16.mxu0 0
  %3321 = vmatpush1.bf16.msra.mxu0 0
  %3322 = vmatprep.subr.bf16.mxu0 0
  %3323 = vmatpush1.bf16.msra.mxu0 0
  %3324 = vmatprep.subr.bf16.mxu0 0
  %3325 = vmatpush1.bf16.msra.mxu0 0
  %3326 = vmatprep.subr.bf16.mxu0 0
  %3327 = vmatpush1.bf16.msra.mxu0 0
  %3328 = vmatprep.mubr.bf16.mxu0 0
  %3329 = vmatmul.mubr.bf16.gmra.mrb[0].mxu0 %v3082
  %v3330 = vpop.f32.mrb[0].mxu0
  %v3331 = vadd.f32 0.0, %v3330
  %v3332 = vpop.f32.mrb[0].mxu0
  %v3333 = vadd.f32 0.0, %v3332
  %v3334 = vpop.f32.mrb[0].mxu0
  %v3335 = vadd.f32 0.0, %v3334
  %v3336 = vpop.f32.mrb[0].mxu0
  %v3337 = vadd.f32 0.0, %v3336
  %3338 = vdwg.mxu0
  %3339 = vmatprep.subr.bf16.mxu0 %v3235
  %3340 = vmatpush1.bf16.msra.mxu0 %v3234
  %3341 = vmatprep.subr.bf16.mxu0 %v3239
  %3342 = vmatpush1.bf16.msra.mxu0 %v3238
  %3343 = vmatprep.subr.bf16.mxu0 %v3243
  %3344 = vmatpush1.bf16.msra.mxu0 %v3242
  %3345 = vmatprep.subr.bf16.mxu0 %v3247
  %3346 = vmatpush1.bf16.msra.mxu0 %v3246
  %3347 = vmatprep.subr.bf16.mxu0 %v3251
  %3348 = vmatpush1.bf16.msra.mxu0 %v3250
  %3349 = vmatprep.subr.bf16.mxu0 %v3255
  %3350 = vmatpush1.bf16.msra.mxu0 %v3254
  %3351 = vmatprep.subr.bf16.mxu0 %v3259
  %3352 = vmatpush1.bf16.msra.mxu0 %v3258
  %3353 = vmatprep.subr.bf16.mxu0 %v3263
  %3354 = vmatpush1.bf16.msra.mxu0 %v3262
  %3355 = vmatprep.subr.bf16.mxu0 0
  %3356 = vmatpush1.bf16.msra.mxu0 0
  %3357 = vmatprep.subr.bf16.mxu0 0
  %3358 = vmatpush1.bf16.msra.mxu0 0
  %3359 = vmatprep.subr.bf16.mxu0 0
  %3360 = vmatpush1.bf16.msra.mxu0 0
  %3361 = vmatprep.subr.bf16.mxu0 0
  %3362 = vmatpush1.bf16.msra.mxu0 0
  %3363 = vmatprep.subr.bf16.mxu0 0
  %3364 = vmatpush1.bf16.msra.mxu0 0
  %3365 = vmatprep.subr.bf16.mxu0 0
  %3366 = vmatpush1.bf16.msra.mxu0 0
  %3367 = vmatprep.subr.bf16.mxu0 0
  %3368 = vmatpush1.bf16.msra.mxu0 0
  %3369 = vmatprep.subr.bf16.mxu0 0
  %3370 = vmatpush1.bf16.msra.mxu0 0
  %3371 = vmatprep.mubr.bf16.mxu0 0
  %3372 = vmatmul.mubr.bf16.gmra.mrb[0].mxu0 %v3082
  %v3373 = vpop.f32.mrb[0].mxu0
  %v3374 = vadd.f32 0.0, %v3373
  %v3375 = vpop.f32.mrb[0].mxu0
  %v3376 = vadd.f32 0.0, %v3375
  %v3377 = vpop.f32.mrb[0].mxu0
  %v3378 = vadd.f32 0.0, %v3377
  %v3379 = vpop.f32.mrb[0].mxu0
  %v3380 = vadd.f32 0.0, %v3379
  %3381 = vdwg.mxu0
  %v3382 = vadd.f32 %v3096, %v3331
  %v3383 = vadd.f32 %v3097, %v3333
  %v3384 = vadd.f32 %v3098, %v3374
  %v3385 = vadd.f32 %v3099, %v3376
  %v3386 = vadd.f32 %v3100, %v3335
  %v3387 = vadd.f32 %v3101, %v3337
  %v3388 = vadd.f32 %v3102, %v3378
  %v3389 = vadd.f32 %v3103, %v3380
  %v3390 = vmul.f32 %v3382, 0.5
  %v3391 = vmul.f32 %v3383, 0.5
  %v3392 = vmul.f32 %v3384, 0.5
  %v3393 = vmul.f32 %v3385, 0.5
  %v3394 = vmul.f32 %v3386, 0.5
  %v3395 = vmul.f32 %v3387, 0.5
  %v3396 = vmul.f32 %v3388, 0.5
  %v3397 = vmul.f32 %v3389, 0.5
  %v3398 = vtanh.pop %v3390
  %v3399 = vtanh.pop %v3391
  %v3400 = vtanh.pop %v3392
  %v3401 = vtanh.pop %v3393
  %v3402 = vtanh.pop %v3394
  %v3403 = vtanh.pop %v3395
  %v3404 = vtanh.pop %v3396
  %v3405 = vtanh.pop %v3397
  %v3406 = vmul.f32 %v3398, 0.5
  %v3407 = vmul.f32 %v3399, 0.5
  %v3408 = vmul.f32 %v3400, 0.5
  %v3409 = vmul.f32 %v3401, 0.5
  %v3410 = vmul.f32 %v3402, 0.5
  %v3411 = vmul.f32 %v3403, 0.5
  %v3412 = vmul.f32 %v3404, 0.5
  %v3413 = vmul.f32 %v3405, 0.5
  %v3414 = vadd.f32 %v3406, 0.5
  %v3415 = vadd.f32 %v3407, 0.5
  %v3416 = vadd.f32 %v3408, 0.5
  %v3417 = vadd.f32 %v3409, 0.5
  %v3418 = vadd.f32 %v3410, 0.5
  %v3419 = vadd.f32 %v3411, 0.5
  %v3420 = vadd.f32 %v3412, 0.5
  %v3421 = vadd.f32 %v3413, 0.5
  %v3422 = vmul.f32 %v3415, %v3070
  %v3423 = vmul.f32 %v3419, %v3071
  %v3424 = vadd.f32 %v3422, %v3416
  %v3425 = vadd.f32 %v3423, %v3420
  %v3426 = vsub.f32 %v3424, %v3414
  %v3427 = vsub.f32 %v3425, %v3418
  %v3428 = vmul.f32 %v3426, 0.5
  %v3429 = vmul.f32 %v3427, 0.5
  %v3430 = vtanh.pop %v3428
  %v3431 = vtanh.pop %v3429
  %v3432 = vmul.f32 %v3430, 0.5
  %v3433 = vmul.f32 %v3431, 0.5
  %v3434 = vadd.f32 %v3432, 0.5
  %v3435 = vadd.f32 %v3433, 0.5
  %v3436 = vsub.f32 %v3434, %v3417
  %v3437 = vsub.f32 %v3435, %v3421
  %v3438 = vpack.c.bf16 %v3437, %v3436
  %v3440 = vunpack.c.l.b16 %v3438
  %v3441 = vunpack.c.h.b16 %v3438
  %v3442 = vpack.c.b16 %v3440, %v3440
  %v3443 = vpack.c.b16 %v3441, %v3441
  %s3446 = scalar_lea.vmem %s4, 56
  %3447 = vst [vmem:[%s3446] sm:$0xf] %v3442
  %3448 = vst [vmem:[%s3446 + $0x4] sm:$0xf] %v3443
  %3449 = vst [vmem:[#allocation3] sm:$0xff] %v3436
  %3450 = vst [vmem:[#allocation3 + $0x8] sm:$0xff] %v3437
  %3451 = vst [vmem:[#allocation4] sm:$0xff] %v3426
  %3452 = vst [vmem:[#allocation4 + $0x8] sm:$0xff] %v3427
  // Predicated region
  $region22: #{rnn_model_forward.6} parent=0 // pred_check
    %p3453 = pneg %p21
  $region23: #{rnn_model_forward.6} parent=0 // pred_check_branch
    %3455 = sbr.rel (%p3453) target = $region25
  $region24: #{rnn_model_forward.6} parent=0 // pred_region
    %v3456 = vld [vmem:[#allocation3] sm:$0xff]
    %v3457 = vld [vmem:[#allocation3 + $0x8] sm:$0xff]
    %3458 = vst [vmem:[%s5] sm:$0xff] %v3456
    %3459 = vst [vmem:[%s5 + $0x8] sm:$0xff] %v3457
    %v3460 = vld [vmem:[#allocation4] sm:$0xff]
    %v3461 = vld [vmem:[#allocation4 + $0x8] sm:$0xff]
    %3462 = vst [vmem:[%s6] sm:$0xff] %v3460
    %3463 = vst [vmem:[%s6 + $0x8] sm:$0xff] %v3461
  $region25: #{rnn_model_forward.6} parent=0 // pred_fallthru
    _
  // Predicated region
  $region26: #{rnn_model_forward.6} parent=0 // pred_check
    _
  $region27: #{rnn_model_forward.6} parent=0 // pred_check_branch
    %3465 = sbr.rel (0) target = $region29
  $region28: #{rnn_model_forward.6} parent=0 // pred_region
    _
  $region29: #{rnn_model_forward.6} parent=0 // pred_fallthru
    _
  // Predicated region
  $region30: #{rnn_model_forward.6} parent=0 // pred_check
    _
  $region31: #{rnn_model_forward.6} parent=0 // pred_check_branch
    %3467 = sbr.rel (0) target = $region33
  $region32: #{rnn_model_forward.6} parent=0 // pred_region
    _
  $region33: #{rnn_model_forward.6} parent=0 // pred_fallthru
    _
  // Predicated region
  $region34: #{rnn_model_forward.6} parent=0 // pred_check
    _
  $region35: #{rnn_model_forward.6} parent=0 // pred_check_branch
    %3469 = sbr.rel (0) target = $region37
  $region36: #{rnn_model_forward.6} parent=0 // pred_region
    _
  $region37: #{rnn_model_forward.6} parent=0 // pred_fallthru
    _
  // Predicated region
  $region38: #{rnn_model_forward.6} parent=0 // pred_check
    _
  $region39: #{rnn_model_forward.6} parent=0 // pred_check_branch
    %3471 = sbr.rel (0) target = $region41
  $region40: #{rnn_model_forward.6} parent=0 // pred_region
    _
  $region41: #{rnn_model_forward.6} parent=0 // pred_fallthru
    _
  // Predicated region
  $region42: #{rnn_model_forward.6} parent=0 // pred_check
    _
  $region43: #{rnn_model_forward.6} parent=0 // pred_check_branch
    %3473 = sbr.rel (0) target = $region45
  $region44: #{rnn_model_forward.6} parent=0 // pred_region
    _
  $region45: #{rnn_model_forward.6} parent=0 // pred_fallthru
    _
  // Predicated region
  $region46: #{rnn_model_forward.6} parent=0 // pred_check
    _
  $region47: #{rnn_model_forward.6} parent=0 // pred_check_branch
    %3475 = sbr.rel (0) target = $region49
  $region48: #{rnn_model_forward.6} parent=0 // pred_region
    _
  $region49: #{rnn_model_forward.6} parent=0 // pred_fallthru
    _

</llo_original>
